<compile_context>
chip_gen: v5e
topology: v5e:2x2
jax: 0.10.0
libtpu: 0.0.40
codegen_flags: <defaults>
</compile_context>

<pallas_src>
import functools

import jax
import jax.numpy as jnp
from jax.experimental import pallas as pl
from jax.experimental.pallas import tpu as pltpu

BN_EPS = 1e-5


def _round_up(x, m):
    return (x + m - 1) // m * m


# ----------------------------- Pallas kernels ------------------------------ #

def _conv_mm_kernel(x_ref, w_ref, sb_ref, o_ref):
    # x_ref: (TM, K)  w_ref: (K, N)  sb_ref: (2, N)=[scale;bias]  o_ref: (TM, N)
    y = jnp.dot(x_ref[...], w_ref[...], preferred_element_type=jnp.float32)
    y = y * sb_ref[0, :][None, :] + sb_ref[1, :][None, :]
    o_ref[...] = jnp.maximum(y, 0.0).astype(o_ref.dtype)


def _conv_mm_pool_kernel(x_ref, w_ref, sb_ref, o_ref):
    # x_ref: (4, TP, K) -- axis 0 indexes the 2x2 pool-window position.
    # o_ref: (TP, N)    -- pooled output (max over the 4 window positions).
    w = w_ref[...]
    s = sb_ref[0, :][None, :]
    b = sb_ref[1, :][None, :]

    def act(q):
        y = jnp.dot(x_ref[q], w, preferred_element_type=jnp.float32)
        return jnp.maximum(y * s + b, 0.0)

    y01 = jnp.maximum(act(0), act(1))
    y23 = jnp.maximum(act(2), act(3))
    o_ref[...] = jnp.maximum(y01, y23).astype(o_ref.dtype)


def _fc_head_kernel(x_ref, w1_ref, sb1_ref, w2_ref, b2_ref, o_ref):
    # x_ref: (B, F)  w1: (F, 128)  sb1: (2, 128)  w2: (128, 128)  b2: (1, 128)
    h = jnp.dot(x_ref[...], w1_ref[...], preferred_element_type=jnp.float32)
    h = jnp.maximum(h * sb1_ref[0, :][None, :] + sb1_ref[1, :][None, :], 0.0)
    o = jnp.dot(h, w2_ref[...], preferred_element_type=jnp.float32)
    o_ref[...] = (o + b2_ref[0, :][None, :]).astype(o_ref.dtype)


# ------------------------------- JAX glue ---------------------------------- #

def im2col_3x3(x):
    """SAME-padded 3x3 patches. x: (B,H,W,C) -> (B,H,W,9*C), tap-major C-minor."""
    B, H, W, C = x.shape
    xp = jnp.pad(x, ((0, 0), (1, 1), (1, 1), (0, 0)))
    cols = [xp[:, kh:kh + H, kw:kw + W, :] for kh in range(3) for kw in range(3)]
    return jnp.concatenate(cols, axis=-1)


def conv3x3_bn_relu(x, wf, sb, *, pool):
    """Fused Conv2d(3x3,pad=1)+BN+ReLU (+optional fused 2x2 maxpool).

    x: (B,H,W,Cin); wf: (K_pad, Cout) folded/padded weights; sb: (2, Cout).
    """
    B, H, W, Cin = x.shape
    K = wf.shape[0]
    N = wf.shape[1]
    K0 = 9 * Cin
    patches = im2col_3x3(x)                                   # (B,H,W,9*Cin)
    if K > K0:
        patches = jnp.pad(patches, ((0, 0), (0, 0), (0, 0), (0, K - K0)))

    if pool:
        Ho, Wo = H // 2, W // 2
        P = B * Ho * Wo
        # pool-window-major layout: (4, B*Ho*Wo, K)
        p = patches.reshape(B, Ho, 2, Wo, 2, K)
        p = p.transpose(2, 4, 0, 1, 3, 5).reshape(4, P, K)
        nm = 2 if (P % 16 == 0) else 1                        # 2 M-tiles -> v7x
        TP = P // nm
        out = pl.pallas_call(
            _conv_mm_pool_kernel,
            out_shape=jax.ShapeDtypeStruct((P, N), jnp.float32),
            grid=(nm,),
            in_specs=[
                pl.BlockSpec((4, TP, K), lambda m: (0, m, 0)),
                pl.BlockSpec((K, N), lambda m: (0, 0)),
                pl.BlockSpec((2, N), lambda m: (0, 0)),
            ],
            out_specs=pl.BlockSpec((TP, N), lambda m: (m, 0)),
            compiler_params=pltpu.CompilerParams(
                dimension_semantics=("parallel",)),
        )(p, wf, sb)
        return out.reshape(B, Ho, Wo, N)
    else:
        M = B * H * W                                          # batch folded into M
        p = patches.reshape(M, K)
        nm = 2 if (M % 16 == 0) else 1
        TM = M // nm
        out = pl.pallas_call(
            _conv_mm_kernel,
            out_shape=jax.ShapeDtypeStruct((M, N), jnp.float32),
            grid=(nm,),
            in_specs=[
                pl.BlockSpec((TM, K), lambda m: (m, 0)),
                pl.BlockSpec((K, N), lambda m: (0, 0)),
                pl.BlockSpec((2, N), lambda m: (0, 0)),
            ],
            out_specs=pl.BlockSpec((TM, N), lambda m: (m, 0)),
            compiler_params=pltpu.CompilerParams(
                dimension_semantics=("parallel",)),
        )(p, wf, sb)
        return out.reshape(B, H, W, N)


def _fold_bn(conv_bias, gamma, beta, mean, var):
    scale = gamma / jnp.sqrt(var + BN_EPS)
    bias = (conv_bias - mean) * scale + beta
    return scale, bias


def prepare_params(params):
    """One-time folding/padding/permutation of PyTorch-style parameters."""
    prep = {}
    for name in ("conv1", "conv2", "conv3", "conv4"):
        cp = params[name]
        scale, bias = _fold_bn(cp["b"], cp["gamma"], cp["beta"],
                               cp["mean"], cp["var"])
        kh, kw, cin, cout = cp["w"].shape
        K0 = kh * kw * cin
        K = _round_up(K0, 8)                       # conv1: 27 -> 32
        wf = cp["w"].reshape(K0, cout)             # matches im2col ordering
        if K > K0:
            wf = jnp.pad(wf, ((0, K - K0), (0, 0)))
        prep[f"{name}_w"] = wf
        prep[f"{name}_sb"] = jnp.stack([scale, bias], axis=0)

    # fc1: fold BN1d, permute rows from NCHW-flatten order to NHWC-flatten
    # order (removes the per-forward transpose), pad N 100 -> 128.
    s1, b1 = _fold_bn(params["fc1_b"], params["fc1_gamma"], params["fc1_beta"],
                      params["fc1_mean"], params["fc1_var"])
    w1 = params["fc1_w"]                                   # (C*Hf*Wf, 100)
    C = params["conv4"]["w"].shape[-1]
    HW = w1.shape[0] // C
    Hf = Wf = int(round(HW ** 0.5))
    w1 = w1.reshape(C, Hf, Wf, -1).transpose(1, 2, 0, 3).reshape(Hf * Wf * C, -1)
    N1 = w1.shape[1]
    N1p = _round_up(N1, 128)
    w1 = jnp.pad(w1, ((0, 0), (0, N1p - N1)))
    s1 = jnp.pad(s1, (0, N1p - N1), constant_values=1.0)
    b1 = jnp.pad(b1, (0, N1p - N1))
    prep["fc1_w"] = w1
    prep["fc1_sb"] = jnp.stack([s1, b1], axis=0)

    # fc2: pad K 100 -> 128 and N output_dim -> 128 (lane-dense store).
    w2 = params["fc2_w"]
    b2 = params["fc2_b"]
    N2 = w2.shape[1]
    N2p = _round_up(N2, 128)
    prep["fc2_w"] = jnp.pad(w2, ((0, N1p - N1), (0, N2p - N2)))
    prep["fc2_b"] = jnp.pad(b2, (0, N2p - N2)).reshape(1, N2p)
    return prep


def init_params(key, output_dim=10):
    ks = jax.random.split(key, 32)
    it = iter(ks)

    def conv_p(cin, cout):
        return dict(
            w=0.1 * jax.random.normal(next(it), (3, 3, cin, cout), jnp.float32),
            b=0.05 * jax.random.normal(next(it), (cout,), jnp.float32),
            gamma=1.0 + 0.1 * jax.random.normal(next(it), (cout,), jnp.float32),
            beta=0.1 * jax.random.normal(next(it), (cout,), jnp.float32),
            mean=0.1 * jax.random.normal(next(it), (cout,), jnp.float32),
            var=jax.random.uniform(next(it), (cout,), jnp.float32, 0.5, 1.5),
        )

    p = dict(conv1=conv_p(3, 32), conv2=conv_p(32, 32),
             conv3=conv_p(32, 16), conv4=conv_p(16, 16))
    p["fc1_w"] = 0.05 * jax.random.normal(next(it), (16 * 7 * 7, 100), jnp.float32)
    p["fc1_b"] = 0.05 * jax.random.normal(next(it), (100,), jnp.float32)
    p["fc1_gamma"] = 1.0 + 0.1 * jax.random.normal(next(it), (100,), jnp.float32)
    p["fc1_beta"] = 0.1 * jax.random.normal(next(it), (100,), jnp.float32)
    p["fc1_mean"] = 0.1 * jax.random.normal(next(it), (100,), jnp.float32)
    p["fc1_var"] = jax.random.uniform(next(it), (100,), jnp.float32, 0.5, 1.5)
    p["fc2_w"] = 0.05 * jax.random.normal(next(it), (100, output_dim), jnp.float32)
    p["fc2_b"] = 0.05 * jax.random.normal(next(it), (output_dim,), jnp.float32)
    return p


def mycnn_forward(x_nchw, prep, *, output_dim):
    """Forward pass of MyCNN. Input follows PyTorch NCHW: (B, 3, 28, 28)."""
    x = jnp.transpose(x_nchw, (0, 2, 3, 1))                       # NCHW -> NHWC

    x = conv3x3_bn_relu(x, prep["conv1_w"], prep["conv1_sb"], pool=False)
    x = conv3x3_bn_relu(x, prep["conv2_w"], prep["conv2_sb"], pool=True)   # 28->14
    x = conv3x3_bn_relu(x, prep["conv3_w"], prep["conv3_sb"], pool=False)
    x = conv3x3_bn_relu(x, prep["conv4_w"], prep["conv4_sb"], pool=True)   # 14->7

    B = x.shape[0]
    feat = x.reshape(B, -1)       # NHWC flatten; fc1_w rows were pre-permuted

    w1, sb1 = prep["fc1_w"], prep["fc1_sb"]
    w2, b2 = prep["fc2_w"], prep["fc2_b"]
    out = pl.pallas_call(
        _fc_head_kernel,
        out_shape=jax.ShapeDtypeStruct((B, w2.shape[1]), jnp.float32),
        grid=(1,),
        in_specs=[
            pl.BlockSpec(feat.shape, lambda i: (0, 0)),
            pl.BlockSpec(w1.shape, lambda i: (0, 0)),
            pl.BlockSpec(sb1.shape, lambda i: (0, 0)),
            pl.BlockSpec(w2.shape, lambda i: (0, 0)),
            pl.BlockSpec(b2.shape, lambda i: (0, 0)),
        ],
        out_specs=pl.BlockSpec((B, w2.shape[1]), lambda i: (0, 0)),
    )(feat, w1, sb1, w2, b2)
    return out[:, :output_dim]


if __name__ == "__main__":
    key = jax.random.PRNGKey(0)
    kx, kp = jax.random.split(key)
    # (B, C, H, W) = (2, 3, 28, 28): spatial 28 so 16*7*7 matches the FC layer.
    x = jax.random.normal(kx, (2, 3, 28, 28), jnp.float32)
    params = init_params(kp, output_dim=10)
    prep = prepare_params(params)          # one-time fold / pad / permute

    fwd = jax.jit(mycnn_forward, static_argnames=("output_dim",))
    out = fwd(x, prep, output_dim=10)
    jax.block_until_ready(out)
    assert out.shape == (2, 10) and out.dtype == jnp.float32
    print("KERNEL_OK")
</pallas_src>

<mosaic_0001>
module attributes {stable_mosaic.version = 11 : i64} {
  func.func @_conv_mm_kernel(%arg0: i32, %arg1: memref<784x32xf32, #tpu.memory_space<vmem>>, %arg2: memref<32x32xf32, #tpu.memory_space<vmem>>, %arg3: memref<2x32xf32, #tpu.memory_space<vmem>>, %arg4: memref<784x32xf32, #tpu.memory_space<vmem>>) attributes {dimension_semantics = [#tpu.dimension_semantics<parallel>], iteration_bounds = array<i64: 2>, scalar_prefetch = 0 : i64, scratch_operands = 0 : i64, tpu.core_type = #tpu.core_type<tc>, window_params = [{transform_indices = @transform_0, window_bounds = array<i64: 784, 32>}, {pipeline_mode = #tpu.pipeline_mode<synchronous>, transform_indices = @transform_1, window_bounds = array<i64: 32, 32>}, {pipeline_mode = #tpu.pipeline_mode<synchronous>, transform_indices = @transform_2, window_bounds = array<i64: 2, 32>}, {transform_indices = @transform_3, window_bounds = array<i64: 784, 32>}]} {
    %c0 = arith.constant 0 : index
    %c0_0 = arith.constant 0 : index
    %0 = vector.load %arg1[%c0, %c0_0] : memref<784x32xf32, #tpu.memory_space<vmem>>, vector<784x32xf32>
    %c0_1 = arith.constant 0 : index
    %c0_2 = arith.constant 0 : index
    %1 = vector.load %arg2[%c0_1, %c0_2] : memref<32x32xf32, #tpu.memory_space<vmem>>, vector<32x32xf32>
    %cst = arith.constant dense<0.000000e+00> : vector<784x32xf32>
    %2 = tpu.matmul %0, %1, %cst {dimension_numbers = #tpu.dot_dimension_numbers<[1], [0], [0], [1], [0, 0, 1, 1], [], []>} : vector<784x32xf32>, vector<32x32xf32>, vector<784x32xf32> -> vector<784x32xf32>
    %c0_3 = arith.constant 0 : index
    %c0_4 = arith.constant 0 : index
    %3 = vector.load %arg3[%c0_3, %c0_4] : memref<2x32xf32, #tpu.memory_space<vmem>>, vector<1x32xf32>
    %4 = vector.shape_cast %3 : vector<1x32xf32> to vector<32xf32>
    %5 = vector.shape_cast %4 : vector<32xf32> to vector<1x32xf32>
    %6 = vector.broadcast %5 : vector<1x32xf32> to vector<784x32xf32>
    %7 = arith.mulf %2, %6 : vector<784x32xf32>
    %c1 = arith.constant 1 : index
    %c0_5 = arith.constant 0 : index
    %8 = vector.load %arg3[%c1, %c0_5] : memref<2x32xf32, #tpu.memory_space<vmem>>, vector<1x32xf32>
    %9 = vector.shape_cast %8 : vector<1x32xf32> to vector<32xf32>
    %10 = vector.shape_cast %9 : vector<32xf32> to vector<1x32xf32>
    %11 = vector.broadcast %10 : vector<1x32xf32> to vector<784x32xf32>
    %12 = arith.addf %7, %11 : vector<784x32xf32>
    %cst_6 = arith.constant 0.000000e+00 : f32
    %13 = vector.broadcast %cst_6 : f32 to vector<784x32xf32>
    %14 = arith.maximumf %12, %13 : vector<784x32xf32>
    %c0_7 = arith.constant 0 : index
    %c0_8 = arith.constant 0 : index
    %15 = vector.load %arg4[%c0_7, %c0_8] : memref<784x32xf32, #tpu.memory_space<vmem>>, vector<784x32xf32>
    tpu.vector_store %arg4[%c0_7, %c0_8], %14 {strides = array<i32>} : memref<784x32xf32, #tpu.memory_space<vmem>>, vector<784x32xf32>,
    return
  }
  func.func @transform_0(%arg0: i32) -> (i32, i32) {
    %c0_i32 = arith.constant 0 : i32
    %c0_i32_0 = arith.constant 0 : i32
    return %arg0, %c0_i32 : i32, i32
  }
  func.func @transform_1(%arg0: i32) -> (i32, i32) {
    %c0_i32 = arith.constant 0 : i32
    %c0_i32_0 = arith.constant 0 : i32
    %c0_i32_1 = arith.constant 0 : i32
    return %c0_i32, %c0_i32_0 : i32, i32
  }
  func.func @transform_2(%arg0: i32) -> (i32, i32) {
    %c0_i32 = arith.constant 0 : i32
    %c0_i32_0 = arith.constant 0 : i32
    %c0_i32_1 = arith.constant 0 : i32
    return %c0_i32, %c0_i32_0 : i32, i32
  }
  func.func @transform_3(%arg0: i32) -> (i32, i32) {
    %c0_i32 = arith.constant 0 : i32
    %c0_i32_0 = arith.constant 0 : i32
    return %arg0, %c0_i32 : i32, i32
  }
}

module attributes {stable_mosaic.version = 11 : i64} {
  func.func @_conv_mm_pool_kernel(%arg0: i32, %arg1: memref<4x392x288xf32, #tpu.memory_space<vmem>>, %arg2: memref<288x32xf32, #tpu.memory_space<vmem>>, %arg3: memref<2x32xf32, #tpu.memory_space<vmem>>, %arg4: memref<392x32xf32, #tpu.memory_space<vmem>>) attributes {dimension_semantics = [#tpu.dimension_semantics<parallel>], iteration_bounds = array<i64: 1>, scalar_prefetch = 0 : i64, scratch_operands = 0 : i64, tpu.core_type = #tpu.core_type<tc>, window_params = [{transform_indices = @transform_0, window_bounds = array<i64: 4, 392, 288>}, {pipeline_mode = #tpu.pipeline_mode<synchronous>, transform_indices = @transform_1, window_bounds = array<i64: 288, 32>}, {pipeline_mode = #tpu.pipeline_mode<synchronous>, transform_indices = @transform_2, window_bounds = array<i64: 2, 32>}, {transform_indices = @transform_3, window_bounds = array<i64: 392, 32>}]} {
    %c0 = arith.constant 0 : index
    %c0_0 = arith.constant 0 : index
    %0 = vector.load %arg2[%c0, %c0_0] : memref<288x32xf32, #tpu.memory_space<vmem>>, vector<288x32xf32>
    %c0_1 = arith.constant 0 : index
    %c0_2 = arith.constant 0 : index
    %1 = vector.load %arg3[%c0_1, %c0_2] : memref<2x32xf32, #tpu.memory_space<vmem>>, vector<1x32xf32>
    %2 = vector.shape_cast %1 : vector<1x32xf32> to vector<32xf32>
    %3 = vector.shape_cast %2 : vector<32xf32> to vector<1x32xf32>
    %c1 = arith.constant 1 : index
    %c0_3 = arith.constant 0 : index
    %4 = vector.load %arg3[%c1, %c0_3] : memref<2x32xf32, #tpu.memory_space<vmem>>, vector<1x32xf32>
    %5 = vector.shape_cast %4 : vector<1x32xf32> to vector<32xf32>
    %6 = vector.shape_cast %5 : vector<32xf32> to vector<1x32xf32>
    %c0_4 = arith.constant 0 : index
    %c0_5 = arith.constant 0 : index
    %c0_6 = arith.constant 0 : index
    %7 = vector.load %arg1[%c0_4, %c0_5, %c0_6] : memref<4x392x288xf32, #tpu.memory_space<vmem>>, vector<1x392x288xf32>
    %8 = vector.shape_cast %7 : vector<1x392x288xf32> to vector<392x288xf32>
    %cst = arith.constant dense<0.000000e+00> : vector<392x32xf32>
    %9 = tpu.matmul %8, %0, %cst {dimension_numbers = #tpu.dot_dimension_numbers<[1], [0], [0], [1], [0, 0, 1, 1], [], []>} : vector<392x288xf32>, vector<288x32xf32>, vector<392x32xf32> -> vector<392x32xf32>
    %10 = vector.broadcast %3 : vector<1x32xf32> to vector<392x32xf32>
    %11 = arith.mulf %9, %10 : vector<392x32xf32>
    %12 = vector.broadcast %6 : vector<1x32xf32> to vector<392x32xf32>
    %13 = arith.addf %11, %12 : vector<392x32xf32>
    %cst_7 = arith.constant 0.000000e+00 : f32
    %14 = vector.broadcast %cst_7 : f32 to vector<392x32xf32>
    %15 = arith.maximumf %13, %14 : vector<392x32xf32>
    %c1_8 = arith.constant 1 : index
    %c0_9 = arith.constant 0 : index
    %c0_10 = arith.constant 0 : index
    %16 = vector.load %arg1[%c1_8, %c0_9, %c0_10] : memref<4x392x288xf32, #tpu.memory_space<vmem>>, vector<1x392x288xf32>
    %17 = vector.shape_cast %16 : vector<1x392x288xf32> to vector<392x288xf32>
    %cst_11 = arith.constant dense<0.000000e+00> : vector<392x32xf32>
    %18 = tpu.matmul %17, %0, %cst_11 {dimension_numbers = #tpu.dot_dimension_numbers<[1], [0], [0], [1], [0, 0, 1, 1], [], []>} : vector<392x288xf32>, vector<288x32xf32>, vector<392x32xf32> -> vector<392x32xf32>
    %19 = vector.broadcast %3 : vector<1x32xf32> to vector<392x32xf32>
    %20 = arith.mulf %18, %19 : vector<392x32xf32>
    %21 = vector.broadcast %6 : vector<1x32xf32> to vector<392x32xf32>
    %22 = arith.addf %20, %21 : vector<392x32xf32>
    %cst_12 = arith.constant 0.000000e+00 : f32
    %23 = vector.broadcast %cst_12 : f32 to vector<392x32xf32>
    %24 = arith.maximumf %22, %23 : vector<392x32xf32>
    %25 = arith.maximumf %15, %24 : vector<392x32xf32>
    %c2 = arith.constant 2 : index
    %c0_13 = arith.constant 0 : index
    %c0_14 = arith.constant 0 : index
    %26 = vector.load %arg1[%c2, %c0_13, %c0_14] : memref<4x392x288xf32, #tpu.memory_space<vmem>>, vector<1x392x288xf32>
    %27 = vector.shape_cast %26 : vector<1x392x288xf32> to vector<392x288xf32>
    %cst_15 = arith.constant dense<0.000000e+00> : vector<392x32xf32>
    %28 = tpu.matmul %27, %0, %cst_15 {dimension_numbers = #tpu.dot_dimension_numbers<[1], [0], [0], [1], [0, 0, 1, 1], [], []>} : vector<392x288xf32>, vector<288x32xf32>, vector<392x32xf32> -> vector<392x32xf32>
    %29 = vector.broadcast %3 : vector<1x32xf32> to vector<392x32xf32>
    %30 = arith.mulf %28, %29 : vector<392x32xf32>
    %31 = vector.broadcast %6 : vector<1x32xf32> to vector<392x32xf32>
    %32 = arith.addf %30, %31 : vector<392x32xf32>
    %cst_16 = arith.constant 0.000000e+00 : f32
    %33 = vector.broadcast %cst_16 : f32 to vector<392x32xf32>
    %34 = arith.maximumf %32, %33 : vector<392x32xf32>
    %c3 = arith.constant 3 : index
    %c0_17 = arith.constant 0 : index
    %c0_18 = arith.constant 0 : index
    %35 = vector.load %arg1[%c3, %c0_17, %c0_18] : memref<4x392x288xf32, #tpu.memory_space<vmem>>, vector<1x392x288xf32>
    %36 = vector.shape_cast %35 : vector<1x392x288xf32> to vector<392x288xf32>
    %cst_19 = arith.constant dense<0.000000e+00> : vector<392x32xf32>
    %37 = tpu.matmul %36, %0, %cst_19 {dimension_numbers = #tpu.dot_dimension_numbers<[1], [0], [0], [1], [0, 0, 1, 1], [], []>} : vector<392x288xf32>, vector<288x32xf32>, vector<392x32xf32> -> vector<392x32xf32>
    %38 = vector.broadcast %3 : vector<1x32xf32> to vector<392x32xf32>
    %39 = arith.mulf %37, %38 : vector<392x32xf32>
    %40 = vector.broadcast %6 : vector<1x32xf32> to vector<392x32xf32>
    %41 = arith.addf %39, %40 : vector<392x32xf32>
    %cst_20 = arith.constant 0.000000e+00 : f32
    %42 = vector.broadcast %cst_20 : f32 to vector<392x32xf32>
    %43 = arith.maximumf %41, %42 : vector<392x32xf32>
    %44 = arith.maximumf %34, %43 : vector<392x32xf32>
    %45 = arith.maximumf %25, %44 : vector<392x32xf32>
    %c0_21 = arith.constant 0 : index
    %c0_22 = arith.constant 0 : index
    %46 = vector.load %arg4[%c0_21, %c0_22] : memref<392x32xf32, #tpu.memory_space<vmem>>, vector<392x32xf32>
    tpu.vector_store %arg4[%c0_21, %c0_22], %45 {strides = array<i32>} : memref<392x32xf32, #tpu.memory_space<vmem>>, vector<392x32xf32>,
    return
  }
  func.func @transform_0(%arg0: i32) -> (i32, i32, i32) {
    %c0_i32 = arith.constant 0 : i32
    %c0_i32_0 = arith.constant 0 : i32
    %c0_i32_1 = arith.constant 0 : i32
    return %c0_i32, %arg0, %c0_i32_0 : i32, i32, i32
  }
  func.func @transform_1(%arg0: i32) -> (i32, i32) {
    %c0_i32 = arith.constant 0 : i32
    %c0_i32_0 = arith.constant 0 : i32
    %c0_i32_1 = arith.constant 0 : i32
    return %c0_i32, %c0_i32_0 : i32, i32
  }
  func.func @transform_2(%arg0: i32) -> (i32, i32) {
    %c0_i32 = arith.constant 0 : i32
    %c0_i32_0 = arith.constant 0 : i32
    %c0_i32_1 = arith.constant 0 : i32
    return %c0_i32, %c0_i32_0 : i32, i32
  }
  func.func @transform_3(%arg0: i32) -> (i32, i32) {
    %c0_i32 = arith.constant 0 : i32
    %c0_i32_0 = arith.constant 0 : i32
    return %arg0, %c0_i32 : i32, i32
  }
}

module attributes {stable_mosaic.version = 11 : i64} {
  func.func @_conv_mm_kernel(%arg0: i32, %arg1: memref<392x288xf32, #tpu.memory_space<vmem>>, %arg2: memref<288x16xf32, #tpu.memory_space<vmem>>, %arg3: memref<2x16xf32, #tpu.memory_space<vmem>>, %arg4: memref<392x16xf32, #tpu.memory_space<vmem>>) attributes {dimension_semantics = [#tpu.dimension_semantics<parallel>], iteration_bounds = array<i64: 1>, scalar_prefetch = 0 : i64, scratch_operands = 0 : i64, tpu.core_type = #tpu.core_type<tc>, window_params = [{transform_indices = @transform_0, window_bounds = array<i64: 392, 288>}, {pipeline_mode = #tpu.pipeline_mode<synchronous>, transform_indices = @transform_1, window_bounds = array<i64: 288, 16>}, {pipeline_mode = #tpu.pipeline_mode<synchronous>, transform_indices = @transform_2, window_bounds = array<i64: 2, 16>}, {transform_indices = @transform_3, window_bounds = array<i64: 392, 16>}]} {
    %c0 = arith.constant 0 : index
    %c0_0 = arith.constant 0 : index
    %0 = vector.load %arg1[%c0, %c0_0] : memref<392x288xf32, #tpu.memory_space<vmem>>, vector<392x288xf32>
    %c0_1 = arith.constant 0 : index
    %c0_2 = arith.constant 0 : index
    %1 = vector.load %arg2[%c0_1, %c0_2] : memref<288x16xf32, #tpu.memory_space<vmem>>, vector<288x16xf32>
    %cst = arith.constant dense<0.000000e+00> : vector<392x16xf32>
    %2 = tpu.matmul %0, %1, %cst {dimension_numbers = #tpu.dot_dimension_numbers<[1], [0], [0], [1], [0, 0, 1, 1], [], []>} : vector<392x288xf32>, vector<288x16xf32>, vector<392x16xf32> -> vector<392x16xf32>
    %c0_3 = arith.constant 0 : index
    %c0_4 = arith.constant 0 : index
    %3 = vector.load %arg3[%c0_3, %c0_4] : memref<2x16xf32, #tpu.memory_space<vmem>>, vector<1x16xf32>
    %4 = vector.shape_cast %3 : vector<1x16xf32> to vector<16xf32>
    %5 = vector.shape_cast %4 : vector<16xf32> to vector<1x16xf32>
    %6 = vector.broadcast %5 : vector<1x16xf32> to vector<392x16xf32>
    %7 = arith.mulf %2, %6 : vector<392x16xf32>
    %c1 = arith.constant 1 : index
    %c0_5 = arith.constant 0 : index
    %8 = vector.load %arg3[%c1, %c0_5] : memref<2x16xf32, #tpu.memory_space<vmem>>, vector<1x16xf32>
    %9 = vector.shape_cast %8 : vector<1x16xf32> to vector<16xf32>
    %10 = vector.shape_cast %9 : vector<16xf32> to vector<1x16xf32>
    %11 = vector.broadcast %10 : vector<1x16xf32> to vector<392x16xf32>
    %12 = arith.addf %7, %11 : vector<392x16xf32>
    %cst_6 = arith.constant 0.000000e+00 : f32
    %13 = vector.broadcast %cst_6 : f32 to vector<392x16xf32>
    %14 = arith.maximumf %12, %13 : vector<392x16xf32>
    %c0_7 = arith.constant 0 : index
    %c0_8 = arith.constant 0 : index
    %15 = vector.load %arg4[%c0_7, %c0_8] : memref<392x16xf32, #tpu.memory_space<vmem>>, vector<392x16xf32>
    tpu.vector_store %arg4[%c0_7, %c0_8], %14 {strides = array<i32>} : memref<392x16xf32, #tpu.memory_space<vmem>>, vector<392x16xf32>,
    return
  }
  func.func @transform_0(%arg0: i32) -> (i32, i32) {
    %c0_i32 = arith.constant 0 : i32
    %c0_i32_0 = arith.constant 0 : i32
    return %arg0, %c0_i32 : i32, i32
  }
  func.func @transform_1(%arg0: i32) -> (i32, i32) {
    %c0_i32 = arith.constant 0 : i32
    %c0_i32_0 = arith.constant 0 : i32
    %c0_i32_1 = arith.constant 0 : i32
    return %c0_i32, %c0_i32_0 : i32, i32
  }
  func.func @transform_2(%arg0: i32) -> (i32, i32) {
    %c0_i32 = arith.constant 0 : i32
    %c0_i32_0 = arith.constant 0 : i32
    %c0_i32_1 = arith.constant 0 : i32
    return %c0_i32, %c0_i32_0 : i32, i32
  }
  func.func @transform_3(%arg0: i32) -> (i32, i32) {
    %c0_i32 = arith.constant 0 : i32
    %c0_i32_0 = arith.constant 0 : i32
    return %arg0, %c0_i32 : i32, i32
  }
}

module attributes {stable_mosaic.version = 11 : i64} {
  func.func @_conv_mm_pool_kernel(%arg0: i32, %arg1: memref<4x98x144xf32, #tpu.memory_space<vmem>>, %arg2: memref<144x16xf32, #tpu.memory_space<vmem>>, %arg3: memref<2x16xf32, #tpu.memory_space<vmem>>, %arg4: memref<98x16xf32, #tpu.memory_space<vmem>>) attributes {dimension_semantics = [#tpu.dimension_semantics<parallel>], iteration_bounds = array<i64: 1>, scalar_prefetch = 0 : i64, scratch_operands = 0 : i64, tpu.core_type = #tpu.core_type<tc>, window_params = [{transform_indices = @transform_0, window_bounds = array<i64: 4, 98, 144>}, {pipeline_mode = #tpu.pipeline_mode<synchronous>, transform_indices = @transform_1, window_bounds = array<i64: 144, 16>}, {pipeline_mode = #tpu.pipeline_mode<synchronous>, transform_indices = @transform_2, window_bounds = array<i64: 2, 16>}, {transform_indices = @transform_3, window_bounds = array<i64: 98, 16>}]} {
    %c0 = arith.constant 0 : index
    %c0_0 = arith.constant 0 : index
    %0 = vector.load %arg2[%c0, %c0_0] : memref<144x16xf32, #tpu.memory_space<vmem>>, vector<144x16xf32>
    %c0_1 = arith.constant 0 : index
    %c0_2 = arith.constant 0 : index
    %1 = vector.load %arg3[%c0_1, %c0_2] : memref<2x16xf32, #tpu.memory_space<vmem>>, vector<1x16xf32>
    %2 = vector.shape_cast %1 : vector<1x16xf32> to vector<16xf32>
    %3 = vector.shape_cast %2 : vector<16xf32> to vector<1x16xf32>
    %c1 = arith.constant 1 : index
    %c0_3 = arith.constant 0 : index
    %4 = vector.load %arg3[%c1, %c0_3] : memref<2x16xf32, #tpu.memory_space<vmem>>, vector<1x16xf32>
    %5 = vector.shape_cast %4 : vector<1x16xf32> to vector<16xf32>
    %6 = vector.shape_cast %5 : vector<16xf32> to vector<1x16xf32>
    %c0_4 = arith.constant 0 : index
    %c0_5 = arith.constant 0 : index
    %c0_6 = arith.constant 0 : index
    %7 = vector.load %arg1[%c0_4, %c0_5, %c0_6] : memref<4x98x144xf32, #tpu.memory_space<vmem>>, vector<1x98x144xf32>
    %8 = vector.shape_cast %7 : vector<1x98x144xf32> to vector<98x144xf32>
    %cst = arith.constant dense<0.000000e+00> : vector<98x16xf32>
    %9 = tpu.matmul %8, %0, %cst {dimension_numbers = #tpu.dot_dimension_numbers<[1], [0], [0], [1], [0, 0, 1, 1], [], []>} : vector<98x144xf32>, vector<144x16xf32>, vector<98x16xf32> -> vector<98x16xf32>
    %10 = vector.broadcast %3 : vector<1x16xf32> to vector<98x16xf32>
    %11 = arith.mulf %9, %10 : vector<98x16xf32>
    %12 = vector.broadcast %6 : vector<1x16xf32> to vector<98x16xf32>
    %13 = arith.addf %11, %12 : vector<98x16xf32>
    %cst_7 = arith.constant 0.000000e+00 : f32
    %14 = vector.broadcast %cst_7 : f32 to vector<98x16xf32>
    %15 = arith.maximumf %13, %14 : vector<98x16xf32>
    %c1_8 = arith.constant 1 : index
    %c0_9 = arith.constant 0 : index
    %c0_10 = arith.constant 0 : index
    %16 = vector.load %arg1[%c1_8, %c0_9, %c0_10] : memref<4x98x144xf32, #tpu.memory_space<vmem>>, vector<1x98x144xf32>
    %17 = vector.shape_cast %16 : vector<1x98x144xf32> to vector<98x144xf32>
    %cst_11 = arith.constant dense<0.000000e+00> : vector<98x16xf32>
    %18 = tpu.matmul %17, %0, %cst_11 {dimension_numbers = #tpu.dot_dimension_numbers<[1], [0], [0], [1], [0, 0, 1, 1], [], []>} : vector<98x144xf32>, vector<144x16xf32>, vector<98x16xf32> -> vector<98x16xf32>
    %19 = vector.broadcast %3 : vector<1x16xf32> to vector<98x16xf32>
    %20 = arith.mulf %18, %19 : vector<98x16xf32>
    %21 = vector.broadcast %6 : vector<1x16xf32> to vector<98x16xf32>
    %22 = arith.addf %20, %21 : vector<98x16xf32>
    %cst_12 = arith.constant 0.000000e+00 : f32
    %23 = vector.broadcast %cst_12 : f32 to vector<98x16xf32>
    %24 = arith.maximumf %22, %23 : vector<98x16xf32>
    %25 = arith.maximumf %15, %24 : vector<98x16xf32>
    %c2 = arith.constant 2 : index
    %c0_13 = arith.constant 0 : index
    %c0_14 = arith.constant 0 : index
    %26 = vector.load %arg1[%c2, %c0_13, %c0_14] : memref<4x98x144xf32, #tpu.memory_space<vmem>>, vector<1x98x144xf32>
    %27 = vector.shape_cast %26 : vector<1x98x144xf32> to vector<98x144xf32>
    %cst_15 = arith.constant dense<0.000000e+00> : vector<98x16xf32>
    %28 = tpu.matmul %27, %0, %cst_15 {dimension_numbers = #tpu.dot_dimension_numbers<[1], [0], [0], [1], [0, 0, 1, 1], [], []>} : vector<98x144xf32>, vector<144x16xf32>, vector<98x16xf32> -> vector<98x16xf32>
    %29 = vector.broadcast %3 : vector<1x16xf32> to vector<98x16xf32>
    %30 = arith.mulf %28, %29 : vector<98x16xf32>
    %31 = vector.broadcast %6 : vector<1x16xf32> to vector<98x16xf32>
    %32 = arith.addf %30, %31 : vector<98x16xf32>
    %cst_16 = arith.constant 0.000000e+00 : f32
    %33 = vector.broadcast %cst_16 : f32 to vector<98x16xf32>
    %34 = arith.maximumf %32, %33 : vector<98x16xf32>
    %c3 = arith.constant 3 : index
    %c0_17 = arith.constant 0 : index
    %c0_18 = arith.constant 0 : index
    %35 = vector.load %arg1[%c3, %c0_17, %c0_18] : memref<4x98x144xf32, #tpu.memory_space<vmem>>, vector<1x98x144xf32>
    %36 = vector.shape_cast %35 : vector<1x98x144xf32> to vector<98x144xf32>
    %cst_19 = arith.constant dense<0.000000e+00> : vector<98x16xf32>
    %37 = tpu.matmul %36, %0, %cst_19 {dimension_numbers = #tpu.dot_dimension_numbers<[1], [0], [0], [1], [0, 0, 1, 1], [], []>} : vector<98x144xf32>, vector<144x16xf32>, vector<98x16xf32> -> vector<98x16xf32>
    %38 = vector.broadcast %3 : vector<1x16xf32> to vector<98x16xf32>
    %39 = arith.mulf %37, %38 : vector<98x16xf32>
    %40 = vector.broadcast %6 : vector<1x16xf32> to vector<98x16xf32>
    %41 = arith.addf %39, %40 : vector<98x16xf32>
    %cst_20 = arith.constant 0.000000e+00 : f32
    %42 = vector.broadcast %cst_20 : f32 to vector<98x16xf32>
    %43 = arith.maximumf %41, %42 : vector<98x16xf32>
    %44 = arith.maximumf %34, %43 : vector<98x16xf32>
    %45 = arith.maximumf %25, %44 : vector<98x16xf32>
    %c0_21 = arith.constant 0 : index
    %c0_22 = arith.constant 0 : index
    %46 = vector.load %arg4[%c0_21, %c0_22] : memref<98x16xf32, #tpu.memory_space<vmem>>, vector<98x16xf32>
    tpu.vector_store %arg4[%c0_21, %c0_22], %45 {strides = array<i32>} : memref<98x16xf32, #tpu.memory_space<vmem>>, vector<98x16xf32>,
    return
  }
  func.func @transform_0(%arg0: i32) -> (i32, i32, i32) {
    %c0_i32 = arith.constant 0 : i32
    %c0_i32_0 = arith.constant 0 : i32
    %c0_i32_1 = arith.constant 0 : i32
    return %c0_i32, %arg0, %c0_i32_0 : i32, i32, i32
  }
  func.func @transform_1(%arg0: i32) -> (i32, i32) {
    %c0_i32 = arith.constant 0 : i32
    %c0_i32_0 = arith.constant 0 : i32
    %c0_i32_1 = arith.constant 0 : i32
    return %c0_i32, %c0_i32_0 : i32, i32
  }
  func.func @transform_2(%arg0: i32) -> (i32, i32) {
    %c0_i32 = arith.constant 0 : i32
    %c0_i32_0 = arith.constant 0 : i32
    %c0_i32_1 = arith.constant 0 : i32
    return %c0_i32, %c0_i32_0 : i32, i32
  }
  func.func @transform_3(%arg0: i32) -> (i32, i32) {
    %c0_i32 = arith.constant 0 : i32
    %c0_i32_0 = arith.constant 0 : i32
    return %arg0, %c0_i32 : i32, i32
  }
}

module attributes {stable_mosaic.version = 11 : i64} {
  func.func @_fc_head_kernel(%arg0: i32, %arg1: memref<2x784xf32, #tpu.memory_space<vmem>>, %arg2: memref<784x128xf32, #tpu.memory_space<vmem>>, %arg3: memref<2x128xf32, #tpu.memory_space<vmem>>, %arg4: memref<128x128xf32, #tpu.memory_space<vmem>>, %arg5: memref<1x128xf32, #tpu.memory_space<vmem>>, %arg6: memref<2x128xf32, #tpu.memory_space<vmem>>) attributes {dimension_semantics = [#tpu.dimension_semantics<arbitrary>], iteration_bounds = array<i64: 1>, scalar_prefetch = 0 : i64, scratch_operands = 0 : i64, tpu.core_type = #tpu.core_type<tc>, window_params = [{pipeline_mode = #tpu.pipeline_mode<synchronous>, transform_indices = @transform_0, window_bounds = array<i64: 2, 784>}, {pipeline_mode = #tpu.pipeline_mode<synchronous>, transform_indices = @transform_1, window_bounds = array<i64: 784, 128>}, {pipeline_mode = #tpu.pipeline_mode<synchronous>, transform_indices = @transform_2, window_bounds = array<i64: 2, 128>}, {pipeline_mode = #tpu.pipeline_mode<synchronous>, transform_indices = @transform_3, window_bounds = array<i64: 128, 128>}, {pipeline_mode = #tpu.pipeline_mode<synchronous>, transform_indices = @transform_4, window_bounds = array<i64: 1, 128>}, {pipeline_mode = #tpu.pipeline_mode<synchronous>, transform_indices = @transform_5, window_bounds = array<i64: 2, 128>}]} {
    %c0 = arith.constant 0 : index
    %c0_0 = arith.constant 0 : index
    %0 = vector.load %arg1[%c0, %c0_0] : memref<2x784xf32, #tpu.memory_space<vmem>>, vector<2x784xf32>
    %c0_1 = arith.constant 0 : index
    %c0_2 = arith.constant 0 : index
    %1 = vector.load %arg2[%c0_1, %c0_2] : memref<784x128xf32, #tpu.memory_space<vmem>>, vector<784x128xf32>
    %cst = arith.constant dense<0.000000e+00> : vector<2x128xf32>
    %2 = tpu.matmul %0, %1, %cst {dimension_numbers = #tpu.dot_dimension_numbers<[1], [0], [0], [1], [0, 0, 1, 1], [], []>} : vector<2x784xf32>, vector<784x128xf32>, vector<2x128xf32> -> vector<2x128xf32>
    %c0_3 = arith.constant 0 : index
    %c0_4 = arith.constant 0 : index
    %3 = vector.load %arg3[%c0_3, %c0_4] : memref<2x128xf32, #tpu.memory_space<vmem>>, vector<1x128xf32>
    %4 = vector.shape_cast %3 : vector<1x128xf32> to vector<128xf32>
    %5 = vector.shape_cast %4 : vector<128xf32> to vector<1x128xf32>
    %6 = vector.broadcast %5 : vector<1x128xf32> to vector<2x128xf32>
    %7 = arith.mulf %2, %6 : vector<2x128xf32>
    %c1 = arith.constant 1 : index
    %c0_5 = arith.constant 0 : index
    %8 = vector.load %arg3[%c1, %c0_5] : memref<2x128xf32, #tpu.memory_space<vmem>>, vector<1x128xf32>
    %9 = vector.shape_cast %8 : vector<1x128xf32> to vector<128xf32>
    %10 = vector.shape_cast %9 : vector<128xf32> to vector<1x128xf32>
    %11 = vector.broadcast %10 : vector<1x128xf32> to vector<2x128xf32>
    %12 = arith.addf %7, %11 : vector<2x128xf32>
    %cst_6 = arith.constant 0.000000e+00 : f32
    %13 = vector.broadcast %cst_6 : f32 to vector<2x128xf32>
    %14 = arith.maximumf %12, %13 : vector<2x128xf32>
    %c0_7 = arith.constant 0 : index
    %c0_8 = arith.constant 0 : index
    %15 = vector.load %arg4[%c0_7, %c0_8] : memref<128x128xf32, #tpu.memory_space<vmem>>, vector<128x128xf32>
    %cst_9 = arith.constant dense<0.000000e+00> : vector<2x128xf32>
    %16 = tpu.matmul %14, %15, %cst_9 {dimension_numbers = #tpu.dot_dimension_numbers<[1], [0], [0], [1], [0, 0, 1, 1], [], []>} : vector<2x128xf32>, vector<128x128xf32>, vector<2x128xf32> -> vector<2x128xf32>
    %c0_10 = arith.constant 0 : index
    %c0_11 = arith.constant 0 : index
    %17 = vector.load %arg5[%c0_10, %c0_11] : memref<1x128xf32, #tpu.memory_space<vmem>>, vector<1x128xf32>
    %18 = vector.shape_cast %17 : vector<1x128xf32> to vector<128xf32>
    %19 = vector.shape_cast %18 : vector<128xf32> to vector<1x128xf32>
    %20 = vector.broadcast %19 : vector<1x128xf32> to vector<2x128xf32>
    %21 = arith.addf %16, %20 : vector<2x128xf32>
    %c0_12 = arith.constant 0 : index
    %c0_13 = arith.constant 0 : index
    %22 = vector.load %arg6[%c0_12, %c0_13] : memref<2x128xf32, #tpu.memory_space<vmem>>, vector<2x128xf32>
    tpu.vector_store %arg6[%c0_12, %c0_13], %21 {strides = array<i32>} : memref<2x128xf32, #tpu.memory_space<vmem>>, vector<2x128xf32>,
    return
  }
  func.func @transform_0(%arg0: i32) -> (i32, i32) {
    %c0_i32 = arith.constant 0 : i32
    %c0_i32_0 = arith.constant 0 : i32
    %c0_i32_1 = arith.constant 0 : i32
    return %c0_i32, %c0_i32_0 : i32, i32
  }
  func.func @transform_1(%arg0: i32) -> (i32, i32) {
    %c0_i32 = arith.constant 0 : i32
    %c0_i32_0 = arith.constant 0 : i32
    %c0_i32_1 = arith.constant 0 : i32
    return %c0_i32, %c0_i32_0 : i32, i32
  }
  func.func @transform_2(%arg0: i32) -> (i32, i32) {
    %c0_i32 = arith.constant 0 : i32
    %c0_i32_0 = arith.constant 0 : i32
    %c0_i32_1 = arith.constant 0 : i32
    return %c0_i32, %c0_i32_0 : i32, i32
  }
  func.func @transform_3(%arg0: i32) -> (i32, i32) {
    %c0_i32 = arith.constant 0 : i32
    %c0_i32_0 = arith.constant 0 : i32
    %c0_i32_1 = arith.constant 0 : i32
    return %c0_i32, %c0_i32_0 : i32, i32
  }
  func.func @transform_4(%arg0: i32) -> (i32, i32) {
    %c0_i32 = arith.constant 0 : i32
    %c0_i32_0 = arith.constant 0 : i32
    %c0_i32_1 = arith.constant 0 : i32
    return %c0_i32, %c0_i32_0 : i32, i32
  }
  func.func @transform_5(%arg0: i32) -> (i32, i32) {
    %c0_i32 = arith.constant 0 : i32
    %c0_i32_0 = arith.constant 0 : i32
    %c0_i32_1 = arith.constant 0 : i32
    return %c0_i32, %c0_i32_0 : i32, i32
  }
}

</mosaic_0001>

<llo_original>
// kernel: mycnn_forward.5
$region0: #{mycnn_forward.5}
  #allocation0 [shape = 'u32[]', space=smem, size = 0x4, offset = 0x4, fixed_abs, tag = 'smem constant byte address 0x4 - core index']
  #allocation1 [shape = 'u32[72,128]{1,0:T(1,128)}', space=vmem, size = 0x9000, scoped, tag = 'internal scratch']
  %s0 = inlined_call_operand.vmem [shape: f32[1568,32], index: 0, kind: input, shape index: {}]
  %s1 = inlined_call_operand.vmem [shape: f32[32,32], index: 1, kind: input, shape index: {}]
  %s2 = inlined_call_operand.vmem [shape: f32[2,32], index: 2, kind: input, shape index: {}]
  %s3 = inlined_call_operand.vmem [shape: f32[1568,32], index: 3, kind: output, shape index: {}]
  %s4 = sld [smem:[#allocation0]]
  $region45: #{mycnn_forward.5} parent=0
    _
  %s6 = ssub.s32 1, %s4
  %s7 = scalar_select 0, %s6, %s4
  loop: start=0, step=1, limit=4
  $region2: #{mycnn_forward.5} parent=0 // loop_pre_header
    _
  $region3: #{mycnn_forward.5} parent=0 // loop_header
    %s9 = sphi 0, %s13
    %p10 = scmp.ge.s32.totalorder %s9, 4
    %s19 = sphi 0, %s21
    %s22 = sphi 0, %s19
    %s23 = sphi 0, %s22
    %s39 = sphi 0, %s23
    %s43 = sphi 0, %s43
    %s45 = sphi 0, %s43
    %s46 = sphi 0, %s45
    %s60 = sphi 0, %s46
    %s64 = sphi 0, %s64
    %s66 = sphi 0, %s64
    %s67 = sphi 0, %s66
    %s81 = sphi 0, %s67
    %s87 = sphi 0, %s89
    %s90 = sphi 0, %s87
    %s91 = sphi 0, %s90
    %s107 = sphi 0, %s91
  $region4: #{mycnn_forward.5} parent=0 // loop_header_branch
    %12 = sbr.rel (%p10) target = $region8
  $region5: #{mycnn_forward.5} parent=0 // loop_body
    %s14 = ssub.s32 %s9, 1
    %s15 = ssub.s32 %s9, 2
    %s16 = sadd.s32 %s9, 1
    %s17 = ssub.s32 %s9, %s16
    %p18 = scmp.eq.s32.totalorder %s17, 0
    %s20 = sadd.s32 %s19, 1
    %s21 = scalar_select %p18, %s19, %s20
    %p24 = pneg %p18
    %p25 = scmp.eq.s32.totalorder %s9, 1
    %p26 = por %p24, %p25
    %p27 = scmp.ne.s32.totalorder %s19, %s22
    %p28 = scmp.eq.s32.totalorder %s9, 0
    %p29 = por %p27, %p28
    %p30 = scmp.ne.s32.totalorder %s19, %s22
    %p31 = scmp.eq.s32.totalorder %s14, 1
    %p32 = por %p30, %p31
    %p33 = scmp.ne.s32.totalorder %s22, %s23
    %p34 = scmp.eq.s32.totalorder %s14, 0
    %p35 = por %p33, %p34
    %p36 = scmp.ne.s32.totalorder %s22, %s23
    %p37 = scmp.eq.s32.totalorder %s15, 1
    %p38 = por %p36, %p37
    %p40 = scmp.ne.s32.totalorder %s23, %s39
    %p41 = scmp.eq.s32.totalorder %s15, 0
    %p42 = por %p40, %p41
    %s44 = sadd.s32 %s43, 1
    %p47 = scmp.eq.s32.totalorder %s9, 1
    %p48 = scmp.ne.s32.totalorder %s43, %s45
    %p49 = scmp.eq.s32.totalorder %s9, 0
    %p50 = por %p48, %p49
    %p51 = scmp.ne.s32.totalorder %s43, %s45
    %p52 = scmp.eq.s32.totalorder %s14, 1
    %p53 = por %p51, %p52
    %p54 = scmp.ne.s32.totalorder %s45, %s46
    %p55 = scmp.eq.s32.totalorder %s14, 0
    %p56 = por %p54, %p55
    %p57 = scmp.ne.s32.totalorder %s45, %s46
    %p58 = scmp.eq.s32.totalorder %s15, 1
    %p59 = por %p57, %p58
    %p61 = scmp.ne.s32.totalorder %s46, %s60
    %p62 = scmp.eq.s32.totalorder %s15, 0
    %p63 = por %p61, %p62
    %s65 = sadd.s32 %s64, 1
    %p68 = scmp.eq.s32.totalorder %s9, 1
    %p69 = scmp.ne.s32.totalorder %s64, %s66
    %p70 = scmp.eq.s32.totalorder %s9, 0
    %p71 = por %p69, %p70
    %p72 = scmp.ne.s32.totalorder %s64, %s66
    %p73 = scmp.eq.s32.totalorder %s14, 1
    %p74 = por %p72, %p73
    %p75 = scmp.ne.s32.totalorder %s66, %s67
    %p76 = scmp.eq.s32.totalorder %s14, 0
    %p77 = por %p75, %p76
    %p78 = scmp.ne.s32.totalorder %s66, %s67
    %p79 = scmp.eq.s32.totalorder %s15, 1
    %p80 = por %p78, %p79
    %p82 = scmp.ne.s32.totalorder %s67, %s81
    %p83 = scmp.eq.s32.totalorder %s15, 0
    %p84 = por %p82, %p83
    %s85 = ssub.s32 %s9, %s16
    %p86 = scmp.eq.s32.totalorder %s85, 0
    %s88 = sadd.s32 %s87, 1
    %s89 = scalar_select %p86, %s87, %s88
    %p92 = pneg %p86
    %p93 = scmp.eq.s32.totalorder %s9, 1
    %p94 = por %p92, %p93
    %p95 = scmp.ne.s32.totalorder %s87, %s90
    %p96 = scmp.eq.s32.totalorder %s9, 0
    %p97 = por %p95, %p96
    %p98 = scmp.ne.s32.totalorder %s87, %s90
    %p99 = scmp.eq.s32.totalorder %s14, 1
    %p100 = por %p98, %p99
    %p101 = scmp.ne.s32.totalorder %s90, %s91
    %p102 = scmp.eq.s32.totalorder %s14, 0
    %p103 = por %p101, %p102
    %p104 = scmp.ne.s32.totalorder %s90, %s91
    %p105 = scmp.eq.s32.totalorder %s15, 1
    %p106 = por %p104, %p105
    %p108 = scmp.ne.s32.totalorder %s91, %s107
    %p109 = scmp.eq.s32.totalorder %s15, 0
    %p110 = por %p108, %p109
    %p111 = scmp.le.s32.totalorder 1, %s9
    %p112 = scmp.lt.s32.totalorder %s9, 3
    %p113 = pnand %p111, %p112
    %p114 = pneg %p113
    // Predicated region
    $region9: #{mycnn_forward.5} parent=5 // pred_check
      _
    $region10: #{mycnn_forward.5} parent=5 // pred_check_branch
      %116 = sbr.rel (%p113) target = $region12
    $region11: #{mycnn_forward.5} parent=5 // pred_region
      %s117 = ssub.s32 %s9, 1
      // Predicated region
      $region13: #{mycnn_forward.5} parent=11 // pred_check
        %p118 = pneg %p56
      $region14: #{mycnn_forward.5} parent=11 // pred_check_branch
        %120 = sbr.rel (%p118) target = $region16
      $region15: #{mycnn_forward.5} parent=11 // pred_region
        _
      $region16: #{mycnn_forward.5} parent=11 // pred_fallthru
        _
      // Predicated region
      $region17: #{mycnn_forward.5} parent=11 // pred_check
        %p121 = pneg %p77
      $region18: #{mycnn_forward.5} parent=11 // pred_check_branch
        %123 = sbr.rel (%p121) target = $region20
      $region19: #{mycnn_forward.5} parent=11 // pred_region
        _
      $region20: #{mycnn_forward.5} parent=11 // pred_fallthru
        _
    $region12: #{mycnn_forward.5} parent=5 // pred_fallthru
      _
    %p124 = scmp.lt.s32.totalorder %s9, 2
    // Predicated region
    $region21: #{mycnn_forward.5} parent=5 // pred_check
      %p125 = pneg %p124
    $region22: #{mycnn_forward.5} parent=5 // pred_check_branch
      %127 = sbr.rel (%p125) target = $region24
    $region23: #{mycnn_forward.5} parent=5 // pred_region
      // Predicated region
      $region25: #{mycnn_forward.5} parent=23 // pred_check
        %p128 = pneg %p29
      $region26: #{mycnn_forward.5} parent=23 // pred_check_branch
        %130 = sbr.rel (%p128) target = $region28
      $region27: #{mycnn_forward.5} parent=23 // pred_region
        %s131 = smul.u32 98, %s9
        %p132 = scmp.lt.s32.totalorder %s131, 195
        %s133 = scalar_select %p132, %s131, 195
        %s134 = smul.addr %s133, 8
        %s135 = scalar_lea.vmem %s0, %s134
        %s136 = smul.u32 98, %s9
      $region28: #{mycnn_forward.5} parent=23 // pred_fallthru
        _
    $region24: #{mycnn_forward.5} parent=5 // pred_fallthru
      _
    %p137 = scmp.le.s32.totalorder 1, %s9
    %p138 = scmp.lt.s32.totalorder %s9, 3
    %p139 = pnand %p137, %p138
    %p140 = pneg %p139
    // Predicated region
    $region29: #{mycnn_forward.5} parent=5 // pred_check
      _
    $region30: #{mycnn_forward.5} parent=5 // pred_check_branch
      %142 = sbr.rel (%p139) target = $region32
    $region31: #{mycnn_forward.5} parent=5 // pred_region
      %s143 = ssub.s32 %s9, 1
      %s144 = smul.u32 98, %s14
      %p145 = scmp.lt.s32.totalorder %s144, 195
      %s146 = scalar_select %p145, %s144, 195
      %s147 = smul.addr %s146, 8
      %s148 = scalar_lea.vmem %s0, %s147
      %p149 = pneg %p35
      %p150 = pneg %p32
      %p151 = pneg %p56
      %p152 = pneg %p53
      %p153 = pneg %p77
      %p154 = pneg %p74
      %p155 = pneg %p103
      %p156 = pneg %p100
      %s157 = smul.u32 98, %s14
      %p158 = scmp.lt.s32.totalorder %s157, 195
      %s159 = scalar_select %p158, %s157, 195
      %s160 = smul.addr %s159, 8
      %s161 = scalar_lea.vmem %s3, %s160
      %s162 = smul.u32 98, %s14
      %p163 = scmp.lt.s32.totalorder %s162, 195
      %s164 = scalar_select %p163, %s162, 195
      %s165 = smul.addr %s164, 8
      %s166 = scalar_lea.vmem %s0, %s165
      %s167 = smul.u32 98, %s14
      %s168 = smul.u32 98, %s14
      %p169 = scmp.lt.s32.totalorder %s168, 195
      %s170 = scalar_select %p169, %s168, 195
      %s171 = smul.addr %s170, 8
      %s172 = scalar_lea.vmem %s3, %s171
      %s173 = smul.u32 98, %s14
      %v174 = vld [vmem:[%s166] sm:$0xff]
      %v175 = vld [vmem:[%s166 + $0x8] sm:$0xff]
      %v176 = vld [vmem:[%s166 + $0x10] sm:$0xff]
      %v177 = vld [vmem:[%s166 + $0x18] sm:$0xff]
      %v178 = vld [vmem:[%s166 + $0x20] sm:$0xff]
      %v179 = vld [vmem:[%s166 + $0x28] sm:$0xff]
      %v180 = vld [vmem:[%s166 + $0x30] sm:$0xff]
      %v181 = vld [vmem:[%s166 + $0x38] sm:$0xff]
      %v182 = vld [vmem:[%s166 + $0x40] sm:$0xff]
      %v183 = vld [vmem:[%s166 + $0x48] sm:$0xff]
      %v184 = vld [vmem:[%s166 + $0x50] sm:$0xff]
      %v185 = vld [vmem:[%s166 + $0x58] sm:$0xff]
      %v186 = vld [vmem:[%s166 + $0x60] sm:$0xff]
      %v187 = vld [vmem:[%s166 + $0x68] sm:$0xff]
      %v188 = vld [vmem:[%s166 + $0x70] sm:$0xff]
      %v189 = vld [vmem:[%s166 + $0x78] sm:$0xff]
      %v190 = vld [vmem:[%s166 + $0x80] sm:$0xff]
      %v191 = vld [vmem:[%s166 + $0x88] sm:$0xff]
      %v192 = vld [vmem:[%s166 + $0x90] sm:$0xff]
      %v193 = vld [vmem:[%s166 + $0x98] sm:$0xff]
      %v194 = vld [vmem:[%s166 + $0xa0] sm:$0xff]
      %v195 = vld [vmem:[%s166 + $0xa8] sm:$0xff]
      %v196 = vld [vmem:[%s166 + $0xb0] sm:$0xff]
      %v197 = vld [vmem:[%s166 + $0xb8] sm:$0xff]
      %v198 = vld [vmem:[%s166 + $0xc0] sm:$0xff]
      %v199 = vld [vmem:[%s166 + $0xc8] sm:$0xff]
      %v200 = vld [vmem:[%s166 + $0xd0] sm:$0xff]
      %v201 = vld [vmem:[%s166 + $0xd8] sm:$0xff]
      %v202 = vld [vmem:[%s166 + $0xe0] sm:$0xff]
      %v203 = vld [vmem:[%s166 + $0xe8] sm:$0xff]
      %v204 = vld [vmem:[%s166 + $0xf0] sm:$0xff]
      %v205 = vld [vmem:[%s166 + $0xf8] sm:$0xff]
      %v206 = vld [vmem:[%s166 + $0x100] sm:$0xff]
      %v207 = vld [vmem:[%s166 + $0x108] sm:$0xff]
      %v208 = vld [vmem:[%s166 + $0x110] sm:$0xff]
      %v209 = vld [vmem:[%s166 + $0x118] sm:$0xff]
      %v210 = vld [vmem:[%s166 + $0x120] sm:$0xff]
      %v211 = vld [vmem:[%s166 + $0x128] sm:$0xff]
      %v212 = vld [vmem:[%s166 + $0x130] sm:$0xff]
      %v213 = vld [vmem:[%s166 + $0x138] sm:$0xff]
      %v214 = vld [vmem:[%s166 + $0x140] sm:$0xff]
      %v215 = vld [vmem:[%s166 + $0x148] sm:$0xff]
      %v216 = vld [vmem:[%s166 + $0x150] sm:$0xff]
      %v217 = vld [vmem:[%s166 + $0x158] sm:$0xff]
      %v218 = vld [vmem:[%s166 + $0x160] sm:$0xff]
      %v219 = vld [vmem:[%s166 + $0x168] sm:$0xff]
      %v220 = vld [vmem:[%s166 + $0x170] sm:$0xff]
      %v221 = vld [vmem:[%s166 + $0x178] sm:$0xff]
      %v222 = vld [vmem:[%s166 + $0x180] sm:$0xff]
      %v223 = vld [vmem:[%s166 + $0x188] sm:$0xff]
      %v224 = vld [vmem:[%s166 + $0x190] sm:$0xff]
      %v225 = vld [vmem:[%s166 + $0x198] sm:$0xff]
      %v226 = vld [vmem:[%s166 + $0x1a0] sm:$0xff]
      %v227 = vld [vmem:[%s166 + $0x1a8] sm:$0xff]
      %v228 = vld [vmem:[%s166 + $0x1b0] sm:$0xff]
      %v229 = vld [vmem:[%s166 + $0x1b8] sm:$0xff]
      %v230 = vld [vmem:[%s166 + $0x1c0] sm:$0xff]
      %v231 = vld [vmem:[%s166 + $0x1c8] sm:$0xff]
      %v232 = vld [vmem:[%s166 + $0x1d0] sm:$0xff]
      %v233 = vld [vmem:[%s166 + $0x1d8] sm:$0xff]
      %v234 = vld [vmem:[%s166 + $0x1e0] sm:$0xff]
      %v235 = vld [vmem:[%s166 + $0x1e8] sm:$0xff]
      %v236 = vld [vmem:[%s166 + $0x1f0] sm:$0xff]
      %v237 = vld [vmem:[%s166 + $0x1f8] sm:$0xff]
      %v238 = vld [vmem:[%s166 + $0x200] sm:$0xff]
      %v239 = vld [vmem:[%s166 + $0x208] sm:$0xff]
      %v240 = vld [vmem:[%s166 + $0x210] sm:$0xff]
      %v241 = vld [vmem:[%s166 + $0x218] sm:$0xff]
      %v242 = vld [vmem:[%s166 + $0x220] sm:$0xff]
      %v243 = vld [vmem:[%s166 + $0x228] sm:$0xff]
      %v244 = vld [vmem:[%s166 + $0x230] sm:$0xff]
      %v245 = vld [vmem:[%s166 + $0x238] sm:$0xff]
      %v246 = vld [vmem:[%s166 + $0x240] sm:$0xff]
      %v247 = vld [vmem:[%s166 + $0x248] sm:$0xff]
      %v248 = vld [vmem:[%s166 + $0x250] sm:$0xff]
      %v249 = vld [vmem:[%s166 + $0x258] sm:$0xff]
      %v250 = vld [vmem:[%s166 + $0x260] sm:$0xff]
      %v251 = vld [vmem:[%s166 + $0x268] sm:$0xff]
      %v252 = vld [vmem:[%s166 + $0x270] sm:$0xff]
      %v253 = vld [vmem:[%s166 + $0x278] sm:$0xff]
      %v254 = vld [vmem:[%s166 + $0x280] sm:$0xff]
      %v255 = vld [vmem:[%s166 + $0x288] sm:$0xff]
      %v256 = vld [vmem:[%s166 + $0x290] sm:$0xff]
      %v257 = vld [vmem:[%s166 + $0x298] sm:$0xff]
      %v258 = vld [vmem:[%s166 + $0x2a0] sm:$0xff]
      %v259 = vld [vmem:[%s166 + $0x2a8] sm:$0xff]
      %v260 = vld [vmem:[%s166 + $0x2b0] sm:$0xff]
      %v261 = vld [vmem:[%s166 + $0x2b8] sm:$0xff]
      %v262 = vld [vmem:[%s166 + $0x2c0] sm:$0xff]
      %v263 = vld [vmem:[%s166 + $0x2c8] sm:$0xff]
      %v264 = vld [vmem:[%s166 + $0x2d0] sm:$0xff]
      %v265 = vld [vmem:[%s166 + $0x2d8] sm:$0xff]
      %v266 = vld [vmem:[%s166 + $0x2e0] sm:$0xff]
      %v267 = vld [vmem:[%s166 + $0x2e8] sm:$0xff]
      %v268 = vld [vmem:[%s166 + $0x2f0] sm:$0xff]
      %v269 = vld [vmem:[%s166 + $0x2f8] sm:$0xff]
      %v270 = vld [vmem:[%s166 + $0x300] sm:$0xff]
      %v271 = vld [vmem:[%s166 + $0x308] sm:$0xff]
      %v272 = vld [vmem:[%s1] sm:$0xff]
      %v273 = vld [vmem:[%s1 + $0x8] sm:$0xff]
      %v274 = vld [vmem:[%s1 + $0x10] sm:$0xff]
      %v275 = vld [vmem:[%s1 + $0x18] sm:$0xff]
      %vm276 = vcmask 261120
      %v278 = vsel %vm276, %v174, 0
      %v281 = vsel %vm276, %v175, 0
      %v284 = vsel %vm276, %v176, 0
      %v287 = vsel %vm276, %v177, 0
      %v290 = vsel %vm276, %v178, 0
      %v293 = vsel %vm276, %v179, 0
      %v296 = vsel %vm276, %v180, 0
      %v299 = vsel %vm276, %v181, 0
      %v302 = vsel %vm276, %v182, 0
      %v305 = vsel %vm276, %v183, 0
      %v308 = vsel %vm276, %v184, 0
      %v311 = vsel %vm276, %v185, 0
      %v314 = vsel %vm276, %v186, 0
      %v317 = vsel %vm276, %v187, 0
      %v320 = vsel %vm276, %v188, 0
      %v323 = vsel %vm276, %v189, 0
      %v326 = vsel %vm276, %v190, 0
      %v329 = vsel %vm276, %v191, 0
      %v332 = vsel %vm276, %v192, 0
      %v335 = vsel %vm276, %v193, 0
      %v338 = vsel %vm276, %v194, 0
      %v341 = vsel %vm276, %v195, 0
      %v344 = vsel %vm276, %v196, 0
      %v347 = vsel %vm276, %v197, 0
      %v350 = vsel %vm276, %v198, 0
      %v353 = vsel %vm276, %v199, 0
      %v356 = vsel %vm276, %v200, 0
      %v359 = vsel %vm276, %v201, 0
      %v362 = vsel %vm276, %v202, 0
      %v365 = vsel %vm276, %v203, 0
      %v368 = vsel %vm276, %v204, 0
      %v371 = vsel %vm276, %v205, 0
      %v374 = vsel %vm276, %v206, 0
      %v377 = vsel %vm276, %v207, 0
      %v380 = vsel %vm276, %v208, 0
      %v383 = vsel %vm276, %v209, 0
      %v386 = vsel %vm276, %v210, 0
      %v389 = vsel %vm276, %v211, 0
      %v392 = vsel %vm276, %v212, 0
      %v395 = vsel %vm276, %v213, 0
      %v398 = vsel %vm276, %v214, 0
      %v401 = vsel %vm276, %v215, 0
      %v404 = vsel %vm276, %v216, 0
      %v407 = vsel %vm276, %v217, 0
      %v410 = vsel %vm276, %v218, 0
      %v413 = vsel %vm276, %v219, 0
      %v416 = vsel %vm276, %v220, 0
      %v419 = vsel %vm276, %v221, 0
      %v422 = vsel %vm276, %v222, 0
      %v425 = vsel %vm276, %v223, 0
      %v428 = vsel %vm276, %v224, 0
      %v431 = vsel %vm276, %v225, 0
      %v434 = vsel %vm276, %v226, 0
      %v437 = vsel %vm276, %v227, 0
      %v440 = vsel %vm276, %v228, 0
      %v443 = vsel %vm276, %v229, 0
      %v446 = vsel %vm276, %v230, 0
      %v449 = vsel %vm276, %v231, 0
      %v452 = vsel %vm276, %v232, 0
      %v455 = vsel %vm276, %v233, 0
      %v458 = vsel %vm276, %v234, 0
      %v461 = vsel %vm276, %v235, 0
      %v464 = vsel %vm276, %v236, 0
      %v467 = vsel %vm276, %v237, 0
      %v470 = vsel %vm276, %v238, 0
      %v473 = vsel %vm276, %v239, 0
      %v476 = vsel %vm276, %v240, 0
      %v479 = vsel %vm276, %v241, 0
      %v482 = vsel %vm276, %v242, 0
      %v485 = vsel %vm276, %v243, 0
      %v488 = vsel %vm276, %v244, 0
      %v491 = vsel %vm276, %v245, 0
      %v494 = vsel %vm276, %v246, 0
      %v497 = vsel %vm276, %v247, 0
      %v500 = vsel %vm276, %v248, 0
      %v503 = vsel %vm276, %v249, 0
      %v506 = vsel %vm276, %v250, 0
      %v509 = vsel %vm276, %v251, 0
      %v512 = vsel %vm276, %v252, 0
      %v515 = vsel %vm276, %v253, 0
      %v518 = vsel %vm276, %v254, 0
      %v521 = vsel %vm276, %v255, 0
      %v524 = vsel %vm276, %v256, 0
      %v527 = vsel %vm276, %v257, 0
      %v530 = vsel %vm276, %v258, 0
      %v533 = vsel %vm276, %v259, 0
      %v536 = vsel %vm276, %v260, 0
      %v539 = vsel %vm276, %v261, 0
      %v542 = vsel %vm276, %v262, 0
      %v545 = vsel %vm276, %v263, 0
      %v548 = vsel %vm276, %v264, 0
      %v551 = vsel %vm276, %v265, 0
      %v554 = vsel %vm276, %v266, 0
      %v557 = vsel %vm276, %v267, 0
      %v560 = vsel %vm276, %v268, 0
      %v563 = vsel %vm276, %v269, 0
      %v566 = vsel %vm276, %v270, 0
      %v569 = vsel %vm276, %v271, 0
      %571 = vmatpush.msra.mxu0 0.0
      %572 = vmatpush.msra.mxu0 0.0
      %573 = vmatpush.msra.mxu0 0.0
      %574 = vmatpush.msra.mxu0 0.0
      %575 = vmatpush.msra.mxu0 0.0
      %576 = vmatpush.msra.mxu0 0.0
      %577 = vmatpush.msra.mxu0 0.0
      %578 = vmatpush.msra.mxu0 0.0
      %579 = vmatpush.msra.mxu0 0.0
      %580 = vmatpush.msra.mxu0 0.0
      %581 = vmatpush.msra.mxu0 0.0
      %582 = vmatpush.msra.mxu0 0.0
      %583 = vmatpush.msra.mxu0 %v275
      %584 = vmatpush.msra.mxu0 %v274
      %585 = vmatpush.msra.mxu0 %v273
      %586 = vmatpush.msra.mxu0 %v272
      %587 = vmatmul.f32.gmra.mxu0 %v278
      %v588 = vpop.f32.mrf.mxu0
      %v589 = vadd.f32 0.0, %v588
      %590 = vmatmul.f32.gmra.mxu0 %v281
      %v591 = vpop.f32.mrf.mxu0
      %v592 = vadd.f32 0.0, %v591
      %593 = vmatmul.f32.gmra.mxu0 %v284
      %v594 = vpop.f32.mrf.mxu0
      %v595 = vadd.f32 0.0, %v594
      %596 = vmatmul.f32.gmra.mxu0 %v287
      %v597 = vpop.f32.mrf.mxu0
      %v598 = vadd.f32 0.0, %v597
      %599 = vmatmul.f32.gmra.mxu0 %v290
      %v600 = vpop.f32.mrf.mxu0
      %v601 = vadd.f32 0.0, %v600
      %602 = vmatmul.f32.gmra.mxu0 %v293
      %v603 = vpop.f32.mrf.mxu0
      %v604 = vadd.f32 0.0, %v603
      %605 = vmatmul.f32.gmra.mxu0 %v296
      %v606 = vpop.f32.mrf.mxu0
      %v607 = vadd.f32 0.0, %v606
      %608 = vmatmul.f32.gmra.mxu0 %v299
      %v609 = vpop.f32.mrf.mxu0
      %v610 = vadd.f32 0.0, %v609
      %611 = vmatmul.f32.gmra.mxu0 %v302
      %v612 = vpop.f32.mrf.mxu0
      %v613 = vadd.f32 0.0, %v612
      %614 = vmatmul.f32.gmra.mxu0 %v305
      %v615 = vpop.f32.mrf.mxu0
      %v616 = vadd.f32 0.0, %v615
      %617 = vmatmul.f32.gmra.mxu0 %v308
      %v618 = vpop.f32.mrf.mxu0
      %v619 = vadd.f32 0.0, %v618
      %620 = vmatmul.f32.gmra.mxu0 %v311
      %v621 = vpop.f32.mrf.mxu0
      %v622 = vadd.f32 0.0, %v621
      %623 = vmatmul.f32.gmra.mxu0 %v314
      %v624 = vpop.f32.mrf.mxu0
      %v625 = vadd.f32 0.0, %v624
      %626 = vmatmul.f32.gmra.mxu0 %v317
      %v627 = vpop.f32.mrf.mxu0
      %v628 = vadd.f32 0.0, %v627
      %629 = vmatmul.f32.gmra.mxu0 %v320
      %v630 = vpop.f32.mrf.mxu0
      %v631 = vadd.f32 0.0, %v630
      %632 = vmatmul.f32.gmra.mxu0 %v323
      %v633 = vpop.f32.mrf.mxu0
      %v634 = vadd.f32 0.0, %v633
      %635 = vmatmul.f32.gmra.mxu0 %v326
      %v636 = vpop.f32.mrf.mxu0
      %v637 = vadd.f32 0.0, %v636
      %638 = vmatmul.f32.gmra.mxu0 %v329
      %v639 = vpop.f32.mrf.mxu0
      %v640 = vadd.f32 0.0, %v639
      %641 = vmatmul.f32.gmra.mxu0 %v332
      %v642 = vpop.f32.mrf.mxu0
      %v643 = vadd.f32 0.0, %v642
      %644 = vmatmul.f32.gmra.mxu0 %v335
      %v645 = vpop.f32.mrf.mxu0
      %v646 = vadd.f32 0.0, %v645
      %647 = vmatmul.f32.gmra.mxu0 %v338
      %v648 = vpop.f32.mrf.mxu0
      %v649 = vadd.f32 0.0, %v648
      %650 = vmatmul.f32.gmra.mxu0 %v341
      %v651 = vpop.f32.mrf.mxu0
      %v652 = vadd.f32 0.0, %v651
      %653 = vmatmul.f32.gmra.mxu0 %v344
      %v654 = vpop.f32.mrf.mxu0
      %v655 = vadd.f32 0.0, %v654
      %656 = vmatmul.f32.gmra.mxu0 %v347
      %v657 = vpop.f32.mrf.mxu0
      %v658 = vadd.f32 0.0, %v657
      %659 = vmatmul.f32.gmra.mxu0 %v350
      %v660 = vpop.f32.mrf.mxu0
      %v661 = vadd.f32 0.0, %v660
      %662 = vmatmul.f32.gmra.mxu0 %v353
      %v663 = vpop.f32.mrf.mxu0
      %v664 = vadd.f32 0.0, %v663
      %665 = vmatmul.f32.gmra.mxu0 %v356
      %v666 = vpop.f32.mrf.mxu0
      %v667 = vadd.f32 0.0, %v666
      %668 = vmatmul.f32.gmra.mxu0 %v359
      %v669 = vpop.f32.mrf.mxu0
      %v670 = vadd.f32 0.0, %v669
      %671 = vmatmul.f32.gmra.mxu0 %v362
      %v672 = vpop.f32.mrf.mxu0
      %v673 = vadd.f32 0.0, %v672
      %674 = vmatmul.f32.gmra.mxu0 %v365
      %v675 = vpop.f32.mrf.mxu0
      %v676 = vadd.f32 0.0, %v675
      %677 = vmatmul.f32.gmra.mxu0 %v368
      %v678 = vpop.f32.mrf.mxu0
      %v679 = vadd.f32 0.0, %v678
      %680 = vmatmul.f32.gmra.mxu0 %v371
      %v681 = vpop.f32.mrf.mxu0
      %v682 = vadd.f32 0.0, %v681
      %683 = vmatmul.f32.gmra.mxu0 %v374
      %v684 = vpop.f32.mrf.mxu0
      %v685 = vadd.f32 0.0, %v684
      %686 = vmatmul.f32.gmra.mxu0 %v377
      %v687 = vpop.f32.mrf.mxu0
      %v688 = vadd.f32 0.0, %v687
      %689 = vmatmul.f32.gmra.mxu0 %v380
      %v690 = vpop.f32.mrf.mxu0
      %v691 = vadd.f32 0.0, %v690
      %692 = vmatmul.f32.gmra.mxu0 %v383
      %v693 = vpop.f32.mrf.mxu0
      %v694 = vadd.f32 0.0, %v693
      %695 = vmatmul.f32.gmra.mxu0 %v386
      %v696 = vpop.f32.mrf.mxu0
      %v697 = vadd.f32 0.0, %v696
      %698 = vmatmul.f32.gmra.mxu0 %v389
      %v699 = vpop.f32.mrf.mxu0
      %v700 = vadd.f32 0.0, %v699
      %701 = vmatmul.f32.gmra.mxu0 %v392
      %v702 = vpop.f32.mrf.mxu0
      %v703 = vadd.f32 0.0, %v702
      %704 = vmatmul.f32.gmra.mxu0 %v395
      %v705 = vpop.f32.mrf.mxu0
      %v706 = vadd.f32 0.0, %v705
      %707 = vmatmul.f32.gmra.mxu0 %v398
      %v708 = vpop.f32.mrf.mxu0
      %v709 = vadd.f32 0.0, %v708
      %710 = vmatmul.f32.gmra.mxu0 %v401
      %v711 = vpop.f32.mrf.mxu0
      %v712 = vadd.f32 0.0, %v711
      %713 = vmatmul.f32.gmra.mxu0 %v404
      %v714 = vpop.f32.mrf.mxu0
      %v715 = vadd.f32 0.0, %v714
      %716 = vmatmul.f32.gmra.mxu0 %v407
      %v717 = vpop.f32.mrf.mxu0
      %v718 = vadd.f32 0.0, %v717
      %719 = vmatmul.f32.gmra.mxu0 %v410
      %v720 = vpop.f32.mrf.mxu0
      %v721 = vadd.f32 0.0, %v720
      %722 = vmatmul.f32.gmra.mxu0 %v413
      %v723 = vpop.f32.mrf.mxu0
      %v724 = vadd.f32 0.0, %v723
      %725 = vmatmul.f32.gmra.mxu0 %v416
      %v726 = vpop.f32.mrf.mxu0
      %v727 = vadd.f32 0.0, %v726
      %728 = vmatmul.f32.gmra.mxu0 %v419
      %v729 = vpop.f32.mrf.mxu0
      %v730 = vadd.f32 0.0, %v729
      %731 = vmatmul.f32.gmra.mxu0 %v422
      %v732 = vpop.f32.mrf.mxu0
      %v733 = vadd.f32 0.0, %v732
      %734 = vmatmul.f32.gmra.mxu0 %v425
      %v735 = vpop.f32.mrf.mxu0
      %v736 = vadd.f32 0.0, %v735
      %737 = vmatmul.f32.gmra.mxu0 %v428
      %v738 = vpop.f32.mrf.mxu0
      %v739 = vadd.f32 0.0, %v738
      %740 = vmatmul.f32.gmra.mxu0 %v431
      %v741 = vpop.f32.mrf.mxu0
      %v742 = vadd.f32 0.0, %v741
      %743 = vmatmul.f32.gmra.mxu0 %v434
      %v744 = vpop.f32.mrf.mxu0
      %v745 = vadd.f32 0.0, %v744
      %746 = vmatmul.f32.gmra.mxu0 %v437
      %v747 = vpop.f32.mrf.mxu0
      %v748 = vadd.f32 0.0, %v747
      %749 = vmatmul.f32.gmra.mxu0 %v440
      %v750 = vpop.f32.mrf.mxu0
      %v751 = vadd.f32 0.0, %v750
      %752 = vmatmul.f32.gmra.mxu0 %v443
      %v753 = vpop.f32.mrf.mxu0
      %v754 = vadd.f32 0.0, %v753
      %755 = vmatmul.f32.gmra.mxu0 %v446
      %v756 = vpop.f32.mrf.mxu0
      %v757 = vadd.f32 0.0, %v756
      %758 = vmatmul.f32.gmra.mxu0 %v449
      %v759 = vpop.f32.mrf.mxu0
      %v760 = vadd.f32 0.0, %v759
      %761 = vmatmul.f32.gmra.mxu0 %v452
      %v762 = vpop.f32.mrf.mxu0
      %v763 = vadd.f32 0.0, %v762
      %764 = vmatmul.f32.gmra.mxu0 %v455
      %v765 = vpop.f32.mrf.mxu0
      %v766 = vadd.f32 0.0, %v765
      %767 = vmatmul.f32.gmra.mxu0 %v458
      %v768 = vpop.f32.mrf.mxu0
      %v769 = vadd.f32 0.0, %v768
      %770 = vmatmul.f32.gmra.mxu0 %v461
      %v771 = vpop.f32.mrf.mxu0
      %v772 = vadd.f32 0.0, %v771
      %773 = vmatmul.f32.gmra.mxu0 %v464
      %v774 = vpop.f32.mrf.mxu0
      %v775 = vadd.f32 0.0, %v774
      %776 = vmatmul.f32.gmra.mxu0 %v467
      %v777 = vpop.f32.mrf.mxu0
      %v778 = vadd.f32 0.0, %v777
      %779 = vmatmul.f32.gmra.mxu0 %v470
      %v780 = vpop.f32.mrf.mxu0
      %v781 = vadd.f32 0.0, %v780
      %782 = vmatmul.f32.gmra.mxu0 %v473
      %v783 = vpop.f32.mrf.mxu0
      %v784 = vadd.f32 0.0, %v783
      %785 = vmatmul.f32.gmra.mxu0 %v476
      %v786 = vpop.f32.mrf.mxu0
      %v787 = vadd.f32 0.0, %v786
      %788 = vmatmul.f32.gmra.mxu0 %v479
      %v789 = vpop.f32.mrf.mxu0
      %v790 = vadd.f32 0.0, %v789
      %791 = vmatmul.f32.gmra.mxu0 %v482
      %v792 = vpop.f32.mrf.mxu0
      %v793 = vadd.f32 0.0, %v792
      %794 = vmatmul.f32.gmra.mxu0 %v485
      %v795 = vpop.f32.mrf.mxu0
      %v796 = vadd.f32 0.0, %v795
      %797 = vmatmul.f32.gmra.mxu0 %v488
      %v798 = vpop.f32.mrf.mxu0
      %v799 = vadd.f32 0.0, %v798
      %800 = vmatmul.f32.gmra.mxu0 %v491
      %v801 = vpop.f32.mrf.mxu0
      %v802 = vadd.f32 0.0, %v801
      %803 = vmatmul.f32.gmra.mxu0 %v494
      %v804 = vpop.f32.mrf.mxu0
      %v805 = vadd.f32 0.0, %v804
      %806 = vmatmul.f32.gmra.mxu0 %v497
      %v807 = vpop.f32.mrf.mxu0
      %v808 = vadd.f32 0.0, %v807
      %809 = vmatmul.f32.gmra.mxu0 %v500
      %v810 = vpop.f32.mrf.mxu0
      %v811 = vadd.f32 0.0, %v810
      %812 = vmatmul.f32.gmra.mxu0 %v503
      %v813 = vpop.f32.mrf.mxu0
      %v814 = vadd.f32 0.0, %v813
      %815 = vmatmul.f32.gmra.mxu0 %v506
      %v816 = vpop.f32.mrf.mxu0
      %v817 = vadd.f32 0.0, %v816
      %818 = vmatmul.f32.gmra.mxu0 %v509
      %v819 = vpop.f32.mrf.mxu0
      %v820 = vadd.f32 0.0, %v819
      %821 = vmatmul.f32.gmra.mxu0 %v512
      %v822 = vpop.f32.mrf.mxu0
      %v823 = vadd.f32 0.0, %v822
      %824 = vmatmul.f32.gmra.mxu0 %v515
      %v825 = vpop.f32.mrf.mxu0
      %v826 = vadd.f32 0.0, %v825
      %827 = vmatmul.f32.gmra.mxu0 %v518
      %v828 = vpop.f32.mrf.mxu0
      %v829 = vadd.f32 0.0, %v828
      %830 = vmatmul.f32.gmra.mxu0 %v521
      %v831 = vpop.f32.mrf.mxu0
      %v832 = vadd.f32 0.0, %v831
      %833 = vmatmul.f32.gmra.mxu0 %v524
      %v834 = vpop.f32.mrf.mxu0
      %v835 = vadd.f32 0.0, %v834
      %836 = vmatmul.f32.gmra.mxu0 %v527
      %v837 = vpop.f32.mrf.mxu0
      %v838 = vadd.f32 0.0, %v837
      %839 = vmatmul.f32.gmra.mxu0 %v530
      %v840 = vpop.f32.mrf.mxu0
      %v841 = vadd.f32 0.0, %v840
      %842 = vmatmul.f32.gmra.mxu0 %v533
      %v843 = vpop.f32.mrf.mxu0
      %v844 = vadd.f32 0.0, %v843
      %845 = vmatmul.f32.gmra.mxu0 %v536
      %v846 = vpop.f32.mrf.mxu0
      %v847 = vadd.f32 0.0, %v846
      %848 = vmatmul.f32.gmra.mxu0 %v539
      %v849 = vpop.f32.mrf.mxu0
      %v850 = vadd.f32 0.0, %v849
      %851 = vmatmul.f32.gmra.mxu0 %v542
      %v852 = vpop.f32.mrf.mxu0
      %v853 = vadd.f32 0.0, %v852
      %854 = vmatmul.f32.gmra.mxu0 %v545
      %v855 = vpop.f32.mrf.mxu0
      %v856 = vadd.f32 0.0, %v855
      %857 = vmatmul.f32.gmra.mxu0 %v548
      %v858 = vpop.f32.mrf.mxu0
      %v859 = vadd.f32 0.0, %v858
      %860 = vmatmul.f32.gmra.mxu0 %v551
      %v861 = vpop.f32.mrf.mxu0
      %v862 = vadd.f32 0.0, %v861
      %863 = vmatmul.f32.gmra.mxu0 %v554
      %v864 = vpop.f32.mrf.mxu0
      %v865 = vadd.f32 0.0, %v864
      %866 = vmatmul.f32.gmra.mxu0 %v557
      %v867 = vpop.f32.mrf.mxu0
      %v868 = vadd.f32 0.0, %v867
      %869 = vmatmul.f32.gmra.mxu0 %v560
      %v870 = vpop.f32.mrf.mxu0
      %v871 = vadd.f32 0.0, %v870
      %872 = vmatmul.f32.gmra.mxu0 %v563
      %v873 = vpop.f32.mrf.mxu0
      %v874 = vadd.f32 0.0, %v873
      %875 = vmatmul.f32.gmra.mxu0 %v566
      %v876 = vpop.f32.mrf.mxu0
      %v877 = vadd.f32 0.0, %v876
      %878 = vmatmul.f32.gmra.mxu0 %v569
      %v879 = vpop.f32.mrf.mxu0
      %v880 = vadd.f32 0.0, %v879
      %881 = vdwg.mxu0
      %v882 = vld [vmem:[%s2] sm:$0x1]
      %v883 = vperm.slane %v882, 0
      %v884 = vmul.f32 %v589, %v883
      %v885 = vmul.f32 %v592, %v883
      %v886 = vmul.f32 %v595, %v883
      %v887 = vmul.f32 %v598, %v883
      %v888 = vmul.f32 %v601, %v883
      %v889 = vmul.f32 %v604, %v883
      %v890 = vmul.f32 %v607, %v883
      %v891 = vmul.f32 %v610, %v883
      %v892 = vmul.f32 %v613, %v883
      %v893 = vmul.f32 %v616, %v883
      %v894 = vmul.f32 %v619, %v883
      %v895 = vmul.f32 %v622, %v883
      %v896 = vmul.f32 %v625, %v883
      %v897 = vmul.f32 %v628, %v883
      %v898 = vmul.f32 %v631, %v883
      %v899 = vmul.f32 %v634, %v883
      %v900 = vmul.f32 %v637, %v883
      %v901 = vmul.f32 %v640, %v883
      %v902 = vmul.f32 %v643, %v883
      %v903 = vmul.f32 %v646, %v883
      %v904 = vmul.f32 %v649, %v883
      %v905 = vmul.f32 %v652, %v883
      %v906 = vmul.f32 %v655, %v883
      %v907 = vmul.f32 %v658, %v883
      %v908 = vmul.f32 %v661, %v883
      %v909 = vmul.f32 %v664, %v883
      %v910 = vmul.f32 %v667, %v883
      %v911 = vmul.f32 %v670, %v883
      %v912 = vmul.f32 %v673, %v883
      %v913 = vmul.f32 %v676, %v883
      %v914 = vmul.f32 %v679, %v883
      %v915 = vmul.f32 %v682, %v883
      %v916 = vmul.f32 %v685, %v883
      %v917 = vmul.f32 %v688, %v883
      %v918 = vmul.f32 %v691, %v883
      %v919 = vmul.f32 %v694, %v883
      %v920 = vmul.f32 %v697, %v883
      %v921 = vmul.f32 %v700, %v883
      %v922 = vmul.f32 %v703, %v883
      %v923 = vmul.f32 %v706, %v883
      %v924 = vmul.f32 %v709, %v883
      %v925 = vmul.f32 %v712, %v883
      %v926 = vmul.f32 %v715, %v883
      %v927 = vmul.f32 %v718, %v883
      %v928 = vmul.f32 %v721, %v883
      %v929 = vmul.f32 %v724, %v883
      %v930 = vmul.f32 %v727, %v883
      %v931 = vmul.f32 %v730, %v883
      %v932 = vmul.f32 %v733, %v883
      %v933 = vmul.f32 %v736, %v883
      %v934 = vmul.f32 %v739, %v883
      %v935 = vmul.f32 %v742, %v883
      %v936 = vmul.f32 %v745, %v883
      %v937 = vmul.f32 %v748, %v883
      %v938 = vmul.f32 %v751, %v883
      %v939 = vmul.f32 %v754, %v883
      %v940 = vmul.f32 %v757, %v883
      %v941 = vmul.f32 %v760, %v883
      %v942 = vmul.f32 %v763, %v883
      %v943 = vmul.f32 %v766, %v883
      %v944 = vmul.f32 %v769, %v883
      %v945 = vmul.f32 %v772, %v883
      %v946 = vmul.f32 %v775, %v883
      %v947 = vmul.f32 %v778, %v883
      %v948 = vmul.f32 %v781, %v883
      %v949 = vmul.f32 %v784, %v883
      %v950 = vmul.f32 %v787, %v883
      %v951 = vmul.f32 %v790, %v883
      %v952 = vmul.f32 %v793, %v883
      %v953 = vmul.f32 %v796, %v883
      %v954 = vmul.f32 %v799, %v883
      %v955 = vmul.f32 %v802, %v883
      %v956 = vmul.f32 %v805, %v883
      %v957 = vmul.f32 %v808, %v883
      %v958 = vmul.f32 %v811, %v883
      %v959 = vmul.f32 %v814, %v883
      %v960 = vmul.f32 %v817, %v883
      %v961 = vmul.f32 %v820, %v883
      %v962 = vmul.f32 %v823, %v883
      %v963 = vmul.f32 %v826, %v883
      %v964 = vmul.f32 %v829, %v883
      %v965 = vmul.f32 %v832, %v883
      %v966 = vmul.f32 %v835, %v883
      %v967 = vmul.f32 %v838, %v883
      %v968 = vmul.f32 %v841, %v883
      %v969 = vmul.f32 %v844, %v883
      %v970 = vmul.f32 %v847, %v883
      %v971 = vmul.f32 %v850, %v883
      %v972 = vmul.f32 %v853, %v883
      %v973 = vmul.f32 %v856, %v883
      %v974 = vmul.f32 %v859, %v883
      %v975 = vmul.f32 %v862, %v883
      %v976 = vmul.f32 %v865, %v883
      %v977 = vmul.f32 %v868, %v883
      %v978 = vmul.f32 %v871, %v883
      %v979 = vmul.f32 %v874, %v883
      %v980 = vmul.f32 %v877, %v883
      %v981 = vmul.f32 %v880, %v883
      %v982 = vld [vmem:[%s2 + $0x1] sm:$0x1]
      %v983 = vperm.slane %v982, 0
      %v984 = vadd.f32 %v884, %v983
      %v985 = vadd.f32 %v885, %v983
      %v986 = vadd.f32 %v886, %v983
      %v987 = vadd.f32 %v887, %v983
      %v988 = vadd.f32 %v888, %v983
      %v989 = vadd.f32 %v889, %v983
      %v990 = vadd.f32 %v890, %v983
      %v991 = vadd.f32 %v891, %v983
      %v992 = vadd.f32 %v892, %v983
      %v993 = vadd.f32 %v893, %v983
      %v994 = vadd.f32 %v894, %v983
      %v995 = vadd.f32 %v895, %v983
      %v996 = vadd.f32 %v896, %v983
      %v997 = vadd.f32 %v897, %v983
      %v998 = vadd.f32 %v898, %v983
      %v999 = vadd.f32 %v899, %v983
      %v1000 = vadd.f32 %v900, %v983
      %v1001 = vadd.f32 %v901, %v983
      %v1002 = vadd.f32 %v902, %v983
      %v1003 = vadd.f32 %v903, %v983
      %v1004 = vadd.f32 %v904, %v983
      %v1005 = vadd.f32 %v905, %v983
      %v1006 = vadd.f32 %v906, %v983
      %v1007 = vadd.f32 %v907, %v983
      %v1008 = vadd.f32 %v908, %v983
      %v1009 = vadd.f32 %v909, %v983
      %v1010 = vadd.f32 %v910, %v983
      %v1011 = vadd.f32 %v911, %v983
      %v1012 = vadd.f32 %v912, %v983
      %v1013 = vadd.f32 %v913, %v983
      %v1014 = vadd.f32 %v914, %v983
      %v1015 = vadd.f32 %v915, %v983
      %v1016 = vadd.f32 %v916, %v983
      %v1017 = vadd.f32 %v917, %v983
      %v1018 = vadd.f32 %v918, %v983
      %v1019 = vadd.f32 %v919, %v983
      %v1020 = vadd.f32 %v920, %v983
      %v1021 = vadd.f32 %v921, %v983
      %v1022 = vadd.f32 %v922, %v983
      %v1023 = vadd.f32 %v923, %v983
      %v1024 = vadd.f32 %v924, %v983
      %v1025 = vadd.f32 %v925, %v983
      %v1026 = vadd.f32 %v926, %v983
      %v1027 = vadd.f32 %v927, %v983
      %v1028 = vadd.f32 %v928, %v983
      %v1029 = vadd.f32 %v929, %v983
      %v1030 = vadd.f32 %v930, %v983
      %v1031 = vadd.f32 %v931, %v983
      %v1032 = vadd.f32 %v932, %v983
      %v1033 = vadd.f32 %v933, %v983
      %v1034 = vadd.f32 %v934, %v983
      %v1035 = vadd.f32 %v935, %v983
      %v1036 = vadd.f32 %v936, %v983
      %v1037 = vadd.f32 %v937, %v983
      %v1038 = vadd.f32 %v938, %v983
      %v1039 = vadd.f32 %v939, %v983
      %v1040 = vadd.f32 %v940, %v983
      %v1041 = vadd.f32 %v941, %v983
      %v1042 = vadd.f32 %v942, %v983
      %v1043 = vadd.f32 %v943, %v983
      %v1044 = vadd.f32 %v944, %v983
      %v1045 = vadd.f32 %v945, %v983
      %v1046 = vadd.f32 %v946, %v983
      %v1047 = vadd.f32 %v947, %v983
      %v1048 = vadd.f32 %v948, %v983
      %v1049 = vadd.f32 %v949, %v983
      %v1050 = vadd.f32 %v950, %v983
      %v1051 = vadd.f32 %v951, %v983
      %v1052 = vadd.f32 %v952, %v983
      %v1053 = vadd.f32 %v953, %v983
      %v1054 = vadd.f32 %v954, %v983
      %v1055 = vadd.f32 %v955, %v983
      %v1056 = vadd.f32 %v956, %v983
      %v1057 = vadd.f32 %v957, %v983
      %v1058 = vadd.f32 %v958, %v983
      %v1059 = vadd.f32 %v959, %v983
      %v1060 = vadd.f32 %v960, %v983
      %v1061 = vadd.f32 %v961, %v983
      %v1062 = vadd.f32 %v962, %v983
      %v1063 = vadd.f32 %v963, %v983
      %v1064 = vadd.f32 %v964, %v983
      %v1065 = vadd.f32 %v965, %v983
      %v1066 = vadd.f32 %v966, %v983
      %v1067 = vadd.f32 %v967, %v983
      %v1068 = vadd.f32 %v968, %v983
      %v1069 = vadd.f32 %v969, %v983
      %v1070 = vadd.f32 %v970, %v983
      %v1071 = vadd.f32 %v971, %v983
      %v1072 = vadd.f32 %v972, %v983
      %v1073 = vadd.f32 %v973, %v983
      %v1074 = vadd.f32 %v974, %v983
      %v1075 = vadd.f32 %v975, %v983
      %v1076 = vadd.f32 %v976, %v983
      %v1077 = vadd.f32 %v977, %v983
      %v1078 = vadd.f32 %v978, %v983
      %v1079 = vadd.f32 %v979, %v983
      %v1080 = vadd.f32 %v980, %v983
      %v1081 = vadd.f32 %v981, %v983
      %v1082 = vmax.f32 %v984, 0.0
      %v1083 = vmax.f32 %v985, 0.0
      %v1084 = vmax.f32 %v986, 0.0
      %v1085 = vmax.f32 %v987, 0.0
      %v1086 = vmax.f32 %v988, 0.0
      %v1087 = vmax.f32 %v989, 0.0
      %v1088 = vmax.f32 %v990, 0.0
      %v1089 = vmax.f32 %v991, 0.0
      %v1090 = vmax.f32 %v992, 0.0
      %v1091 = vmax.f32 %v993, 0.0
      %v1092 = vmax.f32 %v994, 0.0
      %v1093 = vmax.f32 %v995, 0.0
      %v1094 = vmax.f32 %v996, 0.0
      %v1095 = vmax.f32 %v997, 0.0
      %v1096 = vmax.f32 %v998, 0.0
      %v1097 = vmax.f32 %v999, 0.0
      %v1098 = vmax.f32 %v1000, 0.0
      %v1099 = vmax.f32 %v1001, 0.0
      %v1100 = vmax.f32 %v1002, 0.0
      %v1101 = vmax.f32 %v1003, 0.0
      %v1102 = vmax.f32 %v1004, 0.0
      %v1103 = vmax.f32 %v1005, 0.0
      %v1104 = vmax.f32 %v1006, 0.0
      %v1105 = vmax.f32 %v1007, 0.0
      %v1106 = vmax.f32 %v1008, 0.0
      %v1107 = vmax.f32 %v1009, 0.0
      %v1108 = vmax.f32 %v1010, 0.0
      %v1109 = vmax.f32 %v1011, 0.0
      %v1110 = vmax.f32 %v1012, 0.0
      %v1111 = vmax.f32 %v1013, 0.0
      %v1112 = vmax.f32 %v1014, 0.0
      %v1113 = vmax.f32 %v1015, 0.0
      %v1114 = vmax.f32 %v1016, 0.0
      %v1115 = vmax.f32 %v1017, 0.0
      %v1116 = vmax.f32 %v1018, 0.0
      %v1117 = vmax.f32 %v1019, 0.0
      %v1118 = vmax.f32 %v1020, 0.0
      %v1119 = vmax.f32 %v1021, 0.0
      %v1120 = vmax.f32 %v1022, 0.0
      %v1121 = vmax.f32 %v1023, 0.0
      %v1122 = vmax.f32 %v1024, 0.0
      %v1123 = vmax.f32 %v1025, 0.0
      %v1124 = vmax.f32 %v1026, 0.0
      %v1125 = vmax.f32 %v1027, 0.0
      %v1126 = vmax.f32 %v1028, 0.0
      %v1127 = vmax.f32 %v1029, 0.0
      %v1128 = vmax.f32 %v1030, 0.0
      %v1129 = vmax.f32 %v1031, 0.0
      %v1130 = vmax.f32 %v1032, 0.0
      %v1131 = vmax.f32 %v1033, 0.0
      %v1132 = vmax.f32 %v1034, 0.0
      %v1133 = vmax.f32 %v1035, 0.0
      %v1134 = vmax.f32 %v1036, 0.0
      %v1135 = vmax.f32 %v1037, 0.0
      %v1136 = vmax.f32 %v1038, 0.0
      %v1137 = vmax.f32 %v1039, 0.0
      %v1138 = vmax.f32 %v1040, 0.0
      %v1139 = vmax.f32 %v1041, 0.0
      %v1140 = vmax.f32 %v1042, 0.0
      %v1141 = vmax.f32 %v1043, 0.0
      %v1142 = vmax.f32 %v1044, 0.0
      %v1143 = vmax.f32 %v1045, 0.0
      %v1144 = vmax.f32 %v1046, 0.0
      %v1145 = vmax.f32 %v1047, 0.0
      %v1146 = vmax.f32 %v1048, 0.0
      %v1147 = vmax.f32 %v1049, 0.0
      %v1148 = vmax.f32 %v1050, 0.0
      %v1149 = vmax.f32 %v1051, 0.0
      %v1150 = vmax.f32 %v1052, 0.0
      %v1151 = vmax.f32 %v1053, 0.0
      %v1152 = vmax.f32 %v1054, 0.0
      %v1153 = vmax.f32 %v1055, 0.0
      %v1154 = vmax.f32 %v1056, 0.0
      %v1155 = vmax.f32 %v1057, 0.0
      %v1156 = vmax.f32 %v1058, 0.0
      %v1157 = vmax.f32 %v1059, 0.0
      %v1158 = vmax.f32 %v1060, 0.0
      %v1159 = vmax.f32 %v1061, 0.0
      %v1160 = vmax.f32 %v1062, 0.0
      %v1161 = vmax.f32 %v1063, 0.0
      %v1162 = vmax.f32 %v1064, 0.0
      %v1163 = vmax.f32 %v1065, 0.0
      %v1164 = vmax.f32 %v1066, 0.0
      %v1165 = vmax.f32 %v1067, 0.0
      %v1166 = vmax.f32 %v1068, 0.0
      %v1167 = vmax.f32 %v1069, 0.0
      %v1168 = vmax.f32 %v1070, 0.0
      %v1169 = vmax.f32 %v1071, 0.0
      %v1170 = vmax.f32 %v1072, 0.0
      %v1171 = vmax.f32 %v1073, 0.0
      %v1172 = vmax.f32 %v1074, 0.0
      %v1173 = vmax.f32 %v1075, 0.0
      %v1174 = vmax.f32 %v1076, 0.0
      %v1175 = vmax.f32 %v1077, 0.0
      %v1176 = vmax.f32 %v1078, 0.0
      %v1177 = vmax.f32 %v1079, 0.0
      %v1178 = vmax.f32 %v1080, 0.0
      %v1179 = vmax.f32 %v1081, 0.0
      %1180 = vst.msk [vmem:[%s172] sm:$0xff] %vm276, %v1082
      %1181 = vst.msk [vmem:[%s172 + $0x8] sm:$0xff] %vm276, %v1083
      %1182 = vst.msk [vmem:[%s172 + $0x10] sm:$0xff] %vm276, %v1084
      %1183 = vst.msk [vmem:[%s172 + $0x18] sm:$0xff] %vm276, %v1085
      %1184 = vst.msk [vmem:[%s172 + $0x20] sm:$0xff] %vm276, %v1086
      %1185 = vst.msk [vmem:[%s172 + $0x28] sm:$0xff] %vm276, %v1087
      %1186 = vst.msk [vmem:[%s172 + $0x30] sm:$0xff] %vm276, %v1088
      %1187 = vst.msk [vmem:[%s172 + $0x38] sm:$0xff] %vm276, %v1089
      %1188 = vst.msk [vmem:[%s172 + $0x40] sm:$0xff] %vm276, %v1090
      %1189 = vst.msk [vmem:[%s172 + $0x48] sm:$0xff] %vm276, %v1091
      %1190 = vst.msk [vmem:[%s172 + $0x50] sm:$0xff] %vm276, %v1092
      %1191 = vst.msk [vmem:[%s172 + $0x58] sm:$0xff] %vm276, %v1093
      %1192 = vst.msk [vmem:[%s172 + $0x60] sm:$0xff] %vm276, %v1094
      %1193 = vst.msk [vmem:[%s172 + $0x68] sm:$0xff] %vm276, %v1095
      %1194 = vst.msk [vmem:[%s172 + $0x70] sm:$0xff] %vm276, %v1096
      %1195 = vst.msk [vmem:[%s172 + $0x78] sm:$0xff] %vm276, %v1097
      %1196 = vst.msk [vmem:[%s172 + $0x80] sm:$0xff] %vm276, %v1098
      %1197 = vst.msk [vmem:[%s172 + $0x88] sm:$0xff] %vm276, %v1099
      %1198 = vst.msk [vmem:[%s172 + $0x90] sm:$0xff] %vm276, %v1100
      %1199 = vst.msk [vmem:[%s172 + $0x98] sm:$0xff] %vm276, %v1101
      %1200 = vst.msk [vmem:[%s172 + $0xa0] sm:$0xff] %vm276, %v1102
      %1201 = vst.msk [vmem:[%s172 + $0xa8] sm:$0xff] %vm276, %v1103
      %1202 = vst.msk [vmem:[%s172 + $0xb0] sm:$0xff] %vm276, %v1104
      %1203 = vst.msk [vmem:[%s172 + $0xb8] sm:$0xff] %vm276, %v1105
      %1204 = vst.msk [vmem:[%s172 + $0xc0] sm:$0xff] %vm276, %v1106
      %1205 = vst.msk [vmem:[%s172 + $0xc8] sm:$0xff] %vm276, %v1107
      %1206 = vst.msk [vmem:[%s172 + $0xd0] sm:$0xff] %vm276, %v1108
      %1207 = vst.msk [vmem:[%s172 + $0xd8] sm:$0xff] %vm276, %v1109
      %1208 = vst.msk [vmem:[%s172 + $0xe0] sm:$0xff] %vm276, %v1110
      %1209 = vst.msk [vmem:[%s172 + $0xe8] sm:$0xff] %vm276, %v1111
      %1210 = vst.msk [vmem:[%s172 + $0xf0] sm:$0xff] %vm276, %v1112
      %1211 = vst.msk [vmem:[%s172 + $0xf8] sm:$0xff] %vm276, %v1113
      %1212 = vst.msk [vmem:[%s172 + $0x100] sm:$0xff] %vm276, %v1114
      %1213 = vst.msk [vmem:[%s172 + $0x108] sm:$0xff] %vm276, %v1115
      %1214 = vst.msk [vmem:[%s172 + $0x110] sm:$0xff] %vm276, %v1116
      %1215 = vst.msk [vmem:[%s172 + $0x118] sm:$0xff] %vm276, %v1117
      %1216 = vst.msk [vmem:[%s172 + $0x120] sm:$0xff] %vm276, %v1118
      %1217 = vst.msk [vmem:[%s172 + $0x128] sm:$0xff] %vm276, %v1119
      %1218 = vst.msk [vmem:[%s172 + $0x130] sm:$0xff] %vm276, %v1120
      %1219 = vst.msk [vmem:[%s172 + $0x138] sm:$0xff] %vm276, %v1121
      %1220 = vst.msk [vmem:[%s172 + $0x140] sm:$0xff] %vm276, %v1122
      %1221 = vst.msk [vmem:[%s172 + $0x148] sm:$0xff] %vm276, %v1123
      %1222 = vst.msk [vmem:[%s172 + $0x150] sm:$0xff] %vm276, %v1124
      %1223 = vst.msk [vmem:[%s172 + $0x158] sm:$0xff] %vm276, %v1125
      %1224 = vst.msk [vmem:[%s172 + $0x160] sm:$0xff] %vm276, %v1126
      %1225 = vst.msk [vmem:[%s172 + $0x168] sm:$0xff] %vm276, %v1127
      %1226 = vst.msk [vmem:[%s172 + $0x170] sm:$0xff] %vm276, %v1128
      %1227 = vst.msk [vmem:[%s172 + $0x178] sm:$0xff] %vm276, %v1129
      %1228 = vst.msk [vmem:[%s172 + $0x180] sm:$0xff] %vm276, %v1130
      %1229 = vst.msk [vmem:[%s172 + $0x188] sm:$0xff] %vm276, %v1131
      %1230 = vst.msk [vmem:[%s172 + $0x190] sm:$0xff] %vm276, %v1132
      %1231 = vst.msk [vmem:[%s172 + $0x198] sm:$0xff] %vm276, %v1133
      %1232 = vst.msk [vmem:[%s172 + $0x1a0] sm:$0xff] %vm276, %v1134
      %1233 = vst.msk [vmem:[%s172 + $0x1a8] sm:$0xff] %vm276, %v1135
      %1234 = vst.msk [vmem:[%s172 + $0x1b0] sm:$0xff] %vm276, %v1136
      %1235 = vst.msk [vmem:[%s172 + $0x1b8] sm:$0xff] %vm276, %v1137
      %1236 = vst.msk [vmem:[%s172 + $0x1c0] sm:$0xff] %vm276, %v1138
      %1237 = vst.msk [vmem:[%s172 + $0x1c8] sm:$0xff] %vm276, %v1139
      %1238 = vst.msk [vmem:[%s172 + $0x1d0] sm:$0xff] %vm276, %v1140
      %1239 = vst.msk [vmem:[%s172 + $0x1d8] sm:$0xff] %vm276, %v1141
      %1240 = vst.msk [vmem:[%s172 + $0x1e0] sm:$0xff] %vm276, %v1142
      %1241 = vst.msk [vmem:[%s172 + $0x1e8] sm:$0xff] %vm276, %v1143
      %1242 = vst.msk [vmem:[%s172 + $0x1f0] sm:$0xff] %vm276, %v1144
      %1243 = vst.msk [vmem:[%s172 + $0x1f8] sm:$0xff] %vm276, %v1145
      %1244 = vst.msk [vmem:[%s172 + $0x200] sm:$0xff] %vm276, %v1146
      %1245 = vst.msk [vmem:[%s172 + $0x208] sm:$0xff] %vm276, %v1147
      %1246 = vst.msk [vmem:[%s172 + $0x210] sm:$0xff] %vm276, %v1148
      %1247 = vst.msk [vmem:[%s172 + $0x218] sm:$0xff] %vm276, %v1149
      %1248 = vst.msk [vmem:[%s172 + $0x220] sm:$0xff] %vm276, %v1150
      %1249 = vst.msk [vmem:[%s172 + $0x228] sm:$0xff] %vm276, %v1151
      %1250 = vst.msk [vmem:[%s172 + $0x230] sm:$0xff] %vm276, %v1152
      %1251 = vst.msk [vmem:[%s172 + $0x238] sm:$0xff] %vm276, %v1153
      %1252 = vst.msk [vmem:[%s172 + $0x240] sm:$0xff] %vm276, %v1154
      %1253 = vst.msk [vmem:[%s172 + $0x248] sm:$0xff] %vm276, %v1155
      %1254 = vst.msk [vmem:[%s172 + $0x250] sm:$0xff] %vm276, %v1156
      %1255 = vst.msk [vmem:[%s172 + $0x258] sm:$0xff] %vm276, %v1157
      %1256 = vst.msk [vmem:[%s172 + $0x260] sm:$0xff] %vm276, %v1158
      %1257 = vst.msk [vmem:[%s172 + $0x268] sm:$0xff] %vm276, %v1159
      %1258 = vst.msk [vmem:[%s172 + $0x270] sm:$0xff] %vm276, %v1160
      %1259 = vst.msk [vmem:[%s172 + $0x278] sm:$0xff] %vm276, %v1161
      %1260 = vst.msk [vmem:[%s172 + $0x280] sm:$0xff] %vm276, %v1162
      %1261 = vst.msk [vmem:[%s172 + $0x288] sm:$0xff] %vm276, %v1163
      %1262 = vst.msk [vmem:[%s172 + $0x290] sm:$0xff] %vm276, %v1164
      %1263 = vst.msk [vmem:[%s172 + $0x298] sm:$0xff] %vm276, %v1165
      %1264 = vst.msk [vmem:[%s172 + $0x2a0] sm:$0xff] %vm276, %v1166
      %1265 = vst.msk [vmem:[%s172 + $0x2a8] sm:$0xff] %vm276, %v1167
      %1266 = vst.msk [vmem:[%s172 + $0x2b0] sm:$0xff] %vm276, %v1168
      %1267 = vst.msk [vmem:[%s172 + $0x2b8] sm:$0xff] %vm276, %v1169
      %1268 = vst.msk [vmem:[%s172 + $0x2c0] sm:$0xff] %vm276, %v1170
      %1269 = vst.msk [vmem:[%s172 + $0x2c8] sm:$0xff] %vm276, %v1171
      %1270 = vst.msk [vmem:[%s172 + $0x2d0] sm:$0xff] %vm276, %v1172
      %1271 = vst.msk [vmem:[%s172 + $0x2d8] sm:$0xff] %vm276, %v1173
      %1272 = vst.msk [vmem:[%s172 + $0x2e0] sm:$0xff] %vm276, %v1174
      %1273 = vst.msk [vmem:[%s172 + $0x2e8] sm:$0xff] %vm276, %v1175
      %1274 = vst.msk [vmem:[%s172 + $0x2f0] sm:$0xff] %vm276, %v1176
      %1275 = vst.msk [vmem:[%s172 + $0x2f8] sm:$0xff] %vm276, %v1177
      %1276 = vst.msk [vmem:[%s172 + $0x300] sm:$0xff] %vm276, %v1178
      %1277 = vst.msk [vmem:[%s172 + $0x308] sm:$0xff] %vm276, %v1179
      %s1278 = smul.u32 98, %s14
      %p1279 = scmp.lt.s32.totalorder %s1278, 195
      %s1280 = scalar_select %p1279, %s1278, 195
      %s1281 = smul.addr %s1280, 8
      %s1282 = scalar_lea.vmem %s3, %s1281
      // Predicated region
      $region33: #{mycnn_forward.5} parent=31 // pred_check
        %p1283 = pneg %p100
      $region34: #{mycnn_forward.5} parent=31 // pred_check_branch
        %1285 = sbr.rel (%p1283) target = $region36
      $region35: #{mycnn_forward.5} parent=31 // pred_region
        %s1286 = smul.u32 98, %s14
      $region36: #{mycnn_forward.5} parent=31 // pred_fallthru
        _
    $region32: #{mycnn_forward.5} parent=5 // pred_fallthru
      _
    %p1287 = scmp.le.s32.totalorder 2, %s9
    // Predicated region
    $region37: #{mycnn_forward.5} parent=5 // pred_check
      %p1288 = pneg %p1287
    $region38: #{mycnn_forward.5} parent=5 // pred_check_branch
      %1290 = sbr.rel (%p1288) target = $region40
    $region39: #{mycnn_forward.5} parent=5 // pred_region
      %s1291 = ssub.s32 %s9, 2
      // Predicated region
      $region41: #{mycnn_forward.5} parent=39 // pred_check
        %p1292 = pneg %p106
      $region42: #{mycnn_forward.5} parent=39 // pred_check_branch
        %1294 = sbr.rel (%p1292) target = $region44
      $region43: #{mycnn_forward.5} parent=39 // pred_region
        %s1295 = smul.u32 98, %s15
        %p1296 = scmp.lt.s32.totalorder %s1295, 195
        %s1297 = scalar_select %p1296, %s1295, 195
        %s1298 = smul.addr %s1297, 8
        %s1299 = scalar_lea.vmem %s3, %s1298
      $region44: #{mycnn_forward.5} parent=39 // pred_fallthru
        _
    $region40: #{mycnn_forward.5} parent=5 // pred_fallthru
      _
  $region6: #{mycnn_forward.5} parent=0 // loop_footer
    %s13 = sadd.s32 1, %s9
  $region7: #{mycnn_forward.5} parent=0 // loop_footer_branch
    %8 = sbr.rel target = $region3
  $region8: #{mycnn_forward.5} parent=0 // loop_exit
    _

// kernel: mycnn_forward.6
$region0: #{mycnn_forward.6}
  #allocation0 [shape = 'u32[]', space=smem, size = 0x4, offset = 0x4, fixed_abs, tag = 'smem constant byte address 0x4 - core index']
  #allocation1 [shape = 'u32[72,128]{1,0:T(1,128)}', space=vmem, size = 0x9000, scoped, tag = 'internal scratch']
  %s0 = inlined_call_operand.vmem [shape: f32[4,392,288], index: 0, kind: input, shape index: {}]
  %s1 = inlined_call_operand.vmem [shape: f32[288,32], index: 1, kind: input, shape index: {}]
  %s2 = inlined_call_operand.vmem [shape: f32[2,32], index: 2, kind: input, shape index: {}]
  %s3 = inlined_call_operand.vmem [shape: f32[392,32], index: 3, kind: output, shape index: {}]
  %s4 = sld [smem:[#allocation0]]
  $region22: #{mycnn_forward.6} parent=0
    _
  %s6 = ssub.s32 1, %s4
  %s7 = scalar_select 0, %s6, %s4
  // Predicated region
  $region2: #{mycnn_forward.6} parent=0 // pred_check
    _
  $region3: #{mycnn_forward.6} parent=0 // pred_check_branch
    %9 = sbr.rel (0) target = $region5
  $region4: #{mycnn_forward.6} parent=0 // pred_region
    _
  $region5: #{mycnn_forward.6} parent=0 // pred_fallthru
    _
  // Predicated region
  $region6: #{mycnn_forward.6} parent=0 // pred_check
    _
  $region7: #{mycnn_forward.6} parent=0 // pred_check_branch
    %11 = sbr.rel (0) target = $region9
  $region8: #{mycnn_forward.6} parent=0 // pred_region
    _
  $region9: #{mycnn_forward.6} parent=0 // pred_fallthru
    _
  // Predicated region
  $region10: #{mycnn_forward.6} parent=0 // pred_check
    _
  $region11: #{mycnn_forward.6} parent=0 // pred_check_branch
    %13 = sbr.rel (0) target = $region13
  $region12: #{mycnn_forward.6} parent=0 // pred_region
    _
  $region13: #{mycnn_forward.6} parent=0 // pred_fallthru
    _
  %v14 = vld [vmem:[%s1] sm:$0xff]
  %v15 = vld [vmem:[%s1 + $0x8] sm:$0xff]
  %v16 = vld [vmem:[%s1 + $0x10] sm:$0xff]
  %v17 = vld [vmem:[%s1 + $0x18] sm:$0xff]
  %v18 = vld [vmem:[%s1 + $0x20] sm:$0xff]
  %v19 = vld [vmem:[%s1 + $0x28] sm:$0xff]
  %v20 = vld [vmem:[%s1 + $0x30] sm:$0xff]
  %v21 = vld [vmem:[%s1 + $0x38] sm:$0xff]
  %v22 = vld [vmem:[%s1 + $0x40] sm:$0xff]
  %v23 = vld [vmem:[%s1 + $0x48] sm:$0xff]
  %v24 = vld [vmem:[%s1 + $0x50] sm:$0xff]
  %v25 = vld [vmem:[%s1 + $0x58] sm:$0xff]
  %v26 = vld [vmem:[%s1 + $0x60] sm:$0xff]
  %v27 = vld [vmem:[%s1 + $0x68] sm:$0xff]
  %v28 = vld [vmem:[%s1 + $0x70] sm:$0xff]
  %v29 = vld [vmem:[%s1 + $0x78] sm:$0xff]
  %v30 = vld [vmem:[%s1 + $0x80] sm:$0xff]
  %v31 = vld [vmem:[%s1 + $0x88] sm:$0xff]
  %v32 = vld [vmem:[%s1 + $0x90] sm:$0xff]
  %v33 = vld [vmem:[%s1 + $0x98] sm:$0xff]
  %v34 = vld [vmem:[%s1 + $0xa0] sm:$0xff]
  %v35 = vld [vmem:[%s1 + $0xa8] sm:$0xff]
  %v36 = vld [vmem:[%s1 + $0xb0] sm:$0xff]
  %v37 = vld [vmem:[%s1 + $0xb8] sm:$0xff]
  %v38 = vld [vmem:[%s1 + $0xc0] sm:$0xff]
  %v39 = vld [vmem:[%s1 + $0xc8] sm:$0xff]
  %v40 = vld [vmem:[%s1 + $0xd0] sm:$0xff]
  %v41 = vld [vmem:[%s1 + $0xd8] sm:$0xff]
  %v42 = vld [vmem:[%s1 + $0xe0] sm:$0xff]
  %v43 = vld [vmem:[%s1 + $0xe8] sm:$0xff]
  %v44 = vld [vmem:[%s1 + $0xf0] sm:$0xff]
  %v45 = vld [vmem:[%s1 + $0xf8] sm:$0xff]
  %v46 = vld [vmem:[%s1 + $0x100] sm:$0xff]
  %v47 = vld [vmem:[%s1 + $0x108] sm:$0xff]
  %v48 = vld [vmem:[%s1 + $0x110] sm:$0xff]
  %v49 = vld [vmem:[%s1 + $0x118] sm:$0xff]
  %v50 = vld [vmem:[%s2] sm:$0x1]
  %v51 = vld [vmem:[%s2 + $0x1] sm:$0x1]
  %v52 = vld [vmem:[%s0] sm:$0xff]
  %v53 = vld [vmem:[%s0 + $0x8] sm:$0xff]
  %v54 = vld [vmem:[%s0 + $0x10] sm:$0xff]
  %v55 = vld [vmem:[%s0 + $0x18] sm:$0xff]
  %v56 = vld [vmem:[%s0 + $0x20] sm:$0xff]
  %v57 = vld [vmem:[%s0 + $0x28] sm:$0xff]
  %v58 = vld [vmem:[%s0 + $0x30] sm:$0xff]
  %v59 = vld [vmem:[%s0 + $0x38] sm:$0xff]
  %v60 = vld [vmem:[%s0 + $0x40] sm:$0xff]
  %v61 = vld [vmem:[%s0 + $0x48] sm:$0xff]
  %v62 = vld [vmem:[%s0 + $0x50] sm:$0xff]
  %v63 = vld [vmem:[%s0 + $0x58] sm:$0xff]
  %v64 = vld [vmem:[%s0 + $0x60] sm:$0xff]
  %v65 = vld [vmem:[%s0 + $0x68] sm:$0xff]
  %v66 = vld [vmem:[%s0 + $0x70] sm:$0xff]
  %v67 = vld [vmem:[%s0 + $0x78] sm:$0xff]
  %v68 = vld [vmem:[%s0 + $0x80] sm:$0xff]
  %v69 = vld [vmem:[%s0 + $0x88] sm:$0xff]
  %v70 = vld [vmem:[%s0 + $0x90] sm:$0xff]
  %v71 = vld [vmem:[%s0 + $0x98] sm:$0xff]
  %v72 = vld [vmem:[%s0 + $0xa0] sm:$0xff]
  %v73 = vld [vmem:[%s0 + $0xa8] sm:$0xff]
  %v74 = vld [vmem:[%s0 + $0xb0] sm:$0xff]
  %v75 = vld [vmem:[%s0 + $0xb8] sm:$0xff]
  %v76 = vld [vmem:[%s0 + $0xc0] sm:$0xff]
  %v77 = vld [vmem:[%s0 + $0xc8] sm:$0xff]
  %v78 = vld [vmem:[%s0 + $0xd0] sm:$0xff]
  %v79 = vld [vmem:[%s0 + $0xd8] sm:$0xff]
  %v80 = vld [vmem:[%s0 + $0xe0] sm:$0xff]
  %v81 = vld [vmem:[%s0 + $0xe8] sm:$0xff]
  %v82 = vld [vmem:[%s0 + $0xf0] sm:$0xff]
  %v83 = vld [vmem:[%s0 + $0xf8] sm:$0xff]
  %v84 = vld [vmem:[%s0 + $0x100] sm:$0xff]
  %v85 = vld [vmem:[%s0 + $0x108] sm:$0xff]
  %v86 = vld [vmem:[%s0 + $0x110] sm:$0xff]
  %v87 = vld [vmem:[%s0 + $0x118] sm:$0xff]
  %v88 = vld [vmem:[%s0 + $0x120] sm:$0xff]
  %v89 = vld [vmem:[%s0 + $0x128] sm:$0xff]
  %v90 = vld [vmem:[%s0 + $0x130] sm:$0xff]
  %v91 = vld [vmem:[%s0 + $0x138] sm:$0xff]
  %v92 = vld [vmem:[%s0 + $0x140] sm:$0xff]
  %v93 = vld [vmem:[%s0 + $0x148] sm:$0xff]
  %v94 = vld [vmem:[%s0 + $0x150] sm:$0xff]
  %v95 = vld [vmem:[%s0 + $0x158] sm:$0xff]
  %v96 = vld [vmem:[%s0 + $0x160] sm:$0xff]
  %v97 = vld [vmem:[%s0 + $0x168] sm:$0xff]
  %v98 = vld [vmem:[%s0 + $0x170] sm:$0xff]
  %v99 = vld [vmem:[%s0 + $0x178] sm:$0xff]
  %v100 = vld [vmem:[%s0 + $0x180] sm:$0xff]
  %v101 = vld [vmem:[%s0 + $0x188] sm:$0xff]
  %v102 = vld [vmem:[%s0 + $0x190] sm:$0xff]
  %v103 = vld [vmem:[%s0 + $0x198] sm:$0xff]
  %v104 = vld [vmem:[%s0 + $0x1a0] sm:$0xff]
  %v105 = vld [vmem:[%s0 + $0x1a8] sm:$0xff]
  %v106 = vld [vmem:[%s0 + $0x1b0] sm:$0xff]
  %v107 = vld [vmem:[%s0 + $0x1b8] sm:$0xff]
  %v108 = vld [vmem:[%s0 + $0x1c0] sm:$0xff]
  %v109 = vld [vmem:[%s0 + $0x1c8] sm:$0xff]
  %v110 = vld [vmem:[%s0 + $0x1d0] sm:$0xff]
  %v111 = vld [vmem:[%s0 + $0x1d8] sm:$0xff]
  %v112 = vld [vmem:[%s0 + $0x1e0] sm:$0xff]
  %v113 = vld [vmem:[%s0 + $0x1e8] sm:$0xff]
  %v114 = vld [vmem:[%s0 + $0x1f0] sm:$0xff]
  %v115 = vld [vmem:[%s0 + $0x1f8] sm:$0xff]
  %v116 = vld [vmem:[%s0 + $0x200] sm:$0xff]
  %v117 = vld [vmem:[%s0 + $0x208] sm:$0xff]
  %v118 = vld [vmem:[%s0 + $0x210] sm:$0xff]
  %v119 = vld [vmem:[%s0 + $0x218] sm:$0xff]
  %v120 = vld [vmem:[%s0 + $0x220] sm:$0xff]
  %v121 = vld [vmem:[%s0 + $0x228] sm:$0xff]
  %v122 = vld [vmem:[%s0 + $0x230] sm:$0xff]
  %v123 = vld [vmem:[%s0 + $0x238] sm:$0xff]
  %v124 = vld [vmem:[%s0 + $0x240] sm:$0xff]
  %v125 = vld [vmem:[%s0 + $0x248] sm:$0xff]
  %v126 = vld [vmem:[%s0 + $0x250] sm:$0xff]
  %v127 = vld [vmem:[%s0 + $0x258] sm:$0xff]
  %v128 = vld [vmem:[%s0 + $0x260] sm:$0xff]
  %v129 = vld [vmem:[%s0 + $0x268] sm:$0xff]
  %v130 = vld [vmem:[%s0 + $0x270] sm:$0xff]
  %v131 = vld [vmem:[%s0 + $0x278] sm:$0xff]
  %v132 = vld [vmem:[%s0 + $0x280] sm:$0xff]
  %v133 = vld [vmem:[%s0 + $0x288] sm:$0xff]
  %v134 = vld [vmem:[%s0 + $0x290] sm:$0xff]
  %v135 = vld [vmem:[%s0 + $0x298] sm:$0xff]
  %v136 = vld [vmem:[%s0 + $0x2a0] sm:$0xff]
  %v137 = vld [vmem:[%s0 + $0x2a8] sm:$0xff]
  %v138 = vld [vmem:[%s0 + $0x2b0] sm:$0xff]
  %v139 = vld [vmem:[%s0 + $0x2b8] sm:$0xff]
  %v140 = vld [vmem:[%s0 + $0x2c0] sm:$0xff]
  %v141 = vld [vmem:[%s0 + $0x2c8] sm:$0xff]
  %v142 = vld [vmem:[%s0 + $0x2d0] sm:$0xff]
  %v143 = vld [vmem:[%s0 + $0x2d8] sm:$0xff]
  %v144 = vld [vmem:[%s0 + $0x2e0] sm:$0xff]
  %v145 = vld [vmem:[%s0 + $0x2e8] sm:$0xff]
  %v146 = vld [vmem:[%s0 + $0x2f0] sm:$0xff]
  %v147 = vld [vmem:[%s0 + $0x2f8] sm:$0xff]
  %v148 = vld [vmem:[%s0 + $0x300] sm:$0xff]
  %v149 = vld [vmem:[%s0 + $0x308] sm:$0xff]
  %v150 = vld [vmem:[%s0 + $0x310] sm:$0xff]
  %v151 = vld [vmem:[%s0 + $0x318] sm:$0xff]
  %v152 = vld [vmem:[%s0 + $0x320] sm:$0xff]
  %v153 = vld [vmem:[%s0 + $0x328] sm:$0xff]
  %v154 = vld [vmem:[%s0 + $0x330] sm:$0xff]
  %v155 = vld [vmem:[%s0 + $0x338] sm:$0xff]
  %v156 = vld [vmem:[%s0 + $0x340] sm:$0xff]
  %v157 = vld [vmem:[%s0 + $0x348] sm:$0xff]
  %v158 = vld [vmem:[%s0 + $0x350] sm:$0xff]
  %v159 = vld [vmem:[%s0 + $0x358] sm:$0xff]
  %v160 = vld [vmem:[%s0 + $0x360] sm:$0xff]
  %v161 = vld [vmem:[%s0 + $0x368] sm:$0xff]
  %v162 = vld [vmem:[%s0 + $0x370] sm:$0xff]
  %v163 = vld [vmem:[%s0 + $0x378] sm:$0xff]
  %v164 = vld [vmem:[%s0 + $0x380] sm:$0xff]
  %v165 = vld [vmem:[%s0 + $0x388] sm:$0xff]
  %v166 = vld [vmem:[%s0 + $0x390] sm:$0xff]
  %v167 = vld [vmem:[%s0 + $0x398] sm:$0xff]
  %v168 = vld [vmem:[%s0 + $0x3a0] sm:$0xff]
  %v169 = vld [vmem:[%s0 + $0x3a8] sm:$0xff]
  %v170 = vld [vmem:[%s0 + $0x3b0] sm:$0xff]
  %v171 = vld [vmem:[%s0 + $0x3b8] sm:$0xff]
  %v172 = vld [vmem:[%s0 + $0x3c0] sm:$0xff]
  %v173 = vld [vmem:[%s0 + $0x3c8] sm:$0xff]
  %v174 = vld [vmem:[%s0 + $0x3d0] sm:$0xff]
  %v175 = vld [vmem:[%s0 + $0x3d8] sm:$0xff]
  %v176 = vld [vmem:[%s0 + $0x3e0] sm:$0xff]
  %v177 = vld [vmem:[%s0 + $0x3e8] sm:$0xff]
  %v178 = vld [vmem:[%s0 + $0x3f0] sm:$0xff]
  %v179 = vld [vmem:[%s0 + $0x3f8] sm:$0xff]
  %v180 = vld [vmem:[%s0 + $0x400] sm:$0xff]
  %v181 = vld [vmem:[%s0 + $0x408] sm:$0xff]
  %v182 = vld [vmem:[%s0 + $0x410] sm:$0xff]
  %v183 = vld [vmem:[%s0 + $0x418] sm:$0xff]
  %v184 = vld [vmem:[%s0 + $0x420] sm:$0xff]
  %v185 = vld [vmem:[%s0 + $0x428] sm:$0xff]
  %v186 = vld [vmem:[%s0 + $0x430] sm:$0xff]
  %v187 = vld [vmem:[%s0 + $0x438] sm:$0xff]
  %v188 = vld [vmem:[%s0 + $0x440] sm:$0xff]
  %v189 = vld [vmem:[%s0 + $0x448] sm:$0xff]
  %v190 = vld [vmem:[%s0 + $0x450] sm:$0xff]
  %v191 = vld [vmem:[%s0 + $0x458] sm:$0xff]
  %v192 = vld [vmem:[%s0 + $0x460] sm:$0xff]
  %v193 = vld [vmem:[%s0 + $0x468] sm:$0xff]
  %v194 = vld [vmem:[%s0 + $0x470] sm:$0xff]
  %v195 = vld [vmem:[%s0 + $0x478] sm:$0xff]
  %v196 = vld [vmem:[%s0 + $0x480] sm:$0xff]
  %v197 = vld [vmem:[%s0 + $0x488] sm:$0xff]
  %v198 = vld [vmem:[%s0 + $0x490] sm:$0xff]
  %vm199 = vcmask 261120
  %v201 = vsel %vm199, %v54, 0
  %v204 = vsel %vm199, %v57, 0
  %v207 = vsel %vm199, %v60, 0
  %v210 = vsel %vm199, %v63, 0
  %v213 = vsel %vm199, %v66, 0
  %v216 = vsel %vm199, %v69, 0
  %v219 = vsel %vm199, %v72, 0
  %v222 = vsel %vm199, %v75, 0
  %v225 = vsel %vm199, %v78, 0
  %v228 = vsel %vm199, %v81, 0
  %v231 = vsel %vm199, %v84, 0
  %v234 = vsel %vm199, %v87, 0
  %v237 = vsel %vm199, %v90, 0
  %v240 = vsel %vm199, %v93, 0
  %v243 = vsel %vm199, %v96, 0
  %v246 = vsel %vm199, %v99, 0
  %v249 = vsel %vm199, %v102, 0
  %v252 = vsel %vm199, %v105, 0
  %v255 = vsel %vm199, %v108, 0
  %v258 = vsel %vm199, %v111, 0
  %v261 = vsel %vm199, %v114, 0
  %v264 = vsel %vm199, %v117, 0
  %v267 = vsel %vm199, %v120, 0
  %v270 = vsel %vm199, %v123, 0
  %v273 = vsel %vm199, %v126, 0
  %v276 = vsel %vm199, %v129, 0
  %v279 = vsel %vm199, %v132, 0
  %v282 = vsel %vm199, %v135, 0
  %v285 = vsel %vm199, %v138, 0
  %v288 = vsel %vm199, %v141, 0
  %v291 = vsel %vm199, %v144, 0
  %v294 = vsel %vm199, %v147, 0
  %v297 = vsel %vm199, %v150, 0
  %v300 = vsel %vm199, %v153, 0
  %v303 = vsel %vm199, %v156, 0
  %v306 = vsel %vm199, %v159, 0
  %v309 = vsel %vm199, %v162, 0
  %v312 = vsel %vm199, %v165, 0
  %v315 = vsel %vm199, %v168, 0
  %v318 = vsel %vm199, %v171, 0
  %v321 = vsel %vm199, %v174, 0
  %v324 = vsel %vm199, %v177, 0
  %v327 = vsel %vm199, %v180, 0
  %v330 = vsel %vm199, %v183, 0
  %v333 = vsel %vm199, %v186, 0
  %v336 = vsel %vm199, %v189, 0
  %v339 = vsel %vm199, %v192, 0
  %v342 = vsel %vm199, %v195, 0
  %v345 = vsel %vm199, %v198, 0
  %347 = vmatpush.msra.mxu0 %v29
  %348 = vmatpush.msra.mxu0 %v28
  %349 = vmatpush.msra.mxu0 %v27
  %350 = vmatpush.msra.mxu0 %v26
  %351 = vmatpush.msra.mxu0 %v25
  %352 = vmatpush.msra.mxu0 %v24
  %353 = vmatpush.msra.mxu0 %v23
  %354 = vmatpush.msra.mxu0 %v22
  %355 = vmatpush.msra.mxu0 %v21
  %356 = vmatpush.msra.mxu0 %v20
  %357 = vmatpush.msra.mxu0 %v19
  %358 = vmatpush.msra.mxu0 %v18
  %359 = vmatpush.msra.mxu0 %v17
  %360 = vmatpush.msra.mxu0 %v16
  %361 = vmatpush.msra.mxu0 %v15
  %362 = vmatpush.msra.mxu0 %v14
  %363 = vmatmul.f32.gmra.mxu0 %v52
  %v364 = vpop.f32.mrf.mxu0
  %v365 = vadd.f32 0.0, %v364
  %366 = vmatmul.f32.gmra.mxu0 %v55
  %v367 = vpop.f32.mrf.mxu0
  %v368 = vadd.f32 0.0, %v367
  %369 = vmatmul.f32.gmra.mxu0 %v58
  %v370 = vpop.f32.mrf.mxu0
  %v371 = vadd.f32 0.0, %v370
  %372 = vmatmul.f32.gmra.mxu0 %v61
  %v373 = vpop.f32.mrf.mxu0
  %v374 = vadd.f32 0.0, %v373
  %375 = vmatmul.f32.gmra.mxu0 %v64
  %v376 = vpop.f32.mrf.mxu0
  %v377 = vadd.f32 0.0, %v376
  %378 = vmatmul.f32.gmra.mxu0 %v67
  %v379 = vpop.f32.mrf.mxu0
  %v380 = vadd.f32 0.0, %v379
  %381 = vmatmul.f32.gmra.mxu0 %v70
  %v382 = vpop.f32.mrf.mxu0
  %v383 = vadd.f32 0.0, %v382
  %384 = vmatmul.f32.gmra.mxu0 %v73
  %v385 = vpop.f32.mrf.mxu0
  %v386 = vadd.f32 0.0, %v385
  %387 = vmatmul.f32.gmra.mxu0 %v76
  %v388 = vpop.f32.mrf.mxu0
  %v389 = vadd.f32 0.0, %v388
  %390 = vmatmul.f32.gmra.mxu0 %v79
  %v391 = vpop.f32.mrf.mxu0
  %v392 = vadd.f32 0.0, %v391
  %393 = vmatmul.f32.gmra.mxu0 %v82
  %v394 = vpop.f32.mrf.mxu0
  %v395 = vadd.f32 0.0, %v394
  %396 = vmatmul.f32.gmra.mxu0 %v85
  %v397 = vpop.f32.mrf.mxu0
  %v398 = vadd.f32 0.0, %v397
  %399 = vmatmul.f32.gmra.mxu0 %v88
  %v400 = vpop.f32.mrf.mxu0
  %v401 = vadd.f32 0.0, %v400
  %402 = vmatmul.f32.gmra.mxu0 %v91
  %v403 = vpop.f32.mrf.mxu0
  %v404 = vadd.f32 0.0, %v403
  %405 = vmatmul.f32.gmra.mxu0 %v94
  %v406 = vpop.f32.mrf.mxu0
  %v407 = vadd.f32 0.0, %v406
  %408 = vmatmul.f32.gmra.mxu0 %v97
  %v409 = vpop.f32.mrf.mxu0
  %v410 = vadd.f32 0.0, %v409
  %411 = vmatmul.f32.gmra.mxu0 %v100
  %v412 = vpop.f32.mrf.mxu0
  %v413 = vadd.f32 0.0, %v412
  %414 = vmatmul.f32.gmra.mxu0 %v103
  %v415 = vpop.f32.mrf.mxu0
  %v416 = vadd.f32 0.0, %v415
  %417 = vmatmul.f32.gmra.mxu0 %v106
  %v418 = vpop.f32.mrf.mxu0
  %v419 = vadd.f32 0.0, %v418
  %420 = vmatmul.f32.gmra.mxu0 %v109
  %v421 = vpop.f32.mrf.mxu0
  %v422 = vadd.f32 0.0, %v421
  %423 = vmatmul.f32.gmra.mxu0 %v112
  %v424 = vpop.f32.mrf.mxu0
  %v425 = vadd.f32 0.0, %v424
  %426 = vmatmul.f32.gmra.mxu0 %v115
  %v427 = vpop.f32.mrf.mxu0
  %v428 = vadd.f32 0.0, %v427
  %429 = vmatmul.f32.gmra.mxu0 %v118
  %v430 = vpop.f32.mrf.mxu0
  %v431 = vadd.f32 0.0, %v430
  %432 = vmatmul.f32.gmra.mxu0 %v121
  %v433 = vpop.f32.mrf.mxu0
  %v434 = vadd.f32 0.0, %v433
  %435 = vmatmul.f32.gmra.mxu0 %v124
  %v436 = vpop.f32.mrf.mxu0
  %v437 = vadd.f32 0.0, %v436
  %438 = vmatmul.f32.gmra.mxu0 %v127
  %v439 = vpop.f32.mrf.mxu0
  %v440 = vadd.f32 0.0, %v439
  %441 = vmatmul.f32.gmra.mxu0 %v130
  %v442 = vpop.f32.mrf.mxu0
  %v443 = vadd.f32 0.0, %v442
  %444 = vmatmul.f32.gmra.mxu0 %v133
  %v445 = vpop.f32.mrf.mxu0
  %v446 = vadd.f32 0.0, %v445
  %447 = vmatmul.f32.gmra.mxu0 %v136
  %v448 = vpop.f32.mrf.mxu0
  %v449 = vadd.f32 0.0, %v448
  %450 = vmatmul.f32.gmra.mxu0 %v139
  %v451 = vpop.f32.mrf.mxu0
  %v452 = vadd.f32 0.0, %v451
  %453 = vmatmul.f32.gmra.mxu0 %v142
  %v454 = vpop.f32.mrf.mxu0
  %v455 = vadd.f32 0.0, %v454
  %456 = vmatmul.f32.gmra.mxu0 %v145
  %v457 = vpop.f32.mrf.mxu0
  %v458 = vadd.f32 0.0, %v457
  %459 = vmatmul.f32.gmra.mxu0 %v148
  %v460 = vpop.f32.mrf.mxu0
  %v461 = vadd.f32 0.0, %v460
  %462 = vmatmul.f32.gmra.mxu0 %v151
  %v463 = vpop.f32.mrf.mxu0
  %v464 = vadd.f32 0.0, %v463
  %465 = vmatmul.f32.gmra.mxu0 %v154
  %v466 = vpop.f32.mrf.mxu0
  %v467 = vadd.f32 0.0, %v466
  %468 = vmatmul.f32.gmra.mxu0 %v157
  %v469 = vpop.f32.mrf.mxu0
  %v470 = vadd.f32 0.0, %v469
  %471 = vmatmul.f32.gmra.mxu0 %v160
  %v472 = vpop.f32.mrf.mxu0
  %v473 = vadd.f32 0.0, %v472
  %474 = vmatmul.f32.gmra.mxu0 %v163
  %v475 = vpop.f32.mrf.mxu0
  %v476 = vadd.f32 0.0, %v475
  %477 = vmatmul.f32.gmra.mxu0 %v166
  %v478 = vpop.f32.mrf.mxu0
  %v479 = vadd.f32 0.0, %v478
  %480 = vmatmul.f32.gmra.mxu0 %v169
  %v481 = vpop.f32.mrf.mxu0
  %v482 = vadd.f32 0.0, %v481
  %483 = vmatmul.f32.gmra.mxu0 %v172
  %v484 = vpop.f32.mrf.mxu0
  %v485 = vadd.f32 0.0, %v484
  %486 = vmatmul.f32.gmra.mxu0 %v175
  %v487 = vpop.f32.mrf.mxu0
  %v488 = vadd.f32 0.0, %v487
  %489 = vmatmul.f32.gmra.mxu0 %v178
  %v490 = vpop.f32.mrf.mxu0
  %v491 = vadd.f32 0.0, %v490
  %492 = vmatmul.f32.gmra.mxu0 %v181
  %v493 = vpop.f32.mrf.mxu0
  %v494 = vadd.f32 0.0, %v493
  %495 = vmatmul.f32.gmra.mxu0 %v184
  %v496 = vpop.f32.mrf.mxu0
  %v497 = vadd.f32 0.0, %v496
  %498 = vmatmul.f32.gmra.mxu0 %v187
  %v499 = vpop.f32.mrf.mxu0
  %v500 = vadd.f32 0.0, %v499
  %501 = vmatmul.f32.gmra.mxu0 %v190
  %v502 = vpop.f32.mrf.mxu0
  %v503 = vadd.f32 0.0, %v502
  %504 = vmatmul.f32.gmra.mxu0 %v193
  %v505 = vpop.f32.mrf.mxu0
  %v506 = vadd.f32 0.0, %v505
  %507 = vmatmul.f32.gmra.mxu0 %v196
  %v508 = vpop.f32.mrf.mxu0
  %v509 = vadd.f32 0.0, %v508
  %510 = vdwg.mxu0
  %511 = vmatpush.msra.mxu0 %v45
  %512 = vmatpush.msra.mxu0 %v44
  %513 = vmatpush.msra.mxu0 %v43
  %514 = vmatpush.msra.mxu0 %v42
  %515 = vmatpush.msra.mxu0 %v41
  %516 = vmatpush.msra.mxu0 %v40
  %517 = vmatpush.msra.mxu0 %v39
  %518 = vmatpush.msra.mxu0 %v38
  %519 = vmatpush.msra.mxu0 %v37
  %520 = vmatpush.msra.mxu0 %v36
  %521 = vmatpush.msra.mxu0 %v35
  %522 = vmatpush.msra.mxu0 %v34
  %523 = vmatpush.msra.mxu0 %v33
  %524 = vmatpush.msra.mxu0 %v32
  %525 = vmatpush.msra.mxu0 %v31
  %526 = vmatpush.msra.mxu0 %v30
  %527 = vmatmul.f32.gmra.mxu0 %v53
  %v528 = vpop.f32.mrf.mxu0
  %v529 = vadd.f32 %v365, %v528
  %530 = vmatmul.f32.gmra.mxu0 %v56
  %v531 = vpop.f32.mrf.mxu0
  %v532 = vadd.f32 %v368, %v531
  %533 = vmatmul.f32.gmra.mxu0 %v59
  %v534 = vpop.f32.mrf.mxu0
  %v535 = vadd.f32 %v371, %v534
  %536 = vmatmul.f32.gmra.mxu0 %v62
  %v537 = vpop.f32.mrf.mxu0
  %v538 = vadd.f32 %v374, %v537
  %539 = vmatmul.f32.gmra.mxu0 %v65
  %v540 = vpop.f32.mrf.mxu0
  %v541 = vadd.f32 %v377, %v540
  %542 = vmatmul.f32.gmra.mxu0 %v68
  %v543 = vpop.f32.mrf.mxu0
  %v544 = vadd.f32 %v380, %v543
  %545 = vmatmul.f32.gmra.mxu0 %v71
  %v546 = vpop.f32.mrf.mxu0
  %v547 = vadd.f32 %v383, %v546
  %548 = vmatmul.f32.gmra.mxu0 %v74
  %v549 = vpop.f32.mrf.mxu0
  %v550 = vadd.f32 %v386, %v549
  %551 = vmatmul.f32.gmra.mxu0 %v77
  %v552 = vpop.f32.mrf.mxu0
  %v553 = vadd.f32 %v389, %v552
  %554 = vmatmul.f32.gmra.mxu0 %v80
  %v555 = vpop.f32.mrf.mxu0
  %v556 = vadd.f32 %v392, %v555
  %557 = vmatmul.f32.gmra.mxu0 %v83
  %v558 = vpop.f32.mrf.mxu0
  %v559 = vadd.f32 %v395, %v558
  %560 = vmatmul.f32.gmra.mxu0 %v86
  %v561 = vpop.f32.mrf.mxu0
  %v562 = vadd.f32 %v398, %v561
  %563 = vmatmul.f32.gmra.mxu0 %v89
  %v564 = vpop.f32.mrf.mxu0
  %v565 = vadd.f32 %v401, %v564
  %566 = vmatmul.f32.gmra.mxu0 %v92
  %v567 = vpop.f32.mrf.mxu0
  %v568 = vadd.f32 %v404, %v567
  %569 = vmatmul.f32.gmra.mxu0 %v95
  %v570 = vpop.f32.mrf.mxu0
  %v571 = vadd.f32 %v407, %v570
  %572 = vmatmul.f32.gmra.mxu0 %v98
  %v573 = vpop.f32.mrf.mxu0
  %v574 = vadd.f32 %v410, %v573
  %575 = vmatmul.f32.gmra.mxu0 %v101
  %v576 = vpop.f32.mrf.mxu0
  %v577 = vadd.f32 %v413, %v576
  %578 = vmatmul.f32.gmra.mxu0 %v104
  %v579 = vpop.f32.mrf.mxu0
  %v580 = vadd.f32 %v416, %v579
  %581 = vmatmul.f32.gmra.mxu0 %v107
  %v582 = vpop.f32.mrf.mxu0
  %v583 = vadd.f32 %v419, %v582
  %584 = vmatmul.f32.gmra.mxu0 %v110
  %v585 = vpop.f32.mrf.mxu0
  %v586 = vadd.f32 %v422, %v585
  %587 = vmatmul.f32.gmra.mxu0 %v113
  %v588 = vpop.f32.mrf.mxu0
  %v589 = vadd.f32 %v425, %v588
  %590 = vmatmul.f32.gmra.mxu0 %v116
  %v591 = vpop.f32.mrf.mxu0
  %v592 = vadd.f32 %v428, %v591
  %593 = vmatmul.f32.gmra.mxu0 %v119
  %v594 = vpop.f32.mrf.mxu0
  %v595 = vadd.f32 %v431, %v594
  %596 = vmatmul.f32.gmra.mxu0 %v122
  %v597 = vpop.f32.mrf.mxu0
  %v598 = vadd.f32 %v434, %v597
  %599 = vmatmul.f32.gmra.mxu0 %v125
  %v600 = vpop.f32.mrf.mxu0
  %v601 = vadd.f32 %v437, %v600
  %602 = vmatmul.f32.gmra.mxu0 %v128
  %v603 = vpop.f32.mrf.mxu0
  %v604 = vadd.f32 %v440, %v603
  %605 = vmatmul.f32.gmra.mxu0 %v131
  %v606 = vpop.f32.mrf.mxu0
  %v607 = vadd.f32 %v443, %v606
  %608 = vmatmul.f32.gmra.mxu0 %v134
  %v609 = vpop.f32.mrf.mxu0
  %v610 = vadd.f32 %v446, %v609
  %611 = vmatmul.f32.gmra.mxu0 %v137
  %v612 = vpop.f32.mrf.mxu0
  %v613 = vadd.f32 %v449, %v612
  %614 = vmatmul.f32.gmra.mxu0 %v140
  %v615 = vpop.f32.mrf.mxu0
  %v616 = vadd.f32 %v452, %v615
  %617 = vmatmul.f32.gmra.mxu0 %v143
  %v618 = vpop.f32.mrf.mxu0
  %v619 = vadd.f32 %v455, %v618
  %620 = vmatmul.f32.gmra.mxu0 %v146
  %v621 = vpop.f32.mrf.mxu0
  %v622 = vadd.f32 %v458, %v621
  %623 = vmatmul.f32.gmra.mxu0 %v149
  %v624 = vpop.f32.mrf.mxu0
  %v625 = vadd.f32 %v461, %v624
  %626 = vmatmul.f32.gmra.mxu0 %v152
  %v627 = vpop.f32.mrf.mxu0
  %v628 = vadd.f32 %v464, %v627
  %629 = vmatmul.f32.gmra.mxu0 %v155
  %v630 = vpop.f32.mrf.mxu0
  %v631 = vadd.f32 %v467, %v630
  %632 = vmatmul.f32.gmra.mxu0 %v158
  %v633 = vpop.f32.mrf.mxu0
  %v634 = vadd.f32 %v470, %v633
  %635 = vmatmul.f32.gmra.mxu0 %v161
  %v636 = vpop.f32.mrf.mxu0
  %v637 = vadd.f32 %v473, %v636
  %638 = vmatmul.f32.gmra.mxu0 %v164
  %v639 = vpop.f32.mrf.mxu0
  %v640 = vadd.f32 %v476, %v639
  %641 = vmatmul.f32.gmra.mxu0 %v167
  %v642 = vpop.f32.mrf.mxu0
  %v643 = vadd.f32 %v479, %v642
  %644 = vmatmul.f32.gmra.mxu0 %v170
  %v645 = vpop.f32.mrf.mxu0
  %v646 = vadd.f32 %v482, %v645
  %647 = vmatmul.f32.gmra.mxu0 %v173
  %v648 = vpop.f32.mrf.mxu0
  %v649 = vadd.f32 %v485, %v648
  %650 = vmatmul.f32.gmra.mxu0 %v176
  %v651 = vpop.f32.mrf.mxu0
  %v652 = vadd.f32 %v488, %v651
  %653 = vmatmul.f32.gmra.mxu0 %v179
  %v654 = vpop.f32.mrf.mxu0
  %v655 = vadd.f32 %v491, %v654
  %656 = vmatmul.f32.gmra.mxu0 %v182
  %v657 = vpop.f32.mrf.mxu0
  %v658 = vadd.f32 %v494, %v657
  %659 = vmatmul.f32.gmra.mxu0 %v185
  %v660 = vpop.f32.mrf.mxu0
  %v661 = vadd.f32 %v497, %v660
  %662 = vmatmul.f32.gmra.mxu0 %v188
  %v663 = vpop.f32.mrf.mxu0
  %v664 = vadd.f32 %v500, %v663
  %665 = vmatmul.f32.gmra.mxu0 %v191
  %v666 = vpop.f32.mrf.mxu0
  %v667 = vadd.f32 %v503, %v666
  %668 = vmatmul.f32.gmra.mxu0 %v194
  %v669 = vpop.f32.mrf.mxu0
  %v670 = vadd.f32 %v506, %v669
  %671 = vmatmul.f32.gmra.mxu0 %v197
  %v672 = vpop.f32.mrf.mxu0
  %v673 = vadd.f32 %v509, %v672
  %674 = vdwg.mxu0
  %675 = vmatpush.msra.mxu0 0.0
  %676 = vmatpush.msra.mxu0 0.0
  %677 = vmatpush.msra.mxu0 0.0
  %678 = vmatpush.msra.mxu0 0.0
  %679 = vmatpush.msra.mxu0 0.0
  %680 = vmatpush.msra.mxu0 0.0
  %681 = vmatpush.msra.mxu0 0.0
  %682 = vmatpush.msra.mxu0 0.0
  %683 = vmatpush.msra.mxu0 0.0
  %684 = vmatpush.msra.mxu0 0.0
  %685 = vmatpush.msra.mxu0 0.0
  %686 = vmatpush.msra.mxu0 0.0
  %687 = vmatpush.msra.mxu0 %v49
  %688 = vmatpush.msra.mxu0 %v48
  %689 = vmatpush.msra.mxu0 %v47
  %690 = vmatpush.msra.mxu0 %v46
  %691 = vmatmul.f32.gmra.mxu0 %v201
  %v692 = vpop.f32.mrf.mxu0
  %v693 = vadd.f32 %v529, %v692
  %694 = vmatmul.f32.gmra.mxu0 %v204
  %v695 = vpop.f32.mrf.mxu0
  %v696 = vadd.f32 %v532, %v695
  %697 = vmatmul.f32.gmra.mxu0 %v207
  %v698 = vpop.f32.mrf.mxu0
  %v699 = vadd.f32 %v535, %v698
  %700 = vmatmul.f32.gmra.mxu0 %v210
  %v701 = vpop.f32.mrf.mxu0
  %v702 = vadd.f32 %v538, %v701
  %703 = vmatmul.f32.gmra.mxu0 %v213
  %v704 = vpop.f32.mrf.mxu0
  %v705 = vadd.f32 %v541, %v704
  %706 = vmatmul.f32.gmra.mxu0 %v216
  %v707 = vpop.f32.mrf.mxu0
  %v708 = vadd.f32 %v544, %v707
  %709 = vmatmul.f32.gmra.mxu0 %v219
  %v710 = vpop.f32.mrf.mxu0
  %v711 = vadd.f32 %v547, %v710
  %712 = vmatmul.f32.gmra.mxu0 %v222
  %v713 = vpop.f32.mrf.mxu0
  %v714 = vadd.f32 %v550, %v713
  %715 = vmatmul.f32.gmra.mxu0 %v225
  %v716 = vpop.f32.mrf.mxu0
  %v717 = vadd.f32 %v553, %v716
  %718 = vmatmul.f32.gmra.mxu0 %v228
  %v719 = vpop.f32.mrf.mxu0
  %v720 = vadd.f32 %v556, %v719
  %721 = vmatmul.f32.gmra.mxu0 %v231
  %v722 = vpop.f32.mrf.mxu0
  %v723 = vadd.f32 %v559, %v722
  %724 = vmatmul.f32.gmra.mxu0 %v234
  %v725 = vpop.f32.mrf.mxu0
  %v726 = vadd.f32 %v562, %v725
  %727 = vmatmul.f32.gmra.mxu0 %v237
  %v728 = vpop.f32.mrf.mxu0
  %v729 = vadd.f32 %v565, %v728
  %730 = vmatmul.f32.gmra.mxu0 %v240
  %v731 = vpop.f32.mrf.mxu0
  %v732 = vadd.f32 %v568, %v731
  %733 = vmatmul.f32.gmra.mxu0 %v243
  %v734 = vpop.f32.mrf.mxu0
  %v735 = vadd.f32 %v571, %v734
  %736 = vmatmul.f32.gmra.mxu0 %v246
  %v737 = vpop.f32.mrf.mxu0
  %v738 = vadd.f32 %v574, %v737
  %739 = vmatmul.f32.gmra.mxu0 %v249
  %v740 = vpop.f32.mrf.mxu0
  %v741 = vadd.f32 %v577, %v740
  %742 = vmatmul.f32.gmra.mxu0 %v252
  %v743 = vpop.f32.mrf.mxu0
  %v744 = vadd.f32 %v580, %v743
  %745 = vmatmul.f32.gmra.mxu0 %v255
  %v746 = vpop.f32.mrf.mxu0
  %v747 = vadd.f32 %v583, %v746
  %748 = vmatmul.f32.gmra.mxu0 %v258
  %v749 = vpop.f32.mrf.mxu0
  %v750 = vadd.f32 %v586, %v749
  %751 = vmatmul.f32.gmra.mxu0 %v261
  %v752 = vpop.f32.mrf.mxu0
  %v753 = vadd.f32 %v589, %v752
  %754 = vmatmul.f32.gmra.mxu0 %v264
  %v755 = vpop.f32.mrf.mxu0
  %v756 = vadd.f32 %v592, %v755
  %757 = vmatmul.f32.gmra.mxu0 %v267
  %v758 = vpop.f32.mrf.mxu0
  %v759 = vadd.f32 %v595, %v758
  %760 = vmatmul.f32.gmra.mxu0 %v270
  %v761 = vpop.f32.mrf.mxu0
  %v762 = vadd.f32 %v598, %v761
  %763 = vmatmul.f32.gmra.mxu0 %v273
  %v764 = vpop.f32.mrf.mxu0
  %v765 = vadd.f32 %v601, %v764
  %766 = vmatmul.f32.gmra.mxu0 %v276
  %v767 = vpop.f32.mrf.mxu0
  %v768 = vadd.f32 %v604, %v767
  %769 = vmatmul.f32.gmra.mxu0 %v279
  %v770 = vpop.f32.mrf.mxu0
  %v771 = vadd.f32 %v607, %v770
  %772 = vmatmul.f32.gmra.mxu0 %v282
  %v773 = vpop.f32.mrf.mxu0
  %v774 = vadd.f32 %v610, %v773
  %775 = vmatmul.f32.gmra.mxu0 %v285
  %v776 = vpop.f32.mrf.mxu0
  %v777 = vadd.f32 %v613, %v776
  %778 = vmatmul.f32.gmra.mxu0 %v288
  %v779 = vpop.f32.mrf.mxu0
  %v780 = vadd.f32 %v616, %v779
  %781 = vmatmul.f32.gmra.mxu0 %v291
  %v782 = vpop.f32.mrf.mxu0
  %v783 = vadd.f32 %v619, %v782
  %784 = vmatmul.f32.gmra.mxu0 %v294
  %v785 = vpop.f32.mrf.mxu0
  %v786 = vadd.f32 %v622, %v785
  %787 = vmatmul.f32.gmra.mxu0 %v297
  %v788 = vpop.f32.mrf.mxu0
  %v789 = vadd.f32 %v625, %v788
  %790 = vmatmul.f32.gmra.mxu0 %v300
  %v791 = vpop.f32.mrf.mxu0
  %v792 = vadd.f32 %v628, %v791
  %793 = vmatmul.f32.gmra.mxu0 %v303
  %v794 = vpop.f32.mrf.mxu0
  %v795 = vadd.f32 %v631, %v794
  %796 = vmatmul.f32.gmra.mxu0 %v306
  %v797 = vpop.f32.mrf.mxu0
  %v798 = vadd.f32 %v634, %v797
  %799 = vmatmul.f32.gmra.mxu0 %v309
  %v800 = vpop.f32.mrf.mxu0
  %v801 = vadd.f32 %v637, %v800
  %802 = vmatmul.f32.gmra.mxu0 %v312
  %v803 = vpop.f32.mrf.mxu0
  %v804 = vadd.f32 %v640, %v803
  %805 = vmatmul.f32.gmra.mxu0 %v315
  %v806 = vpop.f32.mrf.mxu0
  %v807 = vadd.f32 %v643, %v806
  %808 = vmatmul.f32.gmra.mxu0 %v318
  %v809 = vpop.f32.mrf.mxu0
  %v810 = vadd.f32 %v646, %v809
  %811 = vmatmul.f32.gmra.mxu0 %v321
  %v812 = vpop.f32.mrf.mxu0
  %v813 = vadd.f32 %v649, %v812
  %814 = vmatmul.f32.gmra.mxu0 %v324
  %v815 = vpop.f32.mrf.mxu0
  %v816 = vadd.f32 %v652, %v815
  %817 = vmatmul.f32.gmra.mxu0 %v327
  %v818 = vpop.f32.mrf.mxu0
  %v819 = vadd.f32 %v655, %v818
  %820 = vmatmul.f32.gmra.mxu0 %v330
  %v821 = vpop.f32.mrf.mxu0
  %v822 = vadd.f32 %v658, %v821
  %823 = vmatmul.f32.gmra.mxu0 %v333
  %v824 = vpop.f32.mrf.mxu0
  %v825 = vadd.f32 %v661, %v824
  %826 = vmatmul.f32.gmra.mxu0 %v336
  %v827 = vpop.f32.mrf.mxu0
  %v828 = vadd.f32 %v664, %v827
  %829 = vmatmul.f32.gmra.mxu0 %v339
  %v830 = vpop.f32.mrf.mxu0
  %v831 = vadd.f32 %v667, %v830
  %832 = vmatmul.f32.gmra.mxu0 %v342
  %v833 = vpop.f32.mrf.mxu0
  %v834 = vadd.f32 %v670, %v833
  %835 = vmatmul.f32.gmra.mxu0 %v345
  %v836 = vpop.f32.mrf.mxu0
  %v837 = vadd.f32 %v673, %v836
  %838 = vdwg.mxu0
  %v839 = vperm.slane %v50, 0
  %v840 = vmul.f32 %v693, %v839
  %v841 = vmul.f32 %v696, %v839
  %v842 = vmul.f32 %v699, %v839
  %v843 = vmul.f32 %v702, %v839
  %v844 = vmul.f32 %v705, %v839
  %v845 = vmul.f32 %v708, %v839
  %v846 = vmul.f32 %v711, %v839
  %v847 = vmul.f32 %v714, %v839
  %v848 = vmul.f32 %v717, %v839
  %v849 = vmul.f32 %v720, %v839
  %v850 = vmul.f32 %v723, %v839
  %v851 = vmul.f32 %v726, %v839
  %v852 = vmul.f32 %v729, %v839
  %v853 = vmul.f32 %v732, %v839
  %v854 = vmul.f32 %v735, %v839
  %v855 = vmul.f32 %v738, %v839
  %v856 = vmul.f32 %v741, %v839
  %v857 = vmul.f32 %v744, %v839
  %v858 = vmul.f32 %v747, %v839
  %v859 = vmul.f32 %v750, %v839
  %v860 = vmul.f32 %v753, %v839
  %v861 = vmul.f32 %v756, %v839
  %v862 = vmul.f32 %v759, %v839
  %v863 = vmul.f32 %v762, %v839
  %v864 = vmul.f32 %v765, %v839
  %v865 = vmul.f32 %v768, %v839
  %v866 = vmul.f32 %v771, %v839
  %v867 = vmul.f32 %v774, %v839
  %v868 = vmul.f32 %v777, %v839
  %v869 = vmul.f32 %v780, %v839
  %v870 = vmul.f32 %v783, %v839
  %v871 = vmul.f32 %v786, %v839
  %v872 = vmul.f32 %v789, %v839
  %v873 = vmul.f32 %v792, %v839
  %v874 = vmul.f32 %v795, %v839
  %v875 = vmul.f32 %v798, %v839
  %v876 = vmul.f32 %v801, %v839
  %v877 = vmul.f32 %v804, %v839
  %v878 = vmul.f32 %v807, %v839
  %v879 = vmul.f32 %v810, %v839
  %v880 = vmul.f32 %v813, %v839
  %v881 = vmul.f32 %v816, %v839
  %v882 = vmul.f32 %v819, %v839
  %v883 = vmul.f32 %v822, %v839
  %v884 = vmul.f32 %v825, %v839
  %v885 = vmul.f32 %v828, %v839
  %v886 = vmul.f32 %v831, %v839
  %v887 = vmul.f32 %v834, %v839
  %v888 = vmul.f32 %v837, %v839
  %v889 = vperm.slane %v51, 0
  %v890 = vadd.f32 %v840, %v889
  %v891 = vadd.f32 %v841, %v889
  %v892 = vadd.f32 %v842, %v889
  %v893 = vadd.f32 %v843, %v889
  %v894 = vadd.f32 %v844, %v889
  %v895 = vadd.f32 %v845, %v889
  %v896 = vadd.f32 %v846, %v889
  %v897 = vadd.f32 %v847, %v889
  %v898 = vadd.f32 %v848, %v889
  %v899 = vadd.f32 %v849, %v889
  %v900 = vadd.f32 %v850, %v889
  %v901 = vadd.f32 %v851, %v889
  %v902 = vadd.f32 %v852, %v889
  %v903 = vadd.f32 %v853, %v889
  %v904 = vadd.f32 %v854, %v889
  %v905 = vadd.f32 %v855, %v889
  %v906 = vadd.f32 %v856, %v889
  %v907 = vadd.f32 %v857, %v889
  %v908 = vadd.f32 %v858, %v889
  %v909 = vadd.f32 %v859, %v889
  %v910 = vadd.f32 %v860, %v889
  %v911 = vadd.f32 %v861, %v889
  %v912 = vadd.f32 %v862, %v889
  %v913 = vadd.f32 %v863, %v889
  %v914 = vadd.f32 %v864, %v889
  %v915 = vadd.f32 %v865, %v889
  %v916 = vadd.f32 %v866, %v889
  %v917 = vadd.f32 %v867, %v889
  %v918 = vadd.f32 %v868, %v889
  %v919 = vadd.f32 %v869, %v889
  %v920 = vadd.f32 %v870, %v889
  %v921 = vadd.f32 %v871, %v889
  %v922 = vadd.f32 %v872, %v889
  %v923 = vadd.f32 %v873, %v889
  %v924 = vadd.f32 %v874, %v889
  %v925 = vadd.f32 %v875, %v889
  %v926 = vadd.f32 %v876, %v889
  %v927 = vadd.f32 %v877, %v889
  %v928 = vadd.f32 %v878, %v889
  %v929 = vadd.f32 %v879, %v889
  %v930 = vadd.f32 %v880, %v889
  %v931 = vadd.f32 %v881, %v889
  %v932 = vadd.f32 %v882, %v889
  %v933 = vadd.f32 %v883, %v889
  %v934 = vadd.f32 %v884, %v889
  %v935 = vadd.f32 %v885, %v889
  %v936 = vadd.f32 %v886, %v889
  %v937 = vadd.f32 %v887, %v889
  %v938 = vadd.f32 %v888, %v889
  %v939 = vmax.f32 %v890, 0.0
  %v940 = vmax.f32 %v891, 0.0
  %v941 = vmax.f32 %v892, 0.0
  %v942 = vmax.f32 %v893, 0.0
  %v943 = vmax.f32 %v894, 0.0
  %v944 = vmax.f32 %v895, 0.0
  %v945 = vmax.f32 %v896, 0.0
  %v946 = vmax.f32 %v897, 0.0
  %v947 = vmax.f32 %v898, 0.0
  %v948 = vmax.f32 %v899, 0.0
  %v949 = vmax.f32 %v900, 0.0
  %v950 = vmax.f32 %v901, 0.0
  %v951 = vmax.f32 %v902, 0.0
  %v952 = vmax.f32 %v903, 0.0
  %v953 = vmax.f32 %v904, 0.0
  %v954 = vmax.f32 %v905, 0.0
  %v955 = vmax.f32 %v906, 0.0
  %v956 = vmax.f32 %v907, 0.0
  %v957 = vmax.f32 %v908, 0.0
  %v958 = vmax.f32 %v909, 0.0
  %v959 = vmax.f32 %v910, 0.0
  %v960 = vmax.f32 %v911, 0.0
  %v961 = vmax.f32 %v912, 0.0
  %v962 = vmax.f32 %v913, 0.0
  %v963 = vmax.f32 %v914, 0.0
  %v964 = vmax.f32 %v915, 0.0
  %v965 = vmax.f32 %v916, 0.0
  %v966 = vmax.f32 %v917, 0.0
  %v967 = vmax.f32 %v918, 0.0
  %v968 = vmax.f32 %v919, 0.0
  %v969 = vmax.f32 %v920, 0.0
  %v970 = vmax.f32 %v921, 0.0
  %v971 = vmax.f32 %v922, 0.0
  %v972 = vmax.f32 %v923, 0.0
  %v973 = vmax.f32 %v924, 0.0
  %v974 = vmax.f32 %v925, 0.0
  %v975 = vmax.f32 %v926, 0.0
  %v976 = vmax.f32 %v927, 0.0
  %v977 = vmax.f32 %v928, 0.0
  %v978 = vmax.f32 %v929, 0.0
  %v979 = vmax.f32 %v930, 0.0
  %v980 = vmax.f32 %v931, 0.0
  %v981 = vmax.f32 %v932, 0.0
  %v982 = vmax.f32 %v933, 0.0
  %v983 = vmax.f32 %v934, 0.0
  %v984 = vmax.f32 %v935, 0.0
  %v985 = vmax.f32 %v936, 0.0
  %v986 = vmax.f32 %v937, 0.0
  %v987 = vmax.f32 %v938, 0.0
  %s988 = scalar_lea.vmem %s0, 1176
  %v989 = vld [vmem:[%s988] sm:$0xff]
  %v990 = vld [vmem:[%s988 + $0x8] sm:$0xff]
  %v991 = vld [vmem:[%s988 + $0x10] sm:$0xff]
  %v992 = vld [vmem:[%s988 + $0x18] sm:$0xff]
  %v993 = vld [vmem:[%s988 + $0x20] sm:$0xff]
  %v994 = vld [vmem:[%s988 + $0x28] sm:$0xff]
  %v995 = vld [vmem:[%s988 + $0x30] sm:$0xff]
  %v996 = vld [vmem:[%s988 + $0x38] sm:$0xff]
  %v997 = vld [vmem:[%s988 + $0x40] sm:$0xff]
  %v998 = vld [vmem:[%s988 + $0x48] sm:$0xff]
  %v999 = vld [vmem:[%s988 + $0x50] sm:$0xff]
  %v1000 = vld [vmem:[%s988 + $0x58] sm:$0xff]
  %v1001 = vld [vmem:[%s988 + $0x60] sm:$0xff]
  %v1002 = vld [vmem:[%s988 + $0x68] sm:$0xff]
  %v1003 = vld [vmem:[%s988 + $0x70] sm:$0xff]
  %v1004 = vld [vmem:[%s988 + $0x78] sm:$0xff]
  %v1005 = vld [vmem:[%s988 + $0x80] sm:$0xff]
  %v1006 = vld [vmem:[%s988 + $0x88] sm:$0xff]
  %v1007 = vld [vmem:[%s988 + $0x90] sm:$0xff]
  %v1008 = vld [vmem:[%s988 + $0x98] sm:$0xff]
  %v1009 = vld [vmem:[%s988 + $0xa0] sm:$0xff]
  %v1010 = vld [vmem:[%s988 + $0xa8] sm:$0xff]
  %v1011 = vld [vmem:[%s988 + $0xb0] sm:$0xff]
  %v1012 = vld [vmem:[%s988 + $0xb8] sm:$0xff]
  %v1013 = vld [vmem:[%s988 + $0xc0] sm:$0xff]
  %v1014 = vld [vmem:[%s988 + $0xc8] sm:$0xff]
  %v1015 = vld [vmem:[%s988 + $0xd0] sm:$0xff]
  %v1016 = vld [vmem:[%s988 + $0xd8] sm:$0xff]
  %v1017 = vld [vmem:[%s988 + $0xe0] sm:$0xff]
  %v1018 = vld [vmem:[%s988 + $0xe8] sm:$0xff]
  %v1019 = vld [vmem:[%s988 + $0xf0] sm:$0xff]
  %v1020 = vld [vmem:[%s988 + $0xf8] sm:$0xff]
  %v1021 = vld [vmem:[%s988 + $0x100] sm:$0xff]
  %v1022 = vld [vmem:[%s988 + $0x108] sm:$0xff]
  %v1023 = vld [vmem:[%s988 + $0x110] sm:$0xff]
  %v1024 = vld [vmem:[%s988 + $0x118] sm:$0xff]
  %v1025 = vld [vmem:[%s988 + $0x120] sm:$0xff]
  %v1026 = vld [vmem:[%s988 + $0x128] sm:$0xff]
  %v1027 = vld [vmem:[%s988 + $0x130] sm:$0xff]
  %v1028 = vld [vmem:[%s988 + $0x138] sm:$0xff]
  %v1029 = vld [vmem:[%s988 + $0x140] sm:$0xff]
  %v1030 = vld [vmem:[%s988 + $0x148] sm:$0xff]
  %v1031 = vld [vmem:[%s988 + $0x150] sm:$0xff]
  %v1032 = vld [vmem:[%s988 + $0x158] sm:$0xff]
  %v1033 = vld [vmem:[%s988 + $0x160] sm:$0xff]
  %v1034 = vld [vmem:[%s988 + $0x168] sm:$0xff]
  %v1035 = vld [vmem:[%s988 + $0x170] sm:$0xff]
  %v1036 = vld [vmem:[%s988 + $0x178] sm:$0xff]
  %v1037 = vld [vmem:[%s988 + $0x180] sm:$0xff]
  %v1038 = vld [vmem:[%s988 + $0x188] sm:$0xff]
  %v1039 = vld [vmem:[%s988 + $0x190] sm:$0xff]
  %v1040 = vld [vmem:[%s988 + $0x198] sm:$0xff]
  %v1041 = vld [vmem:[%s988 + $0x1a0] sm:$0xff]
  %v1042 = vld [vmem:[%s988 + $0x1a8] sm:$0xff]
  %v1043 = vld [vmem:[%s988 + $0x1b0] sm:$0xff]
  %v1044 = vld [vmem:[%s988 + $0x1b8] sm:$0xff]
  %v1045 = vld [vmem:[%s988 + $0x1c0] sm:$0xff]
  %v1046 = vld [vmem:[%s988 + $0x1c8] sm:$0xff]
  %v1047 = vld [vmem:[%s988 + $0x1d0] sm:$0xff]
  %v1048 = vld [vmem:[%s988 + $0x1d8] sm:$0xff]
  %v1049 = vld [vmem:[%s988 + $0x1e0] sm:$0xff]
  %v1050 = vld [vmem:[%s988 + $0x1e8] sm:$0xff]
  %v1051 = vld [vmem:[%s988 + $0x1f0] sm:$0xff]
  %v1052 = vld [vmem:[%s988 + $0x1f8] sm:$0xff]
  %v1053 = vld [vmem:[%s988 + $0x200] sm:$0xff]
  %v1054 = vld [vmem:[%s988 + $0x208] sm:$0xff]
  %v1055 = vld [vmem:[%s988 + $0x210] sm:$0xff]
  %v1056 = vld [vmem:[%s988 + $0x218] sm:$0xff]
  %v1057 = vld [vmem:[%s988 + $0x220] sm:$0xff]
  %v1058 = vld [vmem:[%s988 + $0x228] sm:$0xff]
  %v1059 = vld [vmem:[%s988 + $0x230] sm:$0xff]
  %v1060 = vld [vmem:[%s988 + $0x238] sm:$0xff]
  %v1061 = vld [vmem:[%s988 + $0x240] sm:$0xff]
  %v1062 = vld [vmem:[%s988 + $0x248] sm:$0xff]
  %v1063 = vld [vmem:[%s988 + $0x250] sm:$0xff]
  %v1064 = vld [vmem:[%s988 + $0x258] sm:$0xff]
  %v1065 = vld [vmem:[%s988 + $0x260] sm:$0xff]
  %v1066 = vld [vmem:[%s988 + $0x268] sm:$0xff]
  %v1067 = vld [vmem:[%s988 + $0x270] sm:$0xff]
  %v1068 = vld [vmem:[%s988 + $0x278] sm:$0xff]
  %v1069 = vld [vmem:[%s988 + $0x280] sm:$0xff]
  %v1070 = vld [vmem:[%s988 + $0x288] sm:$0xff]
  %v1071 = vld [vmem:[%s988 + $0x290] sm:$0xff]
  %v1072 = vld [vmem:[%s988 + $0x298] sm:$0xff]
  %v1073 = vld [vmem:[%s988 + $0x2a0] sm:$0xff]
  %v1074 = vld [vmem:[%s988 + $0x2a8] sm:$0xff]
  %v1075 = vld [vmem:[%s988 + $0x2b0] sm:$0xff]
  %v1076 = vld [vmem:[%s988 + $0x2b8] sm:$0xff]
  %v1077 = vld [vmem:[%s988 + $0x2c0] sm:$0xff]
  %v1078 = vld [vmem:[%s988 + $0x2c8] sm:$0xff]
  %v1079 = vld [vmem:[%s988 + $0x2d0] sm:$0xff]
  %v1080 = vld [vmem:[%s988 + $0x2d8] sm:$0xff]
  %v1081 = vld [vmem:[%s988 + $0x2e0] sm:$0xff]
  %v1082 = vld [vmem:[%s988 + $0x2e8] sm:$0xff]
  %v1083 = vld [vmem:[%s988 + $0x2f0] sm:$0xff]
  %v1084 = vld [vmem:[%s988 + $0x2f8] sm:$0xff]
  %v1085 = vld [vmem:[%s988 + $0x300] sm:$0xff]
  %v1086 = vld [vmem:[%s988 + $0x308] sm:$0xff]
  %v1087 = vld [vmem:[%s988 + $0x310] sm:$0xff]
  %v1088 = vld [vmem:[%s988 + $0x318] sm:$0xff]
  %v1089 = vld [vmem:[%s988 + $0x320] sm:$0xff]
  %v1090 = vld [vmem:[%s988 + $0x328] sm:$0xff]
  %v1091 = vld [vmem:[%s988 + $0x330] sm:$0xff]
  %v1092 = vld [vmem:[%s988 + $0x338] sm:$0xff]
  %v1093 = vld [vmem:[%s988 + $0x340] sm:$0xff]
  %v1094 = vld [vmem:[%s988 + $0x348] sm:$0xff]
  %v1095 = vld [vmem:[%s988 + $0x350] sm:$0xff]
  %v1096 = vld [vmem:[%s988 + $0x358] sm:$0xff]
  %v1097 = vld [vmem:[%s988 + $0x360] sm:$0xff]
  %v1098 = vld [vmem:[%s988 + $0x368] sm:$0xff]
  %v1099 = vld [vmem:[%s988 + $0x370] sm:$0xff]
  %v1100 = vld [vmem:[%s988 + $0x378] sm:$0xff]
  %v1101 = vld [vmem:[%s988 + $0x380] sm:$0xff]
  %v1102 = vld [vmem:[%s988 + $0x388] sm:$0xff]
  %v1103 = vld [vmem:[%s988 + $0x390] sm:$0xff]
  %v1104 = vld [vmem:[%s988 + $0x398] sm:$0xff]
  %v1105 = vld [vmem:[%s988 + $0x3a0] sm:$0xff]
  %v1106 = vld [vmem:[%s988 + $0x3a8] sm:$0xff]
  %v1107 = vld [vmem:[%s988 + $0x3b0] sm:$0xff]
  %v1108 = vld [vmem:[%s988 + $0x3b8] sm:$0xff]
  %v1109 = vld [vmem:[%s988 + $0x3c0] sm:$0xff]
  %v1110 = vld [vmem:[%s988 + $0x3c8] sm:$0xff]
  %v1111 = vld [vmem:[%s988 + $0x3d0] sm:$0xff]
  %v1112 = vld [vmem:[%s988 + $0x3d8] sm:$0xff]
  %v1113 = vld [vmem:[%s988 + $0x3e0] sm:$0xff]
  %v1114 = vld [vmem:[%s988 + $0x3e8] sm:$0xff]
  %v1115 = vld [vmem:[%s988 + $0x3f0] sm:$0xff]
  %v1116 = vld [vmem:[%s988 + $0x3f8] sm:$0xff]
  %v1117 = vld [vmem:[%s988 + $0x400] sm:$0xff]
  %v1118 = vld [vmem:[%s988 + $0x408] sm:$0xff]
  %v1119 = vld [vmem:[%s988 + $0x410] sm:$0xff]
  %v1120 = vld [vmem:[%s988 + $0x418] sm:$0xff]
  %v1121 = vld [vmem:[%s988 + $0x420] sm:$0xff]
  %v1122 = vld [vmem:[%s988 + $0x428] sm:$0xff]
  %v1123 = vld [vmem:[%s988 + $0x430] sm:$0xff]
  %v1124 = vld [vmem:[%s988 + $0x438] sm:$0xff]
  %v1125 = vld [vmem:[%s988 + $0x440] sm:$0xff]
  %v1126 = vld [vmem:[%s988 + $0x448] sm:$0xff]
  %v1127 = vld [vmem:[%s988 + $0x450] sm:$0xff]
  %v1128 = vld [vmem:[%s988 + $0x458] sm:$0xff]
  %v1129 = vld [vmem:[%s988 + $0x460] sm:$0xff]
  %v1130 = vld [vmem:[%s988 + $0x468] sm:$0xff]
  %v1131 = vld [vmem:[%s988 + $0x470] sm:$0xff]
  %v1132 = vld [vmem:[%s988 + $0x478] sm:$0xff]
  %v1133 = vld [vmem:[%s988 + $0x480] sm:$0xff]
  %v1134 = vld [vmem:[%s988 + $0x488] sm:$0xff]
  %v1135 = vld [vmem:[%s988 + $0x490] sm:$0xff]
  %v1137 = vsel %vm199, %v991, 0
  %v1140 = vsel %vm199, %v994, 0
  %v1143 = vsel %vm199, %v997, 0
  %v1146 = vsel %vm199, %v1000, 0
  %v1149 = vsel %vm199, %v1003, 0
  %v1152 = vsel %vm199, %v1006, 0
  %v1155 = vsel %vm199, %v1009, 0
  %v1158 = vsel %vm199, %v1012, 0
  %v1161 = vsel %vm199, %v1015, 0
  %v1164 = vsel %vm199, %v1018, 0
  %v1167 = vsel %vm199, %v1021, 0
  %v1170 = vsel %vm199, %v1024, 0
  %v1173 = vsel %vm199, %v1027, 0
  %v1176 = vsel %vm199, %v1030, 0
  %v1179 = vsel %vm199, %v1033, 0
  %v1182 = vsel %vm199, %v1036, 0
  %v1185 = vsel %vm199, %v1039, 0
  %v1188 = vsel %vm199, %v1042, 0
  %v1191 = vsel %vm199, %v1045, 0
  %v1194 = vsel %vm199, %v1048, 0
  %v1197 = vsel %vm199, %v1051, 0
  %v1200 = vsel %vm199, %v1054, 0
  %v1203 = vsel %vm199, %v1057, 0
  %v1206 = vsel %vm199, %v1060, 0
  %v1209 = vsel %vm199, %v1063, 0
  %v1212 = vsel %vm199, %v1066, 0
  %v1215 = vsel %vm199, %v1069, 0
  %v1218 = vsel %vm199, %v1072, 0
  %v1221 = vsel %vm199, %v1075, 0
  %v1224 = vsel %vm199, %v1078, 0
  %v1227 = vsel %vm199, %v1081, 0
  %v1230 = vsel %vm199, %v1084, 0
  %v1233 = vsel %vm199, %v1087, 0
  %v1236 = vsel %vm199, %v1090, 0
  %v1239 = vsel %vm199, %v1093, 0
  %v1242 = vsel %vm199, %v1096, 0
  %v1245 = vsel %vm199, %v1099, 0
  %v1248 = vsel %vm199, %v1102, 0
  %v1251 = vsel %vm199, %v1105, 0
  %v1254 = vsel %vm199, %v1108, 0
  %v1257 = vsel %vm199, %v1111, 0
  %v1260 = vsel %vm199, %v1114, 0
  %v1263 = vsel %vm199, %v1117, 0
  %v1266 = vsel %vm199, %v1120, 0
  %v1269 = vsel %vm199, %v1123, 0
  %v1272 = vsel %vm199, %v1126, 0
  %v1275 = vsel %vm199, %v1129, 0
  %v1278 = vsel %vm199, %v1132, 0
  %v1281 = vsel %vm199, %v1135, 0
  %1283 = vmatpush.msra.mxu0 %v29
  %1284 = vmatpush.msra.mxu0 %v28
  %1285 = vmatpush.msra.mxu0 %v27
  %1286 = vmatpush.msra.mxu0 %v26
  %1287 = vmatpush.msra.mxu0 %v25
  %1288 = vmatpush.msra.mxu0 %v24
  %1289 = vmatpush.msra.mxu0 %v23
  %1290 = vmatpush.msra.mxu0 %v22
  %1291 = vmatpush.msra.mxu0 %v21
  %1292 = vmatpush.msra.mxu0 %v20
  %1293 = vmatpush.msra.mxu0 %v19
  %1294 = vmatpush.msra.mxu0 %v18
  %1295 = vmatpush.msra.mxu0 %v17
  %1296 = vmatpush.msra.mxu0 %v16
  %1297 = vmatpush.msra.mxu0 %v15
  %1298 = vmatpush.msra.mxu0 %v14
  %1299 = vmatmul.f32.gmra.mxu0 %v989
  %v1300 = vpop.f32.mrf.mxu0
  %v1301 = vadd.f32 0.0, %v1300
  %1302 = vmatmul.f32.gmra.mxu0 %v992
  %v1303 = vpop.f32.mrf.mxu0
  %v1304 = vadd.f32 0.0, %v1303
  %1305 = vmatmul.f32.gmra.mxu0 %v995
  %v1306 = vpop.f32.mrf.mxu0
  %v1307 = vadd.f32 0.0, %v1306
  %1308 = vmatmul.f32.gmra.mxu0 %v998
  %v1309 = vpop.f32.mrf.mxu0
  %v1310 = vadd.f32 0.0, %v1309
  %1311 = vmatmul.f32.gmra.mxu0 %v1001
  %v1312 = vpop.f32.mrf.mxu0
  %v1313 = vadd.f32 0.0, %v1312
  %1314 = vmatmul.f32.gmra.mxu0 %v1004
  %v1315 = vpop.f32.mrf.mxu0
  %v1316 = vadd.f32 0.0, %v1315
  %1317 = vmatmul.f32.gmra.mxu0 %v1007
  %v1318 = vpop.f32.mrf.mxu0
  %v1319 = vadd.f32 0.0, %v1318
  %1320 = vmatmul.f32.gmra.mxu0 %v1010
  %v1321 = vpop.f32.mrf.mxu0
  %v1322 = vadd.f32 0.0, %v1321
  %1323 = vmatmul.f32.gmra.mxu0 %v1013
  %v1324 = vpop.f32.mrf.mxu0
  %v1325 = vadd.f32 0.0, %v1324
  %1326 = vmatmul.f32.gmra.mxu0 %v1016
  %v1327 = vpop.f32.mrf.mxu0
  %v1328 = vadd.f32 0.0, %v1327
  %1329 = vmatmul.f32.gmra.mxu0 %v1019
  %v1330 = vpop.f32.mrf.mxu0
  %v1331 = vadd.f32 0.0, %v1330
  %1332 = vmatmul.f32.gmra.mxu0 %v1022
  %v1333 = vpop.f32.mrf.mxu0
  %v1334 = vadd.f32 0.0, %v1333
  %1335 = vmatmul.f32.gmra.mxu0 %v1025
  %v1336 = vpop.f32.mrf.mxu0
  %v1337 = vadd.f32 0.0, %v1336
  %1338 = vmatmul.f32.gmra.mxu0 %v1028
  %v1339 = vpop.f32.mrf.mxu0
  %v1340 = vadd.f32 0.0, %v1339
  %1341 = vmatmul.f32.gmra.mxu0 %v1031
  %v1342 = vpop.f32.mrf.mxu0
  %v1343 = vadd.f32 0.0, %v1342
  %1344 = vmatmul.f32.gmra.mxu0 %v1034
  %v1345 = vpop.f32.mrf.mxu0
  %v1346 = vadd.f32 0.0, %v1345
  %1347 = vmatmul.f32.gmra.mxu0 %v1037
  %v1348 = vpop.f32.mrf.mxu0
  %v1349 = vadd.f32 0.0, %v1348
  %1350 = vmatmul.f32.gmra.mxu0 %v1040
  %v1351 = vpop.f32.mrf.mxu0
  %v1352 = vadd.f32 0.0, %v1351
  %1353 = vmatmul.f32.gmra.mxu0 %v1043
  %v1354 = vpop.f32.mrf.mxu0
  %v1355 = vadd.f32 0.0, %v1354
  %1356 = vmatmul.f32.gmra.mxu0 %v1046
  %v1357 = vpop.f32.mrf.mxu0
  %v1358 = vadd.f32 0.0, %v1357
  %1359 = vmatmul.f32.gmra.mxu0 %v1049
  %v1360 = vpop.f32.mrf.mxu0
  %v1361 = vadd.f32 0.0, %v1360
  %1362 = vmatmul.f32.gmra.mxu0 %v1052
  %v1363 = vpop.f32.mrf.mxu0
  %v1364 = vadd.f32 0.0, %v1363
  %1365 = vmatmul.f32.gmra.mxu0 %v1055
  %v1366 = vpop.f32.mrf.mxu0
  %v1367 = vadd.f32 0.0, %v1366
  %1368 = vmatmul.f32.gmra.mxu0 %v1058
  %v1369 = vpop.f32.mrf.mxu0
  %v1370 = vadd.f32 0.0, %v1369
  %1371 = vmatmul.f32.gmra.mxu0 %v1061
  %v1372 = vpop.f32.mrf.mxu0
  %v1373 = vadd.f32 0.0, %v1372
  %1374 = vmatmul.f32.gmra.mxu0 %v1064
  %v1375 = vpop.f32.mrf.mxu0
  %v1376 = vadd.f32 0.0, %v1375
  %1377 = vmatmul.f32.gmra.mxu0 %v1067
  %v1378 = vpop.f32.mrf.mxu0
  %v1379 = vadd.f32 0.0, %v1378
  %1380 = vmatmul.f32.gmra.mxu0 %v1070
  %v1381 = vpop.f32.mrf.mxu0
  %v1382 = vadd.f32 0.0, %v1381
  %1383 = vmatmul.f32.gmra.mxu0 %v1073
  %v1384 = vpop.f32.mrf.mxu0
  %v1385 = vadd.f32 0.0, %v1384
  %1386 = vmatmul.f32.gmra.mxu0 %v1076
  %v1387 = vpop.f32.mrf.mxu0
  %v1388 = vadd.f32 0.0, %v1387
  %1389 = vmatmul.f32.gmra.mxu0 %v1079
  %v1390 = vpop.f32.mrf.mxu0
  %v1391 = vadd.f32 0.0, %v1390
  %1392 = vmatmul.f32.gmra.mxu0 %v1082
  %v1393 = vpop.f32.mrf.mxu0
  %v1394 = vadd.f32 0.0, %v1393
  %1395 = vmatmul.f32.gmra.mxu0 %v1085
  %v1396 = vpop.f32.mrf.mxu0
  %v1397 = vadd.f32 0.0, %v1396
  %1398 = vmatmul.f32.gmra.mxu0 %v1088
  %v1399 = vpop.f32.mrf.mxu0
  %v1400 = vadd.f32 0.0, %v1399
  %1401 = vmatmul.f32.gmra.mxu0 %v1091
  %v1402 = vpop.f32.mrf.mxu0
  %v1403 = vadd.f32 0.0, %v1402
  %1404 = vmatmul.f32.gmra.mxu0 %v1094
  %v1405 = vpop.f32.mrf.mxu0
  %v1406 = vadd.f32 0.0, %v1405
  %1407 = vmatmul.f32.gmra.mxu0 %v1097
  %v1408 = vpop.f32.mrf.mxu0
  %v1409 = vadd.f32 0.0, %v1408
  %1410 = vmatmul.f32.gmra.mxu0 %v1100
  %v1411 = vpop.f32.mrf.mxu0
  %v1412 = vadd.f32 0.0, %v1411
  %1413 = vmatmul.f32.gmra.mxu0 %v1103
  %v1414 = vpop.f32.mrf.mxu0
  %v1415 = vadd.f32 0.0, %v1414
  %1416 = vmatmul.f32.gmra.mxu0 %v1106
  %v1417 = vpop.f32.mrf.mxu0
  %v1418 = vadd.f32 0.0, %v1417
  %1419 = vmatmul.f32.gmra.mxu0 %v1109
  %v1420 = vpop.f32.mrf.mxu0
  %v1421 = vadd.f32 0.0, %v1420
  %1422 = vmatmul.f32.gmra.mxu0 %v1112
  %v1423 = vpop.f32.mrf.mxu0
  %v1424 = vadd.f32 0.0, %v1423
  %1425 = vmatmul.f32.gmra.mxu0 %v1115
  %v1426 = vpop.f32.mrf.mxu0
  %v1427 = vadd.f32 0.0, %v1426
  %1428 = vmatmul.f32.gmra.mxu0 %v1118
  %v1429 = vpop.f32.mrf.mxu0
  %v1430 = vadd.f32 0.0, %v1429
  %1431 = vmatmul.f32.gmra.mxu0 %v1121
  %v1432 = vpop.f32.mrf.mxu0
  %v1433 = vadd.f32 0.0, %v1432
  %1434 = vmatmul.f32.gmra.mxu0 %v1124
  %v1435 = vpop.f32.mrf.mxu0
  %v1436 = vadd.f32 0.0, %v1435
  %1437 = vmatmul.f32.gmra.mxu0 %v1127
  %v1438 = vpop.f32.mrf.mxu0
  %v1439 = vadd.f32 0.0, %v1438
  %1440 = vmatmul.f32.gmra.mxu0 %v1130
  %v1441 = vpop.f32.mrf.mxu0
  %v1442 = vadd.f32 0.0, %v1441
  %1443 = vmatmul.f32.gmra.mxu0 %v1133
  %v1444 = vpop.f32.mrf.mxu0
  %v1445 = vadd.f32 0.0, %v1444
  %1446 = vdwg.mxu0
  %1447 = vmatpush.msra.mxu0 %v45
  %1448 = vmatpush.msra.mxu0 %v44
  %1449 = vmatpush.msra.mxu0 %v43
  %1450 = vmatpush.msra.mxu0 %v42
  %1451 = vmatpush.msra.mxu0 %v41
  %1452 = vmatpush.msra.mxu0 %v40
  %1453 = vmatpush.msra.mxu0 %v39
  %1454 = vmatpush.msra.mxu0 %v38
  %1455 = vmatpush.msra.mxu0 %v37
  %1456 = vmatpush.msra.mxu0 %v36
  %1457 = vmatpush.msra.mxu0 %v35
  %1458 = vmatpush.msra.mxu0 %v34
  %1459 = vmatpush.msra.mxu0 %v33
  %1460 = vmatpush.msra.mxu0 %v32
  %1461 = vmatpush.msra.mxu0 %v31
  %1462 = vmatpush.msra.mxu0 %v30
  %1463 = vmatmul.f32.gmra.mxu0 %v990
  %v1464 = vpop.f32.mrf.mxu0
  %v1465 = vadd.f32 %v1301, %v1464
  %1466 = vmatmul.f32.gmra.mxu0 %v993
  %v1467 = vpop.f32.mrf.mxu0
  %v1468 = vadd.f32 %v1304, %v1467
  %1469 = vmatmul.f32.gmra.mxu0 %v996
  %v1470 = vpop.f32.mrf.mxu0
  %v1471 = vadd.f32 %v1307, %v1470
  %1472 = vmatmul.f32.gmra.mxu0 %v999
  %v1473 = vpop.f32.mrf.mxu0
  %v1474 = vadd.f32 %v1310, %v1473
  %1475 = vmatmul.f32.gmra.mxu0 %v1002
  %v1476 = vpop.f32.mrf.mxu0
  %v1477 = vadd.f32 %v1313, %v1476
  %1478 = vmatmul.f32.gmra.mxu0 %v1005
  %v1479 = vpop.f32.mrf.mxu0
  %v1480 = vadd.f32 %v1316, %v1479
  %1481 = vmatmul.f32.gmra.mxu0 %v1008
  %v1482 = vpop.f32.mrf.mxu0
  %v1483 = vadd.f32 %v1319, %v1482
  %1484 = vmatmul.f32.gmra.mxu0 %v1011
  %v1485 = vpop.f32.mrf.mxu0
  %v1486 = vadd.f32 %v1322, %v1485
  %1487 = vmatmul.f32.gmra.mxu0 %v1014
  %v1488 = vpop.f32.mrf.mxu0
  %v1489 = vadd.f32 %v1325, %v1488
  %1490 = vmatmul.f32.gmra.mxu0 %v1017
  %v1491 = vpop.f32.mrf.mxu0
  %v1492 = vadd.f32 %v1328, %v1491
  %1493 = vmatmul.f32.gmra.mxu0 %v1020
  %v1494 = vpop.f32.mrf.mxu0
  %v1495 = vadd.f32 %v1331, %v1494
  %1496 = vmatmul.f32.gmra.mxu0 %v1023
  %v1497 = vpop.f32.mrf.mxu0
  %v1498 = vadd.f32 %v1334, %v1497
  %1499 = vmatmul.f32.gmra.mxu0 %v1026
  %v1500 = vpop.f32.mrf.mxu0
  %v1501 = vadd.f32 %v1337, %v1500
  %1502 = vmatmul.f32.gmra.mxu0 %v1029
  %v1503 = vpop.f32.mrf.mxu0
  %v1504 = vadd.f32 %v1340, %v1503
  %1505 = vmatmul.f32.gmra.mxu0 %v1032
  %v1506 = vpop.f32.mrf.mxu0
  %v1507 = vadd.f32 %v1343, %v1506
  %1508 = vmatmul.f32.gmra.mxu0 %v1035
  %v1509 = vpop.f32.mrf.mxu0
  %v1510 = vadd.f32 %v1346, %v1509
  %1511 = vmatmul.f32.gmra.mxu0 %v1038
  %v1512 = vpop.f32.mrf.mxu0
  %v1513 = vadd.f32 %v1349, %v1512
  %1514 = vmatmul.f32.gmra.mxu0 %v1041
  %v1515 = vpop.f32.mrf.mxu0
  %v1516 = vadd.f32 %v1352, %v1515
  %1517 = vmatmul.f32.gmra.mxu0 %v1044
  %v1518 = vpop.f32.mrf.mxu0
  %v1519 = vadd.f32 %v1355, %v1518
  %1520 = vmatmul.f32.gmra.mxu0 %v1047
  %v1521 = vpop.f32.mrf.mxu0
  %v1522 = vadd.f32 %v1358, %v1521
  %1523 = vmatmul.f32.gmra.mxu0 %v1050
  %v1524 = vpop.f32.mrf.mxu0
  %v1525 = vadd.f32 %v1361, %v1524
  %1526 = vmatmul.f32.gmra.mxu0 %v1053
  %v1527 = vpop.f32.mrf.mxu0
  %v1528 = vadd.f32 %v1364, %v1527
  %1529 = vmatmul.f32.gmra.mxu0 %v1056
  %v1530 = vpop.f32.mrf.mxu0
  %v1531 = vadd.f32 %v1367, %v1530
  %1532 = vmatmul.f32.gmra.mxu0 %v1059
  %v1533 = vpop.f32.mrf.mxu0
  %v1534 = vadd.f32 %v1370, %v1533
  %1535 = vmatmul.f32.gmra.mxu0 %v1062
  %v1536 = vpop.f32.mrf.mxu0
  %v1537 = vadd.f32 %v1373, %v1536
  %1538 = vmatmul.f32.gmra.mxu0 %v1065
  %v1539 = vpop.f32.mrf.mxu0
  %v1540 = vadd.f32 %v1376, %v1539
  %1541 = vmatmul.f32.gmra.mxu0 %v1068
  %v1542 = vpop.f32.mrf.mxu0
  %v1543 = vadd.f32 %v1379, %v1542
  %1544 = vmatmul.f32.gmra.mxu0 %v1071
  %v1545 = vpop.f32.mrf.mxu0
  %v1546 = vadd.f32 %v1382, %v1545
  %1547 = vmatmul.f32.gmra.mxu0 %v1074
  %v1548 = vpop.f32.mrf.mxu0
  %v1549 = vadd.f32 %v1385, %v1548
  %1550 = vmatmul.f32.gmra.mxu0 %v1077
  %v1551 = vpop.f32.mrf.mxu0
  %v1552 = vadd.f32 %v1388, %v1551
  %1553 = vmatmul.f32.gmra.mxu0 %v1080
  %v1554 = vpop.f32.mrf.mxu0
  %v1555 = vadd.f32 %v1391, %v1554
  %1556 = vmatmul.f32.gmra.mxu0 %v1083
  %v1557 = vpop.f32.mrf.mxu0
  %v1558 = vadd.f32 %v1394, %v1557
  %1559 = vmatmul.f32.gmra.mxu0 %v1086
  %v1560 = vpop.f32.mrf.mxu0
  %v1561 = vadd.f32 %v1397, %v1560
  %1562 = vmatmul.f32.gmra.mxu0 %v1089
  %v1563 = vpop.f32.mrf.mxu0
  %v1564 = vadd.f32 %v1400, %v1563
  %1565 = vmatmul.f32.gmra.mxu0 %v1092
  %v1566 = vpop.f32.mrf.mxu0
  %v1567 = vadd.f32 %v1403, %v1566
  %1568 = vmatmul.f32.gmra.mxu0 %v1095
  %v1569 = vpop.f32.mrf.mxu0
  %v1570 = vadd.f32 %v1406, %v1569
  %1571 = vmatmul.f32.gmra.mxu0 %v1098
  %v1572 = vpop.f32.mrf.mxu0
  %v1573 = vadd.f32 %v1409, %v1572
  %1574 = vmatmul.f32.gmra.mxu0 %v1101
  %v1575 = vpop.f32.mrf.mxu0
  %v1576 = vadd.f32 %v1412, %v1575
  %1577 = vmatmul.f32.gmra.mxu0 %v1104
  %v1578 = vpop.f32.mrf.mxu0
  %v1579 = vadd.f32 %v1415, %v1578
  %1580 = vmatmul.f32.gmra.mxu0 %v1107
  %v1581 = vpop.f32.mrf.mxu0
  %v1582 = vadd.f32 %v1418, %v1581
  %1583 = vmatmul.f32.gmra.mxu0 %v1110
  %v1584 = vpop.f32.mrf.mxu0
  %v1585 = vadd.f32 %v1421, %v1584
  %1586 = vmatmul.f32.gmra.mxu0 %v1113
  %v1587 = vpop.f32.mrf.mxu0
  %v1588 = vadd.f32 %v1424, %v1587
  %1589 = vmatmul.f32.gmra.mxu0 %v1116
  %v1590 = vpop.f32.mrf.mxu0
  %v1591 = vadd.f32 %v1427, %v1590
  %1592 = vmatmul.f32.gmra.mxu0 %v1119
  %v1593 = vpop.f32.mrf.mxu0
  %v1594 = vadd.f32 %v1430, %v1593
  %1595 = vmatmul.f32.gmra.mxu0 %v1122
  %v1596 = vpop.f32.mrf.mxu0
  %v1597 = vadd.f32 %v1433, %v1596
  %1598 = vmatmul.f32.gmra.mxu0 %v1125
  %v1599 = vpop.f32.mrf.mxu0
  %v1600 = vadd.f32 %v1436, %v1599
  %1601 = vmatmul.f32.gmra.mxu0 %v1128
  %v1602 = vpop.f32.mrf.mxu0
  %v1603 = vadd.f32 %v1439, %v1602
  %1604 = vmatmul.f32.gmra.mxu0 %v1131
  %v1605 = vpop.f32.mrf.mxu0
  %v1606 = vadd.f32 %v1442, %v1605
  %1607 = vmatmul.f32.gmra.mxu0 %v1134
  %v1608 = vpop.f32.mrf.mxu0
  %v1609 = vadd.f32 %v1445, %v1608
  %1610 = vdwg.mxu0
  %1611 = vmatpush.msra.mxu0 0.0
  %1612 = vmatpush.msra.mxu0 0.0
  %1613 = vmatpush.msra.mxu0 0.0
  %1614 = vmatpush.msra.mxu0 0.0
  %1615 = vmatpush.msra.mxu0 0.0
  %1616 = vmatpush.msra.mxu0 0.0
  %1617 = vmatpush.msra.mxu0 0.0
  %1618 = vmatpush.msra.mxu0 0.0
  %1619 = vmatpush.msra.mxu0 0.0
  %1620 = vmatpush.msra.mxu0 0.0
  %1621 = vmatpush.msra.mxu0 0.0
  %1622 = vmatpush.msra.mxu0 0.0
  %1623 = vmatpush.msra.mxu0 %v49
  %1624 = vmatpush.msra.mxu0 %v48
  %1625 = vmatpush.msra.mxu0 %v47
  %1626 = vmatpush.msra.mxu0 %v46
  %1627 = vmatmul.f32.gmra.mxu0 %v1137
  %v1628 = vpop.f32.mrf.mxu0
  %v1629 = vadd.f32 %v1465, %v1628
  %1630 = vmatmul.f32.gmra.mxu0 %v1140
  %v1631 = vpop.f32.mrf.mxu0
  %v1632 = vadd.f32 %v1468, %v1631
  %1633 = vmatmul.f32.gmra.mxu0 %v1143
  %v1634 = vpop.f32.mrf.mxu0
  %v1635 = vadd.f32 %v1471, %v1634
  %1636 = vmatmul.f32.gmra.mxu0 %v1146
  %v1637 = vpop.f32.mrf.mxu0
  %v1638 = vadd.f32 %v1474, %v1637
  %1639 = vmatmul.f32.gmra.mxu0 %v1149
  %v1640 = vpop.f32.mrf.mxu0
  %v1641 = vadd.f32 %v1477, %v1640
  %1642 = vmatmul.f32.gmra.mxu0 %v1152
  %v1643 = vpop.f32.mrf.mxu0
  %v1644 = vadd.f32 %v1480, %v1643
  %1645 = vmatmul.f32.gmra.mxu0 %v1155
  %v1646 = vpop.f32.mrf.mxu0
  %v1647 = vadd.f32 %v1483, %v1646
  %1648 = vmatmul.f32.gmra.mxu0 %v1158
  %v1649 = vpop.f32.mrf.mxu0
  %v1650 = vadd.f32 %v1486, %v1649
  %1651 = vmatmul.f32.gmra.mxu0 %v1161
  %v1652 = vpop.f32.mrf.mxu0
  %v1653 = vadd.f32 %v1489, %v1652
  %1654 = vmatmul.f32.gmra.mxu0 %v1164
  %v1655 = vpop.f32.mrf.mxu0
  %v1656 = vadd.f32 %v1492, %v1655
  %1657 = vmatmul.f32.gmra.mxu0 %v1167
  %v1658 = vpop.f32.mrf.mxu0
  %v1659 = vadd.f32 %v1495, %v1658
  %1660 = vmatmul.f32.gmra.mxu0 %v1170
  %v1661 = vpop.f32.mrf.mxu0
  %v1662 = vadd.f32 %v1498, %v1661
  %1663 = vmatmul.f32.gmra.mxu0 %v1173
  %v1664 = vpop.f32.mrf.mxu0
  %v1665 = vadd.f32 %v1501, %v1664
  %1666 = vmatmul.f32.gmra.mxu0 %v1176
  %v1667 = vpop.f32.mrf.mxu0
  %v1668 = vadd.f32 %v1504, %v1667
  %1669 = vmatmul.f32.gmra.mxu0 %v1179
  %v1670 = vpop.f32.mrf.mxu0
  %v1671 = vadd.f32 %v1507, %v1670
  %1672 = vmatmul.f32.gmra.mxu0 %v1182
  %v1673 = vpop.f32.mrf.mxu0
  %v1674 = vadd.f32 %v1510, %v1673
  %1675 = vmatmul.f32.gmra.mxu0 %v1185
  %v1676 = vpop.f32.mrf.mxu0
  %v1677 = vadd.f32 %v1513, %v1676
  %1678 = vmatmul.f32.gmra.mxu0 %v1188
  %v1679 = vpop.f32.mrf.mxu0
  %v1680 = vadd.f32 %v1516, %v1679
  %1681 = vmatmul.f32.gmra.mxu0 %v1191
  %v1682 = vpop.f32.mrf.mxu0
  %v1683 = vadd.f32 %v1519, %v1682
  %1684 = vmatmul.f32.gmra.mxu0 %v1194
  %v1685 = vpop.f32.mrf.mxu0
  %v1686 = vadd.f32 %v1522, %v1685
  %1687 = vmatmul.f32.gmra.mxu0 %v1197
  %v1688 = vpop.f32.mrf.mxu0
  %v1689 = vadd.f32 %v1525, %v1688
  %1690 = vmatmul.f32.gmra.mxu0 %v1200
  %v1691 = vpop.f32.mrf.mxu0
  %v1692 = vadd.f32 %v1528, %v1691
  %1693 = vmatmul.f32.gmra.mxu0 %v1203
  %v1694 = vpop.f32.mrf.mxu0
  %v1695 = vadd.f32 %v1531, %v1694
  %1696 = vmatmul.f32.gmra.mxu0 %v1206
  %v1697 = vpop.f32.mrf.mxu0
  %v1698 = vadd.f32 %v1534, %v1697
  %1699 = vmatmul.f32.gmra.mxu0 %v1209
  %v1700 = vpop.f32.mrf.mxu0
  %v1701 = vadd.f32 %v1537, %v1700
  %1702 = vmatmul.f32.gmra.mxu0 %v1212
  %v1703 = vpop.f32.mrf.mxu0
  %v1704 = vadd.f32 %v1540, %v1703
  %1705 = vmatmul.f32.gmra.mxu0 %v1215
  %v1706 = vpop.f32.mrf.mxu0
  %v1707 = vadd.f32 %v1543, %v1706
  %1708 = vmatmul.f32.gmra.mxu0 %v1218
  %v1709 = vpop.f32.mrf.mxu0
  %v1710 = vadd.f32 %v1546, %v1709
  %1711 = vmatmul.f32.gmra.mxu0 %v1221
  %v1712 = vpop.f32.mrf.mxu0
  %v1713 = vadd.f32 %v1549, %v1712
  %1714 = vmatmul.f32.gmra.mxu0 %v1224
  %v1715 = vpop.f32.mrf.mxu0
  %v1716 = vadd.f32 %v1552, %v1715
  %1717 = vmatmul.f32.gmra.mxu0 %v1227
  %v1718 = vpop.f32.mrf.mxu0
  %v1719 = vadd.f32 %v1555, %v1718
  %1720 = vmatmul.f32.gmra.mxu0 %v1230
  %v1721 = vpop.f32.mrf.mxu0
  %v1722 = vadd.f32 %v1558, %v1721
  %1723 = vmatmul.f32.gmra.mxu0 %v1233
  %v1724 = vpop.f32.mrf.mxu0
  %v1725 = vadd.f32 %v1561, %v1724
  %1726 = vmatmul.f32.gmra.mxu0 %v1236
  %v1727 = vpop.f32.mrf.mxu0
  %v1728 = vadd.f32 %v1564, %v1727
  %1729 = vmatmul.f32.gmra.mxu0 %v1239
  %v1730 = vpop.f32.mrf.mxu0
  %v1731 = vadd.f32 %v1567, %v1730
  %1732 = vmatmul.f32.gmra.mxu0 %v1242
  %v1733 = vpop.f32.mrf.mxu0
  %v1734 = vadd.f32 %v1570, %v1733
  %1735 = vmatmul.f32.gmra.mxu0 %v1245
  %v1736 = vpop.f32.mrf.mxu0
  %v1737 = vadd.f32 %v1573, %v1736
  %1738 = vmatmul.f32.gmra.mxu0 %v1248
  %v1739 = vpop.f32.mrf.mxu0
  %v1740 = vadd.f32 %v1576, %v1739
  %1741 = vmatmul.f32.gmra.mxu0 %v1251
  %v1742 = vpop.f32.mrf.mxu0
  %v1743 = vadd.f32 %v1579, %v1742
  %1744 = vmatmul.f32.gmra.mxu0 %v1254
  %v1745 = vpop.f32.mrf.mxu0
  %v1746 = vadd.f32 %v1582, %v1745
  %1747 = vmatmul.f32.gmra.mxu0 %v1257
  %v1748 = vpop.f32.mrf.mxu0
  %v1749 = vadd.f32 %v1585, %v1748
  %1750 = vmatmul.f32.gmra.mxu0 %v1260
  %v1751 = vpop.f32.mrf.mxu0
  %v1752 = vadd.f32 %v1588, %v1751
  %1753 = vmatmul.f32.gmra.mxu0 %v1263
  %v1754 = vpop.f32.mrf.mxu0
  %v1755 = vadd.f32 %v1591, %v1754
  %1756 = vmatmul.f32.gmra.mxu0 %v1266
  %v1757 = vpop.f32.mrf.mxu0
  %v1758 = vadd.f32 %v1594, %v1757
  %1759 = vmatmul.f32.gmra.mxu0 %v1269
  %v1760 = vpop.f32.mrf.mxu0
  %v1761 = vadd.f32 %v1597, %v1760
  %1762 = vmatmul.f32.gmra.mxu0 %v1272
  %v1763 = vpop.f32.mrf.mxu0
  %v1764 = vadd.f32 %v1600, %v1763
  %1765 = vmatmul.f32.gmra.mxu0 %v1275
  %v1766 = vpop.f32.mrf.mxu0
  %v1767 = vadd.f32 %v1603, %v1766
  %1768 = vmatmul.f32.gmra.mxu0 %v1278
  %v1769 = vpop.f32.mrf.mxu0
  %v1770 = vadd.f32 %v1606, %v1769
  %1771 = vmatmul.f32.gmra.mxu0 %v1281
  %v1772 = vpop.f32.mrf.mxu0
  %v1773 = vadd.f32 %v1609, %v1772
  %1774 = vdwg.mxu0
  %v1775 = vmul.f32 %v1629, %v839
  %v1776 = vmul.f32 %v1632, %v839
  %v1777 = vmul.f32 %v1635, %v839
  %v1778 = vmul.f32 %v1638, %v839
  %v1779 = vmul.f32 %v1641, %v839
  %v1780 = vmul.f32 %v1644, %v839
  %v1781 = vmul.f32 %v1647, %v839
  %v1782 = vmul.f32 %v1650, %v839
  %v1783 = vmul.f32 %v1653, %v839
  %v1784 = vmul.f32 %v1656, %v839
  %v1785 = vmul.f32 %v1659, %v839
  %v1786 = vmul.f32 %v1662, %v839
  %v1787 = vmul.f32 %v1665, %v839
  %v1788 = vmul.f32 %v1668, %v839
  %v1789 = vmul.f32 %v1671, %v839
  %v1790 = vmul.f32 %v1674, %v839
  %v1791 = vmul.f32 %v1677, %v839
  %v1792 = vmul.f32 %v1680, %v839
  %v1793 = vmul.f32 %v1683, %v839
  %v1794 = vmul.f32 %v1686, %v839
  %v1795 = vmul.f32 %v1689, %v839
  %v1796 = vmul.f32 %v1692, %v839
  %v1797 = vmul.f32 %v1695, %v839
  %v1798 = vmul.f32 %v1698, %v839
  %v1799 = vmul.f32 %v1701, %v839
  %v1800 = vmul.f32 %v1704, %v839
  %v1801 = vmul.f32 %v1707, %v839
  %v1802 = vmul.f32 %v1710, %v839
  %v1803 = vmul.f32 %v1713, %v839
  %v1804 = vmul.f32 %v1716, %v839
  %v1805 = vmul.f32 %v1719, %v839
  %v1806 = vmul.f32 %v1722, %v839
  %v1807 = vmul.f32 %v1725, %v839
  %v1808 = vmul.f32 %v1728, %v839
  %v1809 = vmul.f32 %v1731, %v839
  %v1810 = vmul.f32 %v1734, %v839
  %v1811 = vmul.f32 %v1737, %v839
  %v1812 = vmul.f32 %v1740, %v839
  %v1813 = vmul.f32 %v1743, %v839
  %v1814 = vmul.f32 %v1746, %v839
  %v1815 = vmul.f32 %v1749, %v839
  %v1816 = vmul.f32 %v1752, %v839
  %v1817 = vmul.f32 %v1755, %v839
  %v1818 = vmul.f32 %v1758, %v839
  %v1819 = vmul.f32 %v1761, %v839
  %v1820 = vmul.f32 %v1764, %v839
  %v1821 = vmul.f32 %v1767, %v839
  %v1822 = vmul.f32 %v1770, %v839
  %v1823 = vmul.f32 %v1773, %v839
  %v1824 = vadd.f32 %v1775, %v889
  %v1825 = vadd.f32 %v1776, %v889
  %v1826 = vadd.f32 %v1777, %v889
  %v1827 = vadd.f32 %v1778, %v889
  %v1828 = vadd.f32 %v1779, %v889
  %v1829 = vadd.f32 %v1780, %v889
  %v1830 = vadd.f32 %v1781, %v889
  %v1831 = vadd.f32 %v1782, %v889
  %v1832 = vadd.f32 %v1783, %v889
  %v1833 = vadd.f32 %v1784, %v889
  %v1834 = vadd.f32 %v1785, %v889
  %v1835 = vadd.f32 %v1786, %v889
  %v1836 = vadd.f32 %v1787, %v889
  %v1837 = vadd.f32 %v1788, %v889
  %v1838 = vadd.f32 %v1789, %v889
  %v1839 = vadd.f32 %v1790, %v889
  %v1840 = vadd.f32 %v1791, %v889
  %v1841 = vadd.f32 %v1792, %v889
  %v1842 = vadd.f32 %v1793, %v889
  %v1843 = vadd.f32 %v1794, %v889
  %v1844 = vadd.f32 %v1795, %v889
  %v1845 = vadd.f32 %v1796, %v889
  %v1846 = vadd.f32 %v1797, %v889
  %v1847 = vadd.f32 %v1798, %v889
  %v1848 = vadd.f32 %v1799, %v889
  %v1849 = vadd.f32 %v1800, %v889
  %v1850 = vadd.f32 %v1801, %v889
  %v1851 = vadd.f32 %v1802, %v889
  %v1852 = vadd.f32 %v1803, %v889
  %v1853 = vadd.f32 %v1804, %v889
  %v1854 = vadd.f32 %v1805, %v889
  %v1855 = vadd.f32 %v1806, %v889
  %v1856 = vadd.f32 %v1807, %v889
  %v1857 = vadd.f32 %v1808, %v889
  %v1858 = vadd.f32 %v1809, %v889
  %v1859 = vadd.f32 %v1810, %v889
  %v1860 = vadd.f32 %v1811, %v889
  %v1861 = vadd.f32 %v1812, %v889
  %v1862 = vadd.f32 %v1813, %v889
  %v1863 = vadd.f32 %v1814, %v889
  %v1864 = vadd.f32 %v1815, %v889
  %v1865 = vadd.f32 %v1816, %v889
  %v1866 = vadd.f32 %v1817, %v889
  %v1867 = vadd.f32 %v1818, %v889
  %v1868 = vadd.f32 %v1819, %v889
  %v1869 = vadd.f32 %v1820, %v889
  %v1870 = vadd.f32 %v1821, %v889
  %v1871 = vadd.f32 %v1822, %v889
  %v1872 = vadd.f32 %v1823, %v889
  %v1873 = vmax.f32 %v1824, 0.0
  %v1874 = vmax.f32 %v1825, 0.0
  %v1875 = vmax.f32 %v1826, 0.0
  %v1876 = vmax.f32 %v1827, 0.0
  %v1877 = vmax.f32 %v1828, 0.0
  %v1878 = vmax.f32 %v1829, 0.0
  %v1879 = vmax.f32 %v1830, 0.0
  %v1880 = vmax.f32 %v1831, 0.0
  %v1881 = vmax.f32 %v1832, 0.0
  %v1882 = vmax.f32 %v1833, 0.0
  %v1883 = vmax.f32 %v1834, 0.0
  %v1884 = vmax.f32 %v1835, 0.0
  %v1885 = vmax.f32 %v1836, 0.0
  %v1886 = vmax.f32 %v1837, 0.0
  %v1887 = vmax.f32 %v1838, 0.0
  %v1888 = vmax.f32 %v1839, 0.0
  %v1889 = vmax.f32 %v1840, 0.0
  %v1890 = vmax.f32 %v1841, 0.0
  %v1891 = vmax.f32 %v1842, 0.0
  %v1892 = vmax.f32 %v1843, 0.0
  %v1893 = vmax.f32 %v1844, 0.0
  %v1894 = vmax.f32 %v1845, 0.0
  %v1895 = vmax.f32 %v1846, 0.0
  %v1896 = vmax.f32 %v1847, 0.0
  %v1897 = vmax.f32 %v1848, 0.0
  %v1898 = vmax.f32 %v1849, 0.0
  %v1899 = vmax.f32 %v1850, 0.0
  %v1900 = vmax.f32 %v1851, 0.0
  %v1901 = vmax.f32 %v1852, 0.0
  %v1902 = vmax.f32 %v1853, 0.0
  %v1903 = vmax.f32 %v1854, 0.0
  %v1904 = vmax.f32 %v1855, 0.0
  %v1905 = vmax.f32 %v1856, 0.0
  %v1906 = vmax.f32 %v1857, 0.0
  %v1907 = vmax.f32 %v1858, 0.0
  %v1908 = vmax.f32 %v1859, 0.0
  %v1909 = vmax.f32 %v1860, 0.0
  %v1910 = vmax.f32 %v1861, 0.0
  %v1911 = vmax.f32 %v1862, 0.0
  %v1912 = vmax.f32 %v1863, 0.0
  %v1913 = vmax.f32 %v1864, 0.0
  %v1914 = vmax.f32 %v1865, 0.0
  %v1915 = vmax.f32 %v1866, 0.0
  %v1916 = vmax.f32 %v1867, 0.0
  %v1917 = vmax.f32 %v1868, 0.0
  %v1918 = vmax.f32 %v1869, 0.0
  %v1919 = vmax.f32 %v1870, 0.0
  %v1920 = vmax.f32 %v1871, 0.0
  %v1921 = vmax.f32 %v1872, 0.0
  %v1922 = vmax.f32 %v939, %v1873
  %v1923 = vmax.f32 %v940, %v1874
  %v1924 = vmax.f32 %v941, %v1875
  %v1925 = vmax.f32 %v942, %v1876
  %v1926 = vmax.f32 %v943, %v1877
  %v1927 = vmax.f32 %v944, %v1878
  %v1928 = vmax.f32 %v945, %v1879
  %v1929 = vmax.f32 %v946, %v1880
  %v1930 = vmax.f32 %v947, %v1881
  %v1931 = vmax.f32 %v948, %v1882
  %v1932 = vmax.f32 %v949, %v1883
  %v1933 = vmax.f32 %v950, %v1884
  %v1934 = vmax.f32 %v951, %v1885
  %v1935 = vmax.f32 %v952, %v1886
  %v1936 = vmax.f32 %v953, %v1887
  %v1937 = vmax.f32 %v954, %v1888
  %v1938 = vmax.f32 %v955, %v1889
  %v1939 = vmax.f32 %v956, %v1890
  %v1940 = vmax.f32 %v957, %v1891
  %v1941 = vmax.f32 %v958, %v1892
  %v1942 = vmax.f32 %v959, %v1893
  %v1943 = vmax.f32 %v960, %v1894
  %v1944 = vmax.f32 %v961, %v1895
  %v1945 = vmax.f32 %v962, %v1896
  %v1946 = vmax.f32 %v963, %v1897
  %v1947 = vmax.f32 %v964, %v1898
  %v1948 = vmax.f32 %v965, %v1899
  %v1949 = vmax.f32 %v966, %v1900
  %v1950 = vmax.f32 %v967, %v1901
  %v1951 = vmax.f32 %v968, %v1902
  %v1952 = vmax.f32 %v969, %v1903
  %v1953 = vmax.f32 %v970, %v1904
  %v1954 = vmax.f32 %v971, %v1905
  %v1955 = vmax.f32 %v972, %v1906
  %v1956 = vmax.f32 %v973, %v1907
  %v1957 = vmax.f32 %v974, %v1908
  %v1958 = vmax.f32 %v975, %v1909
  %v1959 = vmax.f32 %v976, %v1910
  %v1960 = vmax.f32 %v977, %v1911
  %v1961 = vmax.f32 %v978, %v1912
  %v1962 = vmax.f32 %v979, %v1913
  %v1963 = vmax.f32 %v980, %v1914
  %v1964 = vmax.f32 %v981, %v1915
  %v1965 = vmax.f32 %v982, %v1916
  %v1966 = vmax.f32 %v983, %v1917
  %v1967 = vmax.f32 %v984, %v1918
  %v1968 = vmax.f32 %v985, %v1919
  %v1969 = vmax.f32 %v986, %v1920
  %v1970 = vmax.f32 %v987, %v1921
  %s1971 = scalar_lea.vmem %s0, 2352
  %v1972 = vld [vmem:[%s1971] sm:$0xff]
  %v1973 = vld [vmem:[%s1971 + $0x8] sm:$0xff]
  %v1974 = vld [vmem:[%s1971 + $0x10] sm:$0xff]
  %v1975 = vld [vmem:[%s1971 + $0x18] sm:$0xff]
  %v1976 = vld [vmem:[%s1971 + $0x20] sm:$0xff]
  %v1977 = vld [vmem:[%s1971 + $0x28] sm:$0xff]
  %v1978 = vld [vmem:[%s1971 + $0x30] sm:$0xff]
  %v1979 = vld [vmem:[%s1971 + $0x38] sm:$0xff]
  %v1980 = vld [vmem:[%s1971 + $0x40] sm:$0xff]
  %v1981 = vld [vmem:[%s1971 + $0x48] sm:$0xff]
  %v1982 = vld [vmem:[%s1971 + $0x50] sm:$0xff]
  %v1983 = vld [vmem:[%s1971 + $0x58] sm:$0xff]
  %v1984 = vld [vmem:[%s1971 + $0x60] sm:$0xff]
  %v1985 = vld [vmem:[%s1971 + $0x68] sm:$0xff]
  %v1986 = vld [vmem:[%s1971 + $0x70] sm:$0xff]
  %v1987 = vld [vmem:[%s1971 + $0x78] sm:$0xff]
  %v1988 = vld [vmem:[%s1971 + $0x80] sm:$0xff]
  %v1989 = vld [vmem:[%s1971 + $0x88] sm:$0xff]
  %v1990 = vld [vmem:[%s1971 + $0x90] sm:$0xff]
  %v1991 = vld [vmem:[%s1971 + $0x98] sm:$0xff]
  %v1992 = vld [vmem:[%s1971 + $0xa0] sm:$0xff]
  %v1993 = vld [vmem:[%s1971 + $0xa8] sm:$0xff]
  %v1994 = vld [vmem:[%s1971 + $0xb0] sm:$0xff]
  %v1995 = vld [vmem:[%s1971 + $0xb8] sm:$0xff]
  %v1996 = vld [vmem:[%s1971 + $0xc0] sm:$0xff]
  %v1997 = vld [vmem:[%s1971 + $0xc8] sm:$0xff]
  %v1998 = vld [vmem:[%s1971 + $0xd0] sm:$0xff]
  %v1999 = vld [vmem:[%s1971 + $0xd8] sm:$0xff]
  %v2000 = vld [vmem:[%s1971 + $0xe0] sm:$0xff]
  %v2001 = vld [vmem:[%s1971 + $0xe8] sm:$0xff]
  %v2002 = vld [vmem:[%s1971 + $0xf0] sm:$0xff]
  %v2003 = vld [vmem:[%s1971 + $0xf8] sm:$0xff]
  %v2004 = vld [vmem:[%s1971 + $0x100] sm:$0xff]
  %v2005 = vld [vmem:[%s1971 + $0x108] sm:$0xff]
  %v2006 = vld [vmem:[%s1971 + $0x110] sm:$0xff]
  %v2007 = vld [vmem:[%s1971 + $0x118] sm:$0xff]
  %v2008 = vld [vmem:[%s1971 + $0x120] sm:$0xff]
  %v2009 = vld [vmem:[%s1971 + $0x128] sm:$0xff]
  %v2010 = vld [vmem:[%s1971 + $0x130] sm:$0xff]
  %v2011 = vld [vmem:[%s1971 + $0x138] sm:$0xff]
  %v2012 = vld [vmem:[%s1971 + $0x140] sm:$0xff]
  %v2013 = vld [vmem:[%s1971 + $0x148] sm:$0xff]
  %v2014 = vld [vmem:[%s1971 + $0x150] sm:$0xff]
  %v2015 = vld [vmem:[%s1971 + $0x158] sm:$0xff]
  %v2016 = vld [vmem:[%s1971 + $0x160] sm:$0xff]
  %v2017 = vld [vmem:[%s1971 + $0x168] sm:$0xff]
  %v2018 = vld [vmem:[%s1971 + $0x170] sm:$0xff]
  %v2019 = vld [vmem:[%s1971 + $0x178] sm:$0xff]
  %v2020 = vld [vmem:[%s1971 + $0x180] sm:$0xff]
  %v2021 = vld [vmem:[%s1971 + $0x188] sm:$0xff]
  %v2022 = vld [vmem:[%s1971 + $0x190] sm:$0xff]
  %v2023 = vld [vmem:[%s1971 + $0x198] sm:$0xff]
  %v2024 = vld [vmem:[%s1971 + $0x1a0] sm:$0xff]
  %v2025 = vld [vmem:[%s1971 + $0x1a8] sm:$0xff]
  %v2026 = vld [vmem:[%s1971 + $0x1b0] sm:$0xff]
  %v2027 = vld [vmem:[%s1971 + $0x1b8] sm:$0xff]
  %v2028 = vld [vmem:[%s1971 + $0x1c0] sm:$0xff]
  %v2029 = vld [vmem:[%s1971 + $0x1c8] sm:$0xff]
  %v2030 = vld [vmem:[%s1971 + $0x1d0] sm:$0xff]
  %v2031 = vld [vmem:[%s1971 + $0x1d8] sm:$0xff]
  %v2032 = vld [vmem:[%s1971 + $0x1e0] sm:$0xff]
  %v2033 = vld [vmem:[%s1971 + $0x1e8] sm:$0xff]
  %v2034 = vld [vmem:[%s1971 + $0x1f0] sm:$0xff]
  %v2035 = vld [vmem:[%s1971 + $0x1f8] sm:$0xff]
  %v2036 = vld [vmem:[%s1971 + $0x200] sm:$0xff]
  %v2037 = vld [vmem:[%s1971 + $0x208] sm:$0xff]
  %v2038 = vld [vmem:[%s1971 + $0x210] sm:$0xff]
  %v2039 = vld [vmem:[%s1971 + $0x218] sm:$0xff]
  %v2040 = vld [vmem:[%s1971 + $0x220] sm:$0xff]
  %v2041 = vld [vmem:[%s1971 + $0x228] sm:$0xff]
  %v2042 = vld [vmem:[%s1971 + $0x230] sm:$0xff]
  %v2043 = vld [vmem:[%s1971 + $0x238] sm:$0xff]
  %v2044 = vld [vmem:[%s1971 + $0x240] sm:$0xff]
  %v2045 = vld [vmem:[%s1971 + $0x248] sm:$0xff]
  %v2046 = vld [vmem:[%s1971 + $0x250] sm:$0xff]
  %v2047 = vld [vmem:[%s1971 + $0x258] sm:$0xff]
  %v2048 = vld [vmem:[%s1971 + $0x260] sm:$0xff]
  %v2049 = vld [vmem:[%s1971 + $0x268] sm:$0xff]
  %v2050 = vld [vmem:[%s1971 + $0x270] sm:$0xff]
  %v2051 = vld [vmem:[%s1971 + $0x278] sm:$0xff]
  %v2052 = vld [vmem:[%s1971 + $0x280] sm:$0xff]
  %v2053 = vld [vmem:[%s1971 + $0x288] sm:$0xff]
  %v2054 = vld [vmem:[%s1971 + $0x290] sm:$0xff]
  %v2055 = vld [vmem:[%s1971 + $0x298] sm:$0xff]
  %v2056 = vld [vmem:[%s1971 + $0x2a0] sm:$0xff]
  %v2057 = vld [vmem:[%s1971 + $0x2a8] sm:$0xff]
  %v2058 = vld [vmem:[%s1971 + $0x2b0] sm:$0xff]
  %v2059 = vld [vmem:[%s1971 + $0x2b8] sm:$0xff]
  %v2060 = vld [vmem:[%s1971 + $0x2c0] sm:$0xff]
  %v2061 = vld [vmem:[%s1971 + $0x2c8] sm:$0xff]
  %v2062 = vld [vmem:[%s1971 + $0x2d0] sm:$0xff]
  %v2063 = vld [vmem:[%s1971 + $0x2d8] sm:$0xff]
  %v2064 = vld [vmem:[%s1971 + $0x2e0] sm:$0xff]
  %v2065 = vld [vmem:[%s1971 + $0x2e8] sm:$0xff]
  %v2066 = vld [vmem:[%s1971 + $0x2f0] sm:$0xff]
  %v2067 = vld [vmem:[%s1971 + $0x2f8] sm:$0xff]
  %v2068 = vld [vmem:[%s1971 + $0x300] sm:$0xff]
  %v2069 = vld [vmem:[%s1971 + $0x308] sm:$0xff]
  %v2070 = vld [vmem:[%s1971 + $0x310] sm:$0xff]
  %v2071 = vld [vmem:[%s1971 + $0x318] sm:$0xff]
  %v2072 = vld [vmem:[%s1971 + $0x320] sm:$0xff]
  %v2073 = vld [vmem:[%s1971 + $0x328] sm:$0xff]
  %v2074 = vld [vmem:[%s1971 + $0x330] sm:$0xff]
  %v2075 = vld [vmem:[%s1971 + $0x338] sm:$0xff]
  %v2076 = vld [vmem:[%s1971 + $0x340] sm:$0xff]
  %v2077 = vld [vmem:[%s1971 + $0x348] sm:$0xff]
  %v2078 = vld [vmem:[%s1971 + $0x350] sm:$0xff]
  %v2079 = vld [vmem:[%s1971 + $0x358] sm:$0xff]
  %v2080 = vld [vmem:[%s1971 + $0x360] sm:$0xff]
  %v2081 = vld [vmem:[%s1971 + $0x368] sm:$0xff]
  %v2082 = vld [vmem:[%s1971 + $0x370] sm:$0xff]
  %v2083 = vld [vmem:[%s1971 + $0x378] sm:$0xff]
  %v2084 = vld [vmem:[%s1971 + $0x380] sm:$0xff]
  %v2085 = vld [vmem:[%s1971 + $0x388] sm:$0xff]
  %v2086 = vld [vmem:[%s1971 + $0x390] sm:$0xff]
  %v2087 = vld [vmem:[%s1971 + $0x398] sm:$0xff]
  %v2088 = vld [vmem:[%s1971 + $0x3a0] sm:$0xff]
  %v2089 = vld [vmem:[%s1971 + $0x3a8] sm:$0xff]
  %v2090 = vld [vmem:[%s1971 + $0x3b0] sm:$0xff]
  %v2091 = vld [vmem:[%s1971 + $0x3b8] sm:$0xff]
  %v2092 = vld [vmem:[%s1971 + $0x3c0] sm:$0xff]
  %v2093 = vld [vmem:[%s1971 + $0x3c8] sm:$0xff]
  %v2094 = vld [vmem:[%s1971 + $0x3d0] sm:$0xff]
  %v2095 = vld [vmem:[%s1971 + $0x3d8] sm:$0xff]
  %v2096 = vld [vmem:[%s1971 + $0x3e0] sm:$0xff]
  %v2097 = vld [vmem:[%s1971 + $0x3e8] sm:$0xff]
  %v2098 = vld [vmem:[%s1971 + $0x3f0] sm:$0xff]
  %v2099 = vld [vmem:[%s1971 + $0x3f8] sm:$0xff]
  %v2100 = vld [vmem:[%s1971 + $0x400] sm:$0xff]
  %v2101 = vld [vmem:[%s1971 + $0x408] sm:$0xff]
  %v2102 = vld [vmem:[%s1971 + $0x410] sm:$0xff]
  %v2103 = vld [vmem:[%s1971 + $0x418] sm:$0xff]
  %v2104 = vld [vmem:[%s1971 + $0x420] sm:$0xff]
  %v2105 = vld [vmem:[%s1971 + $0x428] sm:$0xff]
  %v2106 = vld [vmem:[%s1971 + $0x430] sm:$0xff]
  %v2107 = vld [vmem:[%s1971 + $0x438] sm:$0xff]
  %v2108 = vld [vmem:[%s1971 + $0x440] sm:$0xff]
  %v2109 = vld [vmem:[%s1971 + $0x448] sm:$0xff]
  %v2110 = vld [vmem:[%s1971 + $0x450] sm:$0xff]
  %v2111 = vld [vmem:[%s1971 + $0x458] sm:$0xff]
  %v2112 = vld [vmem:[%s1971 + $0x460] sm:$0xff]
  %v2113 = vld [vmem:[%s1971 + $0x468] sm:$0xff]
  %v2114 = vld [vmem:[%s1971 + $0x470] sm:$0xff]
  %v2115 = vld [vmem:[%s1971 + $0x478] sm:$0xff]
  %v2116 = vld [vmem:[%s1971 + $0x480] sm:$0xff]
  %v2117 = vld [vmem:[%s1971 + $0x488] sm:$0xff]
  %v2118 = vld [vmem:[%s1971 + $0x490] sm:$0xff]
  %v2120 = vsel %vm199, %v1974, 0
  %v2123 = vsel %vm199, %v1977, 0
  %v2126 = vsel %vm199, %v1980, 0
  %v2129 = vsel %vm199, %v1983, 0
  %v2132 = vsel %vm199, %v1986, 0
  %v2135 = vsel %vm199, %v1989, 0
  %v2138 = vsel %vm199, %v1992, 0
  %v2141 = vsel %vm199, %v1995, 0
  %v2144 = vsel %vm199, %v1998, 0
  %v2147 = vsel %vm199, %v2001, 0
  %v2150 = vsel %vm199, %v2004, 0
  %v2153 = vsel %vm199, %v2007, 0
  %v2156 = vsel %vm199, %v2010, 0
  %v2159 = vsel %vm199, %v2013, 0
  %v2162 = vsel %vm199, %v2016, 0
  %v2165 = vsel %vm199, %v2019, 0
  %v2168 = vsel %vm199, %v2022, 0
  %v2171 = vsel %vm199, %v2025, 0
  %v2174 = vsel %vm199, %v2028, 0
  %v2177 = vsel %vm199, %v2031, 0
  %v2180 = vsel %vm199, %v2034, 0
  %v2183 = vsel %vm199, %v2037, 0
  %v2186 = vsel %vm199, %v2040, 0
  %v2189 = vsel %vm199, %v2043, 0
  %v2192 = vsel %vm199, %v2046, 0
  %v2195 = vsel %vm199, %v2049, 0
  %v2198 = vsel %vm199, %v2052, 0
  %v2201 = vsel %vm199, %v2055, 0
  %v2204 = vsel %vm199, %v2058, 0
  %v2207 = vsel %vm199, %v2061, 0
  %v2210 = vsel %vm199, %v2064, 0
  %v2213 = vsel %vm199, %v2067, 0
  %v2216 = vsel %vm199, %v2070, 0
  %v2219 = vsel %vm199, %v2073, 0
  %v2222 = vsel %vm199, %v2076, 0
  %v2225 = vsel %vm199, %v2079, 0
  %v2228 = vsel %vm199, %v2082, 0
  %v2231 = vsel %vm199, %v2085, 0
  %v2234 = vsel %vm199, %v2088, 0
  %v2237 = vsel %vm199, %v2091, 0
  %v2240 = vsel %vm199, %v2094, 0
  %v2243 = vsel %vm199, %v2097, 0
  %v2246 = vsel %vm199, %v2100, 0
  %v2249 = vsel %vm199, %v2103, 0
  %v2252 = vsel %vm199, %v2106, 0
  %v2255 = vsel %vm199, %v2109, 0
  %v2258 = vsel %vm199, %v2112, 0
  %v2261 = vsel %vm199, %v2115, 0
  %v2264 = vsel %vm199, %v2118, 0
  %2266 = vmatpush.msra.mxu0 %v29
  %2267 = vmatpush.msra.mxu0 %v28
  %2268 = vmatpush.msra.mxu0 %v27
  %2269 = vmatpush.msra.mxu0 %v26
  %2270 = vmatpush.msra.mxu0 %v25
  %2271 = vmatpush.msra.mxu0 %v24
  %2272 = vmatpush.msra.mxu0 %v23
  %2273 = vmatpush.msra.mxu0 %v22
  %2274 = vmatpush.msra.mxu0 %v21
  %2275 = vmatpush.msra.mxu0 %v20
  %2276 = vmatpush.msra.mxu0 %v19
  %2277 = vmatpush.msra.mxu0 %v18
  %2278 = vmatpush.msra.mxu0 %v17
  %2279 = vmatpush.msra.mxu0 %v16
  %2280 = vmatpush.msra.mxu0 %v15
  %2281 = vmatpush.msra.mxu0 %v14
  %2282 = vmatmul.f32.gmra.mxu0 %v1972
  %v2283 = vpop.f32.mrf.mxu0
  %v2284 = vadd.f32 0.0, %v2283
  %2285 = vmatmul.f32.gmra.mxu0 %v1975
  %v2286 = vpop.f32.mrf.mxu0
  %v2287 = vadd.f32 0.0, %v2286
  %2288 = vmatmul.f32.gmra.mxu0 %v1978
  %v2289 = vpop.f32.mrf.mxu0
  %v2290 = vadd.f32 0.0, %v2289
  %2291 = vmatmul.f32.gmra.mxu0 %v1981
  %v2292 = vpop.f32.mrf.mxu0
  %v2293 = vadd.f32 0.0, %v2292
  %2294 = vmatmul.f32.gmra.mxu0 %v1984
  %v2295 = vpop.f32.mrf.mxu0
  %v2296 = vadd.f32 0.0, %v2295
  %2297 = vmatmul.f32.gmra.mxu0 %v1987
  %v2298 = vpop.f32.mrf.mxu0
  %v2299 = vadd.f32 0.0, %v2298
  %2300 = vmatmul.f32.gmra.mxu0 %v1990
  %v2301 = vpop.f32.mrf.mxu0
  %v2302 = vadd.f32 0.0, %v2301
  %2303 = vmatmul.f32.gmra.mxu0 %v1993
  %v2304 = vpop.f32.mrf.mxu0
  %v2305 = vadd.f32 0.0, %v2304
  %2306 = vmatmul.f32.gmra.mxu0 %v1996
  %v2307 = vpop.f32.mrf.mxu0
  %v2308 = vadd.f32 0.0, %v2307
  %2309 = vmatmul.f32.gmra.mxu0 %v1999
  %v2310 = vpop.f32.mrf.mxu0
  %v2311 = vadd.f32 0.0, %v2310
  %2312 = vmatmul.f32.gmra.mxu0 %v2002
  %v2313 = vpop.f32.mrf.mxu0
  %v2314 = vadd.f32 0.0, %v2313
  %2315 = vmatmul.f32.gmra.mxu0 %v2005
  %v2316 = vpop.f32.mrf.mxu0
  %v2317 = vadd.f32 0.0, %v2316
  %2318 = vmatmul.f32.gmra.mxu0 %v2008
  %v2319 = vpop.f32.mrf.mxu0
  %v2320 = vadd.f32 0.0, %v2319
  %2321 = vmatmul.f32.gmra.mxu0 %v2011
  %v2322 = vpop.f32.mrf.mxu0
  %v2323 = vadd.f32 0.0, %v2322
  %2324 = vmatmul.f32.gmra.mxu0 %v2014
  %v2325 = vpop.f32.mrf.mxu0
  %v2326 = vadd.f32 0.0, %v2325
  %2327 = vmatmul.f32.gmra.mxu0 %v2017
  %v2328 = vpop.f32.mrf.mxu0
  %v2329 = vadd.f32 0.0, %v2328
  %2330 = vmatmul.f32.gmra.mxu0 %v2020
  %v2331 = vpop.f32.mrf.mxu0
  %v2332 = vadd.f32 0.0, %v2331
  %2333 = vmatmul.f32.gmra.mxu0 %v2023
  %v2334 = vpop.f32.mrf.mxu0
  %v2335 = vadd.f32 0.0, %v2334
  %2336 = vmatmul.f32.gmra.mxu0 %v2026
  %v2337 = vpop.f32.mrf.mxu0
  %v2338 = vadd.f32 0.0, %v2337
  %2339 = vmatmul.f32.gmra.mxu0 %v2029
  %v2340 = vpop.f32.mrf.mxu0
  %v2341 = vadd.f32 0.0, %v2340
  %2342 = vmatmul.f32.gmra.mxu0 %v2032
  %v2343 = vpop.f32.mrf.mxu0
  %v2344 = vadd.f32 0.0, %v2343
  %2345 = vmatmul.f32.gmra.mxu0 %v2035
  %v2346 = vpop.f32.mrf.mxu0
  %v2347 = vadd.f32 0.0, %v2346
  %2348 = vmatmul.f32.gmra.mxu0 %v2038
  %v2349 = vpop.f32.mrf.mxu0
  %v2350 = vadd.f32 0.0, %v2349
  %2351 = vmatmul.f32.gmra.mxu0 %v2041
  %v2352 = vpop.f32.mrf.mxu0
  %v2353 = vadd.f32 0.0, %v2352
  %2354 = vmatmul.f32.gmra.mxu0 %v2044
  %v2355 = vpop.f32.mrf.mxu0
  %v2356 = vadd.f32 0.0, %v2355
  %2357 = vmatmul.f32.gmra.mxu0 %v2047
  %v2358 = vpop.f32.mrf.mxu0
  %v2359 = vadd.f32 0.0, %v2358
  %2360 = vmatmul.f32.gmra.mxu0 %v2050
  %v2361 = vpop.f32.mrf.mxu0
  %v2362 = vadd.f32 0.0, %v2361
  %2363 = vmatmul.f32.gmra.mxu0 %v2053
  %v2364 = vpop.f32.mrf.mxu0
  %v2365 = vadd.f32 0.0, %v2364
  %2366 = vmatmul.f32.gmra.mxu0 %v2056
  %v2367 = vpop.f32.mrf.mxu0
  %v2368 = vadd.f32 0.0, %v2367
  %2369 = vmatmul.f32.gmra.mxu0 %v2059
  %v2370 = vpop.f32.mrf.mxu0
  %v2371 = vadd.f32 0.0, %v2370
  %2372 = vmatmul.f32.gmra.mxu0 %v2062
  %v2373 = vpop.f32.mrf.mxu0
  %v2374 = vadd.f32 0.0, %v2373
  %2375 = vmatmul.f32.gmra.mxu0 %v2065
  %v2376 = vpop.f32.mrf.mxu0
  %v2377 = vadd.f32 0.0, %v2376
  %2378 = vmatmul.f32.gmra.mxu0 %v2068
  %v2379 = vpop.f32.mrf.mxu0
  %v2380 = vadd.f32 0.0, %v2379
  %2381 = vmatmul.f32.gmra.mxu0 %v2071
  %v2382 = vpop.f32.mrf.mxu0
  %v2383 = vadd.f32 0.0, %v2382
  %2384 = vmatmul.f32.gmra.mxu0 %v2074
  %v2385 = vpop.f32.mrf.mxu0
  %v2386 = vadd.f32 0.0, %v2385
  %2387 = vmatmul.f32.gmra.mxu0 %v2077
  %v2388 = vpop.f32.mrf.mxu0
  %v2389 = vadd.f32 0.0, %v2388
  %2390 = vmatmul.f32.gmra.mxu0 %v2080
  %v2391 = vpop.f32.mrf.mxu0
  %v2392 = vadd.f32 0.0, %v2391
  %2393 = vmatmul.f32.gmra.mxu0 %v2083
  %v2394 = vpop.f32.mrf.mxu0
  %v2395 = vadd.f32 0.0, %v2394
  %2396 = vmatmul.f32.gmra.mxu0 %v2086
  %v2397 = vpop.f32.mrf.mxu0
  %v2398 = vadd.f32 0.0, %v2397
  %2399 = vmatmul.f32.gmra.mxu0 %v2089
  %v2400 = vpop.f32.mrf.mxu0
  %v2401 = vadd.f32 0.0, %v2400
  %2402 = vmatmul.f32.gmra.mxu0 %v2092
  %v2403 = vpop.f32.mrf.mxu0
  %v2404 = vadd.f32 0.0, %v2403
  %2405 = vmatmul.f32.gmra.mxu0 %v2095
  %v2406 = vpop.f32.mrf.mxu0
  %v2407 = vadd.f32 0.0, %v2406
  %2408 = vmatmul.f32.gmra.mxu0 %v2098
  %v2409 = vpop.f32.mrf.mxu0
  %v2410 = vadd.f32 0.0, %v2409
  %2411 = vmatmul.f32.gmra.mxu0 %v2101
  %v2412 = vpop.f32.mrf.mxu0
  %v2413 = vadd.f32 0.0, %v2412
  %2414 = vmatmul.f32.gmra.mxu0 %v2104
  %v2415 = vpop.f32.mrf.mxu0
  %v2416 = vadd.f32 0.0, %v2415
  %2417 = vmatmul.f32.gmra.mxu0 %v2107
  %v2418 = vpop.f32.mrf.mxu0
  %v2419 = vadd.f32 0.0, %v2418
  %2420 = vmatmul.f32.gmra.mxu0 %v2110
  %v2421 = vpop.f32.mrf.mxu0
  %v2422 = vadd.f32 0.0, %v2421
  %2423 = vmatmul.f32.gmra.mxu0 %v2113
  %v2424 = vpop.f32.mrf.mxu0
  %v2425 = vadd.f32 0.0, %v2424
  %2426 = vmatmul.f32.gmra.mxu0 %v2116
  %v2427 = vpop.f32.mrf.mxu0
  %v2428 = vadd.f32 0.0, %v2427
  %2429 = vdwg.mxu0
  %2430 = vmatpush.msra.mxu0 %v45
  %2431 = vmatpush.msra.mxu0 %v44
  %2432 = vmatpush.msra.mxu0 %v43
  %2433 = vmatpush.msra.mxu0 %v42
  %2434 = vmatpush.msra.mxu0 %v41
  %2435 = vmatpush.msra.mxu0 %v40
  %2436 = vmatpush.msra.mxu0 %v39
  %2437 = vmatpush.msra.mxu0 %v38
  %2438 = vmatpush.msra.mxu0 %v37
  %2439 = vmatpush.msra.mxu0 %v36
  %2440 = vmatpush.msra.mxu0 %v35
  %2441 = vmatpush.msra.mxu0 %v34
  %2442 = vmatpush.msra.mxu0 %v33
  %2443 = vmatpush.msra.mxu0 %v32
  %2444 = vmatpush.msra.mxu0 %v31
  %2445 = vmatpush.msra.mxu0 %v30
  %2446 = vmatmul.f32.gmra.mxu0 %v1973
  %v2447 = vpop.f32.mrf.mxu0
  %v2448 = vadd.f32 %v2284, %v2447
  %2449 = vmatmul.f32.gmra.mxu0 %v1976
  %v2450 = vpop.f32.mrf.mxu0
  %v2451 = vadd.f32 %v2287, %v2450
  %2452 = vmatmul.f32.gmra.mxu0 %v1979
  %v2453 = vpop.f32.mrf.mxu0
  %v2454 = vadd.f32 %v2290, %v2453
  %2455 = vmatmul.f32.gmra.mxu0 %v1982
  %v2456 = vpop.f32.mrf.mxu0
  %v2457 = vadd.f32 %v2293, %v2456
  %2458 = vmatmul.f32.gmra.mxu0 %v1985
  %v2459 = vpop.f32.mrf.mxu0
  %v2460 = vadd.f32 %v2296, %v2459
  %2461 = vmatmul.f32.gmra.mxu0 %v1988
  %v2462 = vpop.f32.mrf.mxu0
  %v2463 = vadd.f32 %v2299, %v2462
  %2464 = vmatmul.f32.gmra.mxu0 %v1991
  %v2465 = vpop.f32.mrf.mxu0
  %v2466 = vadd.f32 %v2302, %v2465
  %2467 = vmatmul.f32.gmra.mxu0 %v1994
  %v2468 = vpop.f32.mrf.mxu0
  %v2469 = vadd.f32 %v2305, %v2468
  %2470 = vmatmul.f32.gmra.mxu0 %v1997
  %v2471 = vpop.f32.mrf.mxu0
  %v2472 = vadd.f32 %v2308, %v2471
  %2473 = vmatmul.f32.gmra.mxu0 %v2000
  %v2474 = vpop.f32.mrf.mxu0
  %v2475 = vadd.f32 %v2311, %v2474
  %2476 = vmatmul.f32.gmra.mxu0 %v2003
  %v2477 = vpop.f32.mrf.mxu0
  %v2478 = vadd.f32 %v2314, %v2477
  %2479 = vmatmul.f32.gmra.mxu0 %v2006
  %v2480 = vpop.f32.mrf.mxu0
  %v2481 = vadd.f32 %v2317, %v2480
  %2482 = vmatmul.f32.gmra.mxu0 %v2009
  %v2483 = vpop.f32.mrf.mxu0
  %v2484 = vadd.f32 %v2320, %v2483
  %2485 = vmatmul.f32.gmra.mxu0 %v2012
  %v2486 = vpop.f32.mrf.mxu0
  %v2487 = vadd.f32 %v2323, %v2486
  %2488 = vmatmul.f32.gmra.mxu0 %v2015
  %v2489 = vpop.f32.mrf.mxu0
  %v2490 = vadd.f32 %v2326, %v2489
  %2491 = vmatmul.f32.gmra.mxu0 %v2018
  %v2492 = vpop.f32.mrf.mxu0
  %v2493 = vadd.f32 %v2329, %v2492
  %2494 = vmatmul.f32.gmra.mxu0 %v2021
  %v2495 = vpop.f32.mrf.mxu0
  %v2496 = vadd.f32 %v2332, %v2495
  %2497 = vmatmul.f32.gmra.mxu0 %v2024
  %v2498 = vpop.f32.mrf.mxu0
  %v2499 = vadd.f32 %v2335, %v2498
  %2500 = vmatmul.f32.gmra.mxu0 %v2027
  %v2501 = vpop.f32.mrf.mxu0
  %v2502 = vadd.f32 %v2338, %v2501
  %2503 = vmatmul.f32.gmra.mxu0 %v2030
  %v2504 = vpop.f32.mrf.mxu0
  %v2505 = vadd.f32 %v2341, %v2504
  %2506 = vmatmul.f32.gmra.mxu0 %v2033
  %v2507 = vpop.f32.mrf.mxu0
  %v2508 = vadd.f32 %v2344, %v2507
  %2509 = vmatmul.f32.gmra.mxu0 %v2036
  %v2510 = vpop.f32.mrf.mxu0
  %v2511 = vadd.f32 %v2347, %v2510
  %2512 = vmatmul.f32.gmra.mxu0 %v2039
  %v2513 = vpop.f32.mrf.mxu0
  %v2514 = vadd.f32 %v2350, %v2513
  %2515 = vmatmul.f32.gmra.mxu0 %v2042
  %v2516 = vpop.f32.mrf.mxu0
  %v2517 = vadd.f32 %v2353, %v2516
  %2518 = vmatmul.f32.gmra.mxu0 %v2045
  %v2519 = vpop.f32.mrf.mxu0
  %v2520 = vadd.f32 %v2356, %v2519
  %2521 = vmatmul.f32.gmra.mxu0 %v2048
  %v2522 = vpop.f32.mrf.mxu0
  %v2523 = vadd.f32 %v2359, %v2522
  %2524 = vmatmul.f32.gmra.mxu0 %v2051
  %v2525 = vpop.f32.mrf.mxu0
  %v2526 = vadd.f32 %v2362, %v2525
  %2527 = vmatmul.f32.gmra.mxu0 %v2054
  %v2528 = vpop.f32.mrf.mxu0
  %v2529 = vadd.f32 %v2365, %v2528
  %2530 = vmatmul.f32.gmra.mxu0 %v2057
  %v2531 = vpop.f32.mrf.mxu0
  %v2532 = vadd.f32 %v2368, %v2531
  %2533 = vmatmul.f32.gmra.mxu0 %v2060
  %v2534 = vpop.f32.mrf.mxu0
  %v2535 = vadd.f32 %v2371, %v2534
  %2536 = vmatmul.f32.gmra.mxu0 %v2063
  %v2537 = vpop.f32.mrf.mxu0
  %v2538 = vadd.f32 %v2374, %v2537
  %2539 = vmatmul.f32.gmra.mxu0 %v2066
  %v2540 = vpop.f32.mrf.mxu0
  %v2541 = vadd.f32 %v2377, %v2540
  %2542 = vmatmul.f32.gmra.mxu0 %v2069
  %v2543 = vpop.f32.mrf.mxu0
  %v2544 = vadd.f32 %v2380, %v2543
  %2545 = vmatmul.f32.gmra.mxu0 %v2072
  %v2546 = vpop.f32.mrf.mxu0
  %v2547 = vadd.f32 %v2383, %v2546
  %2548 = vmatmul.f32.gmra.mxu0 %v2075
  %v2549 = vpop.f32.mrf.mxu0
  %v2550 = vadd.f32 %v2386, %v2549
  %2551 = vmatmul.f32.gmra.mxu0 %v2078
  %v2552 = vpop.f32.mrf.mxu0
  %v2553 = vadd.f32 %v2389, %v2552
  %2554 = vmatmul.f32.gmra.mxu0 %v2081
  %v2555 = vpop.f32.mrf.mxu0
  %v2556 = vadd.f32 %v2392, %v2555
  %2557 = vmatmul.f32.gmra.mxu0 %v2084
  %v2558 = vpop.f32.mrf.mxu0
  %v2559 = vadd.f32 %v2395, %v2558
  %2560 = vmatmul.f32.gmra.mxu0 %v2087
  %v2561 = vpop.f32.mrf.mxu0
  %v2562 = vadd.f32 %v2398, %v2561
  %2563 = vmatmul.f32.gmra.mxu0 %v2090
  %v2564 = vpop.f32.mrf.mxu0
  %v2565 = vadd.f32 %v2401, %v2564
  %2566 = vmatmul.f32.gmra.mxu0 %v2093
  %v2567 = vpop.f32.mrf.mxu0
  %v2568 = vadd.f32 %v2404, %v2567
  %2569 = vmatmul.f32.gmra.mxu0 %v2096
  %v2570 = vpop.f32.mrf.mxu0
  %v2571 = vadd.f32 %v2407, %v2570
  %2572 = vmatmul.f32.gmra.mxu0 %v2099
  %v2573 = vpop.f32.mrf.mxu0
  %v2574 = vadd.f32 %v2410, %v2573
  %2575 = vmatmul.f32.gmra.mxu0 %v2102
  %v2576 = vpop.f32.mrf.mxu0
  %v2577 = vadd.f32 %v2413, %v2576
  %2578 = vmatmul.f32.gmra.mxu0 %v2105
  %v2579 = vpop.f32.mrf.mxu0
  %v2580 = vadd.f32 %v2416, %v2579
  %2581 = vmatmul.f32.gmra.mxu0 %v2108
  %v2582 = vpop.f32.mrf.mxu0
  %v2583 = vadd.f32 %v2419, %v2582
  %2584 = vmatmul.f32.gmra.mxu0 %v2111
  %v2585 = vpop.f32.mrf.mxu0
  %v2586 = vadd.f32 %v2422, %v2585
  %2587 = vmatmul.f32.gmra.mxu0 %v2114
  %v2588 = vpop.f32.mrf.mxu0
  %v2589 = vadd.f32 %v2425, %v2588
  %2590 = vmatmul.f32.gmra.mxu0 %v2117
  %v2591 = vpop.f32.mrf.mxu0
  %v2592 = vadd.f32 %v2428, %v2591
  %2593 = vdwg.mxu0
  %2594 = vmatpush.msra.mxu0 0.0
  %2595 = vmatpush.msra.mxu0 0.0
  %2596 = vmatpush.msra.mxu0 0.0
  %2597 = vmatpush.msra.mxu0 0.0
  %2598 = vmatpush.msra.mxu0 0.0
  %2599 = vmatpush.msra.mxu0 0.0
  %2600 = vmatpush.msra.mxu0 0.0
  %2601 = vmatpush.msra.mxu0 0.0
  %2602 = vmatpush.msra.mxu0 0.0
  %2603 = vmatpush.msra.mxu0 0.0
  %2604 = vmatpush.msra.mxu0 0.0
  %2605 = vmatpush.msra.mxu0 0.0
  %2606 = vmatpush.msra.mxu0 %v49
  %2607 = vmatpush.msra.mxu0 %v48
  %2608 = vmatpush.msra.mxu0 %v47
  %2609 = vmatpush.msra.mxu0 %v46
  %2610 = vmatmul.f32.gmra.mxu0 %v2120
  %v2611 = vpop.f32.mrf.mxu0
  %v2612 = vadd.f32 %v2448, %v2611
  %2613 = vmatmul.f32.gmra.mxu0 %v2123
  %v2614 = vpop.f32.mrf.mxu0
  %v2615 = vadd.f32 %v2451, %v2614
  %2616 = vmatmul.f32.gmra.mxu0 %v2126
  %v2617 = vpop.f32.mrf.mxu0
  %v2618 = vadd.f32 %v2454, %v2617
  %2619 = vmatmul.f32.gmra.mxu0 %v2129
  %v2620 = vpop.f32.mrf.mxu0
  %v2621 = vadd.f32 %v2457, %v2620
  %2622 = vmatmul.f32.gmra.mxu0 %v2132
  %v2623 = vpop.f32.mrf.mxu0
  %v2624 = vadd.f32 %v2460, %v2623
  %2625 = vmatmul.f32.gmra.mxu0 %v2135
  %v2626 = vpop.f32.mrf.mxu0
  %v2627 = vadd.f32 %v2463, %v2626
  %2628 = vmatmul.f32.gmra.mxu0 %v2138
  %v2629 = vpop.f32.mrf.mxu0
  %v2630 = vadd.f32 %v2466, %v2629
  %2631 = vmatmul.f32.gmra.mxu0 %v2141
  %v2632 = vpop.f32.mrf.mxu0
  %v2633 = vadd.f32 %v2469, %v2632
  %2634 = vmatmul.f32.gmra.mxu0 %v2144
  %v2635 = vpop.f32.mrf.mxu0
  %v2636 = vadd.f32 %v2472, %v2635
  %2637 = vmatmul.f32.gmra.mxu0 %v2147
  %v2638 = vpop.f32.mrf.mxu0
  %v2639 = vadd.f32 %v2475, %v2638
  %2640 = vmatmul.f32.gmra.mxu0 %v2150
  %v2641 = vpop.f32.mrf.mxu0
  %v2642 = vadd.f32 %v2478, %v2641
  %2643 = vmatmul.f32.gmra.mxu0 %v2153
  %v2644 = vpop.f32.mrf.mxu0
  %v2645 = vadd.f32 %v2481, %v2644
  %2646 = vmatmul.f32.gmra.mxu0 %v2156
  %v2647 = vpop.f32.mrf.mxu0
  %v2648 = vadd.f32 %v2484, %v2647
  %2649 = vmatmul.f32.gmra.mxu0 %v2159
  %v2650 = vpop.f32.mrf.mxu0
  %v2651 = vadd.f32 %v2487, %v2650
  %2652 = vmatmul.f32.gmra.mxu0 %v2162
  %v2653 = vpop.f32.mrf.mxu0
  %v2654 = vadd.f32 %v2490, %v2653
  %2655 = vmatmul.f32.gmra.mxu0 %v2165
  %v2656 = vpop.f32.mrf.mxu0
  %v2657 = vadd.f32 %v2493, %v2656
  %2658 = vmatmul.f32.gmra.mxu0 %v2168
  %v2659 = vpop.f32.mrf.mxu0
  %v2660 = vadd.f32 %v2496, %v2659
  %2661 = vmatmul.f32.gmra.mxu0 %v2171
  %v2662 = vpop.f32.mrf.mxu0
  %v2663 = vadd.f32 %v2499, %v2662
  %2664 = vmatmul.f32.gmra.mxu0 %v2174
  %v2665 = vpop.f32.mrf.mxu0
  %v2666 = vadd.f32 %v2502, %v2665
  %2667 = vmatmul.f32.gmra.mxu0 %v2177
  %v2668 = vpop.f32.mrf.mxu0
  %v2669 = vadd.f32 %v2505, %v2668
  %2670 = vmatmul.f32.gmra.mxu0 %v2180
  %v2671 = vpop.f32.mrf.mxu0
  %v2672 = vadd.f32 %v2508, %v2671
  %2673 = vmatmul.f32.gmra.mxu0 %v2183
  %v2674 = vpop.f32.mrf.mxu0
  %v2675 = vadd.f32 %v2511, %v2674
  %2676 = vmatmul.f32.gmra.mxu0 %v2186
  %v2677 = vpop.f32.mrf.mxu0
  %v2678 = vadd.f32 %v2514, %v2677
  %2679 = vmatmul.f32.gmra.mxu0 %v2189
  %v2680 = vpop.f32.mrf.mxu0
  %v2681 = vadd.f32 %v2517, %v2680
  %2682 = vmatmul.f32.gmra.mxu0 %v2192
  %v2683 = vpop.f32.mrf.mxu0
  %v2684 = vadd.f32 %v2520, %v2683
  %2685 = vmatmul.f32.gmra.mxu0 %v2195
  %v2686 = vpop.f32.mrf.mxu0
  %v2687 = vadd.f32 %v2523, %v2686
  %2688 = vmatmul.f32.gmra.mxu0 %v2198
  %v2689 = vpop.f32.mrf.mxu0
  %v2690 = vadd.f32 %v2526, %v2689
  %2691 = vmatmul.f32.gmra.mxu0 %v2201
  %v2692 = vpop.f32.mrf.mxu0
  %v2693 = vadd.f32 %v2529, %v2692
  %2694 = vmatmul.f32.gmra.mxu0 %v2204
  %v2695 = vpop.f32.mrf.mxu0
  %v2696 = vadd.f32 %v2532, %v2695
  %2697 = vmatmul.f32.gmra.mxu0 %v2207
  %v2698 = vpop.f32.mrf.mxu0
  %v2699 = vadd.f32 %v2535, %v2698
  %2700 = vmatmul.f32.gmra.mxu0 %v2210
  %v2701 = vpop.f32.mrf.mxu0
  %v2702 = vadd.f32 %v2538, %v2701
  %2703 = vmatmul.f32.gmra.mxu0 %v2213
  %v2704 = vpop.f32.mrf.mxu0
  %v2705 = vadd.f32 %v2541, %v2704
  %2706 = vmatmul.f32.gmra.mxu0 %v2216
  %v2707 = vpop.f32.mrf.mxu0
  %v2708 = vadd.f32 %v2544, %v2707
  %2709 = vmatmul.f32.gmra.mxu0 %v2219
  %v2710 = vpop.f32.mrf.mxu0
  %v2711 = vadd.f32 %v2547, %v2710
  %2712 = vmatmul.f32.gmra.mxu0 %v2222
  %v2713 = vpop.f32.mrf.mxu0
  %v2714 = vadd.f32 %v2550, %v2713
  %2715 = vmatmul.f32.gmra.mxu0 %v2225
  %v2716 = vpop.f32.mrf.mxu0
  %v2717 = vadd.f32 %v2553, %v2716
  %2718 = vmatmul.f32.gmra.mxu0 %v2228
  %v2719 = vpop.f32.mrf.mxu0
  %v2720 = vadd.f32 %v2556, %v2719
  %2721 = vmatmul.f32.gmra.mxu0 %v2231
  %v2722 = vpop.f32.mrf.mxu0
  %v2723 = vadd.f32 %v2559, %v2722
  %2724 = vmatmul.f32.gmra.mxu0 %v2234
  %v2725 = vpop.f32.mrf.mxu0
  %v2726 = vadd.f32 %v2562, %v2725
  %2727 = vmatmul.f32.gmra.mxu0 %v2237
  %v2728 = vpop.f32.mrf.mxu0
  %v2729 = vadd.f32 %v2565, %v2728
  %2730 = vmatmul.f32.gmra.mxu0 %v2240
  %v2731 = vpop.f32.mrf.mxu0
  %v2732 = vadd.f32 %v2568, %v2731
  %2733 = vmatmul.f32.gmra.mxu0 %v2243
  %v2734 = vpop.f32.mrf.mxu0
  %v2735 = vadd.f32 %v2571, %v2734
  %2736 = vmatmul.f32.gmra.mxu0 %v2246
  %v2737 = vpop.f32.mrf.mxu0
  %v2738 = vadd.f32 %v2574, %v2737
  %2739 = vmatmul.f32.gmra.mxu0 %v2249
  %v2740 = vpop.f32.mrf.mxu0
  %v2741 = vadd.f32 %v2577, %v2740
  %2742 = vmatmul.f32.gmra.mxu0 %v2252
  %v2743 = vpop.f32.mrf.mxu0
  %v2744 = vadd.f32 %v2580, %v2743
  %2745 = vmatmul.f32.gmra.mxu0 %v2255
  %v2746 = vpop.f32.mrf.mxu0
  %v2747 = vadd.f32 %v2583, %v2746
  %2748 = vmatmul.f32.gmra.mxu0 %v2258
  %v2749 = vpop.f32.mrf.mxu0
  %v2750 = vadd.f32 %v2586, %v2749
  %2751 = vmatmul.f32.gmra.mxu0 %v2261
  %v2752 = vpop.f32.mrf.mxu0
  %v2753 = vadd.f32 %v2589, %v2752
  %2754 = vmatmul.f32.gmra.mxu0 %v2264
  %v2755 = vpop.f32.mrf.mxu0
  %v2756 = vadd.f32 %v2592, %v2755
  %2757 = vdwg.mxu0
  %v2758 = vmul.f32 %v2612, %v839
  %v2759 = vmul.f32 %v2615, %v839
  %v2760 = vmul.f32 %v2618, %v839
  %v2761 = vmul.f32 %v2621, %v839
  %v2762 = vmul.f32 %v2624, %v839
  %v2763 = vmul.f32 %v2627, %v839
  %v2764 = vmul.f32 %v2630, %v839
  %v2765 = vmul.f32 %v2633, %v839
  %v2766 = vmul.f32 %v2636, %v839
  %v2767 = vmul.f32 %v2639, %v839
  %v2768 = vmul.f32 %v2642, %v839
  %v2769 = vmul.f32 %v2645, %v839
  %v2770 = vmul.f32 %v2648, %v839
  %v2771 = vmul.f32 %v2651, %v839
  %v2772 = vmul.f32 %v2654, %v839
  %v2773 = vmul.f32 %v2657, %v839
  %v2774 = vmul.f32 %v2660, %v839
  %v2775 = vmul.f32 %v2663, %v839
  %v2776 = vmul.f32 %v2666, %v839
  %v2777 = vmul.f32 %v2669, %v839
  %v2778 = vmul.f32 %v2672, %v839
  %v2779 = vmul.f32 %v2675, %v839
  %v2780 = vmul.f32 %v2678, %v839
  %v2781 = vmul.f32 %v2681, %v839
  %v2782 = vmul.f32 %v2684, %v839
  %v2783 = vmul.f32 %v2687, %v839
  %v2784 = vmul.f32 %v2690, %v839
  %v2785 = vmul.f32 %v2693, %v839
  %v2786 = vmul.f32 %v2696, %v839
  %v2787 = vmul.f32 %v2699, %v839
  %v2788 = vmul.f32 %v2702, %v839
  %v2789 = vmul.f32 %v2705, %v839
  %v2790 = vmul.f32 %v2708, %v839
  %v2791 = vmul.f32 %v2711, %v839
  %v2792 = vmul.f32 %v2714, %v839
  %v2793 = vmul.f32 %v2717, %v839
  %v2794 = vmul.f32 %v2720, %v839
  %v2795 = vmul.f32 %v2723, %v839
  %v2796 = vmul.f32 %v2726, %v839
  %v2797 = vmul.f32 %v2729, %v839
  %v2798 = vmul.f32 %v2732, %v839
  %v2799 = vmul.f32 %v2735, %v839
  %v2800 = vmul.f32 %v2738, %v839
  %v2801 = vmul.f32 %v2741, %v839
  %v2802 = vmul.f32 %v2744, %v839
  %v2803 = vmul.f32 %v2747, %v839
  %v2804 = vmul.f32 %v2750, %v839
  %v2805 = vmul.f32 %v2753, %v839
  %v2806 = vmul.f32 %v2756, %v839
  %v2807 = vadd.f32 %v2758, %v889
  %v2808 = vadd.f32 %v2759, %v889
  %v2809 = vadd.f32 %v2760, %v889
  %v2810 = vadd.f32 %v2761, %v889
  %v2811 = vadd.f32 %v2762, %v889
  %v2812 = vadd.f32 %v2763, %v889
  %v2813 = vadd.f32 %v2764, %v889
  %v2814 = vadd.f32 %v2765, %v889
  %v2815 = vadd.f32 %v2766, %v889
  %v2816 = vadd.f32 %v2767, %v889
  %v2817 = vadd.f32 %v2768, %v889
  %v2818 = vadd.f32 %v2769, %v889
  %v2819 = vadd.f32 %v2770, %v889
  %v2820 = vadd.f32 %v2771, %v889
  %v2821 = vadd.f32 %v2772, %v889
  %v2822 = vadd.f32 %v2773, %v889
  %v2823 = vadd.f32 %v2774, %v889
  %v2824 = vadd.f32 %v2775, %v889
  %v2825 = vadd.f32 %v2776, %v889
  %v2826 = vadd.f32 %v2777, %v889
  %v2827 = vadd.f32 %v2778, %v889
  %v2828 = vadd.f32 %v2779, %v889
  %v2829 = vadd.f32 %v2780, %v889
  %v2830 = vadd.f32 %v2781, %v889
  %v2831 = vadd.f32 %v2782, %v889
  %v2832 = vadd.f32 %v2783, %v889
  %v2833 = vadd.f32 %v2784, %v889
  %v2834 = vadd.f32 %v2785, %v889
  %v2835 = vadd.f32 %v2786, %v889
  %v2836 = vadd.f32 %v2787, %v889
  %v2837 = vadd.f32 %v2788, %v889
  %v2838 = vadd.f32 %v2789, %v889
  %v2839 = vadd.f32 %v2790, %v889
  %v2840 = vadd.f32 %v2791, %v889
  %v2841 = vadd.f32 %v2792, %v889
  %v2842 = vadd.f32 %v2793, %v889
  %v2843 = vadd.f32 %v2794, %v889
  %v2844 = vadd.f32 %v2795, %v889
  %v2845 = vadd.f32 %v2796, %v889
  %v2846 = vadd.f32 %v2797, %v889
  %v2847 = vadd.f32 %v2798, %v889
  %v2848 = vadd.f32 %v2799, %v889
  %v2849 = vadd.f32 %v2800, %v889
  %v2850 = vadd.f32 %v2801, %v889
  %v2851 = vadd.f32 %v2802, %v889
  %v2852 = vadd.f32 %v2803, %v889
  %v2853 = vadd.f32 %v2804, %v889
  %v2854 = vadd.f32 %v2805, %v889
  %v2855 = vadd.f32 %v2806, %v889
  %v2856 = vmax.f32 %v2807, 0.0
  %v2857 = vmax.f32 %v2808, 0.0
  %v2858 = vmax.f32 %v2809, 0.0
  %v2859 = vmax.f32 %v2810, 0.0
  %v2860 = vmax.f32 %v2811, 0.0
  %v2861 = vmax.f32 %v2812, 0.0
  %v2862 = vmax.f32 %v2813, 0.0
  %v2863 = vmax.f32 %v2814, 0.0
  %v2864 = vmax.f32 %v2815, 0.0
  %v2865 = vmax.f32 %v2816, 0.0
  %v2866 = vmax.f32 %v2817, 0.0
  %v2867 = vmax.f32 %v2818, 0.0
  %v2868 = vmax.f32 %v2819, 0.0
  %v2869 = vmax.f32 %v2820, 0.0
  %v2870 = vmax.f32 %v2821, 0.0
  %v2871 = vmax.f32 %v2822, 0.0
  %v2872 = vmax.f32 %v2823, 0.0
  %v2873 = vmax.f32 %v2824, 0.0
  %v2874 = vmax.f32 %v2825, 0.0
  %v2875 = vmax.f32 %v2826, 0.0
  %v2876 = vmax.f32 %v2827, 0.0
  %v2877 = vmax.f32 %v2828, 0.0
  %v2878 = vmax.f32 %v2829, 0.0
  %v2879 = vmax.f32 %v2830, 0.0
  %v2880 = vmax.f32 %v2831, 0.0
  %v2881 = vmax.f32 %v2832, 0.0
  %v2882 = vmax.f32 %v2833, 0.0
  %v2883 = vmax.f32 %v2834, 0.0
  %v2884 = vmax.f32 %v2835, 0.0
  %v2885 = vmax.f32 %v2836, 0.0
  %v2886 = vmax.f32 %v2837, 0.0
  %v2887 = vmax.f32 %v2838, 0.0
  %v2888 = vmax.f32 %v2839, 0.0
  %v2889 = vmax.f32 %v2840, 0.0
  %v2890 = vmax.f32 %v2841, 0.0
  %v2891 = vmax.f32 %v2842, 0.0
  %v2892 = vmax.f32 %v2843, 0.0
  %v2893 = vmax.f32 %v2844, 0.0
  %v2894 = vmax.f32 %v2845, 0.0
  %v2895 = vmax.f32 %v2846, 0.0
  %v2896 = vmax.f32 %v2847, 0.0
  %v2897 = vmax.f32 %v2848, 0.0
  %v2898 = vmax.f32 %v2849, 0.0
  %v2899 = vmax.f32 %v2850, 0.0
  %v2900 = vmax.f32 %v2851, 0.0
  %v2901 = vmax.f32 %v2852, 0.0
  %v2902 = vmax.f32 %v2853, 0.0
  %v2903 = vmax.f32 %v2854, 0.0
  %v2904 = vmax.f32 %v2855, 0.0
  %s2905 = scalar_lea.vmem %s0, 3528
  %v2906 = vld [vmem:[%s2905] sm:$0xff]
  %v2907 = vld [vmem:[%s2905 + $0x8] sm:$0xff]
  %v2908 = vld [vmem:[%s2905 + $0x10] sm:$0xff]
  %v2909 = vld [vmem:[%s2905 + $0x18] sm:$0xff]
  %v2910 = vld [vmem:[%s2905 + $0x20] sm:$0xff]
  %v2911 = vld [vmem:[%s2905 + $0x28] sm:$0xff]
  %v2912 = vld [vmem:[%s2905 + $0x30] sm:$0xff]
  %v2913 = vld [vmem:[%s2905 + $0x38] sm:$0xff]
  %v2914 = vld [vmem:[%s2905 + $0x40] sm:$0xff]
  %v2915 = vld [vmem:[%s2905 + $0x48] sm:$0xff]
  %v2916 = vld [vmem:[%s2905 + $0x50] sm:$0xff]
  %v2917 = vld [vmem:[%s2905 + $0x58] sm:$0xff]
  %v2918 = vld [vmem:[%s2905 + $0x60] sm:$0xff]
  %v2919 = vld [vmem:[%s2905 + $0x68] sm:$0xff]
  %v2920 = vld [vmem:[%s2905 + $0x70] sm:$0xff]
  %v2921 = vld [vmem:[%s2905 + $0x78] sm:$0xff]
  %v2922 = vld [vmem:[%s2905 + $0x80] sm:$0xff]
  %v2923 = vld [vmem:[%s2905 + $0x88] sm:$0xff]
  %v2924 = vld [vmem:[%s2905 + $0x90] sm:$0xff]
  %v2925 = vld [vmem:[%s2905 + $0x98] sm:$0xff]
  %v2926 = vld [vmem:[%s2905 + $0xa0] sm:$0xff]
  %v2927 = vld [vmem:[%s2905 + $0xa8] sm:$0xff]
  %v2928 = vld [vmem:[%s2905 + $0xb0] sm:$0xff]
  %v2929 = vld [vmem:[%s2905 + $0xb8] sm:$0xff]
  %v2930 = vld [vmem:[%s2905 + $0xc0] sm:$0xff]
  %v2931 = vld [vmem:[%s2905 + $0xc8] sm:$0xff]
  %v2932 = vld [vmem:[%s2905 + $0xd0] sm:$0xff]
  %v2933 = vld [vmem:[%s2905 + $0xd8] sm:$0xff]
  %v2934 = vld [vmem:[%s2905 + $0xe0] sm:$0xff]
  %v2935 = vld [vmem:[%s2905 + $0xe8] sm:$0xff]
  %v2936 = vld [vmem:[%s2905 + $0xf0] sm:$0xff]
  %v2937 = vld [vmem:[%s2905 + $0xf8] sm:$0xff]
  %v2938 = vld [vmem:[%s2905 + $0x100] sm:$0xff]
  %v2939 = vld [vmem:[%s2905 + $0x108] sm:$0xff]
  %v2940 = vld [vmem:[%s2905 + $0x110] sm:$0xff]
  %v2941 = vld [vmem:[%s2905 + $0x118] sm:$0xff]
  %v2942 = vld [vmem:[%s2905 + $0x120] sm:$0xff]
  %v2943 = vld [vmem:[%s2905 + $0x128] sm:$0xff]
  %v2944 = vld [vmem:[%s2905 + $0x130] sm:$0xff]
  %v2945 = vld [vmem:[%s2905 + $0x138] sm:$0xff]
  %v2946 = vld [vmem:[%s2905 + $0x140] sm:$0xff]
  %v2947 = vld [vmem:[%s2905 + $0x148] sm:$0xff]
  %v2948 = vld [vmem:[%s2905 + $0x150] sm:$0xff]
  %v2949 = vld [vmem:[%s2905 + $0x158] sm:$0xff]
  %v2950 = vld [vmem:[%s2905 + $0x160] sm:$0xff]
  %v2951 = vld [vmem:[%s2905 + $0x168] sm:$0xff]
  %v2952 = vld [vmem:[%s2905 + $0x170] sm:$0xff]
  %v2953 = vld [vmem:[%s2905 + $0x178] sm:$0xff]
  %v2954 = vld [vmem:[%s2905 + $0x180] sm:$0xff]
  %v2955 = vld [vmem:[%s2905 + $0x188] sm:$0xff]
  %v2956 = vld [vmem:[%s2905 + $0x190] sm:$0xff]
  %v2957 = vld [vmem:[%s2905 + $0x198] sm:$0xff]
  %v2958 = vld [vmem:[%s2905 + $0x1a0] sm:$0xff]
  %v2959 = vld [vmem:[%s2905 + $0x1a8] sm:$0xff]
  %v2960 = vld [vmem:[%s2905 + $0x1b0] sm:$0xff]
  %v2961 = vld [vmem:[%s2905 + $0x1b8] sm:$0xff]
  %v2962 = vld [vmem:[%s2905 + $0x1c0] sm:$0xff]
  %v2963 = vld [vmem:[%s2905 + $0x1c8] sm:$0xff]
  %v2964 = vld [vmem:[%s2905 + $0x1d0] sm:$0xff]
  %v2965 = vld [vmem:[%s2905 + $0x1d8] sm:$0xff]
  %v2966 = vld [vmem:[%s2905 + $0x1e0] sm:$0xff]
  %v2967 = vld [vmem:[%s2905 + $0x1e8] sm:$0xff]
  %v2968 = vld [vmem:[%s2905 + $0x1f0] sm:$0xff]
  %v2969 = vld [vmem:[%s2905 + $0x1f8] sm:$0xff]
  %v2970 = vld [vmem:[%s2905 + $0x200] sm:$0xff]
  %v2971 = vld [vmem:[%s2905 + $0x208] sm:$0xff]
  %v2972 = vld [vmem:[%s2905 + $0x210] sm:$0xff]
  %v2973 = vld [vmem:[%s2905 + $0x218] sm:$0xff]
  %v2974 = vld [vmem:[%s2905 + $0x220] sm:$0xff]
  %v2975 = vld [vmem:[%s2905 + $0x228] sm:$0xff]
  %v2976 = vld [vmem:[%s2905 + $0x230] sm:$0xff]
  %v2977 = vld [vmem:[%s2905 + $0x238] sm:$0xff]
  %v2978 = vld [vmem:[%s2905 + $0x240] sm:$0xff]
  %v2979 = vld [vmem:[%s2905 + $0x248] sm:$0xff]
  %v2980 = vld [vmem:[%s2905 + $0x250] sm:$0xff]
  %v2981 = vld [vmem:[%s2905 + $0x258] sm:$0xff]
  %v2982 = vld [vmem:[%s2905 + $0x260] sm:$0xff]
  %v2983 = vld [vmem:[%s2905 + $0x268] sm:$0xff]
  %v2984 = vld [vmem:[%s2905 + $0x270] sm:$0xff]
  %v2985 = vld [vmem:[%s2905 + $0x278] sm:$0xff]
  %v2986 = vld [vmem:[%s2905 + $0x280] sm:$0xff]
  %v2987 = vld [vmem:[%s2905 + $0x288] sm:$0xff]
  %v2988 = vld [vmem:[%s2905 + $0x290] sm:$0xff]
  %v2989 = vld [vmem:[%s2905 + $0x298] sm:$0xff]
  %v2990 = vld [vmem:[%s2905 + $0x2a0] sm:$0xff]
  %v2991 = vld [vmem:[%s2905 + $0x2a8] sm:$0xff]
  %v2992 = vld [vmem:[%s2905 + $0x2b0] sm:$0xff]
  %v2993 = vld [vmem:[%s2905 + $0x2b8] sm:$0xff]
  %v2994 = vld [vmem:[%s2905 + $0x2c0] sm:$0xff]
  %v2995 = vld [vmem:[%s2905 + $0x2c8] sm:$0xff]
  %v2996 = vld [vmem:[%s2905 + $0x2d0] sm:$0xff]
  %v2997 = vld [vmem:[%s2905 + $0x2d8] sm:$0xff]
  %v2998 = vld [vmem:[%s2905 + $0x2e0] sm:$0xff]
  %v2999 = vld [vmem:[%s2905 + $0x2e8] sm:$0xff]
  %v3000 = vld [vmem:[%s2905 + $0x2f0] sm:$0xff]
  %v3001 = vld [vmem:[%s2905 + $0x2f8] sm:$0xff]
  %v3002 = vld [vmem:[%s2905 + $0x300] sm:$0xff]
  %v3003 = vld [vmem:[%s2905 + $0x308] sm:$0xff]
  %v3004 = vld [vmem:[%s2905 + $0x310] sm:$0xff]
  %v3005 = vld [vmem:[%s2905 + $0x318] sm:$0xff]
  %v3006 = vld [vmem:[%s2905 + $0x320] sm:$0xff]
  %v3007 = vld [vmem:[%s2905 + $0x328] sm:$0xff]
  %v3008 = vld [vmem:[%s2905 + $0x330] sm:$0xff]
  %v3009 = vld [vmem:[%s2905 + $0x338] sm:$0xff]
  %v3010 = vld [vmem:[%s2905 + $0x340] sm:$0xff]
  %v3011 = vld [vmem:[%s2905 + $0x348] sm:$0xff]
  %v3012 = vld [vmem:[%s2905 + $0x350] sm:$0xff]
  %v3013 = vld [vmem:[%s2905 + $0x358] sm:$0xff]
  %v3014 = vld [vmem:[%s2905 + $0x360] sm:$0xff]
  %v3015 = vld [vmem:[%s2905 + $0x368] sm:$0xff]
  %v3016 = vld [vmem:[%s2905 + $0x370] sm:$0xff]
  %v3017 = vld [vmem:[%s2905 + $0x378] sm:$0xff]
  %v3018 = vld [vmem:[%s2905 + $0x380] sm:$0xff]
  %v3019 = vld [vmem:[%s2905 + $0x388] sm:$0xff]
  %v3020 = vld [vmem:[%s2905 + $0x390] sm:$0xff]
  %v3021 = vld [vmem:[%s2905 + $0x398] sm:$0xff]
  %v3022 = vld [vmem:[%s2905 + $0x3a0] sm:$0xff]
  %v3023 = vld [vmem:[%s2905 + $0x3a8] sm:$0xff]
  %v3024 = vld [vmem:[%s2905 + $0x3b0] sm:$0xff]
  %v3025 = vld [vmem:[%s2905 + $0x3b8] sm:$0xff]
  %v3026 = vld [vmem:[%s2905 + $0x3c0] sm:$0xff]
  %v3027 = vld [vmem:[%s2905 + $0x3c8] sm:$0xff]
  %v3028 = vld [vmem:[%s2905 + $0x3d0] sm:$0xff]
  %v3029 = vld [vmem:[%s2905 + $0x3d8] sm:$0xff]
  %v3030 = vld [vmem:[%s2905 + $0x3e0] sm:$0xff]
  %v3031 = vld [vmem:[%s2905 + $0x3e8] sm:$0xff]
  %v3032 = vld [vmem:[%s2905 + $0x3f0] sm:$0xff]
  %v3033 = vld [vmem:[%s2905 + $0x3f8] sm:$0xff]
  %v3034 = vld [vmem:[%s2905 + $0x400] sm:$0xff]
  %v3035 = vld [vmem:[%s2905 + $0x408] sm:$0xff]
  %v3036 = vld [vmem:[%s2905 + $0x410] sm:$0xff]
  %v3037 = vld [vmem:[%s2905 + $0x418] sm:$0xff]
  %v3038 = vld [vmem:[%s2905 + $0x420] sm:$0xff]
  %v3039 = vld [vmem:[%s2905 + $0x428] sm:$0xff]
  %v3040 = vld [vmem:[%s2905 + $0x430] sm:$0xff]
  %v3041 = vld [vmem:[%s2905 + $0x438] sm:$0xff]
  %v3042 = vld [vmem:[%s2905 + $0x440] sm:$0xff]
  %v3043 = vld [vmem:[%s2905 + $0x448] sm:$0xff]
  %v3044 = vld [vmem:[%s2905 + $0x450] sm:$0xff]
  %v3045 = vld [vmem:[%s2905 + $0x458] sm:$0xff]
  %v3046 = vld [vmem:[%s2905 + $0x460] sm:$0xff]
  %v3047 = vld [vmem:[%s2905 + $0x468] sm:$0xff]
  %v3048 = vld [vmem:[%s2905 + $0x470] sm:$0xff]
  %v3049 = vld [vmem:[%s2905 + $0x478] sm:$0xff]
  %v3050 = vld [vmem:[%s2905 + $0x480] sm:$0xff]
  %v3051 = vld [vmem:[%s2905 + $0x488] sm:$0xff]
  %v3052 = vld [vmem:[%s2905 + $0x490] sm:$0xff]
  %v3054 = vsel %vm199, %v2908, 0
  %v3057 = vsel %vm199, %v2911, 0
  %v3060 = vsel %vm199, %v2914, 0
  %v3063 = vsel %vm199, %v2917, 0
  %v3066 = vsel %vm199, %v2920, 0
  %v3069 = vsel %vm199, %v2923, 0
  %v3072 = vsel %vm199, %v2926, 0
  %v3075 = vsel %vm199, %v2929, 0
  %v3078 = vsel %vm199, %v2932, 0
  %v3081 = vsel %vm199, %v2935, 0
  %v3084 = vsel %vm199, %v2938, 0
  %v3087 = vsel %vm199, %v2941, 0
  %v3090 = vsel %vm199, %v2944, 0
  %v3093 = vsel %vm199, %v2947, 0
  %v3096 = vsel %vm199, %v2950, 0
  %v3099 = vsel %vm199, %v2953, 0
  %v3102 = vsel %vm199, %v2956, 0
  %v3105 = vsel %vm199, %v2959, 0
  %v3108 = vsel %vm199, %v2962, 0
  %v3111 = vsel %vm199, %v2965, 0
  %v3114 = vsel %vm199, %v2968, 0
  %v3117 = vsel %vm199, %v2971, 0
  %v3120 = vsel %vm199, %v2974, 0
  %v3123 = vsel %vm199, %v2977, 0
  %v3126 = vsel %vm199, %v2980, 0
  %v3129 = vsel %vm199, %v2983, 0
  %v3132 = vsel %vm199, %v2986, 0
  %v3135 = vsel %vm199, %v2989, 0
  %v3138 = vsel %vm199, %v2992, 0
  %v3141 = vsel %vm199, %v2995, 0
  %v3144 = vsel %vm199, %v2998, 0
  %v3147 = vsel %vm199, %v3001, 0
  %v3150 = vsel %vm199, %v3004, 0
  %v3153 = vsel %vm199, %v3007, 0
  %v3156 = vsel %vm199, %v3010, 0
  %v3159 = vsel %vm199, %v3013, 0
  %v3162 = vsel %vm199, %v3016, 0
  %v3165 = vsel %vm199, %v3019, 0
  %v3168 = vsel %vm199, %v3022, 0
  %v3171 = vsel %vm199, %v3025, 0
  %v3174 = vsel %vm199, %v3028, 0
  %v3177 = vsel %vm199, %v3031, 0
  %v3180 = vsel %vm199, %v3034, 0
  %v3183 = vsel %vm199, %v3037, 0
  %v3186 = vsel %vm199, %v3040, 0
  %v3189 = vsel %vm199, %v3043, 0
  %v3192 = vsel %vm199, %v3046, 0
  %v3195 = vsel %vm199, %v3049, 0
  %v3198 = vsel %vm199, %v3052, 0
  %3200 = vmatpush.msra.mxu0 %v29
  %3201 = vmatpush.msra.mxu0 %v28
  %3202 = vmatpush.msra.mxu0 %v27
  %3203 = vmatpush.msra.mxu0 %v26
  %3204 = vmatpush.msra.mxu0 %v25
  %3205 = vmatpush.msra.mxu0 %v24
  %3206 = vmatpush.msra.mxu0 %v23
  %3207 = vmatpush.msra.mxu0 %v22
  %3208 = vmatpush.msra.mxu0 %v21
  %3209 = vmatpush.msra.mxu0 %v20
  %3210 = vmatpush.msra.mxu0 %v19
  %3211 = vmatpush.msra.mxu0 %v18
  %3212 = vmatpush.msra.mxu0 %v17
  %3213 = vmatpush.msra.mxu0 %v16
  %3214 = vmatpush.msra.mxu0 %v15
  %3215 = vmatpush.msra.mxu0 %v14
  %3216 = vmatmul.f32.gmra.mxu0 %v2906
  %v3217 = vpop.f32.mrf.mxu0
  %v3218 = vadd.f32 0.0, %v3217
  %3219 = vmatmul.f32.gmra.mxu0 %v2909
  %v3220 = vpop.f32.mrf.mxu0
  %v3221 = vadd.f32 0.0, %v3220
  %3222 = vmatmul.f32.gmra.mxu0 %v2912
  %v3223 = vpop.f32.mrf.mxu0
  %v3224 = vadd.f32 0.0, %v3223
  %3225 = vmatmul.f32.gmra.mxu0 %v2915
  %v3226 = vpop.f32.mrf.mxu0
  %v3227 = vadd.f32 0.0, %v3226
  %3228 = vmatmul.f32.gmra.mxu0 %v2918
  %v3229 = vpop.f32.mrf.mxu0
  %v3230 = vadd.f32 0.0, %v3229
  %3231 = vmatmul.f32.gmra.mxu0 %v2921
  %v3232 = vpop.f32.mrf.mxu0
  %v3233 = vadd.f32 0.0, %v3232
  %3234 = vmatmul.f32.gmra.mxu0 %v2924
  %v3235 = vpop.f32.mrf.mxu0
  %v3236 = vadd.f32 0.0, %v3235
  %3237 = vmatmul.f32.gmra.mxu0 %v2927
  %v3238 = vpop.f32.mrf.mxu0
  %v3239 = vadd.f32 0.0, %v3238
  %3240 = vmatmul.f32.gmra.mxu0 %v2930
  %v3241 = vpop.f32.mrf.mxu0
  %v3242 = vadd.f32 0.0, %v3241
  %3243 = vmatmul.f32.gmra.mxu0 %v2933
  %v3244 = vpop.f32.mrf.mxu0
  %v3245 = vadd.f32 0.0, %v3244
  %3246 = vmatmul.f32.gmra.mxu0 %v2936
  %v3247 = vpop.f32.mrf.mxu0
  %v3248 = vadd.f32 0.0, %v3247
  %3249 = vmatmul.f32.gmra.mxu0 %v2939
  %v3250 = vpop.f32.mrf.mxu0
  %v3251 = vadd.f32 0.0, %v3250
  %3252 = vmatmul.f32.gmra.mxu0 %v2942
  %v3253 = vpop.f32.mrf.mxu0
  %v3254 = vadd.f32 0.0, %v3253
  %3255 = vmatmul.f32.gmra.mxu0 %v2945
  %v3256 = vpop.f32.mrf.mxu0
  %v3257 = vadd.f32 0.0, %v3256
  %3258 = vmatmul.f32.gmra.mxu0 %v2948
  %v3259 = vpop.f32.mrf.mxu0
  %v3260 = vadd.f32 0.0, %v3259
  %3261 = vmatmul.f32.gmra.mxu0 %v2951
  %v3262 = vpop.f32.mrf.mxu0
  %v3263 = vadd.f32 0.0, %v3262
  %3264 = vmatmul.f32.gmra.mxu0 %v2954
  %v3265 = vpop.f32.mrf.mxu0
  %v3266 = vadd.f32 0.0, %v3265
  %3267 = vmatmul.f32.gmra.mxu0 %v2957
  %v3268 = vpop.f32.mrf.mxu0
  %v3269 = vadd.f32 0.0, %v3268
  %3270 = vmatmul.f32.gmra.mxu0 %v2960
  %v3271 = vpop.f32.mrf.mxu0
  %v3272 = vadd.f32 0.0, %v3271
  %3273 = vmatmul.f32.gmra.mxu0 %v2963
  %v3274 = vpop.f32.mrf.mxu0
  %v3275 = vadd.f32 0.0, %v3274
  %3276 = vmatmul.f32.gmra.mxu0 %v2966
  %v3277 = vpop.f32.mrf.mxu0
  %v3278 = vadd.f32 0.0, %v3277
  %3279 = vmatmul.f32.gmra.mxu0 %v2969
  %v3280 = vpop.f32.mrf.mxu0
  %v3281 = vadd.f32 0.0, %v3280
  %3282 = vmatmul.f32.gmra.mxu0 %v2972
  %v3283 = vpop.f32.mrf.mxu0
  %v3284 = vadd.f32 0.0, %v3283
  %3285 = vmatmul.f32.gmra.mxu0 %v2975
  %v3286 = vpop.f32.mrf.mxu0
  %v3287 = vadd.f32 0.0, %v3286
  %3288 = vmatmul.f32.gmra.mxu0 %v2978
  %v3289 = vpop.f32.mrf.mxu0
  %v3290 = vadd.f32 0.0, %v3289
  %3291 = vmatmul.f32.gmra.mxu0 %v2981
  %v3292 = vpop.f32.mrf.mxu0
  %v3293 = vadd.f32 0.0, %v3292
  %3294 = vmatmul.f32.gmra.mxu0 %v2984
  %v3295 = vpop.f32.mrf.mxu0
  %v3296 = vadd.f32 0.0, %v3295
  %3297 = vmatmul.f32.gmra.mxu0 %v2987
  %v3298 = vpop.f32.mrf.mxu0
  %v3299 = vadd.f32 0.0, %v3298
  %3300 = vmatmul.f32.gmra.mxu0 %v2990
  %v3301 = vpop.f32.mrf.mxu0
  %v3302 = vadd.f32 0.0, %v3301
  %3303 = vmatmul.f32.gmra.mxu0 %v2993
  %v3304 = vpop.f32.mrf.mxu0
  %v3305 = vadd.f32 0.0, %v3304
  %3306 = vmatmul.f32.gmra.mxu0 %v2996
  %v3307 = vpop.f32.mrf.mxu0
  %v3308 = vadd.f32 0.0, %v3307
  %3309 = vmatmul.f32.gmra.mxu0 %v2999
  %v3310 = vpop.f32.mrf.mxu0
  %v3311 = vadd.f32 0.0, %v3310
  %3312 = vmatmul.f32.gmra.mxu0 %v3002
  %v3313 = vpop.f32.mrf.mxu0
  %v3314 = vadd.f32 0.0, %v3313
  %3315 = vmatmul.f32.gmra.mxu0 %v3005
  %v3316 = vpop.f32.mrf.mxu0
  %v3317 = vadd.f32 0.0, %v3316
  %3318 = vmatmul.f32.gmra.mxu0 %v3008
  %v3319 = vpop.f32.mrf.mxu0
  %v3320 = vadd.f32 0.0, %v3319
  %3321 = vmatmul.f32.gmra.mxu0 %v3011
  %v3322 = vpop.f32.mrf.mxu0
  %v3323 = vadd.f32 0.0, %v3322
  %3324 = vmatmul.f32.gmra.mxu0 %v3014
  %v3325 = vpop.f32.mrf.mxu0
  %v3326 = vadd.f32 0.0, %v3325
  %3327 = vmatmul.f32.gmra.mxu0 %v3017
  %v3328 = vpop.f32.mrf.mxu0
  %v3329 = vadd.f32 0.0, %v3328
  %3330 = vmatmul.f32.gmra.mxu0 %v3020
  %v3331 = vpop.f32.mrf.mxu0
  %v3332 = vadd.f32 0.0, %v3331
  %3333 = vmatmul.f32.gmra.mxu0 %v3023
  %v3334 = vpop.f32.mrf.mxu0
  %v3335 = vadd.f32 0.0, %v3334
  %3336 = vmatmul.f32.gmra.mxu0 %v3026
  %v3337 = vpop.f32.mrf.mxu0
  %v3338 = vadd.f32 0.0, %v3337
  %3339 = vmatmul.f32.gmra.mxu0 %v3029
  %v3340 = vpop.f32.mrf.mxu0
  %v3341 = vadd.f32 0.0, %v3340
  %3342 = vmatmul.f32.gmra.mxu0 %v3032
  %v3343 = vpop.f32.mrf.mxu0
  %v3344 = vadd.f32 0.0, %v3343
  %3345 = vmatmul.f32.gmra.mxu0 %v3035
  %v3346 = vpop.f32.mrf.mxu0
  %v3347 = vadd.f32 0.0, %v3346
  %3348 = vmatmul.f32.gmra.mxu0 %v3038
  %v3349 = vpop.f32.mrf.mxu0
  %v3350 = vadd.f32 0.0, %v3349
  %3351 = vmatmul.f32.gmra.mxu0 %v3041
  %v3352 = vpop.f32.mrf.mxu0
  %v3353 = vadd.f32 0.0, %v3352
  %3354 = vmatmul.f32.gmra.mxu0 %v3044
  %v3355 = vpop.f32.mrf.mxu0
  %v3356 = vadd.f32 0.0, %v3355
  %3357 = vmatmul.f32.gmra.mxu0 %v3047
  %v3358 = vpop.f32.mrf.mxu0
  %v3359 = vadd.f32 0.0, %v3358
  %3360 = vmatmul.f32.gmra.mxu0 %v3050
  %v3361 = vpop.f32.mrf.mxu0
  %v3362 = vadd.f32 0.0, %v3361
  %3363 = vdwg.mxu0
  %3364 = vmatpush.msra.mxu0 %v45
  %3365 = vmatpush.msra.mxu0 %v44
  %3366 = vmatpush.msra.mxu0 %v43
  %3367 = vmatpush.msra.mxu0 %v42
  %3368 = vmatpush.msra.mxu0 %v41
  %3369 = vmatpush.msra.mxu0 %v40
  %3370 = vmatpush.msra.mxu0 %v39
  %3371 = vmatpush.msra.mxu0 %v38
  %3372 = vmatpush.msra.mxu0 %v37
  %3373 = vmatpush.msra.mxu0 %v36
  %3374 = vmatpush.msra.mxu0 %v35
  %3375 = vmatpush.msra.mxu0 %v34
  %3376 = vmatpush.msra.mxu0 %v33
  %3377 = vmatpush.msra.mxu0 %v32
  %3378 = vmatpush.msra.mxu0 %v31
  %3379 = vmatpush.msra.mxu0 %v30
  %3380 = vmatmul.f32.gmra.mxu0 %v2907
  %v3381 = vpop.f32.mrf.mxu0
  %v3382 = vadd.f32 %v3218, %v3381
  %3383 = vmatmul.f32.gmra.mxu0 %v2910
  %v3384 = vpop.f32.mrf.mxu0
  %v3385 = vadd.f32 %v3221, %v3384
  %3386 = vmatmul.f32.gmra.mxu0 %v2913
  %v3387 = vpop.f32.mrf.mxu0
  %v3388 = vadd.f32 %v3224, %v3387
  %3389 = vmatmul.f32.gmra.mxu0 %v2916
  %v3390 = vpop.f32.mrf.mxu0
  %v3391 = vadd.f32 %v3227, %v3390
  %3392 = vmatmul.f32.gmra.mxu0 %v2919
  %v3393 = vpop.f32.mrf.mxu0
  %v3394 = vadd.f32 %v3230, %v3393
  %3395 = vmatmul.f32.gmra.mxu0 %v2922
  %v3396 = vpop.f32.mrf.mxu0
  %v3397 = vadd.f32 %v3233, %v3396
  %3398 = vmatmul.f32.gmra.mxu0 %v2925
  %v3399 = vpop.f32.mrf.mxu0
  %v3400 = vadd.f32 %v3236, %v3399
  %3401 = vmatmul.f32.gmra.mxu0 %v2928
  %v3402 = vpop.f32.mrf.mxu0
  %v3403 = vadd.f32 %v3239, %v3402
  %3404 = vmatmul.f32.gmra.mxu0 %v2931
  %v3405 = vpop.f32.mrf.mxu0
  %v3406 = vadd.f32 %v3242, %v3405
  %3407 = vmatmul.f32.gmra.mxu0 %v2934
  %v3408 = vpop.f32.mrf.mxu0
  %v3409 = vadd.f32 %v3245, %v3408
  %3410 = vmatmul.f32.gmra.mxu0 %v2937
  %v3411 = vpop.f32.mrf.mxu0
  %v3412 = vadd.f32 %v3248, %v3411
  %3413 = vmatmul.f32.gmra.mxu0 %v2940
  %v3414 = vpop.f32.mrf.mxu0
  %v3415 = vadd.f32 %v3251, %v3414
  %3416 = vmatmul.f32.gmra.mxu0 %v2943
  %v3417 = vpop.f32.mrf.mxu0
  %v3418 = vadd.f32 %v3254, %v3417
  %3419 = vmatmul.f32.gmra.mxu0 %v2946
  %v3420 = vpop.f32.mrf.mxu0
  %v3421 = vadd.f32 %v3257, %v3420
  %3422 = vmatmul.f32.gmra.mxu0 %v2949
  %v3423 = vpop.f32.mrf.mxu0
  %v3424 = vadd.f32 %v3260, %v3423
  %3425 = vmatmul.f32.gmra.mxu0 %v2952
  %v3426 = vpop.f32.mrf.mxu0
  %v3427 = vadd.f32 %v3263, %v3426
  %3428 = vmatmul.f32.gmra.mxu0 %v2955
  %v3429 = vpop.f32.mrf.mxu0
  %v3430 = vadd.f32 %v3266, %v3429
  %3431 = vmatmul.f32.gmra.mxu0 %v2958
  %v3432 = vpop.f32.mrf.mxu0
  %v3433 = vadd.f32 %v3269, %v3432
  %3434 = vmatmul.f32.gmra.mxu0 %v2961
  %v3435 = vpop.f32.mrf.mxu0
  %v3436 = vadd.f32 %v3272, %v3435
  %3437 = vmatmul.f32.gmra.mxu0 %v2964
  %v3438 = vpop.f32.mrf.mxu0
  %v3439 = vadd.f32 %v3275, %v3438
  %3440 = vmatmul.f32.gmra.mxu0 %v2967
  %v3441 = vpop.f32.mrf.mxu0
  %v3442 = vadd.f32 %v3278, %v3441
  %3443 = vmatmul.f32.gmra.mxu0 %v2970
  %v3444 = vpop.f32.mrf.mxu0
  %v3445 = vadd.f32 %v3281, %v3444
  %3446 = vmatmul.f32.gmra.mxu0 %v2973
  %v3447 = vpop.f32.mrf.mxu0
  %v3448 = vadd.f32 %v3284, %v3447
  %3449 = vmatmul.f32.gmra.mxu0 %v2976
  %v3450 = vpop.f32.mrf.mxu0
  %v3451 = vadd.f32 %v3287, %v3450
  %3452 = vmatmul.f32.gmra.mxu0 %v2979
  %v3453 = vpop.f32.mrf.mxu0
  %v3454 = vadd.f32 %v3290, %v3453
  %3455 = vmatmul.f32.gmra.mxu0 %v2982
  %v3456 = vpop.f32.mrf.mxu0
  %v3457 = vadd.f32 %v3293, %v3456
  %3458 = vmatmul.f32.gmra.mxu0 %v2985
  %v3459 = vpop.f32.mrf.mxu0
  %v3460 = vadd.f32 %v3296, %v3459
  %3461 = vmatmul.f32.gmra.mxu0 %v2988
  %v3462 = vpop.f32.mrf.mxu0
  %v3463 = vadd.f32 %v3299, %v3462
  %3464 = vmatmul.f32.gmra.mxu0 %v2991
  %v3465 = vpop.f32.mrf.mxu0
  %v3466 = vadd.f32 %v3302, %v3465
  %3467 = vmatmul.f32.gmra.mxu0 %v2994
  %v3468 = vpop.f32.mrf.mxu0
  %v3469 = vadd.f32 %v3305, %v3468
  %3470 = vmatmul.f32.gmra.mxu0 %v2997
  %v3471 = vpop.f32.mrf.mxu0
  %v3472 = vadd.f32 %v3308, %v3471
  %3473 = vmatmul.f32.gmra.mxu0 %v3000
  %v3474 = vpop.f32.mrf.mxu0
  %v3475 = vadd.f32 %v3311, %v3474
  %3476 = vmatmul.f32.gmra.mxu0 %v3003
  %v3477 = vpop.f32.mrf.mxu0
  %v3478 = vadd.f32 %v3314, %v3477
  %3479 = vmatmul.f32.gmra.mxu0 %v3006
  %v3480 = vpop.f32.mrf.mxu0
  %v3481 = vadd.f32 %v3317, %v3480
  %3482 = vmatmul.f32.gmra.mxu0 %v3009
  %v3483 = vpop.f32.mrf.mxu0
  %v3484 = vadd.f32 %v3320, %v3483
  %3485 = vmatmul.f32.gmra.mxu0 %v3012
  %v3486 = vpop.f32.mrf.mxu0
  %v3487 = vadd.f32 %v3323, %v3486
  %3488 = vmatmul.f32.gmra.mxu0 %v3015
  %v3489 = vpop.f32.mrf.mxu0
  %v3490 = vadd.f32 %v3326, %v3489
  %3491 = vmatmul.f32.gmra.mxu0 %v3018
  %v3492 = vpop.f32.mrf.mxu0
  %v3493 = vadd.f32 %v3329, %v3492
  %3494 = vmatmul.f32.gmra.mxu0 %v3021
  %v3495 = vpop.f32.mrf.mxu0
  %v3496 = vadd.f32 %v3332, %v3495
  %3497 = vmatmul.f32.gmra.mxu0 %v3024
  %v3498 = vpop.f32.mrf.mxu0
  %v3499 = vadd.f32 %v3335, %v3498
  %3500 = vmatmul.f32.gmra.mxu0 %v3027
  %v3501 = vpop.f32.mrf.mxu0
  %v3502 = vadd.f32 %v3338, %v3501
  %3503 = vmatmul.f32.gmra.mxu0 %v3030
  %v3504 = vpop.f32.mrf.mxu0
  %v3505 = vadd.f32 %v3341, %v3504
  %3506 = vmatmul.f32.gmra.mxu0 %v3033
  %v3507 = vpop.f32.mrf.mxu0
  %v3508 = vadd.f32 %v3344, %v3507
  %3509 = vmatmul.f32.gmra.mxu0 %v3036
  %v3510 = vpop.f32.mrf.mxu0
  %v3511 = vadd.f32 %v3347, %v3510
  %3512 = vmatmul.f32.gmra.mxu0 %v3039
  %v3513 = vpop.f32.mrf.mxu0
  %v3514 = vadd.f32 %v3350, %v3513
  %3515 = vmatmul.f32.gmra.mxu0 %v3042
  %v3516 = vpop.f32.mrf.mxu0
  %v3517 = vadd.f32 %v3353, %v3516
  %3518 = vmatmul.f32.gmra.mxu0 %v3045
  %v3519 = vpop.f32.mrf.mxu0
  %v3520 = vadd.f32 %v3356, %v3519
  %3521 = vmatmul.f32.gmra.mxu0 %v3048
  %v3522 = vpop.f32.mrf.mxu0
  %v3523 = vadd.f32 %v3359, %v3522
  %3524 = vmatmul.f32.gmra.mxu0 %v3051
  %v3525 = vpop.f32.mrf.mxu0
  %v3526 = vadd.f32 %v3362, %v3525
  %3527 = vdwg.mxu0
  %3528 = vmatpush.msra.mxu0 0.0
  %3529 = vmatpush.msra.mxu0 0.0
  %3530 = vmatpush.msra.mxu0 0.0
  %3531 = vmatpush.msra.mxu0 0.0
  %3532 = vmatpush.msra.mxu0 0.0
  %3533 = vmatpush.msra.mxu0 0.0
  %3534 = vmatpush.msra.mxu0 0.0
  %3535 = vmatpush.msra.mxu0 0.0
  %3536 = vmatpush.msra.mxu0 0.0
  %3537 = vmatpush.msra.mxu0 0.0
  %3538 = vmatpush.msra.mxu0 0.0
  %3539 = vmatpush.msra.mxu0 0.0
  %3540 = vmatpush.msra.mxu0 %v49
  %3541 = vmatpush.msra.mxu0 %v48
  %3542 = vmatpush.msra.mxu0 %v47
  %3543 = vmatpush.msra.mxu0 %v46
  %3544 = vmatmul.f32.gmra.mxu0 %v3054
  %v3545 = vpop.f32.mrf.mxu0
  %v3546 = vadd.f32 %v3382, %v3545
  %3547 = vmatmul.f32.gmra.mxu0 %v3057
  %v3548 = vpop.f32.mrf.mxu0
  %v3549 = vadd.f32 %v3385, %v3548
  %3550 = vmatmul.f32.gmra.mxu0 %v3060
  %v3551 = vpop.f32.mrf.mxu0
  %v3552 = vadd.f32 %v3388, %v3551
  %3553 = vmatmul.f32.gmra.mxu0 %v3063
  %v3554 = vpop.f32.mrf.mxu0
  %v3555 = vadd.f32 %v3391, %v3554
  %3556 = vmatmul.f32.gmra.mxu0 %v3066
  %v3557 = vpop.f32.mrf.mxu0
  %v3558 = vadd.f32 %v3394, %v3557
  %3559 = vmatmul.f32.gmra.mxu0 %v3069
  %v3560 = vpop.f32.mrf.mxu0
  %v3561 = vadd.f32 %v3397, %v3560
  %3562 = vmatmul.f32.gmra.mxu0 %v3072
  %v3563 = vpop.f32.mrf.mxu0
  %v3564 = vadd.f32 %v3400, %v3563
  %3565 = vmatmul.f32.gmra.mxu0 %v3075
  %v3566 = vpop.f32.mrf.mxu0
  %v3567 = vadd.f32 %v3403, %v3566
  %3568 = vmatmul.f32.gmra.mxu0 %v3078
  %v3569 = vpop.f32.mrf.mxu0
  %v3570 = vadd.f32 %v3406, %v3569
  %3571 = vmatmul.f32.gmra.mxu0 %v3081
  %v3572 = vpop.f32.mrf.mxu0
  %v3573 = vadd.f32 %v3409, %v3572
  %3574 = vmatmul.f32.gmra.mxu0 %v3084
  %v3575 = vpop.f32.mrf.mxu0
  %v3576 = vadd.f32 %v3412, %v3575
  %3577 = vmatmul.f32.gmra.mxu0 %v3087
  %v3578 = vpop.f32.mrf.mxu0
  %v3579 = vadd.f32 %v3415, %v3578
  %3580 = vmatmul.f32.gmra.mxu0 %v3090
  %v3581 = vpop.f32.mrf.mxu0
  %v3582 = vadd.f32 %v3418, %v3581
  %3583 = vmatmul.f32.gmra.mxu0 %v3093
  %v3584 = vpop.f32.mrf.mxu0
  %v3585 = vadd.f32 %v3421, %v3584
  %3586 = vmatmul.f32.gmra.mxu0 %v3096
  %v3587 = vpop.f32.mrf.mxu0
  %v3588 = vadd.f32 %v3424, %v3587
  %3589 = vmatmul.f32.gmra.mxu0 %v3099
  %v3590 = vpop.f32.mrf.mxu0
  %v3591 = vadd.f32 %v3427, %v3590
  %3592 = vmatmul.f32.gmra.mxu0 %v3102
  %v3593 = vpop.f32.mrf.mxu0
  %v3594 = vadd.f32 %v3430, %v3593
  %3595 = vmatmul.f32.gmra.mxu0 %v3105
  %v3596 = vpop.f32.mrf.mxu0
  %v3597 = vadd.f32 %v3433, %v3596
  %3598 = vmatmul.f32.gmra.mxu0 %v3108
  %v3599 = vpop.f32.mrf.mxu0
  %v3600 = vadd.f32 %v3436, %v3599
  %3601 = vmatmul.f32.gmra.mxu0 %v3111
  %v3602 = vpop.f32.mrf.mxu0
  %v3603 = vadd.f32 %v3439, %v3602
  %3604 = vmatmul.f32.gmra.mxu0 %v3114
  %v3605 = vpop.f32.mrf.mxu0
  %v3606 = vadd.f32 %v3442, %v3605
  %3607 = vmatmul.f32.gmra.mxu0 %v3117
  %v3608 = vpop.f32.mrf.mxu0
  %v3609 = vadd.f32 %v3445, %v3608
  %3610 = vmatmul.f32.gmra.mxu0 %v3120
  %v3611 = vpop.f32.mrf.mxu0
  %v3612 = vadd.f32 %v3448, %v3611
  %3613 = vmatmul.f32.gmra.mxu0 %v3123
  %v3614 = vpop.f32.mrf.mxu0
  %v3615 = vadd.f32 %v3451, %v3614
  %3616 = vmatmul.f32.gmra.mxu0 %v3126
  %v3617 = vpop.f32.mrf.mxu0
  %v3618 = vadd.f32 %v3454, %v3617
  %3619 = vmatmul.f32.gmra.mxu0 %v3129
  %v3620 = vpop.f32.mrf.mxu0
  %v3621 = vadd.f32 %v3457, %v3620
  %3622 = vmatmul.f32.gmra.mxu0 %v3132
  %v3623 = vpop.f32.mrf.mxu0
  %v3624 = vadd.f32 %v3460, %v3623
  %3625 = vmatmul.f32.gmra.mxu0 %v3135
  %v3626 = vpop.f32.mrf.mxu0
  %v3627 = vadd.f32 %v3463, %v3626
  %3628 = vmatmul.f32.gmra.mxu0 %v3138
  %v3629 = vpop.f32.mrf.mxu0
  %v3630 = vadd.f32 %v3466, %v3629
  %3631 = vmatmul.f32.gmra.mxu0 %v3141
  %v3632 = vpop.f32.mrf.mxu0
  %v3633 = vadd.f32 %v3469, %v3632
  %3634 = vmatmul.f32.gmra.mxu0 %v3144
  %v3635 = vpop.f32.mrf.mxu0
  %v3636 = vadd.f32 %v3472, %v3635
  %3637 = vmatmul.f32.gmra.mxu0 %v3147
  %v3638 = vpop.f32.mrf.mxu0
  %v3639 = vadd.f32 %v3475, %v3638
  %3640 = vmatmul.f32.gmra.mxu0 %v3150
  %v3641 = vpop.f32.mrf.mxu0
  %v3642 = vadd.f32 %v3478, %v3641
  %3643 = vmatmul.f32.gmra.mxu0 %v3153
  %v3644 = vpop.f32.mrf.mxu0
  %v3645 = vadd.f32 %v3481, %v3644
  %3646 = vmatmul.f32.gmra.mxu0 %v3156
  %v3647 = vpop.f32.mrf.mxu0
  %v3648 = vadd.f32 %v3484, %v3647
  %3649 = vmatmul.f32.gmra.mxu0 %v3159
  %v3650 = vpop.f32.mrf.mxu0
  %v3651 = vadd.f32 %v3487, %v3650
  %3652 = vmatmul.f32.gmra.mxu0 %v3162
  %v3653 = vpop.f32.mrf.mxu0
  %v3654 = vadd.f32 %v3490, %v3653
  %3655 = vmatmul.f32.gmra.mxu0 %v3165
  %v3656 = vpop.f32.mrf.mxu0
  %v3657 = vadd.f32 %v3493, %v3656
  %3658 = vmatmul.f32.gmra.mxu0 %v3168
  %v3659 = vpop.f32.mrf.mxu0
  %v3660 = vadd.f32 %v3496, %v3659
  %3661 = vmatmul.f32.gmra.mxu0 %v3171
  %v3662 = vpop.f32.mrf.mxu0
  %v3663 = vadd.f32 %v3499, %v3662
  %3664 = vmatmul.f32.gmra.mxu0 %v3174
  %v3665 = vpop.f32.mrf.mxu0
  %v3666 = vadd.f32 %v3502, %v3665
  %3667 = vmatmul.f32.gmra.mxu0 %v3177
  %v3668 = vpop.f32.mrf.mxu0
  %v3669 = vadd.f32 %v3505, %v3668
  %3670 = vmatmul.f32.gmra.mxu0 %v3180
  %v3671 = vpop.f32.mrf.mxu0
  %v3672 = vadd.f32 %v3508, %v3671
  %3673 = vmatmul.f32.gmra.mxu0 %v3183
  %v3674 = vpop.f32.mrf.mxu0
  %v3675 = vadd.f32 %v3511, %v3674
  %3676 = vmatmul.f32.gmra.mxu0 %v3186
  %v3677 = vpop.f32.mrf.mxu0
  %v3678 = vadd.f32 %v3514, %v3677
  %3679 = vmatmul.f32.gmra.mxu0 %v3189
  %v3680 = vpop.f32.mrf.mxu0
  %v3681 = vadd.f32 %v3517, %v3680
  %3682 = vmatmul.f32.gmra.mxu0 %v3192
  %v3683 = vpop.f32.mrf.mxu0
  %v3684 = vadd.f32 %v3520, %v3683
  %3685 = vmatmul.f32.gmra.mxu0 %v3195
  %v3686 = vpop.f32.mrf.mxu0
  %v3687 = vadd.f32 %v3523, %v3686
  %3688 = vmatmul.f32.gmra.mxu0 %v3198
  %v3689 = vpop.f32.mrf.mxu0
  %v3690 = vadd.f32 %v3526, %v3689
  %3691 = vdwg.mxu0
  %v3692 = vmul.f32 %v3546, %v839
  %v3693 = vmul.f32 %v3549, %v839
  %v3694 = vmul.f32 %v3552, %v839
  %v3695 = vmul.f32 %v3555, %v839
  %v3696 = vmul.f32 %v3558, %v839
  %v3697 = vmul.f32 %v3561, %v839
  %v3698 = vmul.f32 %v3564, %v839
  %v3699 = vmul.f32 %v3567, %v839
  %v3700 = vmul.f32 %v3570, %v839
  %v3701 = vmul.f32 %v3573, %v839
  %v3702 = vmul.f32 %v3576, %v839
  %v3703 = vmul.f32 %v3579, %v839
  %v3704 = vmul.f32 %v3582, %v839
  %v3705 = vmul.f32 %v3585, %v839
  %v3706 = vmul.f32 %v3588, %v839
  %v3707 = vmul.f32 %v3591, %v839
  %v3708 = vmul.f32 %v3594, %v839
  %v3709 = vmul.f32 %v3597, %v839
  %v3710 = vmul.f32 %v3600, %v839
  %v3711 = vmul.f32 %v3603, %v839
  %v3712 = vmul.f32 %v3606, %v839
  %v3713 = vmul.f32 %v3609, %v839
  %v3714 = vmul.f32 %v3612, %v839
  %v3715 = vmul.f32 %v3615, %v839
  %v3716 = vmul.f32 %v3618, %v839
  %v3717 = vmul.f32 %v3621, %v839
  %v3718 = vmul.f32 %v3624, %v839
  %v3719 = vmul.f32 %v3627, %v839
  %v3720 = vmul.f32 %v3630, %v839
  %v3721 = vmul.f32 %v3633, %v839
  %v3722 = vmul.f32 %v3636, %v839
  %v3723 = vmul.f32 %v3639, %v839
  %v3724 = vmul.f32 %v3642, %v839
  %v3725 = vmul.f32 %v3645, %v839
  %v3726 = vmul.f32 %v3648, %v839
  %v3727 = vmul.f32 %v3651, %v839
  %v3728 = vmul.f32 %v3654, %v839
  %v3729 = vmul.f32 %v3657, %v839
  %v3730 = vmul.f32 %v3660, %v839
  %v3731 = vmul.f32 %v3663, %v839
  %v3732 = vmul.f32 %v3666, %v839
  %v3733 = vmul.f32 %v3669, %v839
  %v3734 = vmul.f32 %v3672, %v839
  %v3735 = vmul.f32 %v3675, %v839
  %v3736 = vmul.f32 %v3678, %v839
  %v3737 = vmul.f32 %v3681, %v839
  %v3738 = vmul.f32 %v3684, %v839
  %v3739 = vmul.f32 %v3687, %v839
  %v3740 = vmul.f32 %v3690, %v839
  %v3741 = vadd.f32 %v3692, %v889
  %v3742 = vadd.f32 %v3693, %v889
  %v3743 = vadd.f32 %v3694, %v889
  %v3744 = vadd.f32 %v3695, %v889
  %v3745 = vadd.f32 %v3696, %v889
  %v3746 = vadd.f32 %v3697, %v889
  %v3747 = vadd.f32 %v3698, %v889
  %v3748 = vadd.f32 %v3699, %v889
  %v3749 = vadd.f32 %v3700, %v889
  %v3750 = vadd.f32 %v3701, %v889
  %v3751 = vadd.f32 %v3702, %v889
  %v3752 = vadd.f32 %v3703, %v889
  %v3753 = vadd.f32 %v3704, %v889
  %v3754 = vadd.f32 %v3705, %v889
  %v3755 = vadd.f32 %v3706, %v889
  %v3756 = vadd.f32 %v3707, %v889
  %v3757 = vadd.f32 %v3708, %v889
  %v3758 = vadd.f32 %v3709, %v889
  %v3759 = vadd.f32 %v3710, %v889
  %v3760 = vadd.f32 %v3711, %v889
  %v3761 = vadd.f32 %v3712, %v889
  %v3762 = vadd.f32 %v3713, %v889
  %v3763 = vadd.f32 %v3714, %v889
  %v3764 = vadd.f32 %v3715, %v889
  %v3765 = vadd.f32 %v3716, %v889
  %v3766 = vadd.f32 %v3717, %v889
  %v3767 = vadd.f32 %v3718, %v889
  %v3768 = vadd.f32 %v3719, %v889
  %v3769 = vadd.f32 %v3720, %v889
  %v3770 = vadd.f32 %v3721, %v889
  %v3771 = vadd.f32 %v3722, %v889
  %v3772 = vadd.f32 %v3723, %v889
  %v3773 = vadd.f32 %v3724, %v889
  %v3774 = vadd.f32 %v3725, %v889
  %v3775 = vadd.f32 %v3726, %v889
  %v3776 = vadd.f32 %v3727, %v889
  %v3777 = vadd.f32 %v3728, %v889
  %v3778 = vadd.f32 %v3729, %v889
  %v3779 = vadd.f32 %v3730, %v889
  %v3780 = vadd.f32 %v3731, %v889
  %v3781 = vadd.f32 %v3732, %v889
  %v3782 = vadd.f32 %v3733, %v889
  %v3783 = vadd.f32 %v3734, %v889
  %v3784 = vadd.f32 %v3735, %v889
  %v3785 = vadd.f32 %v3736, %v889
  %v3786 = vadd.f32 %v3737, %v889
  %v3787 = vadd.f32 %v3738, %v889
  %v3788 = vadd.f32 %v3739, %v889
  %v3789 = vadd.f32 %v3740, %v889
  %v3790 = vmax.f32 %v3741, 0.0
  %v3791 = vmax.f32 %v3742, 0.0
  %v3792 = vmax.f32 %v3743, 0.0
  %v3793 = vmax.f32 %v3744, 0.0
  %v3794 = vmax.f32 %v3745, 0.0
  %v3795 = vmax.f32 %v3746, 0.0
  %v3796 = vmax.f32 %v3747, 0.0
  %v3797 = vmax.f32 %v3748, 0.0
  %v3798 = vmax.f32 %v3749, 0.0
  %v3799 = vmax.f32 %v3750, 0.0
  %v3800 = vmax.f32 %v3751, 0.0
  %v3801 = vmax.f32 %v3752, 0.0
  %v3802 = vmax.f32 %v3753, 0.0
  %v3803 = vmax.f32 %v3754, 0.0
  %v3804 = vmax.f32 %v3755, 0.0
  %v3805 = vmax.f32 %v3756, 0.0
  %v3806 = vmax.f32 %v3757, 0.0
  %v3807 = vmax.f32 %v3758, 0.0
  %v3808 = vmax.f32 %v3759, 0.0
  %v3809 = vmax.f32 %v3760, 0.0
  %v3810 = vmax.f32 %v3761, 0.0
  %v3811 = vmax.f32 %v3762, 0.0
  %v3812 = vmax.f32 %v3763, 0.0
  %v3813 = vmax.f32 %v3764, 0.0
  %v3814 = vmax.f32 %v3765, 0.0
  %v3815 = vmax.f32 %v3766, 0.0
  %v3816 = vmax.f32 %v3767, 0.0
  %v3817 = vmax.f32 %v3768, 0.0
  %v3818 = vmax.f32 %v3769, 0.0
  %v3819 = vmax.f32 %v3770, 0.0
  %v3820 = vmax.f32 %v3771, 0.0
  %v3821 = vmax.f32 %v3772, 0.0
  %v3822 = vmax.f32 %v3773, 0.0
  %v3823 = vmax.f32 %v3774, 0.0
  %v3824 = vmax.f32 %v3775, 0.0
  %v3825 = vmax.f32 %v3776, 0.0
  %v3826 = vmax.f32 %v3777, 0.0
  %v3827 = vmax.f32 %v3778, 0.0
  %v3828 = vmax.f32 %v3779, 0.0
  %v3829 = vmax.f32 %v3780, 0.0
  %v3830 = vmax.f32 %v3781, 0.0
  %v3831 = vmax.f32 %v3782, 0.0
  %v3832 = vmax.f32 %v3783, 0.0
  %v3833 = vmax.f32 %v3784, 0.0
  %v3834 = vmax.f32 %v3785, 0.0
  %v3835 = vmax.f32 %v3786, 0.0
  %v3836 = vmax.f32 %v3787, 0.0
  %v3837 = vmax.f32 %v3788, 0.0
  %v3838 = vmax.f32 %v3789, 0.0
  %v3839 = vmax.f32 %v2856, %v3790
  %v3840 = vmax.f32 %v2857, %v3791
  %v3841 = vmax.f32 %v2858, %v3792
  %v3842 = vmax.f32 %v2859, %v3793
  %v3843 = vmax.f32 %v2860, %v3794
  %v3844 = vmax.f32 %v2861, %v3795
  %v3845 = vmax.f32 %v2862, %v3796
  %v3846 = vmax.f32 %v2863, %v3797
  %v3847 = vmax.f32 %v2864, %v3798
  %v3848 = vmax.f32 %v2865, %v3799
  %v3849 = vmax.f32 %v2866, %v3800
  %v3850 = vmax.f32 %v2867, %v3801
  %v3851 = vmax.f32 %v2868, %v3802
  %v3852 = vmax.f32 %v2869, %v3803
  %v3853 = vmax.f32 %v2870, %v3804
  %v3854 = vmax.f32 %v2871, %v3805
  %v3855 = vmax.f32 %v2872, %v3806
  %v3856 = vmax.f32 %v2873, %v3807
  %v3857 = vmax.f32 %v2874, %v3808
  %v3858 = vmax.f32 %v2875, %v3809
  %v3859 = vmax.f32 %v2876, %v3810
  %v3860 = vmax.f32 %v2877, %v3811
  %v3861 = vmax.f32 %v2878, %v3812
  %v3862 = vmax.f32 %v2879, %v3813
  %v3863 = vmax.f32 %v2880, %v3814
  %v3864 = vmax.f32 %v2881, %v3815
  %v3865 = vmax.f32 %v2882, %v3816
  %v3866 = vmax.f32 %v2883, %v3817
  %v3867 = vmax.f32 %v2884, %v3818
  %v3868 = vmax.f32 %v2885, %v3819
  %v3869 = vmax.f32 %v2886, %v3820
  %v3870 = vmax.f32 %v2887, %v3821
  %v3871 = vmax.f32 %v2888, %v3822
  %v3872 = vmax.f32 %v2889, %v3823
  %v3873 = vmax.f32 %v2890, %v3824
  %v3874 = vmax.f32 %v2891, %v3825
  %v3875 = vmax.f32 %v2892, %v3826
  %v3876 = vmax.f32 %v2893, %v3827
  %v3877 = vmax.f32 %v2894, %v3828
  %v3878 = vmax.f32 %v2895, %v3829
  %v3879 = vmax.f32 %v2896, %v3830
  %v3880 = vmax.f32 %v2897, %v3831
  %v3881 = vmax.f32 %v2898, %v3832
  %v3882 = vmax.f32 %v2899, %v3833
  %v3883 = vmax.f32 %v2900, %v3834
  %v3884 = vmax.f32 %v2901, %v3835
  %v3885 = vmax.f32 %v2902, %v3836
  %v3886 = vmax.f32 %v2903, %v3837
  %v3887 = vmax.f32 %v2904, %v3838
  %v3888 = vmax.f32 %v1922, %v3839
  %v3889 = vmax.f32 %v1923, %v3840
  %v3890 = vmax.f32 %v1924, %v3841
  %v3891 = vmax.f32 %v1925, %v3842
  %v3892 = vmax.f32 %v1926, %v3843
  %v3893 = vmax.f32 %v1927, %v3844
  %v3894 = vmax.f32 %v1928, %v3845
  %v3895 = vmax.f32 %v1929, %v3846
  %v3896 = vmax.f32 %v1930, %v3847
  %v3897 = vmax.f32 %v1931, %v3848
  %v3898 = vmax.f32 %v1932, %v3849
  %v3899 = vmax.f32 %v1933, %v3850
  %v3900 = vmax.f32 %v1934, %v3851
  %v3901 = vmax.f32 %v1935, %v3852
  %v3902 = vmax.f32 %v1936, %v3853
  %v3903 = vmax.f32 %v1937, %v3854
  %v3904 = vmax.f32 %v1938, %v3855
  %v3905 = vmax.f32 %v1939, %v3856
  %v3906 = vmax.f32 %v1940, %v3857
  %v3907 = vmax.f32 %v1941, %v3858
  %v3908 = vmax.f32 %v1942, %v3859
  %v3909 = vmax.f32 %v1943, %v3860
  %v3910 = vmax.f32 %v1944, %v3861
  %v3911 = vmax.f32 %v1945, %v3862
  %v3912 = vmax.f32 %v1946, %v3863
  %v3913 = vmax.f32 %v1947, %v3864
  %v3914 = vmax.f32 %v1948, %v3865
  %v3915 = vmax.f32 %v1949, %v3866
  %v3916 = vmax.f32 %v1950, %v3867
  %v3917 = vmax.f32 %v1951, %v3868
  %v3918 = vmax.f32 %v1952, %v3869
  %v3919 = vmax.f32 %v1953, %v3870
  %v3920 = vmax.f32 %v1954, %v3871
  %v3921 = vmax.f32 %v1955, %v3872
  %v3922 = vmax.f32 %v1956, %v3873
  %v3923 = vmax.f32 %v1957, %v3874
  %v3924 = vmax.f32 %v1958, %v3875
  %v3925 = vmax.f32 %v1959, %v3876
  %v3926 = vmax.f32 %v1960, %v3877
  %v3927 = vmax.f32 %v1961, %v3878
  %v3928 = vmax.f32 %v1962, %v3879
  %v3929 = vmax.f32 %v1963, %v3880
  %v3930 = vmax.f32 %v1964, %v3881
  %v3931 = vmax.f32 %v1965, %v3882
  %v3932 = vmax.f32 %v1966, %v3883
  %v3933 = vmax.f32 %v1967, %v3884
  %v3934 = vmax.f32 %v1968, %v3885
  %v3935 = vmax.f32 %v1969, %v3886
  %v3936 = vmax.f32 %v1970, %v3887
  %3937 = vst.msk [vmem:[%s3] sm:$0xff] %vm199, %v3888
  %3938 = vst.msk [vmem:[%s3 + $0x8] sm:$0xff] %vm199, %v3889
  %3939 = vst.msk [vmem:[%s3 + $0x10] sm:$0xff] %vm199, %v3890
  %3940 = vst.msk [vmem:[%s3 + $0x18] sm:$0xff] %vm199, %v3891
  %3941 = vst.msk [vmem:[%s3 + $0x20] sm:$0xff] %vm199, %v3892
  %3942 = vst.msk [vmem:[%s3 + $0x28] sm:$0xff] %vm199, %v3893
  %3943 = vst.msk [vmem:[%s3 + $0x30] sm:$0xff] %vm199, %v3894
  %3944 = vst.msk [vmem:[%s3 + $0x38] sm:$0xff] %vm199, %v3895
  %3945 = vst.msk [vmem:[%s3 + $0x40] sm:$0xff] %vm199, %v3896
  %3946 = vst.msk [vmem:[%s3 + $0x48] sm:$0xff] %vm199, %v3897
  %3947 = vst.msk [vmem:[%s3 + $0x50] sm:$0xff] %vm199, %v3898
  %3948 = vst.msk [vmem:[%s3 + $0x58] sm:$0xff] %vm199, %v3899
  %3949 = vst.msk [vmem:[%s3 + $0x60] sm:$0xff] %vm199, %v3900
  %3950 = vst.msk [vmem:[%s3 + $0x68] sm:$0xff] %vm199, %v3901
  %3951 = vst.msk [vmem:[%s3 + $0x70] sm:$0xff] %vm199, %v3902
  %3952 = vst.msk [vmem:[%s3 + $0x78] sm:$0xff] %vm199, %v3903
  %3953 = vst.msk [vmem:[%s3 + $0x80] sm:$0xff] %vm199, %v3904
  %3954 = vst.msk [vmem:[%s3 + $0x88] sm:$0xff] %vm199, %v3905
  %3955 = vst.msk [vmem:[%s3 + $0x90] sm:$0xff] %vm199, %v3906
  %3956 = vst.msk [vmem:[%s3 + $0x98] sm:$0xff] %vm199, %v3907
  %3957 = vst.msk [vmem:[%s3 + $0xa0] sm:$0xff] %vm199, %v3908
  %3958 = vst.msk [vmem:[%s3 + $0xa8] sm:$0xff] %vm199, %v3909
  %3959 = vst.msk [vmem:[%s3 + $0xb0] sm:$0xff] %vm199, %v3910
  %3960 = vst.msk [vmem:[%s3 + $0xb8] sm:$0xff] %vm199, %v3911
  %3961 = vst.msk [vmem:[%s3 + $0xc0] sm:$0xff] %vm199, %v3912
  %3962 = vst.msk [vmem:[%s3 + $0xc8] sm:$0xff] %vm199, %v3913
  %3963 = vst.msk [vmem:[%s3 + $0xd0] sm:$0xff] %vm199, %v3914
  %3964 = vst.msk [vmem:[%s3 + $0xd8] sm:$0xff] %vm199, %v3915
  %3965 = vst.msk [vmem:[%s3 + $0xe0] sm:$0xff] %vm199, %v3916
  %3966 = vst.msk [vmem:[%s3 + $0xe8] sm:$0xff] %vm199, %v3917
  %3967 = vst.msk [vmem:[%s3 + $0xf0] sm:$0xff] %vm199, %v3918
  %3968 = vst.msk [vmem:[%s3 + $0xf8] sm:$0xff] %vm199, %v3919
  %3969 = vst.msk [vmem:[%s3 + $0x100] sm:$0xff] %vm199, %v3920
  %3970 = vst.msk [vmem:[%s3 + $0x108] sm:$0xff] %vm199, %v3921
  %3971 = vst.msk [vmem:[%s3 + $0x110] sm:$0xff] %vm199, %v3922
  %3972 = vst.msk [vmem:[%s3 + $0x118] sm:$0xff] %vm199, %v3923
  %3973 = vst.msk [vmem:[%s3 + $0x120] sm:$0xff] %vm199, %v3924
  %3974 = vst.msk [vmem:[%s3 + $0x128] sm:$0xff] %vm199, %v3925
  %3975 = vst.msk [vmem:[%s3 + $0x130] sm:$0xff] %vm199, %v3926
  %3976 = vst.msk [vmem:[%s3 + $0x138] sm:$0xff] %vm199, %v3927
  %3977 = vst.msk [vmem:[%s3 + $0x140] sm:$0xff] %vm199, %v3928
  %3978 = vst.msk [vmem:[%s3 + $0x148] sm:$0xff] %vm199, %v3929
  %3979 = vst.msk [vmem:[%s3 + $0x150] sm:$0xff] %vm199, %v3930
  %3980 = vst.msk [vmem:[%s3 + $0x158] sm:$0xff] %vm199, %v3931
  %3981 = vst.msk [vmem:[%s3 + $0x160] sm:$0xff] %vm199, %v3932
  %3982 = vst.msk [vmem:[%s3 + $0x168] sm:$0xff] %vm199, %v3933
  %3983 = vst.msk [vmem:[%s3 + $0x170] sm:$0xff] %vm199, %v3934
  %3984 = vst.msk [vmem:[%s3 + $0x178] sm:$0xff] %vm199, %v3935
  %3985 = vst.msk [vmem:[%s3 + $0x180] sm:$0xff] %vm199, %v3936
  // Predicated region
  $region14: #{mycnn_forward.6} parent=0 // pred_check
    _
  $region15: #{mycnn_forward.6} parent=0 // pred_check_branch
    %3987 = sbr.rel (0) target = $region17
  $region16: #{mycnn_forward.6} parent=0 // pred_region
    _
  $region17: #{mycnn_forward.6} parent=0 // pred_fallthru
    _
  // Predicated region
  $region18: #{mycnn_forward.6} parent=0 // pred_check
    _
  $region19: #{mycnn_forward.6} parent=0 // pred_check_branch
    %3989 = sbr.rel (0) target = $region21
  $region20: #{mycnn_forward.6} parent=0 // pred_region
    _
  $region21: #{mycnn_forward.6} parent=0 // pred_fallthru
    _

// kernel: mycnn_forward.7
$region0: #{mycnn_forward.7}
  #allocation0 [shape = 'u32[]', space=smem, size = 0x4, offset = 0x4, fixed_abs, tag = 'smem constant byte address 0x4 - core index']
  #allocation1 [shape = 'u32[72,128]{1,0:T(1,128)}', space=vmem, size = 0x9000, scoped, tag = 'internal scratch']
  %s0 = inlined_call_operand.vmem [shape: f32[392,288], index: 0, kind: input, shape index: {}]
  %s1 = inlined_call_operand.vmem [shape: f32[288,16], index: 1, kind: input, shape index: {}]
  %s2 = inlined_call_operand.vmem [shape: f32[2,16], index: 2, kind: input, shape index: {}]
  %s3 = inlined_call_operand.vmem [shape: f32[392,16], index: 3, kind: output, shape index: {}]
  %s4 = sld [smem:[#allocation0]]
  $region22: #{mycnn_forward.7} parent=0
    _
  %s6 = ssub.s32 1, %s4
  %s7 = scalar_select 0, %s6, %s4
  // Predicated region
  $region2: #{mycnn_forward.7} parent=0 // pred_check
    _
  $region3: #{mycnn_forward.7} parent=0 // pred_check_branch
    %9 = sbr.rel (0) target = $region5
  $region4: #{mycnn_forward.7} parent=0 // pred_region
    _
  $region5: #{mycnn_forward.7} parent=0 // pred_fallthru
    _
  // Predicated region
  $region6: #{mycnn_forward.7} parent=0 // pred_check
    _
  $region7: #{mycnn_forward.7} parent=0 // pred_check_branch
    %11 = sbr.rel (0) target = $region9
  $region8: #{mycnn_forward.7} parent=0 // pred_region
    _
  $region9: #{mycnn_forward.7} parent=0 // pred_fallthru
    _
  // Predicated region
  $region10: #{mycnn_forward.7} parent=0 // pred_check
    _
  $region11: #{mycnn_forward.7} parent=0 // pred_check_branch
    %13 = sbr.rel (0) target = $region13
  $region12: #{mycnn_forward.7} parent=0 // pred_region
    _
  $region13: #{mycnn_forward.7} parent=0 // pred_fallthru
    _
  %v14 = vld [vmem:[%s0] sm:$0xff]
  %v15 = vld [vmem:[%s0 + $0x8] sm:$0xff]
  %v16 = vld [vmem:[%s0 + $0x10] sm:$0xff]
  %v17 = vld [vmem:[%s0 + $0x18] sm:$0xff]
  %v18 = vld [vmem:[%s0 + $0x20] sm:$0xff]
  %v19 = vld [vmem:[%s0 + $0x28] sm:$0xff]
  %v20 = vld [vmem:[%s0 + $0x30] sm:$0xff]
  %v21 = vld [vmem:[%s0 + $0x38] sm:$0xff]
  %v22 = vld [vmem:[%s0 + $0x40] sm:$0xff]
  %v23 = vld [vmem:[%s0 + $0x48] sm:$0xff]
  %v24 = vld [vmem:[%s0 + $0x50] sm:$0xff]
  %v25 = vld [vmem:[%s0 + $0x58] sm:$0xff]
  %v26 = vld [vmem:[%s0 + $0x60] sm:$0xff]
  %v27 = vld [vmem:[%s0 + $0x68] sm:$0xff]
  %v28 = vld [vmem:[%s0 + $0x70] sm:$0xff]
  %v29 = vld [vmem:[%s0 + $0x78] sm:$0xff]
  %v30 = vld [vmem:[%s0 + $0x80] sm:$0xff]
  %v31 = vld [vmem:[%s0 + $0x88] sm:$0xff]
  %v32 = vld [vmem:[%s0 + $0x90] sm:$0xff]
  %v33 = vld [vmem:[%s0 + $0x98] sm:$0xff]
  %v34 = vld [vmem:[%s0 + $0xa0] sm:$0xff]
  %v35 = vld [vmem:[%s0 + $0xa8] sm:$0xff]
  %v36 = vld [vmem:[%s0 + $0xb0] sm:$0xff]
  %v37 = vld [vmem:[%s0 + $0xb8] sm:$0xff]
  %v38 = vld [vmem:[%s0 + $0xc0] sm:$0xff]
  %v39 = vld [vmem:[%s0 + $0xc8] sm:$0xff]
  %v40 = vld [vmem:[%s0 + $0xd0] sm:$0xff]
  %v41 = vld [vmem:[%s0 + $0xd8] sm:$0xff]
  %v42 = vld [vmem:[%s0 + $0xe0] sm:$0xff]
  %v43 = vld [vmem:[%s0 + $0xe8] sm:$0xff]
  %v44 = vld [vmem:[%s0 + $0xf0] sm:$0xff]
  %v45 = vld [vmem:[%s0 + $0xf8] sm:$0xff]
  %v46 = vld [vmem:[%s0 + $0x100] sm:$0xff]
  %v47 = vld [vmem:[%s0 + $0x108] sm:$0xff]
  %v48 = vld [vmem:[%s0 + $0x110] sm:$0xff]
  %v49 = vld [vmem:[%s0 + $0x118] sm:$0xff]
  %v50 = vld [vmem:[%s0 + $0x120] sm:$0xff]
  %v51 = vld [vmem:[%s0 + $0x128] sm:$0xff]
  %v52 = vld [vmem:[%s0 + $0x130] sm:$0xff]
  %v53 = vld [vmem:[%s0 + $0x138] sm:$0xff]
  %v54 = vld [vmem:[%s0 + $0x140] sm:$0xff]
  %v55 = vld [vmem:[%s0 + $0x148] sm:$0xff]
  %v56 = vld [vmem:[%s0 + $0x150] sm:$0xff]
  %v57 = vld [vmem:[%s0 + $0x158] sm:$0xff]
  %v58 = vld [vmem:[%s0 + $0x160] sm:$0xff]
  %v59 = vld [vmem:[%s0 + $0x168] sm:$0xff]
  %v60 = vld [vmem:[%s0 + $0x170] sm:$0xff]
  %v61 = vld [vmem:[%s0 + $0x178] sm:$0xff]
  %v62 = vld [vmem:[%s0 + $0x180] sm:$0xff]
  %v63 = vld [vmem:[%s0 + $0x188] sm:$0xff]
  %v64 = vld [vmem:[%s0 + $0x190] sm:$0xff]
  %v65 = vld [vmem:[%s0 + $0x198] sm:$0xff]
  %v66 = vld [vmem:[%s0 + $0x1a0] sm:$0xff]
  %v67 = vld [vmem:[%s0 + $0x1a8] sm:$0xff]
  %v68 = vld [vmem:[%s0 + $0x1b0] sm:$0xff]
  %v69 = vld [vmem:[%s0 + $0x1b8] sm:$0xff]
  %v70 = vld [vmem:[%s0 + $0x1c0] sm:$0xff]
  %v71 = vld [vmem:[%s0 + $0x1c8] sm:$0xff]
  %v72 = vld [vmem:[%s0 + $0x1d0] sm:$0xff]
  %v73 = vld [vmem:[%s0 + $0x1d8] sm:$0xff]
  %v74 = vld [vmem:[%s0 + $0x1e0] sm:$0xff]
  %v75 = vld [vmem:[%s0 + $0x1e8] sm:$0xff]
  %v76 = vld [vmem:[%s0 + $0x1f0] sm:$0xff]
  %v77 = vld [vmem:[%s0 + $0x1f8] sm:$0xff]
  %v78 = vld [vmem:[%s0 + $0x200] sm:$0xff]
  %v79 = vld [vmem:[%s0 + $0x208] sm:$0xff]
  %v80 = vld [vmem:[%s0 + $0x210] sm:$0xff]
  %v81 = vld [vmem:[%s0 + $0x218] sm:$0xff]
  %v82 = vld [vmem:[%s0 + $0x220] sm:$0xff]
  %v83 = vld [vmem:[%s0 + $0x228] sm:$0xff]
  %v84 = vld [vmem:[%s0 + $0x230] sm:$0xff]
  %v85 = vld [vmem:[%s0 + $0x238] sm:$0xff]
  %v86 = vld [vmem:[%s0 + $0x240] sm:$0xff]
  %v87 = vld [vmem:[%s0 + $0x248] sm:$0xff]
  %v88 = vld [vmem:[%s0 + $0x250] sm:$0xff]
  %v89 = vld [vmem:[%s0 + $0x258] sm:$0xff]
  %v90 = vld [vmem:[%s0 + $0x260] sm:$0xff]
  %v91 = vld [vmem:[%s0 + $0x268] sm:$0xff]
  %v92 = vld [vmem:[%s0 + $0x270] sm:$0xff]
  %v93 = vld [vmem:[%s0 + $0x278] sm:$0xff]
  %v94 = vld [vmem:[%s0 + $0x280] sm:$0xff]
  %v95 = vld [vmem:[%s0 + $0x288] sm:$0xff]
  %v96 = vld [vmem:[%s0 + $0x290] sm:$0xff]
  %v97 = vld [vmem:[%s0 + $0x298] sm:$0xff]
  %v98 = vld [vmem:[%s0 + $0x2a0] sm:$0xff]
  %v99 = vld [vmem:[%s0 + $0x2a8] sm:$0xff]
  %v100 = vld [vmem:[%s0 + $0x2b0] sm:$0xff]
  %v101 = vld [vmem:[%s0 + $0x2b8] sm:$0xff]
  %v102 = vld [vmem:[%s0 + $0x2c0] sm:$0xff]
  %v103 = vld [vmem:[%s0 + $0x2c8] sm:$0xff]
  %v104 = vld [vmem:[%s0 + $0x2d0] sm:$0xff]
  %v105 = vld [vmem:[%s0 + $0x2d8] sm:$0xff]
  %v106 = vld [vmem:[%s0 + $0x2e0] sm:$0xff]
  %v107 = vld [vmem:[%s0 + $0x2e8] sm:$0xff]
  %v108 = vld [vmem:[%s0 + $0x2f0] sm:$0xff]
  %v109 = vld [vmem:[%s0 + $0x2f8] sm:$0xff]
  %v110 = vld [vmem:[%s0 + $0x300] sm:$0xff]
  %v111 = vld [vmem:[%s0 + $0x308] sm:$0xff]
  %v112 = vld [vmem:[%s0 + $0x310] sm:$0xff]
  %v113 = vld [vmem:[%s0 + $0x318] sm:$0xff]
  %v114 = vld [vmem:[%s0 + $0x320] sm:$0xff]
  %v115 = vld [vmem:[%s0 + $0x328] sm:$0xff]
  %v116 = vld [vmem:[%s0 + $0x330] sm:$0xff]
  %v117 = vld [vmem:[%s0 + $0x338] sm:$0xff]
  %v118 = vld [vmem:[%s0 + $0x340] sm:$0xff]
  %v119 = vld [vmem:[%s0 + $0x348] sm:$0xff]
  %v120 = vld [vmem:[%s0 + $0x350] sm:$0xff]
  %v121 = vld [vmem:[%s0 + $0x358] sm:$0xff]
  %v122 = vld [vmem:[%s0 + $0x360] sm:$0xff]
  %v123 = vld [vmem:[%s0 + $0x368] sm:$0xff]
  %v124 = vld [vmem:[%s0 + $0x370] sm:$0xff]
  %v125 = vld [vmem:[%s0 + $0x378] sm:$0xff]
  %v126 = vld [vmem:[%s0 + $0x380] sm:$0xff]
  %v127 = vld [vmem:[%s0 + $0x388] sm:$0xff]
  %v128 = vld [vmem:[%s0 + $0x390] sm:$0xff]
  %v129 = vld [vmem:[%s0 + $0x398] sm:$0xff]
  %v130 = vld [vmem:[%s0 + $0x3a0] sm:$0xff]
  %v131 = vld [vmem:[%s0 + $0x3a8] sm:$0xff]
  %v132 = vld [vmem:[%s0 + $0x3b0] sm:$0xff]
  %v133 = vld [vmem:[%s0 + $0x3b8] sm:$0xff]
  %v134 = vld [vmem:[%s0 + $0x3c0] sm:$0xff]
  %v135 = vld [vmem:[%s0 + $0x3c8] sm:$0xff]
  %v136 = vld [vmem:[%s0 + $0x3d0] sm:$0xff]
  %v137 = vld [vmem:[%s0 + $0x3d8] sm:$0xff]
  %v138 = vld [vmem:[%s0 + $0x3e0] sm:$0xff]
  %v139 = vld [vmem:[%s0 + $0x3e8] sm:$0xff]
  %v140 = vld [vmem:[%s0 + $0x3f0] sm:$0xff]
  %v141 = vld [vmem:[%s0 + $0x3f8] sm:$0xff]
  %v142 = vld [vmem:[%s0 + $0x400] sm:$0xff]
  %v143 = vld [vmem:[%s0 + $0x408] sm:$0xff]
  %v144 = vld [vmem:[%s0 + $0x410] sm:$0xff]
  %v145 = vld [vmem:[%s0 + $0x418] sm:$0xff]
  %v146 = vld [vmem:[%s0 + $0x420] sm:$0xff]
  %v147 = vld [vmem:[%s0 + $0x428] sm:$0xff]
  %v148 = vld [vmem:[%s0 + $0x430] sm:$0xff]
  %v149 = vld [vmem:[%s0 + $0x438] sm:$0xff]
  %v150 = vld [vmem:[%s0 + $0x440] sm:$0xff]
  %v151 = vld [vmem:[%s0 + $0x448] sm:$0xff]
  %v152 = vld [vmem:[%s0 + $0x450] sm:$0xff]
  %v153 = vld [vmem:[%s0 + $0x458] sm:$0xff]
  %v154 = vld [vmem:[%s0 + $0x460] sm:$0xff]
  %v155 = vld [vmem:[%s0 + $0x468] sm:$0xff]
  %v156 = vld [vmem:[%s0 + $0x470] sm:$0xff]
  %v157 = vld [vmem:[%s0 + $0x478] sm:$0xff]
  %v158 = vld [vmem:[%s0 + $0x480] sm:$0xff]
  %v159 = vld [vmem:[%s0 + $0x488] sm:$0xff]
  %v160 = vld [vmem:[%s0 + $0x490] sm:$0xff]
  %v161 = vld [vmem:[%s1] sm:$0xff]
  %v162 = vld [vmem:[%s1 + $0x8] sm:$0xff]
  %v163 = vld [vmem:[%s1 + $0x10] sm:$0xff]
  %v164 = vld [vmem:[%s1 + $0x18] sm:$0xff]
  %v165 = vld [vmem:[%s1 + $0x20] sm:$0xff]
  %v166 = vld [vmem:[%s1 + $0x28] sm:$0xff]
  %v167 = vld [vmem:[%s1 + $0x30] sm:$0xff]
  %v168 = vld [vmem:[%s1 + $0x38] sm:$0xff]
  %v169 = vld [vmem:[%s1 + $0x40] sm:$0xff]
  %v170 = vld [vmem:[%s1 + $0x48] sm:$0xff]
  %v171 = vld [vmem:[%s1 + $0x50] sm:$0xff]
  %v172 = vld [vmem:[%s1 + $0x58] sm:$0xff]
  %v173 = vld [vmem:[%s1 + $0x60] sm:$0xff]
  %v174 = vld [vmem:[%s1 + $0x68] sm:$0xff]
  %v175 = vld [vmem:[%s1 + $0x70] sm:$0xff]
  %v176 = vld [vmem:[%s1 + $0x78] sm:$0xff]
  %v177 = vld [vmem:[%s1 + $0x80] sm:$0xff]
  %v178 = vld [vmem:[%s1 + $0x88] sm:$0xff]
  %v179 = vld [vmem:[%s1 + $0x90] sm:$0xff]
  %v180 = vld [vmem:[%s1 + $0x98] sm:$0xff]
  %v181 = vld [vmem:[%s1 + $0xa0] sm:$0xff]
  %v182 = vld [vmem:[%s1 + $0xa8] sm:$0xff]
  %v183 = vld [vmem:[%s1 + $0xb0] sm:$0xff]
  %v184 = vld [vmem:[%s1 + $0xb8] sm:$0xff]
  %v185 = vld [vmem:[%s1 + $0xc0] sm:$0xff]
  %v186 = vld [vmem:[%s1 + $0xc8] sm:$0xff]
  %v187 = vld [vmem:[%s1 + $0xd0] sm:$0xff]
  %v188 = vld [vmem:[%s1 + $0xd8] sm:$0xff]
  %v189 = vld [vmem:[%s1 + $0xe0] sm:$0xff]
  %v190 = vld [vmem:[%s1 + $0xe8] sm:$0xff]
  %v191 = vld [vmem:[%s1 + $0xf0] sm:$0xff]
  %v192 = vld [vmem:[%s1 + $0xf8] sm:$0xff]
  %v193 = vld [vmem:[%s1 + $0x100] sm:$0xff]
  %v194 = vld [vmem:[%s1 + $0x108] sm:$0xff]
  %v195 = vld [vmem:[%s1 + $0x110] sm:$0xff]
  %v196 = vld [vmem:[%s1 + $0x118] sm:$0xff]
  %vm197 = vcmask 261120
  %v199 = vsel %vm197, %v16, 0
  %v202 = vsel %vm197, %v19, 0
  %v205 = vsel %vm197, %v22, 0
  %v208 = vsel %vm197, %v25, 0
  %v211 = vsel %vm197, %v28, 0
  %v214 = vsel %vm197, %v31, 0
  %v217 = vsel %vm197, %v34, 0
  %v220 = vsel %vm197, %v37, 0
  %v223 = vsel %vm197, %v40, 0
  %v226 = vsel %vm197, %v43, 0
  %v229 = vsel %vm197, %v46, 0
  %v232 = vsel %vm197, %v49, 0
  %v235 = vsel %vm197, %v52, 0
  %v238 = vsel %vm197, %v55, 0
  %v241 = vsel %vm197, %v58, 0
  %v244 = vsel %vm197, %v61, 0
  %v247 = vsel %vm197, %v64, 0
  %v250 = vsel %vm197, %v67, 0
  %v253 = vsel %vm197, %v70, 0
  %v256 = vsel %vm197, %v73, 0
  %v259 = vsel %vm197, %v76, 0
  %v262 = vsel %vm197, %v79, 0
  %v265 = vsel %vm197, %v82, 0
  %v268 = vsel %vm197, %v85, 0
  %v271 = vsel %vm197, %v88, 0
  %v274 = vsel %vm197, %v91, 0
  %v277 = vsel %vm197, %v94, 0
  %v280 = vsel %vm197, %v97, 0
  %v283 = vsel %vm197, %v100, 0
  %v286 = vsel %vm197, %v103, 0
  %v289 = vsel %vm197, %v106, 0
  %v292 = vsel %vm197, %v109, 0
  %v295 = vsel %vm197, %v112, 0
  %v298 = vsel %vm197, %v115, 0
  %v301 = vsel %vm197, %v118, 0
  %v304 = vsel %vm197, %v121, 0
  %v307 = vsel %vm197, %v124, 0
  %v310 = vsel %vm197, %v127, 0
  %v313 = vsel %vm197, %v130, 0
  %v316 = vsel %vm197, %v133, 0
  %v319 = vsel %vm197, %v136, 0
  %v322 = vsel %vm197, %v139, 0
  %v325 = vsel %vm197, %v142, 0
  %v328 = vsel %vm197, %v145, 0
  %v331 = vsel %vm197, %v148, 0
  %v334 = vsel %vm197, %v151, 0
  %v337 = vsel %vm197, %v154, 0
  %v340 = vsel %vm197, %v157, 0
  %v343 = vsel %vm197, %v160, 0
  %345 = vmatpush.msra.mxu0 %v176
  %346 = vmatpush.msra.mxu0 %v175
  %347 = vmatpush.msra.mxu0 %v174
  %348 = vmatpush.msra.mxu0 %v173
  %349 = vmatpush.msra.mxu0 %v172
  %350 = vmatpush.msra.mxu0 %v171
  %351 = vmatpush.msra.mxu0 %v170
  %352 = vmatpush.msra.mxu0 %v169
  %353 = vmatpush.msra.mxu0 %v168
  %354 = vmatpush.msra.mxu0 %v167
  %355 = vmatpush.msra.mxu0 %v166
  %356 = vmatpush.msra.mxu0 %v165
  %357 = vmatpush.msra.mxu0 %v164
  %358 = vmatpush.msra.mxu0 %v163
  %359 = vmatpush.msra.mxu0 %v162
  %360 = vmatpush.msra.mxu0 %v161
  %361 = vmatmul.f32.gmra.mxu0 %v14
  %v362 = vpop.f32.mrf.mxu0
  %v363 = vadd.f32 0.0, %v362
  %364 = vmatmul.f32.gmra.mxu0 %v17
  %v365 = vpop.f32.mrf.mxu0
  %v366 = vadd.f32 0.0, %v365
  %367 = vmatmul.f32.gmra.mxu0 %v20
  %v368 = vpop.f32.mrf.mxu0
  %v369 = vadd.f32 0.0, %v368
  %370 = vmatmul.f32.gmra.mxu0 %v23
  %v371 = vpop.f32.mrf.mxu0
  %v372 = vadd.f32 0.0, %v371
  %373 = vmatmul.f32.gmra.mxu0 %v26
  %v374 = vpop.f32.mrf.mxu0
  %v375 = vadd.f32 0.0, %v374
  %376 = vmatmul.f32.gmra.mxu0 %v29
  %v377 = vpop.f32.mrf.mxu0
  %v378 = vadd.f32 0.0, %v377
  %379 = vmatmul.f32.gmra.mxu0 %v32
  %v380 = vpop.f32.mrf.mxu0
  %v381 = vadd.f32 0.0, %v380
  %382 = vmatmul.f32.gmra.mxu0 %v35
  %v383 = vpop.f32.mrf.mxu0
  %v384 = vadd.f32 0.0, %v383
  %385 = vmatmul.f32.gmra.mxu0 %v38
  %v386 = vpop.f32.mrf.mxu0
  %v387 = vadd.f32 0.0, %v386
  %388 = vmatmul.f32.gmra.mxu0 %v41
  %v389 = vpop.f32.mrf.mxu0
  %v390 = vadd.f32 0.0, %v389
  %391 = vmatmul.f32.gmra.mxu0 %v44
  %v392 = vpop.f32.mrf.mxu0
  %v393 = vadd.f32 0.0, %v392
  %394 = vmatmul.f32.gmra.mxu0 %v47
  %v395 = vpop.f32.mrf.mxu0
  %v396 = vadd.f32 0.0, %v395
  %397 = vmatmul.f32.gmra.mxu0 %v50
  %v398 = vpop.f32.mrf.mxu0
  %v399 = vadd.f32 0.0, %v398
  %400 = vmatmul.f32.gmra.mxu0 %v53
  %v401 = vpop.f32.mrf.mxu0
  %v402 = vadd.f32 0.0, %v401
  %403 = vmatmul.f32.gmra.mxu0 %v56
  %v404 = vpop.f32.mrf.mxu0
  %v405 = vadd.f32 0.0, %v404
  %406 = vmatmul.f32.gmra.mxu0 %v59
  %v407 = vpop.f32.mrf.mxu0
  %v408 = vadd.f32 0.0, %v407
  %409 = vmatmul.f32.gmra.mxu0 %v62
  %v410 = vpop.f32.mrf.mxu0
  %v411 = vadd.f32 0.0, %v410
  %412 = vmatmul.f32.gmra.mxu0 %v65
  %v413 = vpop.f32.mrf.mxu0
  %v414 = vadd.f32 0.0, %v413
  %415 = vmatmul.f32.gmra.mxu0 %v68
  %v416 = vpop.f32.mrf.mxu0
  %v417 = vadd.f32 0.0, %v416
  %418 = vmatmul.f32.gmra.mxu0 %v71
  %v419 = vpop.f32.mrf.mxu0
  %v420 = vadd.f32 0.0, %v419
  %421 = vmatmul.f32.gmra.mxu0 %v74
  %v422 = vpop.f32.mrf.mxu0
  %v423 = vadd.f32 0.0, %v422
  %424 = vmatmul.f32.gmra.mxu0 %v77
  %v425 = vpop.f32.mrf.mxu0
  %v426 = vadd.f32 0.0, %v425
  %427 = vmatmul.f32.gmra.mxu0 %v80
  %v428 = vpop.f32.mrf.mxu0
  %v429 = vadd.f32 0.0, %v428
  %430 = vmatmul.f32.gmra.mxu0 %v83
  %v431 = vpop.f32.mrf.mxu0
  %v432 = vadd.f32 0.0, %v431
  %433 = vmatmul.f32.gmra.mxu0 %v86
  %v434 = vpop.f32.mrf.mxu0
  %v435 = vadd.f32 0.0, %v434
  %436 = vmatmul.f32.gmra.mxu0 %v89
  %v437 = vpop.f32.mrf.mxu0
  %v438 = vadd.f32 0.0, %v437
  %439 = vmatmul.f32.gmra.mxu0 %v92
  %v440 = vpop.f32.mrf.mxu0
  %v441 = vadd.f32 0.0, %v440
  %442 = vmatmul.f32.gmra.mxu0 %v95
  %v443 = vpop.f32.mrf.mxu0
  %v444 = vadd.f32 0.0, %v443
  %445 = vmatmul.f32.gmra.mxu0 %v98
  %v446 = vpop.f32.mrf.mxu0
  %v447 = vadd.f32 0.0, %v446
  %448 = vmatmul.f32.gmra.mxu0 %v101
  %v449 = vpop.f32.mrf.mxu0
  %v450 = vadd.f32 0.0, %v449
  %451 = vmatmul.f32.gmra.mxu0 %v104
  %v452 = vpop.f32.mrf.mxu0
  %v453 = vadd.f32 0.0, %v452
  %454 = vmatmul.f32.gmra.mxu0 %v107
  %v455 = vpop.f32.mrf.mxu0
  %v456 = vadd.f32 0.0, %v455
  %457 = vmatmul.f32.gmra.mxu0 %v110
  %v458 = vpop.f32.mrf.mxu0
  %v459 = vadd.f32 0.0, %v458
  %460 = vmatmul.f32.gmra.mxu0 %v113
  %v461 = vpop.f32.mrf.mxu0
  %v462 = vadd.f32 0.0, %v461
  %463 = vmatmul.f32.gmra.mxu0 %v116
  %v464 = vpop.f32.mrf.mxu0
  %v465 = vadd.f32 0.0, %v464
  %466 = vmatmul.f32.gmra.mxu0 %v119
  %v467 = vpop.f32.mrf.mxu0
  %v468 = vadd.f32 0.0, %v467
  %469 = vmatmul.f32.gmra.mxu0 %v122
  %v470 = vpop.f32.mrf.mxu0
  %v471 = vadd.f32 0.0, %v470
  %472 = vmatmul.f32.gmra.mxu0 %v125
  %v473 = vpop.f32.mrf.mxu0
  %v474 = vadd.f32 0.0, %v473
  %475 = vmatmul.f32.gmra.mxu0 %v128
  %v476 = vpop.f32.mrf.mxu0
  %v477 = vadd.f32 0.0, %v476
  %478 = vmatmul.f32.gmra.mxu0 %v131
  %v479 = vpop.f32.mrf.mxu0
  %v480 = vadd.f32 0.0, %v479
  %481 = vmatmul.f32.gmra.mxu0 %v134
  %v482 = vpop.f32.mrf.mxu0
  %v483 = vadd.f32 0.0, %v482
  %484 = vmatmul.f32.gmra.mxu0 %v137
  %v485 = vpop.f32.mrf.mxu0
  %v486 = vadd.f32 0.0, %v485
  %487 = vmatmul.f32.gmra.mxu0 %v140
  %v488 = vpop.f32.mrf.mxu0
  %v489 = vadd.f32 0.0, %v488
  %490 = vmatmul.f32.gmra.mxu0 %v143
  %v491 = vpop.f32.mrf.mxu0
  %v492 = vadd.f32 0.0, %v491
  %493 = vmatmul.f32.gmra.mxu0 %v146
  %v494 = vpop.f32.mrf.mxu0
  %v495 = vadd.f32 0.0, %v494
  %496 = vmatmul.f32.gmra.mxu0 %v149
  %v497 = vpop.f32.mrf.mxu0
  %v498 = vadd.f32 0.0, %v497
  %499 = vmatmul.f32.gmra.mxu0 %v152
  %v500 = vpop.f32.mrf.mxu0
  %v501 = vadd.f32 0.0, %v500
  %502 = vmatmul.f32.gmra.mxu0 %v155
  %v503 = vpop.f32.mrf.mxu0
  %v504 = vadd.f32 0.0, %v503
  %505 = vmatmul.f32.gmra.mxu0 %v158
  %v506 = vpop.f32.mrf.mxu0
  %v507 = vadd.f32 0.0, %v506
  %508 = vdwg.mxu0
  %509 = vmatpush.msra.mxu0 %v192
  %510 = vmatpush.msra.mxu0 %v191
  %511 = vmatpush.msra.mxu0 %v190
  %512 = vmatpush.msra.mxu0 %v189
  %513 = vmatpush.msra.mxu0 %v188
  %514 = vmatpush.msra.mxu0 %v187
  %515 = vmatpush.msra.mxu0 %v186
  %516 = vmatpush.msra.mxu0 %v185
  %517 = vmatpush.msra.mxu0 %v184
  %518 = vmatpush.msra.mxu0 %v183
  %519 = vmatpush.msra.mxu0 %v182
  %520 = vmatpush.msra.mxu0 %v181
  %521 = vmatpush.msra.mxu0 %v180
  %522 = vmatpush.msra.mxu0 %v179
  %523 = vmatpush.msra.mxu0 %v178
  %524 = vmatpush.msra.mxu0 %v177
  %525 = vmatmul.f32.gmra.mxu0 %v15
  %v526 = vpop.f32.mrf.mxu0
  %v527 = vadd.f32 %v363, %v526
  %528 = vmatmul.f32.gmra.mxu0 %v18
  %v529 = vpop.f32.mrf.mxu0
  %v530 = vadd.f32 %v366, %v529
  %531 = vmatmul.f32.gmra.mxu0 %v21
  %v532 = vpop.f32.mrf.mxu0
  %v533 = vadd.f32 %v369, %v532
  %534 = vmatmul.f32.gmra.mxu0 %v24
  %v535 = vpop.f32.mrf.mxu0
  %v536 = vadd.f32 %v372, %v535
  %537 = vmatmul.f32.gmra.mxu0 %v27
  %v538 = vpop.f32.mrf.mxu0
  %v539 = vadd.f32 %v375, %v538
  %540 = vmatmul.f32.gmra.mxu0 %v30
  %v541 = vpop.f32.mrf.mxu0
  %v542 = vadd.f32 %v378, %v541
  %543 = vmatmul.f32.gmra.mxu0 %v33
  %v544 = vpop.f32.mrf.mxu0
  %v545 = vadd.f32 %v381, %v544
  %546 = vmatmul.f32.gmra.mxu0 %v36
  %v547 = vpop.f32.mrf.mxu0
  %v548 = vadd.f32 %v384, %v547
  %549 = vmatmul.f32.gmra.mxu0 %v39
  %v550 = vpop.f32.mrf.mxu0
  %v551 = vadd.f32 %v387, %v550
  %552 = vmatmul.f32.gmra.mxu0 %v42
  %v553 = vpop.f32.mrf.mxu0
  %v554 = vadd.f32 %v390, %v553
  %555 = vmatmul.f32.gmra.mxu0 %v45
  %v556 = vpop.f32.mrf.mxu0
  %v557 = vadd.f32 %v393, %v556
  %558 = vmatmul.f32.gmra.mxu0 %v48
  %v559 = vpop.f32.mrf.mxu0
  %v560 = vadd.f32 %v396, %v559
  %561 = vmatmul.f32.gmra.mxu0 %v51
  %v562 = vpop.f32.mrf.mxu0
  %v563 = vadd.f32 %v399, %v562
  %564 = vmatmul.f32.gmra.mxu0 %v54
  %v565 = vpop.f32.mrf.mxu0
  %v566 = vadd.f32 %v402, %v565
  %567 = vmatmul.f32.gmra.mxu0 %v57
  %v568 = vpop.f32.mrf.mxu0
  %v569 = vadd.f32 %v405, %v568
  %570 = vmatmul.f32.gmra.mxu0 %v60
  %v571 = vpop.f32.mrf.mxu0
  %v572 = vadd.f32 %v408, %v571
  %573 = vmatmul.f32.gmra.mxu0 %v63
  %v574 = vpop.f32.mrf.mxu0
  %v575 = vadd.f32 %v411, %v574
  %576 = vmatmul.f32.gmra.mxu0 %v66
  %v577 = vpop.f32.mrf.mxu0
  %v578 = vadd.f32 %v414, %v577
  %579 = vmatmul.f32.gmra.mxu0 %v69
  %v580 = vpop.f32.mrf.mxu0
  %v581 = vadd.f32 %v417, %v580
  %582 = vmatmul.f32.gmra.mxu0 %v72
  %v583 = vpop.f32.mrf.mxu0
  %v584 = vadd.f32 %v420, %v583
  %585 = vmatmul.f32.gmra.mxu0 %v75
  %v586 = vpop.f32.mrf.mxu0
  %v587 = vadd.f32 %v423, %v586
  %588 = vmatmul.f32.gmra.mxu0 %v78
  %v589 = vpop.f32.mrf.mxu0
  %v590 = vadd.f32 %v426, %v589
  %591 = vmatmul.f32.gmra.mxu0 %v81
  %v592 = vpop.f32.mrf.mxu0
  %v593 = vadd.f32 %v429, %v592
  %594 = vmatmul.f32.gmra.mxu0 %v84
  %v595 = vpop.f32.mrf.mxu0
  %v596 = vadd.f32 %v432, %v595
  %597 = vmatmul.f32.gmra.mxu0 %v87
  %v598 = vpop.f32.mrf.mxu0
  %v599 = vadd.f32 %v435, %v598
  %600 = vmatmul.f32.gmra.mxu0 %v90
  %v601 = vpop.f32.mrf.mxu0
  %v602 = vadd.f32 %v438, %v601
  %603 = vmatmul.f32.gmra.mxu0 %v93
  %v604 = vpop.f32.mrf.mxu0
  %v605 = vadd.f32 %v441, %v604
  %606 = vmatmul.f32.gmra.mxu0 %v96
  %v607 = vpop.f32.mrf.mxu0
  %v608 = vadd.f32 %v444, %v607
  %609 = vmatmul.f32.gmra.mxu0 %v99
  %v610 = vpop.f32.mrf.mxu0
  %v611 = vadd.f32 %v447, %v610
  %612 = vmatmul.f32.gmra.mxu0 %v102
  %v613 = vpop.f32.mrf.mxu0
  %v614 = vadd.f32 %v450, %v613
  %615 = vmatmul.f32.gmra.mxu0 %v105
  %v616 = vpop.f32.mrf.mxu0
  %v617 = vadd.f32 %v453, %v616
  %618 = vmatmul.f32.gmra.mxu0 %v108
  %v619 = vpop.f32.mrf.mxu0
  %v620 = vadd.f32 %v456, %v619
  %621 = vmatmul.f32.gmra.mxu0 %v111
  %v622 = vpop.f32.mrf.mxu0
  %v623 = vadd.f32 %v459, %v622
  %624 = vmatmul.f32.gmra.mxu0 %v114
  %v625 = vpop.f32.mrf.mxu0
  %v626 = vadd.f32 %v462, %v625
  %627 = vmatmul.f32.gmra.mxu0 %v117
  %v628 = vpop.f32.mrf.mxu0
  %v629 = vadd.f32 %v465, %v628
  %630 = vmatmul.f32.gmra.mxu0 %v120
  %v631 = vpop.f32.mrf.mxu0
  %v632 = vadd.f32 %v468, %v631
  %633 = vmatmul.f32.gmra.mxu0 %v123
  %v634 = vpop.f32.mrf.mxu0
  %v635 = vadd.f32 %v471, %v634
  %636 = vmatmul.f32.gmra.mxu0 %v126
  %v637 = vpop.f32.mrf.mxu0
  %v638 = vadd.f32 %v474, %v637
  %639 = vmatmul.f32.gmra.mxu0 %v129
  %v640 = vpop.f32.mrf.mxu0
  %v641 = vadd.f32 %v477, %v640
  %642 = vmatmul.f32.gmra.mxu0 %v132
  %v643 = vpop.f32.mrf.mxu0
  %v644 = vadd.f32 %v480, %v643
  %645 = vmatmul.f32.gmra.mxu0 %v135
  %v646 = vpop.f32.mrf.mxu0
  %v647 = vadd.f32 %v483, %v646
  %648 = vmatmul.f32.gmra.mxu0 %v138
  %v649 = vpop.f32.mrf.mxu0
  %v650 = vadd.f32 %v486, %v649
  %651 = vmatmul.f32.gmra.mxu0 %v141
  %v652 = vpop.f32.mrf.mxu0
  %v653 = vadd.f32 %v489, %v652
  %654 = vmatmul.f32.gmra.mxu0 %v144
  %v655 = vpop.f32.mrf.mxu0
  %v656 = vadd.f32 %v492, %v655
  %657 = vmatmul.f32.gmra.mxu0 %v147
  %v658 = vpop.f32.mrf.mxu0
  %v659 = vadd.f32 %v495, %v658
  %660 = vmatmul.f32.gmra.mxu0 %v150
  %v661 = vpop.f32.mrf.mxu0
  %v662 = vadd.f32 %v498, %v661
  %663 = vmatmul.f32.gmra.mxu0 %v153
  %v664 = vpop.f32.mrf.mxu0
  %v665 = vadd.f32 %v501, %v664
  %666 = vmatmul.f32.gmra.mxu0 %v156
  %v667 = vpop.f32.mrf.mxu0
  %v668 = vadd.f32 %v504, %v667
  %669 = vmatmul.f32.gmra.mxu0 %v159
  %v670 = vpop.f32.mrf.mxu0
  %v671 = vadd.f32 %v507, %v670
  %672 = vdwg.mxu0
  %673 = vmatpush.msra.mxu0 0.0
  %674 = vmatpush.msra.mxu0 0.0
  %675 = vmatpush.msra.mxu0 0.0
  %676 = vmatpush.msra.mxu0 0.0
  %677 = vmatpush.msra.mxu0 0.0
  %678 = vmatpush.msra.mxu0 0.0
  %679 = vmatpush.msra.mxu0 0.0
  %680 = vmatpush.msra.mxu0 0.0
  %681 = vmatpush.msra.mxu0 0.0
  %682 = vmatpush.msra.mxu0 0.0
  %683 = vmatpush.msra.mxu0 0.0
  %684 = vmatpush.msra.mxu0 0.0
  %685 = vmatpush.msra.mxu0 %v196
  %686 = vmatpush.msra.mxu0 %v195
  %687 = vmatpush.msra.mxu0 %v194
  %688 = vmatpush.msra.mxu0 %v193
  %689 = vmatmul.f32.gmra.mxu0 %v199
  %v690 = vpop.f32.mrf.mxu0
  %v691 = vadd.f32 %v527, %v690
  %692 = vmatmul.f32.gmra.mxu0 %v202
  %v693 = vpop.f32.mrf.mxu0
  %v694 = vadd.f32 %v530, %v693
  %695 = vmatmul.f32.gmra.mxu0 %v205
  %v696 = vpop.f32.mrf.mxu0
  %v697 = vadd.f32 %v533, %v696
  %698 = vmatmul.f32.gmra.mxu0 %v208
  %v699 = vpop.f32.mrf.mxu0
  %v700 = vadd.f32 %v536, %v699
  %701 = vmatmul.f32.gmra.mxu0 %v211
  %v702 = vpop.f32.mrf.mxu0
  %v703 = vadd.f32 %v539, %v702
  %704 = vmatmul.f32.gmra.mxu0 %v214
  %v705 = vpop.f32.mrf.mxu0
  %v706 = vadd.f32 %v542, %v705
  %707 = vmatmul.f32.gmra.mxu0 %v217
  %v708 = vpop.f32.mrf.mxu0
  %v709 = vadd.f32 %v545, %v708
  %710 = vmatmul.f32.gmra.mxu0 %v220
  %v711 = vpop.f32.mrf.mxu0
  %v712 = vadd.f32 %v548, %v711
  %713 = vmatmul.f32.gmra.mxu0 %v223
  %v714 = vpop.f32.mrf.mxu0
  %v715 = vadd.f32 %v551, %v714
  %716 = vmatmul.f32.gmra.mxu0 %v226
  %v717 = vpop.f32.mrf.mxu0
  %v718 = vadd.f32 %v554, %v717
  %719 = vmatmul.f32.gmra.mxu0 %v229
  %v720 = vpop.f32.mrf.mxu0
  %v721 = vadd.f32 %v557, %v720
  %722 = vmatmul.f32.gmra.mxu0 %v232
  %v723 = vpop.f32.mrf.mxu0
  %v724 = vadd.f32 %v560, %v723
  %725 = vmatmul.f32.gmra.mxu0 %v235
  %v726 = vpop.f32.mrf.mxu0
  %v727 = vadd.f32 %v563, %v726
  %728 = vmatmul.f32.gmra.mxu0 %v238
  %v729 = vpop.f32.mrf.mxu0
  %v730 = vadd.f32 %v566, %v729
  %731 = vmatmul.f32.gmra.mxu0 %v241
  %v732 = vpop.f32.mrf.mxu0
  %v733 = vadd.f32 %v569, %v732
  %734 = vmatmul.f32.gmra.mxu0 %v244
  %v735 = vpop.f32.mrf.mxu0
  %v736 = vadd.f32 %v572, %v735
  %737 = vmatmul.f32.gmra.mxu0 %v247
  %v738 = vpop.f32.mrf.mxu0
  %v739 = vadd.f32 %v575, %v738
  %740 = vmatmul.f32.gmra.mxu0 %v250
  %v741 = vpop.f32.mrf.mxu0
  %v742 = vadd.f32 %v578, %v741
  %743 = vmatmul.f32.gmra.mxu0 %v253
  %v744 = vpop.f32.mrf.mxu0
  %v745 = vadd.f32 %v581, %v744
  %746 = vmatmul.f32.gmra.mxu0 %v256
  %v747 = vpop.f32.mrf.mxu0
  %v748 = vadd.f32 %v584, %v747
  %749 = vmatmul.f32.gmra.mxu0 %v259
  %v750 = vpop.f32.mrf.mxu0
  %v751 = vadd.f32 %v587, %v750
  %752 = vmatmul.f32.gmra.mxu0 %v262
  %v753 = vpop.f32.mrf.mxu0
  %v754 = vadd.f32 %v590, %v753
  %755 = vmatmul.f32.gmra.mxu0 %v265
  %v756 = vpop.f32.mrf.mxu0
  %v757 = vadd.f32 %v593, %v756
  %758 = vmatmul.f32.gmra.mxu0 %v268
  %v759 = vpop.f32.mrf.mxu0
  %v760 = vadd.f32 %v596, %v759
  %761 = vmatmul.f32.gmra.mxu0 %v271
  %v762 = vpop.f32.mrf.mxu0
  %v763 = vadd.f32 %v599, %v762
  %764 = vmatmul.f32.gmra.mxu0 %v274
  %v765 = vpop.f32.mrf.mxu0
  %v766 = vadd.f32 %v602, %v765
  %767 = vmatmul.f32.gmra.mxu0 %v277
  %v768 = vpop.f32.mrf.mxu0
  %v769 = vadd.f32 %v605, %v768
  %770 = vmatmul.f32.gmra.mxu0 %v280
  %v771 = vpop.f32.mrf.mxu0
  %v772 = vadd.f32 %v608, %v771
  %773 = vmatmul.f32.gmra.mxu0 %v283
  %v774 = vpop.f32.mrf.mxu0
  %v775 = vadd.f32 %v611, %v774
  %776 = vmatmul.f32.gmra.mxu0 %v286
  %v777 = vpop.f32.mrf.mxu0
  %v778 = vadd.f32 %v614, %v777
  %779 = vmatmul.f32.gmra.mxu0 %v289
  %v780 = vpop.f32.mrf.mxu0
  %v781 = vadd.f32 %v617, %v780
  %782 = vmatmul.f32.gmra.mxu0 %v292
  %v783 = vpop.f32.mrf.mxu0
  %v784 = vadd.f32 %v620, %v783
  %785 = vmatmul.f32.gmra.mxu0 %v295
  %v786 = vpop.f32.mrf.mxu0
  %v787 = vadd.f32 %v623, %v786
  %788 = vmatmul.f32.gmra.mxu0 %v298
  %v789 = vpop.f32.mrf.mxu0
  %v790 = vadd.f32 %v626, %v789
  %791 = vmatmul.f32.gmra.mxu0 %v301
  %v792 = vpop.f32.mrf.mxu0
  %v793 = vadd.f32 %v629, %v792
  %794 = vmatmul.f32.gmra.mxu0 %v304
  %v795 = vpop.f32.mrf.mxu0
  %v796 = vadd.f32 %v632, %v795
  %797 = vmatmul.f32.gmra.mxu0 %v307
  %v798 = vpop.f32.mrf.mxu0
  %v799 = vadd.f32 %v635, %v798
  %800 = vmatmul.f32.gmra.mxu0 %v310
  %v801 = vpop.f32.mrf.mxu0
  %v802 = vadd.f32 %v638, %v801
  %803 = vmatmul.f32.gmra.mxu0 %v313
  %v804 = vpop.f32.mrf.mxu0
  %v805 = vadd.f32 %v641, %v804
  %806 = vmatmul.f32.gmra.mxu0 %v316
  %v807 = vpop.f32.mrf.mxu0
  %v808 = vadd.f32 %v644, %v807
  %809 = vmatmul.f32.gmra.mxu0 %v319
  %v810 = vpop.f32.mrf.mxu0
  %v811 = vadd.f32 %v647, %v810
  %812 = vmatmul.f32.gmra.mxu0 %v322
  %v813 = vpop.f32.mrf.mxu0
  %v814 = vadd.f32 %v650, %v813
  %815 = vmatmul.f32.gmra.mxu0 %v325
  %v816 = vpop.f32.mrf.mxu0
  %v817 = vadd.f32 %v653, %v816
  %818 = vmatmul.f32.gmra.mxu0 %v328
  %v819 = vpop.f32.mrf.mxu0
  %v820 = vadd.f32 %v656, %v819
  %821 = vmatmul.f32.gmra.mxu0 %v331
  %v822 = vpop.f32.mrf.mxu0
  %v823 = vadd.f32 %v659, %v822
  %824 = vmatmul.f32.gmra.mxu0 %v334
  %v825 = vpop.f32.mrf.mxu0
  %v826 = vadd.f32 %v662, %v825
  %827 = vmatmul.f32.gmra.mxu0 %v337
  %v828 = vpop.f32.mrf.mxu0
  %v829 = vadd.f32 %v665, %v828
  %830 = vmatmul.f32.gmra.mxu0 %v340
  %v831 = vpop.f32.mrf.mxu0
  %v832 = vadd.f32 %v668, %v831
  %833 = vmatmul.f32.gmra.mxu0 %v343
  %v834 = vpop.f32.mrf.mxu0
  %v835 = vadd.f32 %v671, %v834
  %836 = vdwg.mxu0
  %v837 = vld [vmem:[%s2] sm:$0x1]
  %v838 = vperm.slane %v837, 0
  %v839 = vmul.f32 %v691, %v838
  %v840 = vmul.f32 %v694, %v838
  %v841 = vmul.f32 %v697, %v838
  %v842 = vmul.f32 %v700, %v838
  %v843 = vmul.f32 %v703, %v838
  %v844 = vmul.f32 %v706, %v838
  %v845 = vmul.f32 %v709, %v838
  %v846 = vmul.f32 %v712, %v838
  %v847 = vmul.f32 %v715, %v838
  %v848 = vmul.f32 %v718, %v838
  %v849 = vmul.f32 %v721, %v838
  %v850 = vmul.f32 %v724, %v838
  %v851 = vmul.f32 %v727, %v838
  %v852 = vmul.f32 %v730, %v838
  %v853 = vmul.f32 %v733, %v838
  %v854 = vmul.f32 %v736, %v838
  %v855 = vmul.f32 %v739, %v838
  %v856 = vmul.f32 %v742, %v838
  %v857 = vmul.f32 %v745, %v838
  %v858 = vmul.f32 %v748, %v838
  %v859 = vmul.f32 %v751, %v838
  %v860 = vmul.f32 %v754, %v838
  %v861 = vmul.f32 %v757, %v838
  %v862 = vmul.f32 %v760, %v838
  %v863 = vmul.f32 %v763, %v838
  %v864 = vmul.f32 %v766, %v838
  %v865 = vmul.f32 %v769, %v838
  %v866 = vmul.f32 %v772, %v838
  %v867 = vmul.f32 %v775, %v838
  %v868 = vmul.f32 %v778, %v838
  %v869 = vmul.f32 %v781, %v838
  %v870 = vmul.f32 %v784, %v838
  %v871 = vmul.f32 %v787, %v838
  %v872 = vmul.f32 %v790, %v838
  %v873 = vmul.f32 %v793, %v838
  %v874 = vmul.f32 %v796, %v838
  %v875 = vmul.f32 %v799, %v838
  %v876 = vmul.f32 %v802, %v838
  %v877 = vmul.f32 %v805, %v838
  %v878 = vmul.f32 %v808, %v838
  %v879 = vmul.f32 %v811, %v838
  %v880 = vmul.f32 %v814, %v838
  %v881 = vmul.f32 %v817, %v838
  %v882 = vmul.f32 %v820, %v838
  %v883 = vmul.f32 %v823, %v838
  %v884 = vmul.f32 %v826, %v838
  %v885 = vmul.f32 %v829, %v838
  %v886 = vmul.f32 %v832, %v838
  %v887 = vmul.f32 %v835, %v838
  %v888 = vld [vmem:[%s2 + $0x1] sm:$0x1]
  %v889 = vperm.slane %v888, 0
  %v890 = vadd.f32 %v839, %v889
  %v891 = vadd.f32 %v840, %v889
  %v892 = vadd.f32 %v841, %v889
  %v893 = vadd.f32 %v842, %v889
  %v894 = vadd.f32 %v843, %v889
  %v895 = vadd.f32 %v844, %v889
  %v896 = vadd.f32 %v845, %v889
  %v897 = vadd.f32 %v846, %v889
  %v898 = vadd.f32 %v847, %v889
  %v899 = vadd.f32 %v848, %v889
  %v900 = vadd.f32 %v849, %v889
  %v901 = vadd.f32 %v850, %v889
  %v902 = vadd.f32 %v851, %v889
  %v903 = vadd.f32 %v852, %v889
  %v904 = vadd.f32 %v853, %v889
  %v905 = vadd.f32 %v854, %v889
  %v906 = vadd.f32 %v855, %v889
  %v907 = vadd.f32 %v856, %v889
  %v908 = vadd.f32 %v857, %v889
  %v909 = vadd.f32 %v858, %v889
  %v910 = vadd.f32 %v859, %v889
  %v911 = vadd.f32 %v860, %v889
  %v912 = vadd.f32 %v861, %v889
  %v913 = vadd.f32 %v862, %v889
  %v914 = vadd.f32 %v863, %v889
  %v915 = vadd.f32 %v864, %v889
  %v916 = vadd.f32 %v865, %v889
  %v917 = vadd.f32 %v866, %v889
  %v918 = vadd.f32 %v867, %v889
  %v919 = vadd.f32 %v868, %v889
  %v920 = vadd.f32 %v869, %v889
  %v921 = vadd.f32 %v870, %v889
  %v922 = vadd.f32 %v871, %v889
  %v923 = vadd.f32 %v872, %v889
  %v924 = vadd.f32 %v873, %v889
  %v925 = vadd.f32 %v874, %v889
  %v926 = vadd.f32 %v875, %v889
  %v927 = vadd.f32 %v876, %v889
  %v928 = vadd.f32 %v877, %v889
  %v929 = vadd.f32 %v878, %v889
  %v930 = vadd.f32 %v879, %v889
  %v931 = vadd.f32 %v880, %v889
  %v932 = vadd.f32 %v881, %v889
  %v933 = vadd.f32 %v882, %v889
  %v934 = vadd.f32 %v883, %v889
  %v935 = vadd.f32 %v884, %v889
  %v936 = vadd.f32 %v885, %v889
  %v937 = vadd.f32 %v886, %v889
  %v938 = vadd.f32 %v887, %v889
  %v939 = vmax.f32 %v890, 0.0
  %v940 = vmax.f32 %v891, 0.0
  %v941 = vmax.f32 %v892, 0.0
  %v942 = vmax.f32 %v893, 0.0
  %v943 = vmax.f32 %v894, 0.0
  %v944 = vmax.f32 %v895, 0.0
  %v945 = vmax.f32 %v896, 0.0
  %v946 = vmax.f32 %v897, 0.0
  %v947 = vmax.f32 %v898, 0.0
  %v948 = vmax.f32 %v899, 0.0
  %v949 = vmax.f32 %v900, 0.0
  %v950 = vmax.f32 %v901, 0.0
  %v951 = vmax.f32 %v902, 0.0
  %v952 = vmax.f32 %v903, 0.0
  %v953 = vmax.f32 %v904, 0.0
  %v954 = vmax.f32 %v905, 0.0
  %v955 = vmax.f32 %v906, 0.0
  %v956 = vmax.f32 %v907, 0.0
  %v957 = vmax.f32 %v908, 0.0
  %v958 = vmax.f32 %v909, 0.0
  %v959 = vmax.f32 %v910, 0.0
  %v960 = vmax.f32 %v911, 0.0
  %v961 = vmax.f32 %v912, 0.0
  %v962 = vmax.f32 %v913, 0.0
  %v963 = vmax.f32 %v914, 0.0
  %v964 = vmax.f32 %v915, 0.0
  %v965 = vmax.f32 %v916, 0.0
  %v966 = vmax.f32 %v917, 0.0
  %v967 = vmax.f32 %v918, 0.0
  %v968 = vmax.f32 %v919, 0.0
  %v969 = vmax.f32 %v920, 0.0
  %v970 = vmax.f32 %v921, 0.0
  %v971 = vmax.f32 %v922, 0.0
  %v972 = vmax.f32 %v923, 0.0
  %v973 = vmax.f32 %v924, 0.0
  %v974 = vmax.f32 %v925, 0.0
  %v975 = vmax.f32 %v926, 0.0
  %v976 = vmax.f32 %v927, 0.0
  %v977 = vmax.f32 %v928, 0.0
  %v978 = vmax.f32 %v929, 0.0
  %v979 = vmax.f32 %v930, 0.0
  %v980 = vmax.f32 %v931, 0.0
  %v981 = vmax.f32 %v932, 0.0
  %v982 = vmax.f32 %v933, 0.0
  %v983 = vmax.f32 %v934, 0.0
  %v984 = vmax.f32 %v935, 0.0
  %v985 = vmax.f32 %v936, 0.0
  %v986 = vmax.f32 %v937, 0.0
  %v987 = vmax.f32 %v938, 0.0
  %vm988 = vcmask 130048
  %989 = vst.msk [vmem:[%s3] sm:$0xff] %vm988, %v939
  %990 = vst.msk [vmem:[%s3 + $0x8] sm:$0xff] %vm988, %v940
  %991 = vst.msk [vmem:[%s3 + $0x10] sm:$0xff] %vm988, %v941
  %992 = vst.msk [vmem:[%s3 + $0x18] sm:$0xff] %vm988, %v942
  %993 = vst.msk [vmem:[%s3 + $0x20] sm:$0xff] %vm988, %v943
  %994 = vst.msk [vmem:[%s3 + $0x28] sm:$0xff] %vm988, %v944
  %995 = vst.msk [vmem:[%s3 + $0x30] sm:$0xff] %vm988, %v945
  %996 = vst.msk [vmem:[%s3 + $0x38] sm:$0xff] %vm988, %v946
  %997 = vst.msk [vmem:[%s3 + $0x40] sm:$0xff] %vm988, %v947
  %998 = vst.msk [vmem:[%s3 + $0x48] sm:$0xff] %vm988, %v948
  %999 = vst.msk [vmem:[%s3 + $0x50] sm:$0xff] %vm988, %v949
  %1000 = vst.msk [vmem:[%s3 + $0x58] sm:$0xff] %vm988, %v950
  %1001 = vst.msk [vmem:[%s3 + $0x60] sm:$0xff] %vm988, %v951
  %1002 = vst.msk [vmem:[%s3 + $0x68] sm:$0xff] %vm988, %v952
  %1003 = vst.msk [vmem:[%s3 + $0x70] sm:$0xff] %vm988, %v953
  %1004 = vst.msk [vmem:[%s3 + $0x78] sm:$0xff] %vm988, %v954
  %1005 = vst.msk [vmem:[%s3 + $0x80] sm:$0xff] %vm988, %v955
  %1006 = vst.msk [vmem:[%s3 + $0x88] sm:$0xff] %vm988, %v956
  %1007 = vst.msk [vmem:[%s3 + $0x90] sm:$0xff] %vm988, %v957
  %1008 = vst.msk [vmem:[%s3 + $0x98] sm:$0xff] %vm988, %v958
  %1009 = vst.msk [vmem:[%s3 + $0xa0] sm:$0xff] %vm988, %v959
  %1010 = vst.msk [vmem:[%s3 + $0xa8] sm:$0xff] %vm988, %v960
  %1011 = vst.msk [vmem:[%s3 + $0xb0] sm:$0xff] %vm988, %v961
  %1012 = vst.msk [vmem:[%s3 + $0xb8] sm:$0xff] %vm988, %v962
  %1013 = vst.msk [vmem:[%s3 + $0xc0] sm:$0xff] %vm988, %v963
  %1014 = vst.msk [vmem:[%s3 + $0xc8] sm:$0xff] %vm988, %v964
  %1015 = vst.msk [vmem:[%s3 + $0xd0] sm:$0xff] %vm988, %v965
  %1016 = vst.msk [vmem:[%s3 + $0xd8] sm:$0xff] %vm988, %v966
  %1017 = vst.msk [vmem:[%s3 + $0xe0] sm:$0xff] %vm988, %v967
  %1018 = vst.msk [vmem:[%s3 + $0xe8] sm:$0xff] %vm988, %v968
  %1019 = vst.msk [vmem:[%s3 + $0xf0] sm:$0xff] %vm988, %v969
  %1020 = vst.msk [vmem:[%s3 + $0xf8] sm:$0xff] %vm988, %v970
  %1021 = vst.msk [vmem:[%s3 + $0x100] sm:$0xff] %vm988, %v971
  %1022 = vst.msk [vmem:[%s3 + $0x108] sm:$0xff] %vm988, %v972
  %1023 = vst.msk [vmem:[%s3 + $0x110] sm:$0xff] %vm988, %v973
  %1024 = vst.msk [vmem:[%s3 + $0x118] sm:$0xff] %vm988, %v974
  %1025 = vst.msk [vmem:[%s3 + $0x120] sm:$0xff] %vm988, %v975
  %1026 = vst.msk [vmem:[%s3 + $0x128] sm:$0xff] %vm988, %v976
  %1027 = vst.msk [vmem:[%s3 + $0x130] sm:$0xff] %vm988, %v977
  %1028 = vst.msk [vmem:[%s3 + $0x138] sm:$0xff] %vm988, %v978
  %1029 = vst.msk [vmem:[%s3 + $0x140] sm:$0xff] %vm988, %v979
  %1030 = vst.msk [vmem:[%s3 + $0x148] sm:$0xff] %vm988, %v980
  %1031 = vst.msk [vmem:[%s3 + $0x150] sm:$0xff] %vm988, %v981
  %1032 = vst.msk [vmem:[%s3 + $0x158] sm:$0xff] %vm988, %v982
  %1033 = vst.msk [vmem:[%s3 + $0x160] sm:$0xff] %vm988, %v983
  %1034 = vst.msk [vmem:[%s3 + $0x168] sm:$0xff] %vm988, %v984
  %1035 = vst.msk [vmem:[%s3 + $0x170] sm:$0xff] %vm988, %v985
  %1036 = vst.msk [vmem:[%s3 + $0x178] sm:$0xff] %vm988, %v986
  %1037 = vst.msk [vmem:[%s3 + $0x180] sm:$0xff] %vm988, %v987
  // Predicated region
  $region14: #{mycnn_forward.7} parent=0 // pred_check
    _
  $region15: #{mycnn_forward.7} parent=0 // pred_check_branch
    %1039 = sbr.rel (0) target = $region17
  $region16: #{mycnn_forward.7} parent=0 // pred_region
    _
  $region17: #{mycnn_forward.7} parent=0 // pred_fallthru
    _
  // Predicated region
  $region18: #{mycnn_forward.7} parent=0 // pred_check
    _
  $region19: #{mycnn_forward.7} parent=0 // pred_check_branch
    %1041 = sbr.rel (0) target = $region21
  $region20: #{mycnn_forward.7} parent=0 // pred_region
    _
  $region21: #{mycnn_forward.7} parent=0 // pred_fallthru
    _

// kernel: mycnn_forward.8
$region0: #{mycnn_forward.8}
  #allocation0 [shape = 'u32[]', space=smem, size = 0x4, offset = 0x4, fixed_abs, tag = 'smem constant byte address 0x4 - core index']
  #allocation1 [shape = 'u32[72,128]{1,0:T(1,128)}', space=vmem, size = 0x9000, scoped, tag = 'internal scratch']
  %s0 = inlined_call_operand.vmem [shape: f32[4,98,144], index: 0, kind: input, shape index: {}]
  %s1 = inlined_call_operand.vmem [shape: f32[144,16], index: 1, kind: input, shape index: {}]
  %s2 = inlined_call_operand.vmem [shape: f32[2,16], index: 2, kind: input, shape index: {}]
  %s3 = inlined_call_operand.vmem [shape: f32[98,16], index: 3, kind: output, shape index: {}]
  %s4 = sld [smem:[#allocation0]]
  $region22: #{mycnn_forward.8} parent=0
    _
  %s6 = ssub.s32 1, %s4
  %s7 = scalar_select 0, %s6, %s4
  // Predicated region
  $region2: #{mycnn_forward.8} parent=0 // pred_check
    _
  $region3: #{mycnn_forward.8} parent=0 // pred_check_branch
    %9 = sbr.rel (0) target = $region5
  $region4: #{mycnn_forward.8} parent=0 // pred_region
    _
  $region5: #{mycnn_forward.8} parent=0 // pred_fallthru
    _
  // Predicated region
  $region6: #{mycnn_forward.8} parent=0 // pred_check
    _
  $region7: #{mycnn_forward.8} parent=0 // pred_check_branch
    %11 = sbr.rel (0) target = $region9
  $region8: #{mycnn_forward.8} parent=0 // pred_region
    _
  $region9: #{mycnn_forward.8} parent=0 // pred_fallthru
    _
  // Predicated region
  $region10: #{mycnn_forward.8} parent=0 // pred_check
    _
  $region11: #{mycnn_forward.8} parent=0 // pred_check_branch
    %13 = sbr.rel (0) target = $region13
  $region12: #{mycnn_forward.8} parent=0 // pred_region
    _
  $region13: #{mycnn_forward.8} parent=0 // pred_fallthru
    _
  %v14 = vld [vmem:[%s1] sm:$0xff]
  %v15 = vld [vmem:[%s1 + $0x8] sm:$0xff]
  %v16 = vld [vmem:[%s1 + $0x10] sm:$0xff]
  %v17 = vld [vmem:[%s1 + $0x18] sm:$0xff]
  %v18 = vld [vmem:[%s1 + $0x20] sm:$0xff]
  %v19 = vld [vmem:[%s1 + $0x28] sm:$0xff]
  %v20 = vld [vmem:[%s1 + $0x30] sm:$0xff]
  %v21 = vld [vmem:[%s1 + $0x38] sm:$0xff]
  %v22 = vld [vmem:[%s1 + $0x40] sm:$0xff]
  %v23 = vld [vmem:[%s1 + $0x48] sm:$0xff]
  %v24 = vld [vmem:[%s1 + $0x50] sm:$0xff]
  %v25 = vld [vmem:[%s1 + $0x58] sm:$0xff]
  %v26 = vld [vmem:[%s1 + $0x60] sm:$0xff]
  %v27 = vld [vmem:[%s1 + $0x68] sm:$0xff]
  %v28 = vld [vmem:[%s1 + $0x70] sm:$0xff]
  %v29 = vld [vmem:[%s1 + $0x78] sm:$0xff]
  %v30 = vld [vmem:[%s1 + $0x80] sm:$0xff]
  %v31 = vld [vmem:[%s1 + $0x88] sm:$0xff]
  %v32 = vld [vmem:[%s2] sm:$0x1]
  %v33 = vld [vmem:[%s2 + $0x1] sm:$0x1]
  %v34 = vld [vmem:[%s0] sm:$0xff]
  %v35 = vld [vmem:[%s0 + $0x8] sm:$0xff]
  %v36 = vld [vmem:[%s0 + $0x10] sm:$0xff]
  %v37 = vld [vmem:[%s0 + $0x18] sm:$0xff]
  %v38 = vld [vmem:[%s0 + $0x20] sm:$0xff]
  %v39 = vld [vmem:[%s0 + $0x28] sm:$0xff]
  %v40 = vld [vmem:[%s0 + $0x30] sm:$0xff]
  %v41 = vld [vmem:[%s0 + $0x38] sm:$0xff]
  %v42 = vld [vmem:[%s0 + $0x40] sm:$0xff]
  %v43 = vld [vmem:[%s0 + $0x48] sm:$0xff]
  %v44 = vld [vmem:[%s0 + $0x50] sm:$0xff]
  %v45 = vld [vmem:[%s0 + $0x58] sm:$0xff]
  %v46 = vld [vmem:[%s0 + $0x60] sm:$0xff]
  %v47 = vld [vmem:[%s0 + $0x68] sm:$0xff]
  %v48 = vld [vmem:[%s0 + $0x70] sm:$0xff]
  %v49 = vld [vmem:[%s0 + $0x78] sm:$0xff]
  %v50 = vld [vmem:[%s0 + $0x80] sm:$0xff]
  %v51 = vld [vmem:[%s0 + $0x88] sm:$0xff]
  %v52 = vld [vmem:[%s0 + $0x90] sm:$0xff]
  %v53 = vld [vmem:[%s0 + $0x98] sm:$0xff]
  %v54 = vld [vmem:[%s0 + $0xa0] sm:$0xff]
  %v55 = vld [vmem:[%s0 + $0xa8] sm:$0xff]
  %v56 = vld [vmem:[%s0 + $0xb0] sm:$0xff]
  %v57 = vld [vmem:[%s0 + $0xb8] sm:$0xff]
  %v58 = vld [vmem:[%s0 + $0xc0] sm:$0x3]
  %v59 = vld [vmem:[%s0 + $0xc8] sm:$0x3]
  %vm60 = vcmask 130048
  %v62 = vsel %vm60, %v35, 0
  %v65 = vsel %vm60, %v37, 0
  %v68 = vsel %vm60, %v39, 0
  %v71 = vsel %vm60, %v41, 0
  %v74 = vsel %vm60, %v43, 0
  %v77 = vsel %vm60, %v45, 0
  %v80 = vsel %vm60, %v47, 0
  %v83 = vsel %vm60, %v49, 0
  %v86 = vsel %vm60, %v51, 0
  %v89 = vsel %vm60, %v53, 0
  %v92 = vsel %vm60, %v55, 0
  %v95 = vsel %vm60, %v57, 0
  %v98 = vsel %vm60, %v59, 0
  %100 = vmatpush.msra.mxu0 %v29
  %101 = vmatpush.msra.mxu0 %v28
  %102 = vmatpush.msra.mxu0 %v27
  %103 = vmatpush.msra.mxu0 %v26
  %104 = vmatpush.msra.mxu0 %v25
  %105 = vmatpush.msra.mxu0 %v24
  %106 = vmatpush.msra.mxu0 %v23
  %107 = vmatpush.msra.mxu0 %v22
  %108 = vmatpush.msra.mxu0 %v21
  %109 = vmatpush.msra.mxu0 %v20
  %110 = vmatpush.msra.mxu0 %v19
  %111 = vmatpush.msra.mxu0 %v18
  %112 = vmatpush.msra.mxu0 %v17
  %113 = vmatpush.msra.mxu0 %v16
  %114 = vmatpush.msra.mxu0 %v15
  %115 = vmatpush.msra.mxu0 %v14
  %116 = vmatmul.f32.gmra.mxu0 %v34
  %v117 = vpop.f32.mrf.mxu0
  %v118 = vadd.f32 0.0, %v117
  %119 = vmatmul.f32.gmra.mxu0 %v36
  %v120 = vpop.f32.mrf.mxu0
  %v121 = vadd.f32 0.0, %v120
  %122 = vmatmul.f32.gmra.mxu0 %v38
  %v123 = vpop.f32.mrf.mxu0
  %v124 = vadd.f32 0.0, %v123
  %125 = vmatmul.f32.gmra.mxu0 %v40
  %v126 = vpop.f32.mrf.mxu0
  %v127 = vadd.f32 0.0, %v126
  %128 = vmatmul.f32.gmra.mxu0 %v42
  %v129 = vpop.f32.mrf.mxu0
  %v130 = vadd.f32 0.0, %v129
  %131 = vmatmul.f32.gmra.mxu0 %v44
  %v132 = vpop.f32.mrf.mxu0
  %v133 = vadd.f32 0.0, %v132
  %134 = vmatmul.f32.gmra.mxu0 %v46
  %v135 = vpop.f32.mrf.mxu0
  %v136 = vadd.f32 0.0, %v135
  %137 = vmatmul.f32.gmra.mxu0 %v48
  %v138 = vpop.f32.mrf.mxu0
  %v139 = vadd.f32 0.0, %v138
  %140 = vmatmul.f32.gmra.mxu0 %v50
  %v141 = vpop.f32.mrf.mxu0
  %v142 = vadd.f32 0.0, %v141
  %143 = vmatmul.f32.gmra.mxu0 %v52
  %v144 = vpop.f32.mrf.mxu0
  %v145 = vadd.f32 0.0, %v144
  %146 = vmatmul.f32.gmra.mxu0 %v54
  %v147 = vpop.f32.mrf.mxu0
  %v148 = vadd.f32 0.0, %v147
  %149 = vmatmul.f32.gmra.mxu0 %v56
  %v150 = vpop.f32.mrf.mxu0
  %v151 = vadd.f32 0.0, %v150
  %152 = vmatmul.f32.gmra.mxu0 %v58
  %v153 = vpop.f32.mrf.mxu0
  %v154 = vadd.f32 0.0, %v153
  %155 = vdwg.mxu0
  %156 = vmatpush.msra.mxu0 0.0
  %157 = vmatpush.msra.mxu0 0.0
  %158 = vmatpush.msra.mxu0 0.0
  %159 = vmatpush.msra.mxu0 0.0
  %160 = vmatpush.msra.mxu0 0.0
  %161 = vmatpush.msra.mxu0 0.0
  %162 = vmatpush.msra.mxu0 0.0
  %163 = vmatpush.msra.mxu0 0.0
  %164 = vmatpush.msra.mxu0 0.0
  %165 = vmatpush.msra.mxu0 0.0
  %166 = vmatpush.msra.mxu0 0.0
  %167 = vmatpush.msra.mxu0 0.0
  %168 = vmatpush.msra.mxu0 0.0
  %169 = vmatpush.msra.mxu0 0.0
  %170 = vmatpush.msra.mxu0 %v31
  %171 = vmatpush.msra.mxu0 %v30
  %172 = vmatmul.f32.gmra.mxu0 %v62
  %v173 = vpop.f32.mrf.mxu0
  %v174 = vadd.f32 %v118, %v173
  %175 = vmatmul.f32.gmra.mxu0 %v65
  %v176 = vpop.f32.mrf.mxu0
  %v177 = vadd.f32 %v121, %v176
  %178 = vmatmul.f32.gmra.mxu0 %v68
  %v179 = vpop.f32.mrf.mxu0
  %v180 = vadd.f32 %v124, %v179
  %181 = vmatmul.f32.gmra.mxu0 %v71
  %v182 = vpop.f32.mrf.mxu0
  %v183 = vadd.f32 %v127, %v182
  %184 = vmatmul.f32.gmra.mxu0 %v74
  %v185 = vpop.f32.mrf.mxu0
  %v186 = vadd.f32 %v130, %v185
  %187 = vmatmul.f32.gmra.mxu0 %v77
  %v188 = vpop.f32.mrf.mxu0
  %v189 = vadd.f32 %v133, %v188
  %190 = vmatmul.f32.gmra.mxu0 %v80
  %v191 = vpop.f32.mrf.mxu0
  %v192 = vadd.f32 %v136, %v191
  %193 = vmatmul.f32.gmra.mxu0 %v83
  %v194 = vpop.f32.mrf.mxu0
  %v195 = vadd.f32 %v139, %v194
  %196 = vmatmul.f32.gmra.mxu0 %v86
  %v197 = vpop.f32.mrf.mxu0
  %v198 = vadd.f32 %v142, %v197
  %199 = vmatmul.f32.gmra.mxu0 %v89
  %v200 = vpop.f32.mrf.mxu0
  %v201 = vadd.f32 %v145, %v200
  %202 = vmatmul.f32.gmra.mxu0 %v92
  %v203 = vpop.f32.mrf.mxu0
  %v204 = vadd.f32 %v148, %v203
  %205 = vmatmul.f32.gmra.mxu0 %v95
  %v206 = vpop.f32.mrf.mxu0
  %v207 = vadd.f32 %v151, %v206
  %208 = vmatmul.f32.gmra.mxu0 %v98
  %v209 = vpop.f32.mrf.mxu0
  %v210 = vadd.f32 %v154, %v209
  %211 = vdwg.mxu0
  %v212 = vperm.slane %v32, 0
  %v213 = vmul.f32 %v174, %v212
  %v214 = vmul.f32 %v177, %v212
  %v215 = vmul.f32 %v180, %v212
  %v216 = vmul.f32 %v183, %v212
  %v217 = vmul.f32 %v186, %v212
  %v218 = vmul.f32 %v189, %v212
  %v219 = vmul.f32 %v192, %v212
  %v220 = vmul.f32 %v195, %v212
  %v221 = vmul.f32 %v198, %v212
  %v222 = vmul.f32 %v201, %v212
  %v223 = vmul.f32 %v204, %v212
  %v224 = vmul.f32 %v207, %v212
  %v225 = vmul.f32 %v210, %v212
  %v226 = vperm.slane %v33, 0
  %v227 = vadd.f32 %v213, %v226
  %v228 = vadd.f32 %v214, %v226
  %v229 = vadd.f32 %v215, %v226
  %v230 = vadd.f32 %v216, %v226
  %v231 = vadd.f32 %v217, %v226
  %v232 = vadd.f32 %v218, %v226
  %v233 = vadd.f32 %v219, %v226
  %v234 = vadd.f32 %v220, %v226
  %v235 = vadd.f32 %v221, %v226
  %v236 = vadd.f32 %v222, %v226
  %v237 = vadd.f32 %v223, %v226
  %v238 = vadd.f32 %v224, %v226
  %v239 = vadd.f32 %v225, %v226
  %v240 = vmax.f32 %v227, 0.0
  %v241 = vmax.f32 %v228, 0.0
  %v242 = vmax.f32 %v229, 0.0
  %v243 = vmax.f32 %v230, 0.0
  %v244 = vmax.f32 %v231, 0.0
  %v245 = vmax.f32 %v232, 0.0
  %v246 = vmax.f32 %v233, 0.0
  %v247 = vmax.f32 %v234, 0.0
  %v248 = vmax.f32 %v235, 0.0
  %v249 = vmax.f32 %v236, 0.0
  %v250 = vmax.f32 %v237, 0.0
  %v251 = vmax.f32 %v238, 0.0
  %v252 = vmax.f32 %v239, 0.0
  %s253 = scalar_lea.vmem %s0, 208
  %v254 = vld [vmem:[%s253] sm:$0xff]
  %v255 = vld [vmem:[%s253 + $0x8] sm:$0xff]
  %v256 = vld [vmem:[%s253 + $0x10] sm:$0xff]
  %v257 = vld [vmem:[%s253 + $0x18] sm:$0xff]
  %v258 = vld [vmem:[%s253 + $0x20] sm:$0xff]
  %v259 = vld [vmem:[%s253 + $0x28] sm:$0xff]
  %v260 = vld [vmem:[%s253 + $0x30] sm:$0xff]
  %v261 = vld [vmem:[%s253 + $0x38] sm:$0xff]
  %v262 = vld [vmem:[%s253 + $0x40] sm:$0xff]
  %v263 = vld [vmem:[%s253 + $0x48] sm:$0xff]
  %v264 = vld [vmem:[%s253 + $0x50] sm:$0xff]
  %v265 = vld [vmem:[%s253 + $0x58] sm:$0xff]
  %v266 = vld [vmem:[%s253 + $0x60] sm:$0xff]
  %v267 = vld [vmem:[%s253 + $0x68] sm:$0xff]
  %v268 = vld [vmem:[%s253 + $0x70] sm:$0xff]
  %v269 = vld [vmem:[%s253 + $0x78] sm:$0xff]
  %v270 = vld [vmem:[%s253 + $0x80] sm:$0xff]
  %v271 = vld [vmem:[%s253 + $0x88] sm:$0xff]
  %v272 = vld [vmem:[%s253 + $0x90] sm:$0xff]
  %v273 = vld [vmem:[%s253 + $0x98] sm:$0xff]
  %v274 = vld [vmem:[%s253 + $0xa0] sm:$0xff]
  %v275 = vld [vmem:[%s253 + $0xa8] sm:$0xff]
  %v276 = vld [vmem:[%s253 + $0xb0] sm:$0xff]
  %v277 = vld [vmem:[%s253 + $0xb8] sm:$0xff]
  %v278 = vld [vmem:[%s253 + $0xc0] sm:$0x3]
  %v279 = vld [vmem:[%s253 + $0xc8] sm:$0x3]
  %v281 = vsel %vm60, %v255, 0
  %v284 = vsel %vm60, %v257, 0
  %v287 = vsel %vm60, %v259, 0
  %v290 = vsel %vm60, %v261, 0
  %v293 = vsel %vm60, %v263, 0
  %v296 = vsel %vm60, %v265, 0
  %v299 = vsel %vm60, %v267, 0
  %v302 = vsel %vm60, %v269, 0
  %v305 = vsel %vm60, %v271, 0
  %v308 = vsel %vm60, %v273, 0
  %v311 = vsel %vm60, %v275, 0
  %v314 = vsel %vm60, %v277, 0
  %v317 = vsel %vm60, %v279, 0
  %319 = vmatpush.msra.mxu0 %v29
  %320 = vmatpush.msra.mxu0 %v28
  %321 = vmatpush.msra.mxu0 %v27
  %322 = vmatpush.msra.mxu0 %v26
  %323 = vmatpush.msra.mxu0 %v25
  %324 = vmatpush.msra.mxu0 %v24
  %325 = vmatpush.msra.mxu0 %v23
  %326 = vmatpush.msra.mxu0 %v22
  %327 = vmatpush.msra.mxu0 %v21
  %328 = vmatpush.msra.mxu0 %v20
  %329 = vmatpush.msra.mxu0 %v19
  %330 = vmatpush.msra.mxu0 %v18
  %331 = vmatpush.msra.mxu0 %v17
  %332 = vmatpush.msra.mxu0 %v16
  %333 = vmatpush.msra.mxu0 %v15
  %334 = vmatpush.msra.mxu0 %v14
  %335 = vmatmul.f32.gmra.mxu0 %v254
  %v336 = vpop.f32.mrf.mxu0
  %v337 = vadd.f32 0.0, %v336
  %338 = vmatmul.f32.gmra.mxu0 %v256
  %v339 = vpop.f32.mrf.mxu0
  %v340 = vadd.f32 0.0, %v339
  %341 = vmatmul.f32.gmra.mxu0 %v258
  %v342 = vpop.f32.mrf.mxu0
  %v343 = vadd.f32 0.0, %v342
  %344 = vmatmul.f32.gmra.mxu0 %v260
  %v345 = vpop.f32.mrf.mxu0
  %v346 = vadd.f32 0.0, %v345
  %347 = vmatmul.f32.gmra.mxu0 %v262
  %v348 = vpop.f32.mrf.mxu0
  %v349 = vadd.f32 0.0, %v348
  %350 = vmatmul.f32.gmra.mxu0 %v264
  %v351 = vpop.f32.mrf.mxu0
  %v352 = vadd.f32 0.0, %v351
  %353 = vmatmul.f32.gmra.mxu0 %v266
  %v354 = vpop.f32.mrf.mxu0
  %v355 = vadd.f32 0.0, %v354
  %356 = vmatmul.f32.gmra.mxu0 %v268
  %v357 = vpop.f32.mrf.mxu0
  %v358 = vadd.f32 0.0, %v357
  %359 = vmatmul.f32.gmra.mxu0 %v270
  %v360 = vpop.f32.mrf.mxu0
  %v361 = vadd.f32 0.0, %v360
  %362 = vmatmul.f32.gmra.mxu0 %v272
  %v363 = vpop.f32.mrf.mxu0
  %v364 = vadd.f32 0.0, %v363
  %365 = vmatmul.f32.gmra.mxu0 %v274
  %v366 = vpop.f32.mrf.mxu0
  %v367 = vadd.f32 0.0, %v366
  %368 = vmatmul.f32.gmra.mxu0 %v276
  %v369 = vpop.f32.mrf.mxu0
  %v370 = vadd.f32 0.0, %v369
  %371 = vmatmul.f32.gmra.mxu0 %v278
  %v372 = vpop.f32.mrf.mxu0
  %v373 = vadd.f32 0.0, %v372
  %374 = vdwg.mxu0
  %375 = vmatpush.msra.mxu0 0.0
  %376 = vmatpush.msra.mxu0 0.0
  %377 = vmatpush.msra.mxu0 0.0
  %378 = vmatpush.msra.mxu0 0.0
  %379 = vmatpush.msra.mxu0 0.0
  %380 = vmatpush.msra.mxu0 0.0
  %381 = vmatpush.msra.mxu0 0.0
  %382 = vmatpush.msra.mxu0 0.0
  %383 = vmatpush.msra.mxu0 0.0
  %384 = vmatpush.msra.mxu0 0.0
  %385 = vmatpush.msra.mxu0 0.0
  %386 = vmatpush.msra.mxu0 0.0
  %387 = vmatpush.msra.mxu0 0.0
  %388 = vmatpush.msra.mxu0 0.0
  %389 = vmatpush.msra.mxu0 %v31
  %390 = vmatpush.msra.mxu0 %v30
  %391 = vmatmul.f32.gmra.mxu0 %v281
  %v392 = vpop.f32.mrf.mxu0
  %v393 = vadd.f32 %v337, %v392
  %394 = vmatmul.f32.gmra.mxu0 %v284
  %v395 = vpop.f32.mrf.mxu0
  %v396 = vadd.f32 %v340, %v395
  %397 = vmatmul.f32.gmra.mxu0 %v287
  %v398 = vpop.f32.mrf.mxu0
  %v399 = vadd.f32 %v343, %v398
  %400 = vmatmul.f32.gmra.mxu0 %v290
  %v401 = vpop.f32.mrf.mxu0
  %v402 = vadd.f32 %v346, %v401
  %403 = vmatmul.f32.gmra.mxu0 %v293
  %v404 = vpop.f32.mrf.mxu0
  %v405 = vadd.f32 %v349, %v404
  %406 = vmatmul.f32.gmra.mxu0 %v296
  %v407 = vpop.f32.mrf.mxu0
  %v408 = vadd.f32 %v352, %v407
  %409 = vmatmul.f32.gmra.mxu0 %v299
  %v410 = vpop.f32.mrf.mxu0
  %v411 = vadd.f32 %v355, %v410
  %412 = vmatmul.f32.gmra.mxu0 %v302
  %v413 = vpop.f32.mrf.mxu0
  %v414 = vadd.f32 %v358, %v413
  %415 = vmatmul.f32.gmra.mxu0 %v305
  %v416 = vpop.f32.mrf.mxu0
  %v417 = vadd.f32 %v361, %v416
  %418 = vmatmul.f32.gmra.mxu0 %v308
  %v419 = vpop.f32.mrf.mxu0
  %v420 = vadd.f32 %v364, %v419
  %421 = vmatmul.f32.gmra.mxu0 %v311
  %v422 = vpop.f32.mrf.mxu0
  %v423 = vadd.f32 %v367, %v422
  %424 = vmatmul.f32.gmra.mxu0 %v314
  %v425 = vpop.f32.mrf.mxu0
  %v426 = vadd.f32 %v370, %v425
  %427 = vmatmul.f32.gmra.mxu0 %v317
  %v428 = vpop.f32.mrf.mxu0
  %v429 = vadd.f32 %v373, %v428
  %430 = vdwg.mxu0
  %v431 = vmul.f32 %v393, %v212
  %v432 = vmul.f32 %v396, %v212
  %v433 = vmul.f32 %v399, %v212
  %v434 = vmul.f32 %v402, %v212
  %v435 = vmul.f32 %v405, %v212
  %v436 = vmul.f32 %v408, %v212
  %v437 = vmul.f32 %v411, %v212
  %v438 = vmul.f32 %v414, %v212
  %v439 = vmul.f32 %v417, %v212
  %v440 = vmul.f32 %v420, %v212
  %v441 = vmul.f32 %v423, %v212
  %v442 = vmul.f32 %v426, %v212
  %v443 = vmul.f32 %v429, %v212
  %v444 = vadd.f32 %v431, %v226
  %v445 = vadd.f32 %v432, %v226
  %v446 = vadd.f32 %v433, %v226
  %v447 = vadd.f32 %v434, %v226
  %v448 = vadd.f32 %v435, %v226
  %v449 = vadd.f32 %v436, %v226
  %v450 = vadd.f32 %v437, %v226
  %v451 = vadd.f32 %v438, %v226
  %v452 = vadd.f32 %v439, %v226
  %v453 = vadd.f32 %v440, %v226
  %v454 = vadd.f32 %v441, %v226
  %v455 = vadd.f32 %v442, %v226
  %v456 = vadd.f32 %v443, %v226
  %v457 = vmax.f32 %v444, 0.0
  %v458 = vmax.f32 %v445, 0.0
  %v459 = vmax.f32 %v446, 0.0
  %v460 = vmax.f32 %v447, 0.0
  %v461 = vmax.f32 %v448, 0.0
  %v462 = vmax.f32 %v449, 0.0
  %v463 = vmax.f32 %v450, 0.0
  %v464 = vmax.f32 %v451, 0.0
  %v465 = vmax.f32 %v452, 0.0
  %v466 = vmax.f32 %v453, 0.0
  %v467 = vmax.f32 %v454, 0.0
  %v468 = vmax.f32 %v455, 0.0
  %v469 = vmax.f32 %v456, 0.0
  %v470 = vmax.f32 %v240, %v457
  %v471 = vmax.f32 %v241, %v458
  %v472 = vmax.f32 %v242, %v459
  %v473 = vmax.f32 %v243, %v460
  %v474 = vmax.f32 %v244, %v461
  %v475 = vmax.f32 %v245, %v462
  %v476 = vmax.f32 %v246, %v463
  %v477 = vmax.f32 %v247, %v464
  %v478 = vmax.f32 %v248, %v465
  %v479 = vmax.f32 %v249, %v466
  %v480 = vmax.f32 %v250, %v467
  %v481 = vmax.f32 %v251, %v468
  %v482 = vmax.f32 %v252, %v469
  %s483 = scalar_lea.vmem %s0, 416
  %v484 = vld [vmem:[%s483] sm:$0xff]
  %v485 = vld [vmem:[%s483 + $0x8] sm:$0xff]
  %v486 = vld [vmem:[%s483 + $0x10] sm:$0xff]
  %v487 = vld [vmem:[%s483 + $0x18] sm:$0xff]
  %v488 = vld [vmem:[%s483 + $0x20] sm:$0xff]
  %v489 = vld [vmem:[%s483 + $0x28] sm:$0xff]
  %v490 = vld [vmem:[%s483 + $0x30] sm:$0xff]
  %v491 = vld [vmem:[%s483 + $0x38] sm:$0xff]
  %v492 = vld [vmem:[%s483 + $0x40] sm:$0xff]
  %v493 = vld [vmem:[%s483 + $0x48] sm:$0xff]
  %v494 = vld [vmem:[%s483 + $0x50] sm:$0xff]
  %v495 = vld [vmem:[%s483 + $0x58] sm:$0xff]
  %v496 = vld [vmem:[%s483 + $0x60] sm:$0xff]
  %v497 = vld [vmem:[%s483 + $0x68] sm:$0xff]
  %v498 = vld [vmem:[%s483 + $0x70] sm:$0xff]
  %v499 = vld [vmem:[%s483 + $0x78] sm:$0xff]
  %v500 = vld [vmem:[%s483 + $0x80] sm:$0xff]
  %v501 = vld [vmem:[%s483 + $0x88] sm:$0xff]
  %v502 = vld [vmem:[%s483 + $0x90] sm:$0xff]
  %v503 = vld [vmem:[%s483 + $0x98] sm:$0xff]
  %v504 = vld [vmem:[%s483 + $0xa0] sm:$0xff]
  %v505 = vld [vmem:[%s483 + $0xa8] sm:$0xff]
  %v506 = vld [vmem:[%s483 + $0xb0] sm:$0xff]
  %v507 = vld [vmem:[%s483 + $0xb8] sm:$0xff]
  %v508 = vld [vmem:[%s483 + $0xc0] sm:$0x3]
  %v509 = vld [vmem:[%s483 + $0xc8] sm:$0x3]
  %v511 = vsel %vm60, %v485, 0
  %v514 = vsel %vm60, %v487, 0
  %v517 = vsel %vm60, %v489, 0
  %v520 = vsel %vm60, %v491, 0
  %v523 = vsel %vm60, %v493, 0
  %v526 = vsel %vm60, %v495, 0
  %v529 = vsel %vm60, %v497, 0
  %v532 = vsel %vm60, %v499, 0
  %v535 = vsel %vm60, %v501, 0
  %v538 = vsel %vm60, %v503, 0
  %v541 = vsel %vm60, %v505, 0
  %v544 = vsel %vm60, %v507, 0
  %v547 = vsel %vm60, %v509, 0
  %549 = vmatpush.msra.mxu0 %v29
  %550 = vmatpush.msra.mxu0 %v28
  %551 = vmatpush.msra.mxu0 %v27
  %552 = vmatpush.msra.mxu0 %v26
  %553 = vmatpush.msra.mxu0 %v25
  %554 = vmatpush.msra.mxu0 %v24
  %555 = vmatpush.msra.mxu0 %v23
  %556 = vmatpush.msra.mxu0 %v22
  %557 = vmatpush.msra.mxu0 %v21
  %558 = vmatpush.msra.mxu0 %v20
  %559 = vmatpush.msra.mxu0 %v19
  %560 = vmatpush.msra.mxu0 %v18
  %561 = vmatpush.msra.mxu0 %v17
  %562 = vmatpush.msra.mxu0 %v16
  %563 = vmatpush.msra.mxu0 %v15
  %564 = vmatpush.msra.mxu0 %v14
  %565 = vmatmul.f32.gmra.mxu0 %v484
  %v566 = vpop.f32.mrf.mxu0
  %v567 = vadd.f32 0.0, %v566
  %568 = vmatmul.f32.gmra.mxu0 %v486
  %v569 = vpop.f32.mrf.mxu0
  %v570 = vadd.f32 0.0, %v569
  %571 = vmatmul.f32.gmra.mxu0 %v488
  %v572 = vpop.f32.mrf.mxu0
  %v573 = vadd.f32 0.0, %v572
  %574 = vmatmul.f32.gmra.mxu0 %v490
  %v575 = vpop.f32.mrf.mxu0
  %v576 = vadd.f32 0.0, %v575
  %577 = vmatmul.f32.gmra.mxu0 %v492
  %v578 = vpop.f32.mrf.mxu0
  %v579 = vadd.f32 0.0, %v578
  %580 = vmatmul.f32.gmra.mxu0 %v494
  %v581 = vpop.f32.mrf.mxu0
  %v582 = vadd.f32 0.0, %v581
  %583 = vmatmul.f32.gmra.mxu0 %v496
  %v584 = vpop.f32.mrf.mxu0
  %v585 = vadd.f32 0.0, %v584
  %586 = vmatmul.f32.gmra.mxu0 %v498
  %v587 = vpop.f32.mrf.mxu0
  %v588 = vadd.f32 0.0, %v587
  %589 = vmatmul.f32.gmra.mxu0 %v500
  %v590 = vpop.f32.mrf.mxu0
  %v591 = vadd.f32 0.0, %v590
  %592 = vmatmul.f32.gmra.mxu0 %v502
  %v593 = vpop.f32.mrf.mxu0
  %v594 = vadd.f32 0.0, %v593
  %595 = vmatmul.f32.gmra.mxu0 %v504
  %v596 = vpop.f32.mrf.mxu0
  %v597 = vadd.f32 0.0, %v596
  %598 = vmatmul.f32.gmra.mxu0 %v506
  %v599 = vpop.f32.mrf.mxu0
  %v600 = vadd.f32 0.0, %v599
  %601 = vmatmul.f32.gmra.mxu0 %v508
  %v602 = vpop.f32.mrf.mxu0
  %v603 = vadd.f32 0.0, %v602
  %604 = vdwg.mxu0
  %605 = vmatpush.msra.mxu0 0.0
  %606 = vmatpush.msra.mxu0 0.0
  %607 = vmatpush.msra.mxu0 0.0
  %608 = vmatpush.msra.mxu0 0.0
  %609 = vmatpush.msra.mxu0 0.0
  %610 = vmatpush.msra.mxu0 0.0
  %611 = vmatpush.msra.mxu0 0.0
  %612 = vmatpush.msra.mxu0 0.0
  %613 = vmatpush.msra.mxu0 0.0
  %614 = vmatpush.msra.mxu0 0.0
  %615 = vmatpush.msra.mxu0 0.0
  %616 = vmatpush.msra.mxu0 0.0
  %617 = vmatpush.msra.mxu0 0.0
  %618 = vmatpush.msra.mxu0 0.0
  %619 = vmatpush.msra.mxu0 %v31
  %620 = vmatpush.msra.mxu0 %v30
  %621 = vmatmul.f32.gmra.mxu0 %v511
  %v622 = vpop.f32.mrf.mxu0
  %v623 = vadd.f32 %v567, %v622
  %624 = vmatmul.f32.gmra.mxu0 %v514
  %v625 = vpop.f32.mrf.mxu0
  %v626 = vadd.f32 %v570, %v625
  %627 = vmatmul.f32.gmra.mxu0 %v517
  %v628 = vpop.f32.mrf.mxu0
  %v629 = vadd.f32 %v573, %v628
  %630 = vmatmul.f32.gmra.mxu0 %v520
  %v631 = vpop.f32.mrf.mxu0
  %v632 = vadd.f32 %v576, %v631
  %633 = vmatmul.f32.gmra.mxu0 %v523
  %v634 = vpop.f32.mrf.mxu0
  %v635 = vadd.f32 %v579, %v634
  %636 = vmatmul.f32.gmra.mxu0 %v526
  %v637 = vpop.f32.mrf.mxu0
  %v638 = vadd.f32 %v582, %v637
  %639 = vmatmul.f32.gmra.mxu0 %v529
  %v640 = vpop.f32.mrf.mxu0
  %v641 = vadd.f32 %v585, %v640
  %642 = vmatmul.f32.gmra.mxu0 %v532
  %v643 = vpop.f32.mrf.mxu0
  %v644 = vadd.f32 %v588, %v643
  %645 = vmatmul.f32.gmra.mxu0 %v535
  %v646 = vpop.f32.mrf.mxu0
  %v647 = vadd.f32 %v591, %v646
  %648 = vmatmul.f32.gmra.mxu0 %v538
  %v649 = vpop.f32.mrf.mxu0
  %v650 = vadd.f32 %v594, %v649
  %651 = vmatmul.f32.gmra.mxu0 %v541
  %v652 = vpop.f32.mrf.mxu0
  %v653 = vadd.f32 %v597, %v652
  %654 = vmatmul.f32.gmra.mxu0 %v544
  %v655 = vpop.f32.mrf.mxu0
  %v656 = vadd.f32 %v600, %v655
  %657 = vmatmul.f32.gmra.mxu0 %v547
  %v658 = vpop.f32.mrf.mxu0
  %v659 = vadd.f32 %v603, %v658
  %660 = vdwg.mxu0
  %v661 = vmul.f32 %v623, %v212
  %v662 = vmul.f32 %v626, %v212
  %v663 = vmul.f32 %v629, %v212
  %v664 = vmul.f32 %v632, %v212
  %v665 = vmul.f32 %v635, %v212
  %v666 = vmul.f32 %v638, %v212
  %v667 = vmul.f32 %v641, %v212
  %v668 = vmul.f32 %v644, %v212
  %v669 = vmul.f32 %v647, %v212
  %v670 = vmul.f32 %v650, %v212
  %v671 = vmul.f32 %v653, %v212
  %v672 = vmul.f32 %v656, %v212
  %v673 = vmul.f32 %v659, %v212
  %v674 = vadd.f32 %v661, %v226
  %v675 = vadd.f32 %v662, %v226
  %v676 = vadd.f32 %v663, %v226
  %v677 = vadd.f32 %v664, %v226
  %v678 = vadd.f32 %v665, %v226
  %v679 = vadd.f32 %v666, %v226
  %v680 = vadd.f32 %v667, %v226
  %v681 = vadd.f32 %v668, %v226
  %v682 = vadd.f32 %v669, %v226
  %v683 = vadd.f32 %v670, %v226
  %v684 = vadd.f32 %v671, %v226
  %v685 = vadd.f32 %v672, %v226
  %v686 = vadd.f32 %v673, %v226
  %v687 = vmax.f32 %v674, 0.0
  %v688 = vmax.f32 %v675, 0.0
  %v689 = vmax.f32 %v676, 0.0
  %v690 = vmax.f32 %v677, 0.0
  %v691 = vmax.f32 %v678, 0.0
  %v692 = vmax.f32 %v679, 0.0
  %v693 = vmax.f32 %v680, 0.0
  %v694 = vmax.f32 %v681, 0.0
  %v695 = vmax.f32 %v682, 0.0
  %v696 = vmax.f32 %v683, 0.0
  %v697 = vmax.f32 %v684, 0.0
  %v698 = vmax.f32 %v685, 0.0
  %v699 = vmax.f32 %v686, 0.0
  %s700 = scalar_lea.vmem %s0, 624
  %v701 = vld [vmem:[%s700] sm:$0xff]
  %v702 = vld [vmem:[%s700 + $0x8] sm:$0xff]
  %v703 = vld [vmem:[%s700 + $0x10] sm:$0xff]
  %v704 = vld [vmem:[%s700 + $0x18] sm:$0xff]
  %v705 = vld [vmem:[%s700 + $0x20] sm:$0xff]
  %v706 = vld [vmem:[%s700 + $0x28] sm:$0xff]
  %v707 = vld [vmem:[%s700 + $0x30] sm:$0xff]
  %v708 = vld [vmem:[%s700 + $0x38] sm:$0xff]
  %v709 = vld [vmem:[%s700 + $0x40] sm:$0xff]
  %v710 = vld [vmem:[%s700 + $0x48] sm:$0xff]
  %v711 = vld [vmem:[%s700 + $0x50] sm:$0xff]
  %v712 = vld [vmem:[%s700 + $0x58] sm:$0xff]
  %v713 = vld [vmem:[%s700 + $0x60] sm:$0xff]
  %v714 = vld [vmem:[%s700 + $0x68] sm:$0xff]
  %v715 = vld [vmem:[%s700 + $0x70] sm:$0xff]
  %v716 = vld [vmem:[%s700 + $0x78] sm:$0xff]
  %v717 = vld [vmem:[%s700 + $0x80] sm:$0xff]
  %v718 = vld [vmem:[%s700 + $0x88] sm:$0xff]
  %v719 = vld [vmem:[%s700 + $0x90] sm:$0xff]
  %v720 = vld [vmem:[%s700 + $0x98] sm:$0xff]
  %v721 = vld [vmem:[%s700 + $0xa0] sm:$0xff]
  %v722 = vld [vmem:[%s700 + $0xa8] sm:$0xff]
  %v723 = vld [vmem:[%s700 + $0xb0] sm:$0xff]
  %v724 = vld [vmem:[%s700 + $0xb8] sm:$0xff]
  %v725 = vld [vmem:[%s700 + $0xc0] sm:$0x3]
  %v726 = vld [vmem:[%s700 + $0xc8] sm:$0x3]
  %v728 = vsel %vm60, %v702, 0
  %v731 = vsel %vm60, %v704, 0
  %v734 = vsel %vm60, %v706, 0
  %v737 = vsel %vm60, %v708, 0
  %v740 = vsel %vm60, %v710, 0
  %v743 = vsel %vm60, %v712, 0
  %v746 = vsel %vm60, %v714, 0
  %v749 = vsel %vm60, %v716, 0
  %v752 = vsel %vm60, %v718, 0
  %v755 = vsel %vm60, %v720, 0
  %v758 = vsel %vm60, %v722, 0
  %v761 = vsel %vm60, %v724, 0
  %v764 = vsel %vm60, %v726, 0
  %766 = vmatpush.msra.mxu0 %v29
  %767 = vmatpush.msra.mxu0 %v28
  %768 = vmatpush.msra.mxu0 %v27
  %769 = vmatpush.msra.mxu0 %v26
  %770 = vmatpush.msra.mxu0 %v25
  %771 = vmatpush.msra.mxu0 %v24
  %772 = vmatpush.msra.mxu0 %v23
  %773 = vmatpush.msra.mxu0 %v22
  %774 = vmatpush.msra.mxu0 %v21
  %775 = vmatpush.msra.mxu0 %v20
  %776 = vmatpush.msra.mxu0 %v19
  %777 = vmatpush.msra.mxu0 %v18
  %778 = vmatpush.msra.mxu0 %v17
  %779 = vmatpush.msra.mxu0 %v16
  %780 = vmatpush.msra.mxu0 %v15
  %781 = vmatpush.msra.mxu0 %v14
  %782 = vmatmul.f32.gmra.mxu0 %v701
  %v783 = vpop.f32.mrf.mxu0
  %v784 = vadd.f32 0.0, %v783
  %785 = vmatmul.f32.gmra.mxu0 %v703
  %v786 = vpop.f32.mrf.mxu0
  %v787 = vadd.f32 0.0, %v786
  %788 = vmatmul.f32.gmra.mxu0 %v705
  %v789 = vpop.f32.mrf.mxu0
  %v790 = vadd.f32 0.0, %v789
  %791 = vmatmul.f32.gmra.mxu0 %v707
  %v792 = vpop.f32.mrf.mxu0
  %v793 = vadd.f32 0.0, %v792
  %794 = vmatmul.f32.gmra.mxu0 %v709
  %v795 = vpop.f32.mrf.mxu0
  %v796 = vadd.f32 0.0, %v795
  %797 = vmatmul.f32.gmra.mxu0 %v711
  %v798 = vpop.f32.mrf.mxu0
  %v799 = vadd.f32 0.0, %v798
  %800 = vmatmul.f32.gmra.mxu0 %v713
  %v801 = vpop.f32.mrf.mxu0
  %v802 = vadd.f32 0.0, %v801
  %803 = vmatmul.f32.gmra.mxu0 %v715
  %v804 = vpop.f32.mrf.mxu0
  %v805 = vadd.f32 0.0, %v804
  %806 = vmatmul.f32.gmra.mxu0 %v717
  %v807 = vpop.f32.mrf.mxu0
  %v808 = vadd.f32 0.0, %v807
  %809 = vmatmul.f32.gmra.mxu0 %v719
  %v810 = vpop.f32.mrf.mxu0
  %v811 = vadd.f32 0.0, %v810
  %812 = vmatmul.f32.gmra.mxu0 %v721
  %v813 = vpop.f32.mrf.mxu0
  %v814 = vadd.f32 0.0, %v813
  %815 = vmatmul.f32.gmra.mxu0 %v723
  %v816 = vpop.f32.mrf.mxu0
  %v817 = vadd.f32 0.0, %v816
  %818 = vmatmul.f32.gmra.mxu0 %v725
  %v819 = vpop.f32.mrf.mxu0
  %v820 = vadd.f32 0.0, %v819
  %821 = vdwg.mxu0
  %822 = vmatpush.msra.mxu0 0.0
  %823 = vmatpush.msra.mxu0 0.0
  %824 = vmatpush.msra.mxu0 0.0
  %825 = vmatpush.msra.mxu0 0.0
  %826 = vmatpush.msra.mxu0 0.0
  %827 = vmatpush.msra.mxu0 0.0
  %828 = vmatpush.msra.mxu0 0.0
  %829 = vmatpush.msra.mxu0 0.0
  %830 = vmatpush.msra.mxu0 0.0
  %831 = vmatpush.msra.mxu0 0.0
  %832 = vmatpush.msra.mxu0 0.0
  %833 = vmatpush.msra.mxu0 0.0
  %834 = vmatpush.msra.mxu0 0.0
  %835 = vmatpush.msra.mxu0 0.0
  %836 = vmatpush.msra.mxu0 %v31
  %837 = vmatpush.msra.mxu0 %v30
  %838 = vmatmul.f32.gmra.mxu0 %v728
  %v839 = vpop.f32.mrf.mxu0
  %v840 = vadd.f32 %v784, %v839
  %841 = vmatmul.f32.gmra.mxu0 %v731
  %v842 = vpop.f32.mrf.mxu0
  %v843 = vadd.f32 %v787, %v842
  %844 = vmatmul.f32.gmra.mxu0 %v734
  %v845 = vpop.f32.mrf.mxu0
  %v846 = vadd.f32 %v790, %v845
  %847 = vmatmul.f32.gmra.mxu0 %v737
  %v848 = vpop.f32.mrf.mxu0
  %v849 = vadd.f32 %v793, %v848
  %850 = vmatmul.f32.gmra.mxu0 %v740
  %v851 = vpop.f32.mrf.mxu0
  %v852 = vadd.f32 %v796, %v851
  %853 = vmatmul.f32.gmra.mxu0 %v743
  %v854 = vpop.f32.mrf.mxu0
  %v855 = vadd.f32 %v799, %v854
  %856 = vmatmul.f32.gmra.mxu0 %v746
  %v857 = vpop.f32.mrf.mxu0
  %v858 = vadd.f32 %v802, %v857
  %859 = vmatmul.f32.gmra.mxu0 %v749
  %v860 = vpop.f32.mrf.mxu0
  %v861 = vadd.f32 %v805, %v860
  %862 = vmatmul.f32.gmra.mxu0 %v752
  %v863 = vpop.f32.mrf.mxu0
  %v864 = vadd.f32 %v808, %v863
  %865 = vmatmul.f32.gmra.mxu0 %v755
  %v866 = vpop.f32.mrf.mxu0
  %v867 = vadd.f32 %v811, %v866
  %868 = vmatmul.f32.gmra.mxu0 %v758
  %v869 = vpop.f32.mrf.mxu0
  %v870 = vadd.f32 %v814, %v869
  %871 = vmatmul.f32.gmra.mxu0 %v761
  %v872 = vpop.f32.mrf.mxu0
  %v873 = vadd.f32 %v817, %v872
  %874 = vmatmul.f32.gmra.mxu0 %v764
  %v875 = vpop.f32.mrf.mxu0
  %v876 = vadd.f32 %v820, %v875
  %877 = vdwg.mxu0
  %v878 = vmul.f32 %v840, %v212
  %v879 = vmul.f32 %v843, %v212
  %v880 = vmul.f32 %v846, %v212
  %v881 = vmul.f32 %v849, %v212
  %v882 = vmul.f32 %v852, %v212
  %v883 = vmul.f32 %v855, %v212
  %v884 = vmul.f32 %v858, %v212
  %v885 = vmul.f32 %v861, %v212
  %v886 = vmul.f32 %v864, %v212
  %v887 = vmul.f32 %v867, %v212
  %v888 = vmul.f32 %v870, %v212
  %v889 = vmul.f32 %v873, %v212
  %v890 = vmul.f32 %v876, %v212
  %v891 = vadd.f32 %v878, %v226
  %v892 = vadd.f32 %v879, %v226
  %v893 = vadd.f32 %v880, %v226
  %v894 = vadd.f32 %v881, %v226
  %v895 = vadd.f32 %v882, %v226
  %v896 = vadd.f32 %v883, %v226
  %v897 = vadd.f32 %v884, %v226
  %v898 = vadd.f32 %v885, %v226
  %v899 = vadd.f32 %v886, %v226
  %v900 = vadd.f32 %v887, %v226
  %v901 = vadd.f32 %v888, %v226
  %v902 = vadd.f32 %v889, %v226
  %v903 = vadd.f32 %v890, %v226
  %v904 = vmax.f32 %v891, 0.0
  %v905 = vmax.f32 %v892, 0.0
  %v906 = vmax.f32 %v893, 0.0
  %v907 = vmax.f32 %v894, 0.0
  %v908 = vmax.f32 %v895, 0.0
  %v909 = vmax.f32 %v896, 0.0
  %v910 = vmax.f32 %v897, 0.0
  %v911 = vmax.f32 %v898, 0.0
  %v912 = vmax.f32 %v899, 0.0
  %v913 = vmax.f32 %v900, 0.0
  %v914 = vmax.f32 %v901, 0.0
  %v915 = vmax.f32 %v902, 0.0
  %v916 = vmax.f32 %v903, 0.0
  %v917 = vmax.f32 %v687, %v904
  %v918 = vmax.f32 %v688, %v905
  %v919 = vmax.f32 %v689, %v906
  %v920 = vmax.f32 %v690, %v907
  %v921 = vmax.f32 %v691, %v908
  %v922 = vmax.f32 %v692, %v909
  %v923 = vmax.f32 %v693, %v910
  %v924 = vmax.f32 %v694, %v911
  %v925 = vmax.f32 %v695, %v912
  %v926 = vmax.f32 %v696, %v913
  %v927 = vmax.f32 %v697, %v914
  %v928 = vmax.f32 %v698, %v915
  %v929 = vmax.f32 %v699, %v916
  %v930 = vmax.f32 %v470, %v917
  %v931 = vmax.f32 %v471, %v918
  %v932 = vmax.f32 %v472, %v919
  %v933 = vmax.f32 %v473, %v920
  %v934 = vmax.f32 %v474, %v921
  %v935 = vmax.f32 %v475, %v922
  %v936 = vmax.f32 %v476, %v923
  %v937 = vmax.f32 %v477, %v924
  %v938 = vmax.f32 %v478, %v925
  %v939 = vmax.f32 %v479, %v926
  %v940 = vmax.f32 %v480, %v927
  %v941 = vmax.f32 %v481, %v928
  %v942 = vmax.f32 %v482, %v929
  %943 = vst.msk [vmem:[%s3] sm:$0xff] %vm60, %v930
  %944 = vst.msk [vmem:[%s3 + $0x8] sm:$0xff] %vm60, %v931
  %945 = vst.msk [vmem:[%s3 + $0x10] sm:$0xff] %vm60, %v932
  %946 = vst.msk [vmem:[%s3 + $0x18] sm:$0xff] %vm60, %v933
  %947 = vst.msk [vmem:[%s3 + $0x20] sm:$0xff] %vm60, %v934
  %948 = vst.msk [vmem:[%s3 + $0x28] sm:$0xff] %vm60, %v935
  %949 = vst.msk [vmem:[%s3 + $0x30] sm:$0xff] %vm60, %v936
  %950 = vst.msk [vmem:[%s3 + $0x38] sm:$0xff] %vm60, %v937
  %951 = vst.msk [vmem:[%s3 + $0x40] sm:$0xff] %vm60, %v938
  %952 = vst.msk [vmem:[%s3 + $0x48] sm:$0xff] %vm60, %v939
  %953 = vst.msk [vmem:[%s3 + $0x50] sm:$0xff] %vm60, %v940
  %954 = vst.msk [vmem:[%s3 + $0x58] sm:$0xff] %vm60, %v941
  %vm955 = vcmask 123904
  %956 = vst.msk [vmem:[%s3 + $0x60] sm:$0x3] %vm955, %v942
  // Predicated region
  $region14: #{mycnn_forward.8} parent=0 // pred_check
    _
  $region15: #{mycnn_forward.8} parent=0 // pred_check_branch
    %958 = sbr.rel (0) target = $region17
  $region16: #{mycnn_forward.8} parent=0 // pred_region
    _
  $region17: #{mycnn_forward.8} parent=0 // pred_fallthru
    _
  // Predicated region
  $region18: #{mycnn_forward.8} parent=0 // pred_check
    _
  $region19: #{mycnn_forward.8} parent=0 // pred_check_branch
    %960 = sbr.rel (0) target = $region21
  $region20: #{mycnn_forward.8} parent=0 // pred_region
    _
  $region21: #{mycnn_forward.8} parent=0 // pred_fallthru
    _

// kernel: mycnn_forward.9
$region0: #{mycnn_forward.9}
  #allocation0 [shape = 'u32[]', space=smem, size = 0x4, offset = 0x4, fixed_abs, tag = 'smem constant byte address 0x4 - core index']
  #allocation1 [shape = 'u32[72,128]{1,0:T(1,128)}', space=vmem, size = 0x9000, scoped, tag = 'internal scratch']
  %s0 = inlined_call_operand.vmem [shape: f32[2,784], index: 0, kind: input, shape index: {}]
  %s1 = inlined_call_operand.vmem [shape: f32[784,128], index: 1, kind: input, shape index: {}]
  %s2 = inlined_call_operand.vmem [shape: f32[2,128], index: 2, kind: input, shape index: {}]
  %s3 = inlined_call_operand.vmem [shape: f32[128,128], index: 3, kind: input, shape index: {}]
  %s4 = inlined_call_operand.vmem [shape: f32[1,128], index: 4, kind: input, shape index: {}]
  %s5 = inlined_call_operand.hbm [shape: f32[2,128], index: 5, kind: output, shape index: {}]
  %s6 = sld [smem:[#allocation0]]
  $region30: #{mycnn_forward.9} parent=0
    _
  %s8 = ssub.s32 1, %s6
  %s9 = scalar_select 0, %s8, %s6
  $region1: #{mycnn_forward.9} parent=0
    #allocation2 [shape = 'u8[1024]{0}', space=vmem, size = 0x400, scoped, tag = 'output window, operand 0, single buffered']
    #allocation3 [shape = 's32[1]{0}', space=sflag, size = 0x4, scoped, tag = 'scoped memory for mycnn_forward.9']
    %10 = vsyncpa [#allocation3], 0
    // Predicated region
    $region2: #{mycnn_forward.9} parent=1 // pred_check
      _
    $region3: #{mycnn_forward.9} parent=1 // pred_check_branch
      %12 = sbr.rel (0) target = $region5
    $region4: #{mycnn_forward.9} parent=1 // pred_region
      _
    $region5: #{mycnn_forward.9} parent=1 // pred_fallthru
      _
    // Predicated region
    $region6: #{mycnn_forward.9} parent=1 // pred_check
      _
    $region7: #{mycnn_forward.9} parent=1 // pred_check_branch
      %14 = sbr.rel (0) target = $region9
    $region8: #{mycnn_forward.9} parent=1 // pred_region
      _
    $region9: #{mycnn_forward.9} parent=1 // pred_fallthru
      _
    // Predicated region
    $region10: #{mycnn_forward.9} parent=1 // pred_check
      _
    $region11: #{mycnn_forward.9} parent=1 // pred_check_branch
      %16 = sbr.rel (0) target = $region13
    $region12: #{mycnn_forward.9} parent=1 // pred_region
      _
    $region13: #{mycnn_forward.9} parent=1 // pred_fallthru
      _
    // Predicated region
    $region14: #{mycnn_forward.9} parent=1 // pred_check
      _
    $region15: #{mycnn_forward.9} parent=1 // pred_check_branch
      %18 = sbr.rel (0) target = $region17
    $region16: #{mycnn_forward.9} parent=1 // pred_region
      _
    $region17: #{mycnn_forward.9} parent=1 // pred_fallthru
      _
    // Predicated region
    $region18: #{mycnn_forward.9} parent=1 // pred_check
      _
    $region19: #{mycnn_forward.9} parent=1 // pred_check_branch
      %20 = sbr.rel (0) target = $region21
    $region20: #{mycnn_forward.9} parent=1 // pred_region
      _
    $region21: #{mycnn_forward.9} parent=1 // pred_fallthru
      _
    %v21 = vld [vmem:[%s0] sm:$0xff]
    %v22 = vld [vmem:[%s0 + $0x8] sm:$0x3f]
    %v23 = vld [vmem:[%s1] sm:$0xff]
    %v24 = vld [vmem:[%s1 + $0x8] sm:$0xff]
    %v25 = vld [vmem:[%s1 + $0x10] sm:$0xff]
    %v26 = vld [vmem:[%s1 + $0x18] sm:$0xff]
    %v27 = vld [vmem:[%s1 + $0x20] sm:$0xff]
    %v28 = vld [vmem:[%s1 + $0x28] sm:$0xff]
    %v29 = vld [vmem:[%s1 + $0x30] sm:$0xff]
    %v30 = vld [vmem:[%s1 + $0x38] sm:$0xff]
    %v31 = vld [vmem:[%s1 + $0x40] sm:$0xff]
    %v32 = vld [vmem:[%s1 + $0x48] sm:$0xff]
    %v33 = vld [vmem:[%s1 + $0x50] sm:$0xff]
    %v34 = vld [vmem:[%s1 + $0x58] sm:$0xff]
    %v35 = vld [vmem:[%s1 + $0x60] sm:$0xff]
    %v36 = vld [vmem:[%s1 + $0x68] sm:$0xff]
    %v37 = vld [vmem:[%s1 + $0x70] sm:$0xff]
    %v38 = vld [vmem:[%s1 + $0x78] sm:$0xff]
    %v39 = vld [vmem:[%s1 + $0x80] sm:$0xff]
    %v40 = vld [vmem:[%s1 + $0x88] sm:$0xff]
    %v41 = vld [vmem:[%s1 + $0x90] sm:$0xff]
    %v42 = vld [vmem:[%s1 + $0x98] sm:$0xff]
    %v43 = vld [vmem:[%s1 + $0xa0] sm:$0xff]
    %v44 = vld [vmem:[%s1 + $0xa8] sm:$0xff]
    %v45 = vld [vmem:[%s1 + $0xb0] sm:$0xff]
    %v46 = vld [vmem:[%s1 + $0xb8] sm:$0xff]
    %v47 = vld [vmem:[%s1 + $0xc0] sm:$0xff]
    %v48 = vld [vmem:[%s1 + $0xc8] sm:$0xff]
    %v49 = vld [vmem:[%s1 + $0xd0] sm:$0xff]
    %v50 = vld [vmem:[%s1 + $0xd8] sm:$0xff]
    %v51 = vld [vmem:[%s1 + $0xe0] sm:$0xff]
    %v52 = vld [vmem:[%s1 + $0xe8] sm:$0xff]
    %v53 = vld [vmem:[%s1 + $0xf0] sm:$0xff]
    %v54 = vld [vmem:[%s1 + $0xf8] sm:$0xff]
    %v55 = vld [vmem:[%s1 + $0x100] sm:$0xff]
    %v56 = vld [vmem:[%s1 + $0x108] sm:$0xff]
    %v57 = vld [vmem:[%s1 + $0x110] sm:$0xff]
    %v58 = vld [vmem:[%s1 + $0x118] sm:$0xff]
    %v59 = vld [vmem:[%s1 + $0x120] sm:$0xff]
    %v60 = vld [vmem:[%s1 + $0x128] sm:$0xff]
    %v61 = vld [vmem:[%s1 + $0x130] sm:$0xff]
    %v62 = vld [vmem:[%s1 + $0x138] sm:$0xff]
    %v63 = vld [vmem:[%s1 + $0x140] sm:$0xff]
    %v64 = vld [vmem:[%s1 + $0x148] sm:$0xff]
    %v65 = vld [vmem:[%s1 + $0x150] sm:$0xff]
    %v66 = vld [vmem:[%s1 + $0x158] sm:$0xff]
    %v67 = vld [vmem:[%s1 + $0x160] sm:$0xff]
    %v68 = vld [vmem:[%s1 + $0x168] sm:$0xff]
    %v69 = vld [vmem:[%s1 + $0x170] sm:$0xff]
    %v70 = vld [vmem:[%s1 + $0x178] sm:$0xff]
    %v71 = vld [vmem:[%s1 + $0x180] sm:$0xff]
    %v72 = vld [vmem:[%s1 + $0x188] sm:$0xff]
    %v73 = vld [vmem:[%s1 + $0x190] sm:$0xff]
    %v74 = vld [vmem:[%s1 + $0x198] sm:$0xff]
    %v75 = vld [vmem:[%s1 + $0x1a0] sm:$0xff]
    %v76 = vld [vmem:[%s1 + $0x1a8] sm:$0xff]
    %v77 = vld [vmem:[%s1 + $0x1b0] sm:$0xff]
    %v78 = vld [vmem:[%s1 + $0x1b8] sm:$0xff]
    %v79 = vld [vmem:[%s1 + $0x1c0] sm:$0xff]
    %v80 = vld [vmem:[%s1 + $0x1c8] sm:$0xff]
    %v81 = vld [vmem:[%s1 + $0x1d0] sm:$0xff]
    %v82 = vld [vmem:[%s1 + $0x1d8] sm:$0xff]
    %v83 = vld [vmem:[%s1 + $0x1e0] sm:$0xff]
    %v84 = vld [vmem:[%s1 + $0x1e8] sm:$0xff]
    %v85 = vld [vmem:[%s1 + $0x1f0] sm:$0xff]
    %v86 = vld [vmem:[%s1 + $0x1f8] sm:$0xff]
    %v87 = vld [vmem:[%s1 + $0x200] sm:$0xff]
    %v88 = vld [vmem:[%s1 + $0x208] sm:$0xff]
    %v89 = vld [vmem:[%s1 + $0x210] sm:$0xff]
    %v90 = vld [vmem:[%s1 + $0x218] sm:$0xff]
    %v91 = vld [vmem:[%s1 + $0x220] sm:$0xff]
    %v92 = vld [vmem:[%s1 + $0x228] sm:$0xff]
    %v93 = vld [vmem:[%s1 + $0x230] sm:$0xff]
    %v94 = vld [vmem:[%s1 + $0x238] sm:$0xff]
    %v95 = vld [vmem:[%s1 + $0x240] sm:$0xff]
    %v96 = vld [vmem:[%s1 + $0x248] sm:$0xff]
    %v97 = vld [vmem:[%s1 + $0x250] sm:$0xff]
    %v98 = vld [vmem:[%s1 + $0x258] sm:$0xff]
    %v99 = vld [vmem:[%s1 + $0x260] sm:$0xff]
    %v100 = vld [vmem:[%s1 + $0x268] sm:$0xff]
    %v101 = vld [vmem:[%s1 + $0x270] sm:$0xff]
    %v102 = vld [vmem:[%s1 + $0x278] sm:$0xff]
    %v103 = vld [vmem:[%s1 + $0x280] sm:$0xff]
    %v104 = vld [vmem:[%s1 + $0x288] sm:$0xff]
    %v105 = vld [vmem:[%s1 + $0x290] sm:$0xff]
    %v106 = vld [vmem:[%s1 + $0x298] sm:$0xff]
    %v107 = vld [vmem:[%s1 + $0x2a0] sm:$0xff]
    %v108 = vld [vmem:[%s1 + $0x2a8] sm:$0xff]
    %v109 = vld [vmem:[%s1 + $0x2b0] sm:$0xff]
    %v110 = vld [vmem:[%s1 + $0x2b8] sm:$0xff]
    %v111 = vld [vmem:[%s1 + $0x2c0] sm:$0xff]
    %v112 = vld [vmem:[%s1 + $0x2c8] sm:$0xff]
    %v113 = vld [vmem:[%s1 + $0x2d0] sm:$0xff]
    %v114 = vld [vmem:[%s1 + $0x2d8] sm:$0xff]
    %v115 = vld [vmem:[%s1 + $0x2e0] sm:$0xff]
    %v116 = vld [vmem:[%s1 + $0x2e8] sm:$0xff]
    %v117 = vld [vmem:[%s1 + $0x2f0] sm:$0xff]
    %v118 = vld [vmem:[%s1 + $0x2f8] sm:$0xff]
    %v119 = vld [vmem:[%s1 + $0x300] sm:$0xff]
    %v120 = vld [vmem:[%s1 + $0x308] sm:$0xff]
    %123 = vst [vmem:[#allocation1] ss:$4 sm:$0xff] %v21
    %s124 = scalar_lea.vmem [#allocation1], 32
    %125 = vst [vmem:[%s124] ss:$4 sm:$0xff] %v22
    %v126 = vld.sshfl [vmem:[#allocation1] sm:$0xff pattern:$0x73625140]
    %v127 = vld.sshfl [vmem:[#allocation1 + $0x8] sm:$0xff pattern:$0x73625140]
    %v128 = vld.sshfl [vmem:[#allocation1 + $0x10] sm:$0xff pattern:$0x73625140]
    %v129 = vld.sshfl [vmem:[#allocation1 + $0x18] sm:$0xff pattern:$0x73625140]
    %v130 = vld.sshfl [vmem:[#allocation1 + $0x20] sm:$0xff pattern:$0x73625140]
    %v131 = vld.sshfl [vmem:[#allocation1 + $0x28] sm:$0xff pattern:$0x73625140]
    %v132 = vld.sshfl [vmem:[#allocation1 + $0x30] sm:$0xff pattern:$0x73625140]
    %vm139 = vcmask 130048
    %v140 = vsel %vm139, %v132, 0
    %142 = vmatpush.msra.mxu0 %v38
    %143 = vmatpush.msra.mxu0 %v37
    %144 = vmatpush.msra.mxu0 %v36
    %145 = vmatpush.msra.mxu0 %v35
    %146 = vmatpush.msra.mxu0 %v34
    %147 = vmatpush.msra.mxu0 %v33
    %148 = vmatpush.msra.mxu0 %v32
    %149 = vmatpush.msra.mxu0 %v31
    %150 = vmatpush.msra.mxu0 %v30
    %151 = vmatpush.msra.mxu0 %v29
    %152 = vmatpush.msra.mxu0 %v28
    %153 = vmatpush.msra.mxu0 %v27
    %154 = vmatpush.msra.mxu0 %v26
    %155 = vmatpush.msra.mxu0 %v25
    %156 = vmatpush.msra.mxu0 %v24
    %157 = vmatpush.msra.mxu0 %v23
    %158 = vmatmul.f32.gmra.mxu0 %v126
    %v159 = vpop.f32.mrf.mxu0
    %v160 = vadd.f32 0.0, %v159
    %161 = vdwg.mxu0
    %162 = vmatpush.msra.mxu0 %v54
    %163 = vmatpush.msra.mxu0 %v53
    %164 = vmatpush.msra.mxu0 %v52
    %165 = vmatpush.msra.mxu0 %v51
    %166 = vmatpush.msra.mxu0 %v50
    %167 = vmatpush.msra.mxu0 %v49
    %168 = vmatpush.msra.mxu0 %v48
    %169 = vmatpush.msra.mxu0 %v47
    %170 = vmatpush.msra.mxu0 %v46
    %171 = vmatpush.msra.mxu0 %v45
    %172 = vmatpush.msra.mxu0 %v44
    %173 = vmatpush.msra.mxu0 %v43
    %174 = vmatpush.msra.mxu0 %v42
    %175 = vmatpush.msra.mxu0 %v41
    %176 = vmatpush.msra.mxu0 %v40
    %177 = vmatpush.msra.mxu0 %v39
    %178 = vmatmul.f32.gmra.mxu0 %v127
    %v179 = vpop.f32.mrf.mxu0
    %v180 = vadd.f32 %v160, %v179
    %181 = vdwg.mxu0
    %182 = vmatpush.msra.mxu0 %v70
    %183 = vmatpush.msra.mxu0 %v69
    %184 = vmatpush.msra.mxu0 %v68
    %185 = vmatpush.msra.mxu0 %v67
    %186 = vmatpush.msra.mxu0 %v66
    %187 = vmatpush.msra.mxu0 %v65
    %188 = vmatpush.msra.mxu0 %v64
    %189 = vmatpush.msra.mxu0 %v63
    %190 = vmatpush.msra.mxu0 %v62
    %191 = vmatpush.msra.mxu0 %v61
    %192 = vmatpush.msra.mxu0 %v60
    %193 = vmatpush.msra.mxu0 %v59
    %194 = vmatpush.msra.mxu0 %v58
    %195 = vmatpush.msra.mxu0 %v57
    %196 = vmatpush.msra.mxu0 %v56
    %197 = vmatpush.msra.mxu0 %v55
    %198 = vmatmul.f32.gmra.mxu0 %v128
    %v199 = vpop.f32.mrf.mxu0
    %v200 = vadd.f32 %v180, %v199
    %201 = vdwg.mxu0
    %202 = vmatpush.msra.mxu0 %v86
    %203 = vmatpush.msra.mxu0 %v85
    %204 = vmatpush.msra.mxu0 %v84
    %205 = vmatpush.msra.mxu0 %v83
    %206 = vmatpush.msra.mxu0 %v82
    %207 = vmatpush.msra.mxu0 %v81
    %208 = vmatpush.msra.mxu0 %v80
    %209 = vmatpush.msra.mxu0 %v79
    %210 = vmatpush.msra.mxu0 %v78
    %211 = vmatpush.msra.mxu0 %v77
    %212 = vmatpush.msra.mxu0 %v76
    %213 = vmatpush.msra.mxu0 %v75
    %214 = vmatpush.msra.mxu0 %v74
    %215 = vmatpush.msra.mxu0 %v73
    %216 = vmatpush.msra.mxu0 %v72
    %217 = vmatpush.msra.mxu0 %v71
    %218 = vmatmul.f32.gmra.mxu0 %v129
    %v219 = vpop.f32.mrf.mxu0
    %v220 = vadd.f32 %v200, %v219
    %221 = vdwg.mxu0
    %222 = vmatpush.msra.mxu0 %v102
    %223 = vmatpush.msra.mxu0 %v101
    %224 = vmatpush.msra.mxu0 %v100
    %225 = vmatpush.msra.mxu0 %v99
    %226 = vmatpush.msra.mxu0 %v98
    %227 = vmatpush.msra.mxu0 %v97
    %228 = vmatpush.msra.mxu0 %v96
    %229 = vmatpush.msra.mxu0 %v95
    %230 = vmatpush.msra.mxu0 %v94
    %231 = vmatpush.msra.mxu0 %v93
    %232 = vmatpush.msra.mxu0 %v92
    %233 = vmatpush.msra.mxu0 %v91
    %234 = vmatpush.msra.mxu0 %v90
    %235 = vmatpush.msra.mxu0 %v89
    %236 = vmatpush.msra.mxu0 %v88
    %237 = vmatpush.msra.mxu0 %v87
    %238 = vmatmul.f32.gmra.mxu0 %v130
    %v239 = vpop.f32.mrf.mxu0
    %v240 = vadd.f32 %v220, %v239
    %241 = vdwg.mxu0
    %242 = vmatpush.msra.mxu0 %v118
    %243 = vmatpush.msra.mxu0 %v117
    %244 = vmatpush.msra.mxu0 %v116
    %245 = vmatpush.msra.mxu0 %v115
    %246 = vmatpush.msra.mxu0 %v114
    %247 = vmatpush.msra.mxu0 %v113
    %248 = vmatpush.msra.mxu0 %v112
    %249 = vmatpush.msra.mxu0 %v111
    %250 = vmatpush.msra.mxu0 %v110
    %251 = vmatpush.msra.mxu0 %v109
    %252 = vmatpush.msra.mxu0 %v108
    %253 = vmatpush.msra.mxu0 %v107
    %254 = vmatpush.msra.mxu0 %v106
    %255 = vmatpush.msra.mxu0 %v105
    %256 = vmatpush.msra.mxu0 %v104
    %257 = vmatpush.msra.mxu0 %v103
    %258 = vmatmul.f32.gmra.mxu0 %v131
    %v259 = vpop.f32.mrf.mxu0
    %v260 = vadd.f32 %v240, %v259
    %261 = vdwg.mxu0
    %262 = vmatpush.msra.mxu0 0.0
    %263 = vmatpush.msra.mxu0 0.0
    %264 = vmatpush.msra.mxu0 0.0
    %265 = vmatpush.msra.mxu0 0.0
    %266 = vmatpush.msra.mxu0 0.0
    %267 = vmatpush.msra.mxu0 0.0
    %268 = vmatpush.msra.mxu0 0.0
    %269 = vmatpush.msra.mxu0 0.0
    %270 = vmatpush.msra.mxu0 0.0
    %271 = vmatpush.msra.mxu0 0.0
    %272 = vmatpush.msra.mxu0 0.0
    %273 = vmatpush.msra.mxu0 0.0
    %274 = vmatpush.msra.mxu0 0.0
    %275 = vmatpush.msra.mxu0 0.0
    %276 = vmatpush.msra.mxu0 %v120
    %277 = vmatpush.msra.mxu0 %v119
    %278 = vmatmul.f32.gmra.mxu0 %v140
    %v279 = vpop.f32.mrf.mxu0
    %v280 = vadd.f32 %v260, %v279
    %281 = vdwg.mxu0
    %v282 = vld [vmem:[%s2] sm:$0x1]
    %v283 = vperm.slane %v282, 0
    %v284 = vmul.f32 %v280, %v283
    %v285 = vld [vmem:[%s2 + $0x1] sm:$0x1]
    %v286 = vperm.slane %v285, 0
    %v287 = vadd.f32 %v284, %v286
    %v288 = vmax.f32 %v287, 0.0
    %v289 = vld [vmem:[%s3] sm:$0xff]
    %v290 = vld [vmem:[%s3 + $0x8] sm:$0xff]
    %v291 = vld [vmem:[%s3 + $0x10] sm:$0xff]
    %v292 = vld [vmem:[%s3 + $0x18] sm:$0xff]
    %v293 = vld [vmem:[%s3 + $0x20] sm:$0xff]
    %v294 = vld [vmem:[%s3 + $0x28] sm:$0xff]
    %v295 = vld [vmem:[%s3 + $0x30] sm:$0xff]
    %v296 = vld [vmem:[%s3 + $0x38] sm:$0xff]
    %v297 = vld [vmem:[%s3 + $0x40] sm:$0xff]
    %v298 = vld [vmem:[%s3 + $0x48] sm:$0xff]
    %v299 = vld [vmem:[%s3 + $0x50] sm:$0xff]
    %v300 = vld [vmem:[%s3 + $0x58] sm:$0xff]
    %v301 = vld [vmem:[%s3 + $0x60] sm:$0xff]
    %v302 = vld [vmem:[%s3 + $0x68] sm:$0xff]
    %v303 = vld [vmem:[%s3 + $0x70] sm:$0xff]
    %v304 = vld [vmem:[%s3 + $0x78] sm:$0xff]
    %v305 = vld [vmem:[%s4] sm:$0x1]
    %v307 = vperm.slane %v305, 0
    %309 = vmatpush.msra.mxu0 %v304
    %310 = vmatpush.msra.mxu0 %v303
    %311 = vmatpush.msra.mxu0 %v302
    %312 = vmatpush.msra.mxu0 %v301
    %313 = vmatpush.msra.mxu0 %v300
    %314 = vmatpush.msra.mxu0 %v299
    %315 = vmatpush.msra.mxu0 %v298
    %316 = vmatpush.msra.mxu0 %v297
    %317 = vmatpush.msra.mxu0 %v296
    %318 = vmatpush.msra.mxu0 %v295
    %319 = vmatpush.msra.mxu0 %v294
    %320 = vmatpush.msra.mxu0 %v293
    %321 = vmatpush.msra.mxu0 %v292
    %322 = vmatpush.msra.mxu0 %v291
    %323 = vmatpush.msra.mxu0 %v290
    %324 = vmatpush.msra.mxu0 %v289
    %325 = vmatmul.f32.gmra.mxu0 %v288
    %v326 = vpop.f32.mrf.mxu0
    %v327 = vadd.f32 %v307, %v326
    %328 = vdwg.mxu0
    %329 = vst [vmem:[#allocation2] sm:$0x3] %v327
    // Predicated region
    $region22: #{mycnn_forward.9} parent=1 // pred_check
      _
    $region23: #{mycnn_forward.9} parent=1 // pred_check_branch
      %331 = sbr.rel (0) target = $region25
    $region24: #{mycnn_forward.9} parent=1 // pred_region
      %333 = vsyncadd [#allocation3], 0
      %s335 = sshll.u32 [#allocation2], 4
      %s336 = int_to_ptr.vmem [resolvable:$true] %s335
      %s337 = sshll.u32 %s5, 4
      %s338 = int_to_ptr.hbm [resolvable:$true] %s337
      %340 = dma.vmem_to_hbm [thread:$0]  %s336, 32, %s338, [#allocation3]
    $region25: #{mycnn_forward.9} parent=1 // pred_fallthru
      _
    // Predicated region
    $region26: #{mycnn_forward.9} parent=1 // pred_check
      _
    $region27: #{mycnn_forward.9} parent=1 // pred_check_branch
      %342 = sbr.rel (0) target = $region29
    $region28: #{mycnn_forward.9} parent=1 // pred_region
      %344 = dma.done [#allocation3], 32
    $region29: #{mycnn_forward.9} parent=1 // pred_fallthru
      _
    %345 = vsyncpa [#allocation3], 1

</llo_original>
